<compile_context>
chip_gen: v5e
topology: v5e:2x2
jax: 0.10.0
libtpu: 0.0.40
codegen_flags: <defaults>
</compile_context>

<pallas_src>
import functools

import jax
import jax.numpy as jnp
from jax.experimental import pallas as pl
from jax.experimental.pallas import tpu as pltpu

BN_EPS = 1e-5
VMEM_LIMIT = 32 * 1024 * 1024   # safe scoped-VMEM budget on v5e/v6e/v7x


def _round_up(x, m):
    return (x + m - 1) // m * m


# --------------------------------------------------------------------------
# Phase-decomposed ConvTranspose2d (stride s) tap bookkeeping
# --------------------------------------------------------------------------
def _tap_offsets(k, s, p):
    """All input offsets d used by some output residue r (kernel idx r+p-s*d)."""
    return sorted({d for r in range(s) for d in range(-k, k + 1)
                   if 0 <= r + p - s * d < k})


def _build_w_eff(wt, scale, s, p, taps):
    """wt: PyTorch ConvTranspose2d weight (Cin, Cout, k, k); scale: (Cout,).
    Returns (s*s*Cout, n_taps*Cin) bf16 with the 4 phases fused into rows and
    the BN scale folded in.  Taps a phase does not use get zero weights."""
    Cin, Cout, k, _ = wt.shape
    blocks = []
    for ry in range(s):
        for rx in range(s):
            rows = []
            for dy, dx in taps:
                ky = ry + p - s * dy
                kx = rx + p - s * dx
                if 0 <= ky < k and 0 <= kx < k:
                    rows.append(wt[:, :, ky, kx])                  # (Cin, Cout)
                else:
                    rows.append(jnp.zeros((Cin, Cout), wt.dtype))
            wb = jnp.stack(rows, axis=0)                           # (T, Cin, Cout)
            wb = wb.transpose(2, 0, 1).reshape(Cout, -1)           # (Cout, T*Cin)
            blocks.append(wb * scale[:, None])
    return jnp.concatenate(blocks, axis=0).astype(jnp.bfloat16)    # (4*Cout, T*Cin)


# --------------------------------------------------------------------------
# Pallas kernel: per-image fused  W_eff @ gather(X)  -> +bias -> activation
# --------------------------------------------------------------------------
def deconv_kernel(x_ref, w_ref, b_ref, o_ref, *, shifts, guard, m_out, activation):
    # x_ref : (1, Cin, L)      bf16  padded+guarded flat image (VMEM resident)
    # w_ref : (R, T*Cin)       bf16  4 phases fused into rows, BN scale folded in
    # b_ref : (R, 1)           f32
    # o_ref : (1, R, m_out)
    x = x_ref[0]                                                   # (Cin, L)
    # Union-of-taps gather: static in-VMEM slices (no HBM im2col blow-up).
    xcat = jnp.concatenate(
        [x[:, guard + sh: guard + sh + m_out] for sh in shifts], axis=0)
    acc = jnp.dot(w_ref[...], xcat, preferred_element_type=jnp.float32)
    acc = acc + b_ref[...]
    if activation == "leaky":
        acc = jnp.where(acc > 0, acc, 0.2 * acc)
    elif activation == "tanh":
        acc = jnp.tanh(acc)
    o_ref[0] = acc.astype(o_ref.dtype)


def deconv_layer(x, wt, k, s, p, scale, bias, activation, out_dtype):
    """x: (B, Cin, H, W); wt: (Cin, Cout, k, k).  Returns (B, Cout, s*H, s*W)."""
    B, Cin, H, W = x.shape
    Cout = wt.shape[1]
    ds = _tap_offsets(k, s, p)
    halo = max(-min(ds), max(ds))
    taps = [(dy, dx) for dy in ds for dx in ds]

    Hp, Wp = H + 2 * halo, W + 2 * halo
    M = Hp * Wp
    Mpad = _round_up(max(M, 128), 128)           # lane-dense output tiles
    G = halo * (Wp + 1)                          # flat guard = worst |tap shift|
    L = Mpad + 2 * G
    shifts = tuple(dy * Wp + dx for dy, dx in taps)

    # Activation read exactly once: halo pad + per-image flatten + flat guard pad.
    xp = jnp.pad(x.astype(jnp.bfloat16),
                 ((0, 0), (0, 0), (halo, halo), (halo, halo)))
    xg = jnp.pad(xp.reshape(B, Cin, M), ((0, 0), (0, 0), (G, L - G - M)))

    w_eff = _build_w_eff(wt, scale.astype(jnp.float32), s, p, taps)
    R = s * s * Cout
    b_eff = jnp.tile(bias.astype(jnp.float32), s * s).reshape(R, 1)

    kernel = functools.partial(deconv_kernel, shifts=shifts, guard=G,
                               m_out=Mpad, activation=activation)
    y = pl.pallas_call(
        kernel,
        out_shape=jax.ShapeDtypeStruct((B, R, Mpad), out_dtype),
        grid=(B,),
        in_specs=[
            pl.BlockSpec((1, Cin, L), lambda b: (b, 0, 0)),
            pl.BlockSpec((R, len(taps) * Cin), lambda b: (0, 0)),
            pl.BlockSpec((R, 1), lambda b: (0, 0)),
        ],
        out_specs=pl.BlockSpec((1, R, Mpad), lambda b: (b, 0, 0)),
        compiler_params=pltpu.CompilerParams(
            dimension_semantics=("parallel",),
            vmem_limit_bytes=VMEM_LIMIT),
    )(xg, w_eff, b_eff)

    # Drop halo/guard outputs and interleave the s*s phases (pixel shuffle).
    y = y[:, :, :M].reshape(B, s, s, Cout, Hp, Wp)
    y = y[:, :, :, :, halo:halo + H, halo:halo + W]
    y = y.transpose(0, 3, 4, 1, 5, 2).reshape(B, Cout, s * H, s * W)
    return y


# --------------------------------------------------------------------------
# Pallas kernel: fused  Linear(100,512) -> LeakyReLU -> Linear(512,2048)
# --------------------------------------------------------------------------
def linear_fused_kernel(x_ref, w1_ref, b1_ref, w2_ref, b2_ref, o_ref):
    h = jnp.dot(x_ref[...], w1_ref[...], preferred_element_type=jnp.float32)
    h = h + b1_ref[...]
    h = jnp.where(h > 0, h, 0.2 * h)
    # TODO(synk): nn.Dropout() is stochastic in train mode; eval-mode identity used.
    y = jnp.dot(h.astype(jnp.bfloat16), w2_ref[...],
                preferred_element_type=jnp.float32)
    o_ref[...] = (y + b2_ref[...]).astype(o_ref.dtype)


def linear_fused(z, w1, b1, w2, b2):
    B, K = z.shape
    Kp = _round_up(K, 128)                       # 100 -> 128: no ragged K loads
    z_p = jnp.pad(z, ((0, 0), (0, Kp - K))).astype(jnp.bfloat16)
    w1_p = jnp.pad(w1, ((0, Kp - K), (0, 0))).astype(jnp.bfloat16)
    N = w2.shape[1]
    vmem = pl.BlockSpec(memory_space=pltpu.MemorySpace.VMEM)
    return pl.pallas_call(
        linear_fused_kernel,
        out_shape=jax.ShapeDtypeStruct((B, N), jnp.bfloat16),
        in_specs=[vmem] * 5,
        out_specs=vmem,
        compiler_params=pltpu.CompilerParams(vmem_limit_bytes=VMEM_LIMIT),
    )(z_p, w1_p, b1[None, :].astype(jnp.float32),
      w2.astype(jnp.bfloat16), b2[None, :].astype(jnp.float32))


# --------------------------------------------------------------------------
# Parameter construction (deterministic, mirrors weights_init)
# --------------------------------------------------------------------------
def init_params(key):
    ks = jax.random.split(key, 12)
    p = {}
    p["lin1_w"] = jax.random.normal(ks[0], (100, 512), jnp.float32) * 0.05
    p["lin1_b"] = jax.random.normal(ks[1], (512,), jnp.float32) * 0.05
    p["lin2_w"] = jax.random.normal(ks[2], (512, 128 * 4 * 4), jnp.float32) * 0.02
    p["lin2_b"] = jax.random.normal(ks[3], (128 * 4 * 4,), jnp.float32) * 0.02
    conv_cfg = [(128, 64, 4), (64, 32, 4), (32, 16, 4), (16, 1, 6)]
    for i, (cin, cout, k) in enumerate(conv_cfg):
        p[f"conv{i}_w"] = jax.random.normal(ks[4 + i], (cin, cout, k, k),
                                            jnp.float32) * 0.02
    for i, c in enumerate([64, 32, 16]):
        p[f"bn{i}_g"] = 1.0 + jax.random.normal(ks[8 + i], (c,), jnp.float32) * 0.02
        p[f"bn{i}_b"] = jnp.zeros((c,), jnp.float32)
    return p


# --------------------------------------------------------------------------
# Generator forward (eval-mode semantics for BatchNorm / Dropout)
# --------------------------------------------------------------------------
def generator_forward(params, noise):
    B = noise.shape[0]
    z = noise.reshape(B, 100)

    # Fused Linear(100,512) + LeakyReLU(0.2) + [Dropout eval] + Linear(512,2048)
    x = linear_fused(z, params["lin1_w"], params["lin1_b"],
                     params["lin2_w"], params["lin2_b"])           # (B, 2048) bf16
    x = x.reshape(B, 128, 4, 4)                                    # NCHW, batch-major

    # TODO(synk): BatchNorm2d folded in eval mode with *fresh* running stats
    # (mean=0, var=1); trained running statistics are not modeled.
    bn_scale = lambda g: g / jnp.sqrt(1.0 + BN_EPS)

    x = deconv_layer(x, params["conv0_w"], 4, 2, 1,
                     bn_scale(params["bn0_g"]), params["bn0_b"],
                     "leaky", jnp.bfloat16)
    x = deconv_layer(x, params["conv1_w"], 4, 2, 1,
                     bn_scale(params["bn1_g"]), params["bn1_b"],
                     "leaky", jnp.bfloat16)
    x = deconv_layer(x, params["conv2_w"], 4, 2, 1,
                     bn_scale(params["bn2_g"]), params["bn2_b"],
                     "leaky", jnp.bfloat16)
    x = deconv_layer(x, params["conv3_w"], 6, 2, 2,
                     jnp.ones((1,), jnp.float32), jnp.zeros((1,), jnp.float32),
                     "tanh", jnp.float32)
    return x                                                       # (B, 1, 64, 64)


if __name__ == "__main__":
    key = jax.random.PRNGKey(0)
    pkey, nkey = jax.random.split(key)
    params = init_params(pkey)

    batch = 2
    noise = jax.random.normal(nkey, (batch, 100, 1, 1), jnp.float32)

    out = jax.jit(generator_forward)(params, noise)
    out = jax.block_until_ready(out)

    assert out.shape == (batch, 1, 64, 64), out.shape
    assert bool(jnp.all(jnp.isfinite(out)))
    assert bool(jnp.all(jnp.abs(out) <= 1.0 + 1e-6))   # tanh range
    print("KERNEL_OK")
</pallas_src>

<mosaic_0001>
module attributes {stable_mosaic.version = 11 : i64} {
  func.func @linear_fused_kernel(%arg0: memref<2x128xbf16, #tpu.memory_space<vmem>>, %arg1: memref<128x512xbf16, #tpu.memory_space<vmem>>, %arg2: memref<1x512xf32, #tpu.memory_space<vmem>>, %arg3: memref<512x2048xbf16, #tpu.memory_space<vmem>>, %arg4: memref<1x2048xf32, #tpu.memory_space<vmem>>, %arg5: memref<2x2048xbf16, #tpu.memory_space<vmem>>) attributes {dimension_semantics = [], scalar_prefetch = 0 : i64, scratch_operands = 0 : i64, tpu.core_type = #tpu.core_type<tc>} {
    %c0 = arith.constant 0 : index
    %c0_0 = arith.constant 0 : index
    %0 = vector.load %arg0[%c0, %c0_0] : memref<2x128xbf16, #tpu.memory_space<vmem>>, vector<2x128xbf16>
    %c0_1 = arith.constant 0 : index
    %c0_2 = arith.constant 0 : index
    %1 = vector.load %arg1[%c0_1, %c0_2] : memref<128x512xbf16, #tpu.memory_space<vmem>>, vector<128x512xbf16>
    %cst = arith.constant dense<0.000000e+00> : vector<2x512xf32>
    %2 = tpu.matmul %0, %1, %cst {dimension_numbers = #tpu.dot_dimension_numbers<[1], [0], [0], [1], [0, 0, 1, 1], [], []>} : vector<2x128xbf16>, vector<128x512xbf16>, vector<2x512xf32> -> vector<2x512xf32>
    %c0_3 = arith.constant 0 : index
    %c0_4 = arith.constant 0 : index
    %3 = vector.load %arg2[%c0_3, %c0_4] : memref<1x512xf32, #tpu.memory_space<vmem>>, vector<1x512xf32>
    %4 = vector.broadcast %3 : vector<1x512xf32> to vector<2x512xf32>
    %5 = arith.addf %2, %4 : vector<2x512xf32>
    %cst_5 = arith.constant 0.000000e+00 : f32
    %6 = vector.broadcast %cst_5 : f32 to vector<2x512xf32>
    %7 = arith.cmpf ogt, %5, %6 : vector<2x512xf32>
    %cst_6 = arith.constant 2.000000e-01 : f32
    %8 = vector.broadcast %cst_6 : f32 to vector<2x512xf32>
    %9 = arith.mulf %8, %5 : vector<2x512xf32>
    %10 = arith.select %7, %5, %9 : vector<2x512xi1>, vector<2x512xf32>
    %11 = arith.truncf %10 : vector<2x512xf32> to vector<2x512xbf16>
    %c0_7 = arith.constant 0 : index
    %c0_8 = arith.constant 0 : index
    %12 = vector.load %arg3[%c0_7, %c0_8] : memref<512x2048xbf16, #tpu.memory_space<vmem>>, vector<512x2048xbf16>
    %cst_9 = arith.constant dense<0.000000e+00> : vector<2x2048xf32>
    %13 = tpu.matmul %11, %12, %cst_9 {dimension_numbers = #tpu.dot_dimension_numbers<[1], [0], [0], [1], [0, 0, 1, 1], [], []>} : vector<2x512xbf16>, vector<512x2048xbf16>, vector<2x2048xf32> -> vector<2x2048xf32>
    %c0_10 = arith.constant 0 : index
    %c0_11 = arith.constant 0 : index
    %14 = vector.load %arg4[%c0_10, %c0_11] : memref<1x2048xf32, #tpu.memory_space<vmem>>, vector<1x2048xf32>
    %15 = vector.broadcast %14 : vector<1x2048xf32> to vector<2x2048xf32>
    %16 = arith.addf %13, %15 : vector<2x2048xf32>
    %17 = arith.truncf %16 : vector<2x2048xf32> to vector<2x2048xbf16>
    %c0_12 = arith.constant 0 : index
    %c0_13 = arith.constant 0 : index
    %18 = vector.load %arg5[%c0_12, %c0_13] : memref<2x2048xbf16, #tpu.memory_space<vmem>>, vector<2x2048xbf16>
    tpu.vector_store %arg5[%c0_12, %c0_13], %17 {strides = array<i32>} : memref<2x2048xbf16, #tpu.memory_space<vmem>>, vector<2x2048xbf16>,
    return
  }
}

module attributes {stable_mosaic.version = 11 : i64} {
  func.func @deconv_kernel(%arg0: i32, %arg1: memref<1x128x142xbf16, #tpu.memory_space<vmem>>, %arg2: memref<256x1152xbf16, #tpu.memory_space<vmem>>, %arg3: memref<256x1xf32, #tpu.memory_space<vmem>>, %arg4: memref<1x256x128xbf16, #tpu.memory_space<vmem>>) attributes {dimension_semantics = [#tpu.dimension_semantics<parallel>], iteration_bounds = array<i64: 2>, scalar_prefetch = 0 : i64, scratch_operands = 0 : i64, tpu.core_type = #tpu.core_type<tc>, window_params = [{transform_indices = @transform_0, window_bounds = array<i64: 1, 128, 142>}, {pipeline_mode = #tpu.pipeline_mode<synchronous>, transform_indices = @transform_1, window_bounds = array<i64: 256, 1152>}, {pipeline_mode = #tpu.pipeline_mode<synchronous>, transform_indices = @transform_2, window_bounds = array<i64: 256, 1>}, {transform_indices = @transform_3, window_bounds = array<i64: 1, 256, 128>}]} {
    %c0 = arith.constant 0 : index
    %c0_0 = arith.constant 0 : index
    %c0_1 = arith.constant 0 : index
    %0 = vector.load %arg1[%c0, %c0_0, %c0_1] : memref<1x128x142xbf16, #tpu.memory_space<vmem>>, vector<1x128x142xbf16>
    %1 = vector.shape_cast %0 : vector<1x128x142xbf16> to vector<128x142xbf16>
    %2 = vector.extract_strided_slice %1 {offsets = [0, 0], sizes = [128, 128], strides = [1, 1]} : vector<128x142xbf16> to vector<128x128xbf16>
    %3 = vector.extract_strided_slice %1 {offsets = [0, 1], sizes = [128, 128], strides = [1, 1]} : vector<128x142xbf16> to vector<128x128xbf16>
    %4 = vector.extract_strided_slice %1 {offsets = [0, 2], sizes = [128, 128], strides = [1, 1]} : vector<128x142xbf16> to vector<128x128xbf16>
    %5 = vector.extract_strided_slice %1 {offsets = [0, 6], sizes = [128, 128], strides = [1, 1]} : vector<128x142xbf16> to vector<128x128xbf16>
    %6 = vector.extract_strided_slice %1 {offsets = [0, 7], sizes = [128, 128], strides = [1, 1]} : vector<128x142xbf16> to vector<128x128xbf16>
    %7 = vector.extract_strided_slice %1 {offsets = [0, 8], sizes = [128, 128], strides = [1, 1]} : vector<128x142xbf16> to vector<128x128xbf16>
    %8 = vector.extract_strided_slice %1 {offsets = [0, 12], sizes = [128, 128], strides = [1, 1]} : vector<128x142xbf16> to vector<128x128xbf16>
    %9 = vector.extract_strided_slice %1 {offsets = [0, 13], sizes = [128, 128], strides = [1, 1]} : vector<128x142xbf16> to vector<128x128xbf16>
    %10 = vector.extract_strided_slice %1 {offsets = [0, 14], sizes = [128, 128], strides = [1, 1]} : vector<128x142xbf16> to vector<128x128xbf16>
    %11 = tpu.concatenate %2, %3, %4, %5, %6, %7, %8, %9, %10 in 0 : vector<128x128xbf16>, vector<128x128xbf16>, vector<128x128xbf16>, vector<128x128xbf16>, vector<128x128xbf16>, vector<128x128xbf16>, vector<128x128xbf16>, vector<128x128xbf16>, vector<128x128xbf16> -> vector<1152x128xbf16>
    %c0_2 = arith.constant 0 : index
    %c0_3 = arith.constant 0 : index
    %12 = vector.load %arg2[%c0_2, %c0_3] : memref<256x1152xbf16, #tpu.memory_space<vmem>>, vector<256x1152xbf16>
    %cst = arith.constant dense<0.000000e+00> : vector<256x128xf32>
    %13 = tpu.matmul %12, %11, %cst {dimension_numbers = #tpu.dot_dimension_numbers<[1], [0], [0], [1], [0, 0, 1, 1], [], []>} : vector<256x1152xbf16>, vector<1152x128xbf16>, vector<256x128xf32> -> vector<256x128xf32>
    %c0_4 = arith.constant 0 : index
    %c0_5 = arith.constant 0 : index
    %14 = vector.load %arg3[%c0_4, %c0_5] : memref<256x1xf32, #tpu.memory_space<vmem>>, vector<256x1xf32>
    %15 = vector.broadcast %14 : vector<256x1xf32> to vector<256x128xf32>
    %16 = arith.addf %13, %15 : vector<256x128xf32>
    %cst_6 = arith.constant 0.000000e+00 : f32
    %17 = vector.broadcast %cst_6 : f32 to vector<256x128xf32>
    %18 = arith.cmpf ogt, %16, %17 : vector<256x128xf32>
    %cst_7 = arith.constant 2.000000e-01 : f32
    %19 = vector.broadcast %cst_7 : f32 to vector<256x128xf32>
    %20 = arith.mulf %19, %16 : vector<256x128xf32>
    %21 = arith.select %18, %16, %20 : vector<256x128xi1>, vector<256x128xf32>
    %22 = arith.truncf %21 : vector<256x128xf32> to vector<256x128xbf16>
    %c0_8 = arith.constant 0 : index
    %c0_9 = arith.constant 0 : index
    %c0_10 = arith.constant 0 : index
    %23 = vector.load %arg4[%c0_8, %c0_9, %c0_10] : memref<1x256x128xbf16, #tpu.memory_space<vmem>>, vector<1x256x128xbf16>
    %24 = vector.shape_cast %23 : vector<1x256x128xbf16> to vector<256x128xbf16>
    %25 = vector.shape_cast %22 : vector<256x128xbf16> to vector<1x256x128xbf16>
    tpu.vector_store %arg4[%c0_8, %c0_9, %c0_10], %25 {strides = array<i32>} : memref<1x256x128xbf16, #tpu.memory_space<vmem>>, vector<1x256x128xbf16>,
    return
  }
  func.func @transform_0(%arg0: i32) -> (i32, i32, i32) {
    %c0_i32 = arith.constant 0 : i32
    %c0_i32_0 = arith.constant 0 : i32
    %c0_i32_1 = arith.constant 0 : i32
    return %arg0, %c0_i32, %c0_i32_0 : i32, i32, i32
  }
  func.func @transform_1(%arg0: i32) -> (i32, i32) {
    %c0_i32 = arith.constant 0 : i32
    %c0_i32_0 = arith.constant 0 : i32
    %c0_i32_1 = arith.constant 0 : i32
    return %c0_i32, %c0_i32_0 : i32, i32
  }
  func.func @transform_2(%arg0: i32) -> (i32, i32) {
    %c0_i32 = arith.constant 0 : i32
    %c0_i32_0 = arith.constant 0 : i32
    %c0_i32_1 = arith.constant 0 : i32
    return %c0_i32, %c0_i32_0 : i32, i32
  }
  func.func @transform_3(%arg0: i32) -> (i32, i32, i32) {
    %c0_i32 = arith.constant 0 : i32
    %c0_i32_0 = arith.constant 0 : i32
    %c0_i32_1 = arith.constant 0 : i32
    return %arg0, %c0_i32, %c0_i32_0 : i32, i32, i32
  }
}

module attributes {stable_mosaic.version = 11 : i64} {
  func.func @deconv_kernel(%arg0: i32, %arg1: memref<1x64x150xbf16, #tpu.memory_space<vmem>>, %arg2: memref<128x576xbf16, #tpu.memory_space<vmem>>, %arg3: memref<128x1xf32, #tpu.memory_space<vmem>>, %arg4: memref<1x128x128xbf16, #tpu.memory_space<vmem>>) attributes {dimension_semantics = [#tpu.dimension_semantics<parallel>], iteration_bounds = array<i64: 2>, scalar_prefetch = 0 : i64, scratch_operands = 0 : i64, tpu.core_type = #tpu.core_type<tc>, window_params = [{transform_indices = @transform_0, window_bounds = array<i64: 1, 64, 150>}, {pipeline_mode = #tpu.pipeline_mode<synchronous>, transform_indices = @transform_1, window_bounds = array<i64: 128, 576>}, {pipeline_mode = #tpu.pipeline_mode<synchronous>, transform_indices = @transform_2, window_bounds = array<i64: 128, 1>}, {transform_indices = @transform_3, window_bounds = array<i64: 1, 128, 128>}]} {
    %c0 = arith.constant 0 : index
    %c0_0 = arith.constant 0 : index
    %c0_1 = arith.constant 0 : index
    %0 = vector.load %arg1[%c0, %c0_0, %c0_1] : memref<1x64x150xbf16, #tpu.memory_space<vmem>>, vector<1x64x150xbf16>
    %1 = vector.shape_cast %0 : vector<1x64x150xbf16> to vector<64x150xbf16>
    %2 = vector.extract_strided_slice %1 {offsets = [0, 0], sizes = [64, 128], strides = [1, 1]} : vector<64x150xbf16> to vector<64x128xbf16>
    %3 = vector.extract_strided_slice %1 {offsets = [0, 1], sizes = [64, 128], strides = [1, 1]} : vector<64x150xbf16> to vector<64x128xbf16>
    %4 = vector.extract_strided_slice %1 {offsets = [0, 2], sizes = [64, 128], strides = [1, 1]} : vector<64x150xbf16> to vector<64x128xbf16>
    %5 = vector.extract_strided_slice %1 {offsets = [0, 10], sizes = [64, 128], strides = [1, 1]} : vector<64x150xbf16> to vector<64x128xbf16>
    %6 = vector.extract_strided_slice %1 {offsets = [0, 11], sizes = [64, 128], strides = [1, 1]} : vector<64x150xbf16> to vector<64x128xbf16>
    %7 = vector.extract_strided_slice %1 {offsets = [0, 12], sizes = [64, 128], strides = [1, 1]} : vector<64x150xbf16> to vector<64x128xbf16>
    %8 = vector.extract_strided_slice %1 {offsets = [0, 20], sizes = [64, 128], strides = [1, 1]} : vector<64x150xbf16> to vector<64x128xbf16>
    %9 = vector.extract_strided_slice %1 {offsets = [0, 21], sizes = [64, 128], strides = [1, 1]} : vector<64x150xbf16> to vector<64x128xbf16>
    %10 = vector.extract_strided_slice %1 {offsets = [0, 22], sizes = [64, 128], strides = [1, 1]} : vector<64x150xbf16> to vector<64x128xbf16>
    %11 = tpu.concatenate %2, %3, %4, %5, %6, %7, %8, %9, %10 in 0 : vector<64x128xbf16>, vector<64x128xbf16>, vector<64x128xbf16>, vector<64x128xbf16>, vector<64x128xbf16>, vector<64x128xbf16>, vector<64x128xbf16>, vector<64x128xbf16>, vector<64x128xbf16> -> vector<576x128xbf16>
    %c0_2 = arith.constant 0 : index
    %c0_3 = arith.constant 0 : index
    %12 = vector.load %arg2[%c0_2, %c0_3] : memref<128x576xbf16, #tpu.memory_space<vmem>>, vector<128x576xbf16>
    %cst = arith.constant dense<0.000000e+00> : vector<128x128xf32>
    %13 = tpu.matmul %12, %11, %cst {dimension_numbers = #tpu.dot_dimension_numbers<[1], [0], [0], [1], [0, 0, 1, 1], [], []>} : vector<128x576xbf16>, vector<576x128xbf16>, vector<128x128xf32> -> vector<128x128xf32>
    %c0_4 = arith.constant 0 : index
    %c0_5 = arith.constant 0 : index
    %14 = vector.load %arg3[%c0_4, %c0_5] : memref<128x1xf32, #tpu.memory_space<vmem>>, vector<128x1xf32>
    %15 = vector.broadcast %14 : vector<128x1xf32> to vector<128x128xf32>
    %16 = arith.addf %13, %15 : vector<128x128xf32>
    %cst_6 = arith.constant 0.000000e+00 : f32
    %17 = vector.broadcast %cst_6 : f32 to vector<128x128xf32>
    %18 = arith.cmpf ogt, %16, %17 : vector<128x128xf32>
    %cst_7 = arith.constant 2.000000e-01 : f32
    %19 = vector.broadcast %cst_7 : f32 to vector<128x128xf32>
    %20 = arith.mulf %19, %16 : vector<128x128xf32>
    %21 = arith.select %18, %16, %20 : vector<128x128xi1>, vector<128x128xf32>
    %22 = arith.truncf %21 : vector<128x128xf32> to vector<128x128xbf16>
    %c0_8 = arith.constant 0 : index
    %c0_9 = arith.constant 0 : index
    %c0_10 = arith.constant 0 : index
    %23 = vector.load %arg4[%c0_8, %c0_9, %c0_10] : memref<1x128x128xbf16, #tpu.memory_space<vmem>>, vector<1x128x128xbf16>
    %24 = vector.shape_cast %23 : vector<1x128x128xbf16> to vector<128x128xbf16>
    %25 = vector.shape_cast %22 : vector<128x128xbf16> to vector<1x128x128xbf16>
    tpu.vector_store %arg4[%c0_8, %c0_9, %c0_10], %25 {strides = array<i32>} : memref<1x128x128xbf16, #tpu.memory_space<vmem>>, vector<1x128x128xbf16>,
    return
  }
  func.func @transform_0(%arg0: i32) -> (i32, i32, i32) {
    %c0_i32 = arith.constant 0 : i32
    %c0_i32_0 = arith.constant 0 : i32
    %c0_i32_1 = arith.constant 0 : i32
    return %arg0, %c0_i32, %c0_i32_0 : i32, i32, i32
  }
  func.func @transform_1(%arg0: i32) -> (i32, i32) {
    %c0_i32 = arith.constant 0 : i32
    %c0_i32_0 = arith.constant 0 : i32
    %c0_i32_1 = arith.constant 0 : i32
    return %c0_i32, %c0_i32_0 : i32, i32
  }
  func.func @transform_2(%arg0: i32) -> (i32, i32) {
    %c0_i32 = arith.constant 0 : i32
    %c0_i32_0 = arith.constant 0 : i32
    %c0_i32_1 = arith.constant 0 : i32
    return %c0_i32, %c0_i32_0 : i32, i32
  }
  func.func @transform_3(%arg0: i32) -> (i32, i32, i32) {
    %c0_i32 = arith.constant 0 : i32
    %c0_i32_0 = arith.constant 0 : i32
    %c0_i32_1 = arith.constant 0 : i32
    return %arg0, %c0_i32, %c0_i32_0 : i32, i32, i32
  }
}

module attributes {stable_mosaic.version = 11 : i64} {
  func.func @deconv_kernel(%arg0: i32, %arg1: memref<1x32x422xbf16, #tpu.memory_space<vmem>>, %arg2: memref<64x288xbf16, #tpu.memory_space<vmem>>, %arg3: memref<64x1xf32, #tpu.memory_space<vmem>>, %arg4: memref<1x64x384xbf16, #tpu.memory_space<vmem>>) attributes {dimension_semantics = [#tpu.dimension_semantics<parallel>], iteration_bounds = array<i64: 2>, scalar_prefetch = 0 : i64, scratch_operands = 0 : i64, tpu.core_type = #tpu.core_type<tc>, window_params = [{transform_indices = @transform_0, window_bounds = array<i64: 1, 32, 422>}, {pipeline_mode = #tpu.pipeline_mode<synchronous>, transform_indices = @transform_1, window_bounds = array<i64: 64, 288>}, {pipeline_mode = #tpu.pipeline_mode<synchronous>, transform_indices = @transform_2, window_bounds = array<i64: 64, 1>}, {transform_indices = @transform_3, window_bounds = array<i64: 1, 64, 384>}]} {
    %c0 = arith.constant 0 : index
    %c0_0 = arith.constant 0 : index
    %c0_1 = arith.constant 0 : index
    %0 = vector.load %arg1[%c0, %c0_0, %c0_1] : memref<1x32x422xbf16, #tpu.memory_space<vmem>>, vector<1x32x422xbf16>
    %1 = vector.shape_cast %0 : vector<1x32x422xbf16> to vector<32x422xbf16>
    %2 = vector.extract_strided_slice %1 {offsets = [0, 0], sizes = [32, 384], strides = [1, 1]} : vector<32x422xbf16> to vector<32x384xbf16>
    %3 = vector.extract_strided_slice %1 {offsets = [0, 1], sizes = [32, 384], strides = [1, 1]} : vector<32x422xbf16> to vector<32x384xbf16>
    %4 = vector.extract_strided_slice %1 {offsets = [0, 2], sizes = [32, 384], strides = [1, 1]} : vector<32x422xbf16> to vector<32x384xbf16>
    %5 = vector.extract_strided_slice %1 {offsets = [0, 18], sizes = [32, 384], strides = [1, 1]} : vector<32x422xbf16> to vector<32x384xbf16>
    %6 = vector.extract_strided_slice %1 {offsets = [0, 19], sizes = [32, 384], strides = [1, 1]} : vector<32x422xbf16> to vector<32x384xbf16>
    %7 = vector.extract_strided_slice %1 {offsets = [0, 20], sizes = [32, 384], strides = [1, 1]} : vector<32x422xbf16> to vector<32x384xbf16>
    %8 = vector.extract_strided_slice %1 {offsets = [0, 36], sizes = [32, 384], strides = [1, 1]} : vector<32x422xbf16> to vector<32x384xbf16>
    %9 = vector.extract_strided_slice %1 {offsets = [0, 37], sizes = [32, 384], strides = [1, 1]} : vector<32x422xbf16> to vector<32x384xbf16>
    %10 = vector.extract_strided_slice %1 {offsets = [0, 38], sizes = [32, 384], strides = [1, 1]} : vector<32x422xbf16> to vector<32x384xbf16>
    %11 = tpu.concatenate %2, %3, %4, %5, %6, %7, %8, %9, %10 in 0 : vector<32x384xbf16>, vector<32x384xbf16>, vector<32x384xbf16>, vector<32x384xbf16>, vector<32x384xbf16>, vector<32x384xbf16>, vector<32x384xbf16>, vector<32x384xbf16>, vector<32x384xbf16> -> vector<288x384xbf16>
    %c0_2 = arith.constant 0 : index
    %c0_3 = arith.constant 0 : index
    %12 = vector.load %arg2[%c0_2, %c0_3] : memref<64x288xbf16, #tpu.memory_space<vmem>>, vector<64x288xbf16>
    %cst = arith.constant dense<0.000000e+00> : vector<64x384xf32>
    %13 = tpu.matmul %12, %11, %cst {dimension_numbers = #tpu.dot_dimension_numbers<[1], [0], [0], [1], [0, 0, 1, 1], [], []>} : vector<64x288xbf16>, vector<288x384xbf16>, vector<64x384xf32> -> vector<64x384xf32>
    %c0_4 = arith.constant 0 : index
    %c0_5 = arith.constant 0 : index
    %14 = vector.load %arg3[%c0_4, %c0_5] : memref<64x1xf32, #tpu.memory_space<vmem>>, vector<64x1xf32>
    %15 = vector.broadcast %14 : vector<64x1xf32> to vector<64x384xf32>
    %16 = arith.addf %13, %15 : vector<64x384xf32>
    %cst_6 = arith.constant 0.000000e+00 : f32
    %17 = vector.broadcast %cst_6 : f32 to vector<64x384xf32>
    %18 = arith.cmpf ogt, %16, %17 : vector<64x384xf32>
    %cst_7 = arith.constant 2.000000e-01 : f32
    %19 = vector.broadcast %cst_7 : f32 to vector<64x384xf32>
    %20 = arith.mulf %19, %16 : vector<64x384xf32>
    %21 = arith.select %18, %16, %20 : vector<64x384xi1>, vector<64x384xf32>
    %22 = arith.truncf %21 : vector<64x384xf32> to vector<64x384xbf16>
    %c0_8 = arith.constant 0 : index
    %c0_9 = arith.constant 0 : index
    %c0_10 = arith.constant 0 : index
    %23 = vector.load %arg4[%c0_8, %c0_9, %c0_10] : memref<1x64x384xbf16, #tpu.memory_space<vmem>>, vector<1x64x384xbf16>
    %24 = vector.shape_cast %23 : vector<1x64x384xbf16> to vector<64x384xbf16>
    %25 = vector.shape_cast %22 : vector<64x384xbf16> to vector<1x64x384xbf16>
    tpu.vector_store %arg4[%c0_8, %c0_9, %c0_10], %25 {strides = array<i32>} : memref<1x64x384xbf16, #tpu.memory_space<vmem>>, vector<1x64x384xbf16>,
    return
  }
  func.func @transform_0(%arg0: i32) -> (i32, i32, i32) {
    %c0_i32 = arith.constant 0 : i32
    %c0_i32_0 = arith.constant 0 : i32
    %c0_i32_1 = arith.constant 0 : i32
    return %arg0, %c0_i32, %c0_i32_0 : i32, i32, i32
  }
  func.func @transform_1(%arg0: i32) -> (i32, i32) {
    %c0_i32 = arith.constant 0 : i32
    %c0_i32_0 = arith.constant 0 : i32
    %c0_i32_1 = arith.constant 0 : i32
    return %c0_i32, %c0_i32_0 : i32, i32
  }
  func.func @transform_2(%arg0: i32) -> (i32, i32) {
    %c0_i32 = arith.constant 0 : i32
    %c0_i32_0 = arith.constant 0 : i32
    %c0_i32_1 = arith.constant 0 : i32
    return %c0_i32, %c0_i32_0 : i32, i32
  }
  func.func @transform_3(%arg0: i32) -> (i32, i32, i32) {
    %c0_i32 = arith.constant 0 : i32
    %c0_i32_0 = arith.constant 0 : i32
    %c0_i32_1 = arith.constant 0 : i32
    return %arg0, %c0_i32, %c0_i32_0 : i32, i32, i32
  }
}

module attributes {stable_mosaic.version = 11 : i64} {
  func.func @deconv_kernel(%arg0: i32, %arg1: memref<1x16x1350xbf16, #tpu.memory_space<vmem>>, %arg2: memref<4x144xbf16, #tpu.memory_space<vmem>>, %arg3: memref<4x1xf32, #tpu.memory_space<vmem>>, %arg4: memref<1x4x1280xf32, #tpu.memory_space<vmem>>) attributes {dimension_semantics = [#tpu.dimension_semantics<parallel>], iteration_bounds = array<i64: 2>, scalar_prefetch = 0 : i64, scratch_operands = 0 : i64, tpu.core_type = #tpu.core_type<tc>, window_params = [{transform_indices = @transform_0, window_bounds = array<i64: 1, 16, 1350>}, {pipeline_mode = #tpu.pipeline_mode<synchronous>, transform_indices = @transform_1, window_bounds = array<i64: 4, 144>}, {pipeline_mode = #tpu.pipeline_mode<synchronous>, transform_indices = @transform_2, window_bounds = array<i64: 4, 1>}, {transform_indices = @transform_3, window_bounds = array<i64: 1, 4, 1280>}]} {
    %c0 = arith.constant 0 : index
    %c0_0 = arith.constant 0 : index
    %c0_1 = arith.constant 0 : index
    %0 = vector.load %arg1[%c0, %c0_0, %c0_1] : memref<1x16x1350xbf16, #tpu.memory_space<vmem>>, vector<1x16x1350xbf16>
    %1 = vector.shape_cast %0 : vector<1x16x1350xbf16> to vector<16x1350xbf16>
    %2 = vector.extract_strided_slice %1 {offsets = [0, 0], sizes = [16, 1280], strides = [1, 1]} : vector<16x1350xbf16> to vector<16x1280xbf16>
    %3 = vector.extract_strided_slice %1 {offsets = [0, 1], sizes = [16, 1280], strides = [1, 1]} : vector<16x1350xbf16> to vector<16x1280xbf16>
    %4 = vector.extract_strided_slice %1 {offsets = [0, 2], sizes = [16, 1280], strides = [1, 1]} : vector<16x1350xbf16> to vector<16x1280xbf16>
    %5 = vector.extract_strided_slice %1 {offsets = [0, 34], sizes = [16, 1280], strides = [1, 1]} : vector<16x1350xbf16> to vector<16x1280xbf16>
    %6 = vector.extract_strided_slice %1 {offsets = [0, 35], sizes = [16, 1280], strides = [1, 1]} : vector<16x1350xbf16> to vector<16x1280xbf16>
    %7 = vector.extract_strided_slice %1 {offsets = [0, 36], sizes = [16, 1280], strides = [1, 1]} : vector<16x1350xbf16> to vector<16x1280xbf16>
    %8 = vector.extract_strided_slice %1 {offsets = [0, 68], sizes = [16, 1280], strides = [1, 1]} : vector<16x1350xbf16> to vector<16x1280xbf16>
    %9 = vector.extract_strided_slice %1 {offsets = [0, 69], sizes = [16, 1280], strides = [1, 1]} : vector<16x1350xbf16> to vector<16x1280xbf16>
    %10 = vector.extract_strided_slice %1 {offsets = [0, 70], sizes = [16, 1280], strides = [1, 1]} : vector<16x1350xbf16> to vector<16x1280xbf16>
    %11 = tpu.concatenate %2, %3, %4, %5, %6, %7, %8, %9, %10 in 0 : vector<16x1280xbf16>, vector<16x1280xbf16>, vector<16x1280xbf16>, vector<16x1280xbf16>, vector<16x1280xbf16>, vector<16x1280xbf16>, vector<16x1280xbf16>, vector<16x1280xbf16>, vector<16x1280xbf16> -> vector<144x1280xbf16>
    %c0_2 = arith.constant 0 : index
    %c0_3 = arith.constant 0 : index
    %12 = vector.load %arg2[%c0_2, %c0_3] : memref<4x144xbf16, #tpu.memory_space<vmem>>, vector<4x144xbf16>
    %cst = arith.constant dense<0.000000e+00> : vector<4x1280xf32>
    %13 = tpu.matmul %12, %11, %cst {dimension_numbers = #tpu.dot_dimension_numbers<[1], [0], [0], [1], [0, 0, 1, 1], [], []>} : vector<4x144xbf16>, vector<144x1280xbf16>, vector<4x1280xf32> -> vector<4x1280xf32>
    %c0_4 = arith.constant 0 : index
    %c0_5 = arith.constant 0 : index
    %14 = vector.load %arg3[%c0_4, %c0_5] : memref<4x1xf32, #tpu.memory_space<vmem>>, vector<4x1xf32>
    %15 = vector.broadcast %14 : vector<4x1xf32> to vector<4x1280xf32>
    %16 = arith.addf %13, %15 : vector<4x1280xf32>
    %17 = math.tanh %16 : vector<4x1280xf32>
    %c0_6 = arith.constant 0 : index
    %c0_7 = arith.constant 0 : index
    %c0_8 = arith.constant 0 : index
    %18 = vector.load %arg4[%c0_6, %c0_7, %c0_8] : memref<1x4x1280xf32, #tpu.memory_space<vmem>>, vector<1x4x1280xf32>
    %19 = vector.shape_cast %18 : vector<1x4x1280xf32> to vector<4x1280xf32>
    %20 = vector.shape_cast %17 : vector<4x1280xf32> to vector<1x4x1280xf32>
    tpu.vector_store %arg4[%c0_6, %c0_7, %c0_8], %20 {strides = array<i32>} : memref<1x4x1280xf32, #tpu.memory_space<vmem>>, vector<1x4x1280xf32>,
    return
  }
  func.func @transform_0(%arg0: i32) -> (i32, i32, i32) {
    %c0_i32 = arith.constant 0 : i32
    %c0_i32_0 = arith.constant 0 : i32
    %c0_i32_1 = arith.constant 0 : i32
    return %arg0, %c0_i32, %c0_i32_0 : i32, i32, i32
  }
  func.func @transform_1(%arg0: i32) -> (i32, i32) {
    %c0_i32 = arith.constant 0 : i32
    %c0_i32_0 = arith.constant 0 : i32
    %c0_i32_1 = arith.constant 0 : i32
    return %c0_i32, %c0_i32_0 : i32, i32
  }
  func.func @transform_2(%arg0: i32) -> (i32, i32) {
    %c0_i32 = arith.constant 0 : i32
    %c0_i32_0 = arith.constant 0 : i32
    %c0_i32_1 = arith.constant 0 : i32
    return %c0_i32, %c0_i32_0 : i32, i32
  }
  func.func @transform_3(%arg0: i32) -> (i32, i32, i32) {
    %c0_i32 = arith.constant 0 : i32
    %c0_i32_0 = arith.constant 0 : i32
    %c0_i32_1 = arith.constant 0 : i32
    return %arg0, %c0_i32, %c0_i32_0 : i32, i32, i32
  }
}

</mosaic_0001>

<llo_original>
// kernel: generator_forward.5
$region0: #{generator_forward.5}
  #allocation0 [shape = 'u32[]', space=smem, size = 0x4, offset = 0x4, fixed_abs, tag = 'smem constant byte address 0x4 - core index']
  #allocation1 [shape = 'u32[72,128]{1,0:T(1,128)}', space=vmem, size = 0x9000, scoped, tag = 'internal scratch']
  %s0 = inlined_call_operand.vmem [shape: bf16[2,128], index: 0, kind: input, shape index: {}]
  %s1 = inlined_call_operand.vmem [shape: bf16[128,512], index: 1, kind: input, shape index: {}]
  %s2 = inlined_call_operand.vmem [shape: f32[1,512], index: 2, kind: input, shape index: {}]
  %s3 = inlined_call_operand.vmem [shape: bf16[512,2048], index: 3, kind: input, shape index: {}]
  %s4 = inlined_call_operand.vmem [shape: f32[1,2048], index: 4, kind: input, shape index: {}]
  %s5 = inlined_call_operand.vmem [shape: bf16[2,2048], index: 5, kind: output, shape index: {}]
  %s6 = sld [smem:[#allocation0]]
  $region30: #{generator_forward.5} parent=0
    _
  %s8 = ssub.s32 1, %s6
  %s9 = scalar_select 0, %s8, %s6
  // Predicated region
  $region2: #{generator_forward.5} parent=0 // pred_check
    _
  $region3: #{generator_forward.5} parent=0 // pred_check_branch
    %11 = sbr.rel (0) target = $region5
  $region4: #{generator_forward.5} parent=0 // pred_region
    _
  $region5: #{generator_forward.5} parent=0 // pred_fallthru
    _
  // Predicated region
  $region6: #{generator_forward.5} parent=0 // pred_check
    _
  $region7: #{generator_forward.5} parent=0 // pred_check_branch
    %13 = sbr.rel (0) target = $region9
  $region8: #{generator_forward.5} parent=0 // pred_region
    _
  $region9: #{generator_forward.5} parent=0 // pred_fallthru
    _
  // Predicated region
  $region10: #{generator_forward.5} parent=0 // pred_check
    _
  $region11: #{generator_forward.5} parent=0 // pred_check_branch
    %15 = sbr.rel (0) target = $region13
  $region12: #{generator_forward.5} parent=0 // pred_region
    _
  $region13: #{generator_forward.5} parent=0 // pred_fallthru
    _
  // Predicated region
  $region14: #{generator_forward.5} parent=0 // pred_check
    _
  $region15: #{generator_forward.5} parent=0 // pred_check_branch
    %17 = sbr.rel (0) target = $region17
  $region16: #{generator_forward.5} parent=0 // pred_region
    _
  $region17: #{generator_forward.5} parent=0 // pred_fallthru
    _
  // Predicated region
  $region18: #{generator_forward.5} parent=0 // pred_check
    _
  $region19: #{generator_forward.5} parent=0 // pred_check_branch
    %19 = sbr.rel (0) target = $region21
  $region20: #{generator_forward.5} parent=0 // pred_region
    _
  $region21: #{generator_forward.5} parent=0 // pred_fallthru
    _
  %v20 = vld [vmem:[%s0] sm:$0x1]
  %v21 = vld [vmem:[%s1] sm:$0xff]
  %v22 = vld [vmem:[%s1 + $0x8] sm:$0xff]
  %v23 = vld [vmem:[%s1 + $0x10] sm:$0xff]
  %v24 = vld [vmem:[%s1 + $0x18] sm:$0xff]
  %v25 = vld [vmem:[%s1 + $0x20] sm:$0xff]
  %v26 = vld [vmem:[%s1 + $0x28] sm:$0xff]
  %v27 = vld [vmem:[%s1 + $0x30] sm:$0xff]
  %v28 = vld [vmem:[%s1 + $0x38] sm:$0xff]
  %v29 = vld [vmem:[%s1 + $0x40] sm:$0xff]
  %v30 = vld [vmem:[%s1 + $0x48] sm:$0xff]
  %v31 = vld [vmem:[%s1 + $0x50] sm:$0xff]
  %v32 = vld [vmem:[%s1 + $0x58] sm:$0xff]
  %v33 = vld [vmem:[%s1 + $0x60] sm:$0xff]
  %v34 = vld [vmem:[%s1 + $0x68] sm:$0xff]
  %v35 = vld [vmem:[%s1 + $0x70] sm:$0xff]
  %v36 = vld [vmem:[%s1 + $0x78] sm:$0xff]
  %v37 = vld [vmem:[%s1 + $0x80] sm:$0xff]
  %v38 = vld [vmem:[%s1 + $0x88] sm:$0xff]
  %v39 = vld [vmem:[%s1 + $0x90] sm:$0xff]
  %v40 = vld [vmem:[%s1 + $0x98] sm:$0xff]
  %v41 = vld [vmem:[%s1 + $0xa0] sm:$0xff]
  %v42 = vld [vmem:[%s1 + $0xa8] sm:$0xff]
  %v43 = vld [vmem:[%s1 + $0xb0] sm:$0xff]
  %v44 = vld [vmem:[%s1 + $0xb8] sm:$0xff]
  %v45 = vld [vmem:[%s1 + $0xc0] sm:$0xff]
  %v46 = vld [vmem:[%s1 + $0xc8] sm:$0xff]
  %v47 = vld [vmem:[%s1 + $0xd0] sm:$0xff]
  %v48 = vld [vmem:[%s1 + $0xd8] sm:$0xff]
  %v49 = vld [vmem:[%s1 + $0xe0] sm:$0xff]
  %v50 = vld [vmem:[%s1 + $0xe8] sm:$0xff]
  %v51 = vld [vmem:[%s1 + $0xf0] sm:$0xff]
  %v52 = vld [vmem:[%s1 + $0xf8] sm:$0xff]
  %v53 = vld [vmem:[%s2] sm:$0xf]
  %v55 = vperm.slane %v53, 0
  %v56 = vperm.slane %v53, 1
  %v57 = vperm.slane %v53, 2
  %v58 = vperm.slane %v53, 3
  %v95 = vunpack.c.l.b16 %v21
  %v96 = vunpack.c.h.b16 %v21
  %v97 = vunpack.c.l.b16 %v22
  %v98 = vunpack.c.h.b16 %v22
  %v99 = vunpack.c.l.b16 %v23
  %v100 = vunpack.c.h.b16 %v23
  %v101 = vunpack.c.l.b16 %v24
  %v102 = vunpack.c.h.b16 %v24
  %v103 = vunpack.c.l.b16 %v25
  %v104 = vunpack.c.h.b16 %v25
  %v105 = vunpack.c.l.b16 %v26
  %v106 = vunpack.c.h.b16 %v26
  %v107 = vunpack.c.l.b16 %v27
  %v108 = vunpack.c.h.b16 %v27
  %v109 = vunpack.c.l.b16 %v28
  %v110 = vunpack.c.h.b16 %v28
  %v111 = vunpack.c.l.b16 %v29
  %v112 = vunpack.c.h.b16 %v29
  %v113 = vunpack.c.l.b16 %v30
  %v114 = vunpack.c.h.b16 %v30
  %v115 = vunpack.c.l.b16 %v31
  %v116 = vunpack.c.h.b16 %v31
  %v117 = vunpack.c.l.b16 %v32
  %v118 = vunpack.c.h.b16 %v32
  %v119 = vunpack.c.l.b16 %v33
  %v120 = vunpack.c.h.b16 %v33
  %v121 = vunpack.c.l.b16 %v34
  %v122 = vunpack.c.h.b16 %v34
  %v123 = vunpack.c.l.b16 %v35
  %v124 = vunpack.c.h.b16 %v35
  %v125 = vunpack.c.l.b16 %v36
  %v126 = vunpack.c.h.b16 %v36
  %v127 = vunpack.c.l.b16 %v37
  %v128 = vunpack.c.h.b16 %v37
  %v129 = vunpack.c.l.b16 %v38
  %v130 = vunpack.c.h.b16 %v38
  %v131 = vunpack.c.l.b16 %v39
  %v132 = vunpack.c.h.b16 %v39
  %v133 = vunpack.c.l.b16 %v40
  %v134 = vunpack.c.h.b16 %v40
  %v135 = vunpack.c.l.b16 %v41
  %v136 = vunpack.c.h.b16 %v41
  %v137 = vunpack.c.l.b16 %v42
  %v138 = vunpack.c.h.b16 %v42
  %v139 = vunpack.c.l.b16 %v43
  %v140 = vunpack.c.h.b16 %v43
  %v141 = vunpack.c.l.b16 %v44
  %v142 = vunpack.c.h.b16 %v44
  %v143 = vunpack.c.l.b16 %v45
  %v144 = vunpack.c.h.b16 %v45
  %v145 = vunpack.c.l.b16 %v46
  %v146 = vunpack.c.h.b16 %v46
  %v147 = vunpack.c.l.b16 %v47
  %v148 = vunpack.c.h.b16 %v47
  %v149 = vunpack.c.l.b16 %v48
  %v150 = vunpack.c.h.b16 %v48
  %v151 = vunpack.c.l.b16 %v49
  %v152 = vunpack.c.h.b16 %v49
  %v153 = vunpack.c.l.b16 %v50
  %v154 = vunpack.c.h.b16 %v50
  %v155 = vunpack.c.l.b16 %v51
  %v156 = vunpack.c.h.b16 %v51
  %v157 = vunpack.c.l.b16 %v52
  %v158 = vunpack.c.h.b16 %v52
  %v159 = vpack.c.b16 %v99, %v95
  %v160 = vpack.c.b16 %v100, %v96
  %v161 = vpack.c.b16 %v101, %v97
  %v162 = vpack.c.b16 %v102, %v98
  %v163 = vpack.c.b16 %v107, %v103
  %v164 = vpack.c.b16 %v108, %v104
  %v165 = vpack.c.b16 %v109, %v105
  %v166 = vpack.c.b16 %v110, %v106
  %v167 = vpack.c.b16 %v115, %v111
  %v168 = vpack.c.b16 %v116, %v112
  %v169 = vpack.c.b16 %v117, %v113
  %v170 = vpack.c.b16 %v118, %v114
  %v171 = vpack.c.b16 %v123, %v119
  %v172 = vpack.c.b16 %v124, %v120
  %v173 = vpack.c.b16 %v125, %v121
  %v174 = vpack.c.b16 %v126, %v122
  %v175 = vpack.c.b16 %v131, %v127
  %v176 = vpack.c.b16 %v132, %v128
  %v177 = vpack.c.b16 %v133, %v129
  %v178 = vpack.c.b16 %v134, %v130
  %v179 = vpack.c.b16 %v139, %v135
  %v180 = vpack.c.b16 %v140, %v136
  %v181 = vpack.c.b16 %v141, %v137
  %v182 = vpack.c.b16 %v142, %v138
  %v183 = vpack.c.b16 %v147, %v143
  %v184 = vpack.c.b16 %v148, %v144
  %v185 = vpack.c.b16 %v149, %v145
  %v186 = vpack.c.b16 %v150, %v146
  %v187 = vpack.c.b16 %v155, %v151
  %v188 = vpack.c.b16 %v156, %v152
  %v189 = vpack.c.b16 %v157, %v153
  %v190 = vpack.c.b16 %v158, %v154
  %223 = vmatpush.bf16.msra.mxu0 %v187
  %224 = vmatpush.bf16.msra.mxu0 %v183
  %225 = vmatpush.bf16.msra.mxu0 %v179
  %226 = vmatpush.bf16.msra.mxu0 %v175
  %227 = vmatpush.bf16.msra.mxu0 %v171
  %228 = vmatpush.bf16.msra.mxu0 %v167
  %229 = vmatpush.bf16.msra.mxu0 %v163
  %230 = vmatpush.bf16.msra.mxu0 %v159
  %231 = vmatmul.bf16.gmra.mxu0 %v20
  %v232 = vpop.f32.mrf.mxu0
  %v233 = vadd.f32 %v55, %v232
  %v234 = vpop.f32.mrf.mxu0
  %235 = vdwg.mxu0
  %236 = vmatpush.bf16.msra.mxu0 %v188
  %237 = vmatpush.bf16.msra.mxu0 %v184
  %238 = vmatpush.bf16.msra.mxu0 %v180
  %239 = vmatpush.bf16.msra.mxu0 %v176
  %240 = vmatpush.bf16.msra.mxu0 %v172
  %241 = vmatpush.bf16.msra.mxu0 %v168
  %242 = vmatpush.bf16.msra.mxu0 %v164
  %243 = vmatpush.bf16.msra.mxu0 %v160
  %244 = vmatmul.bf16.gmra.mxu0 %v20
  %v245 = vpop.f32.mrf.mxu0
  %v246 = vadd.f32 %v56, %v245
  %v247 = vpop.f32.mrf.mxu0
  %248 = vdwg.mxu0
  %249 = vmatpush.bf16.msra.mxu0 %v189
  %250 = vmatpush.bf16.msra.mxu0 %v185
  %251 = vmatpush.bf16.msra.mxu0 %v181
  %252 = vmatpush.bf16.msra.mxu0 %v177
  %253 = vmatpush.bf16.msra.mxu0 %v173
  %254 = vmatpush.bf16.msra.mxu0 %v169
  %255 = vmatpush.bf16.msra.mxu0 %v165
  %256 = vmatpush.bf16.msra.mxu0 %v161
  %257 = vmatmul.bf16.gmra.mxu0 %v20
  %v258 = vpop.f32.mrf.mxu0
  %v259 = vadd.f32 %v57, %v258
  %v260 = vpop.f32.mrf.mxu0
  %261 = vdwg.mxu0
  %262 = vmatpush.bf16.msra.mxu0 %v190
  %263 = vmatpush.bf16.msra.mxu0 %v186
  %264 = vmatpush.bf16.msra.mxu0 %v182
  %265 = vmatpush.bf16.msra.mxu0 %v178
  %266 = vmatpush.bf16.msra.mxu0 %v174
  %267 = vmatpush.bf16.msra.mxu0 %v170
  %268 = vmatpush.bf16.msra.mxu0 %v166
  %269 = vmatpush.bf16.msra.mxu0 %v162
  %270 = vmatmul.bf16.gmra.mxu0 %v20
  %v271 = vpop.f32.mrf.mxu0
  %v272 = vadd.f32 %v58, %v271
  %v273 = vpop.f32.mrf.mxu0
  %274 = vdwg.mxu0
  %vm275 = vcmp.gt.f32.partialorder %v233, 0.0
  %vm276 = vcmp.gt.f32.partialorder %v246, 0.0
  %vm277 = vcmp.gt.f32.partialorder %v259, 0.0
  %vm278 = vcmp.gt.f32.partialorder %v272, 0.0
  %v279 = vmul.f32 %v233, 0.2
  %v280 = vmul.f32 %v246, 0.2
  %v281 = vmul.f32 %v259, 0.2
  %v282 = vmul.f32 %v272, 0.2
  %v283 = vsel %vm275, %v233, %v279
  %v284 = vsel %vm276, %v246, %v280
  %v285 = vsel %vm277, %v259, %v281
  %v286 = vsel %vm278, %v272, %v282
  %v287 = vpack.c.bf16 %v283, %v283
  %v288 = vpack.c.bf16 %v284, %v284
  %v289 = vpack.c.bf16 %v285, %v285
  %v290 = vpack.c.bf16 %v286, %v286
  %v291 = vld [vmem:[%s3] sm:$0xff]
  %v292 = vld [vmem:[%s3 + $0x8] sm:$0xff]
  %v293 = vld [vmem:[%s3 + $0x10] sm:$0xff]
  %v294 = vld [vmem:[%s3 + $0x18] sm:$0xff]
  %v295 = vld [vmem:[%s3 + $0x20] sm:$0xff]
  %v296 = vld [vmem:[%s3 + $0x28] sm:$0xff]
  %v297 = vld [vmem:[%s3 + $0x30] sm:$0xff]
  %v298 = vld [vmem:[%s3 + $0x38] sm:$0xff]
  %v299 = vld [vmem:[%s3 + $0x40] sm:$0xff]
  %v300 = vld [vmem:[%s3 + $0x48] sm:$0xff]
  %v301 = vld [vmem:[%s3 + $0x50] sm:$0xff]
  %v302 = vld [vmem:[%s3 + $0x58] sm:$0xff]
  %v303 = vld [vmem:[%s3 + $0x60] sm:$0xff]
  %v304 = vld [vmem:[%s3 + $0x68] sm:$0xff]
  %v305 = vld [vmem:[%s3 + $0x70] sm:$0xff]
  %v306 = vld [vmem:[%s3 + $0x78] sm:$0xff]
  %v307 = vld [vmem:[%s3 + $0x80] sm:$0xff]
  %v308 = vld [vmem:[%s3 + $0x88] sm:$0xff]
  %v309 = vld [vmem:[%s3 + $0x90] sm:$0xff]
  %v310 = vld [vmem:[%s3 + $0x98] sm:$0xff]
  %v311 = vld [vmem:[%s3 + $0xa0] sm:$0xff]
  %v312 = vld [vmem:[%s3 + $0xa8] sm:$0xff]
  %v313 = vld [vmem:[%s3 + $0xb0] sm:$0xff]
  %v314 = vld [vmem:[%s3 + $0xb8] sm:$0xff]
  %v315 = vld [vmem:[%s3 + $0xc0] sm:$0xff]
  %v316 = vld [vmem:[%s3 + $0xc8] sm:$0xff]
  %v317 = vld [vmem:[%s3 + $0xd0] sm:$0xff]
  %v318 = vld [vmem:[%s3 + $0xd8] sm:$0xff]
  %v319 = vld [vmem:[%s3 + $0xe0] sm:$0xff]
  %v320 = vld [vmem:[%s3 + $0xe8] sm:$0xff]
  %v321 = vld [vmem:[%s3 + $0xf0] sm:$0xff]
  %v322 = vld [vmem:[%s3 + $0xf8] sm:$0xff]
  %v323 = vld [vmem:[%s3 + $0x100] sm:$0xff]
  %v324 = vld [vmem:[%s3 + $0x108] sm:$0xff]
  %v325 = vld [vmem:[%s3 + $0x110] sm:$0xff]
  %v326 = vld [vmem:[%s3 + $0x118] sm:$0xff]
  %v327 = vld [vmem:[%s3 + $0x120] sm:$0xff]
  %v328 = vld [vmem:[%s3 + $0x128] sm:$0xff]
  %v329 = vld [vmem:[%s3 + $0x130] sm:$0xff]
  %v330 = vld [vmem:[%s3 + $0x138] sm:$0xff]
  %v331 = vld [vmem:[%s3 + $0x140] sm:$0xff]
  %v332 = vld [vmem:[%s3 + $0x148] sm:$0xff]
  %v333 = vld [vmem:[%s3 + $0x150] sm:$0xff]
  %v334 = vld [vmem:[%s3 + $0x158] sm:$0xff]
  %v335 = vld [vmem:[%s3 + $0x160] sm:$0xff]
  %v336 = vld [vmem:[%s3 + $0x168] sm:$0xff]
  %v337 = vld [vmem:[%s3 + $0x170] sm:$0xff]
  %v338 = vld [vmem:[%s3 + $0x178] sm:$0xff]
  %v339 = vld [vmem:[%s3 + $0x180] sm:$0xff]
  %v340 = vld [vmem:[%s3 + $0x188] sm:$0xff]
  %v341 = vld [vmem:[%s3 + $0x190] sm:$0xff]
  %v342 = vld [vmem:[%s3 + $0x198] sm:$0xff]
  %v343 = vld [vmem:[%s3 + $0x1a0] sm:$0xff]
  %v344 = vld [vmem:[%s3 + $0x1a8] sm:$0xff]
  %v345 = vld [vmem:[%s3 + $0x1b0] sm:$0xff]
  %v346 = vld [vmem:[%s3 + $0x1b8] sm:$0xff]
  %v347 = vld [vmem:[%s3 + $0x1c0] sm:$0xff]
  %v348 = vld [vmem:[%s3 + $0x1c8] sm:$0xff]
  %v349 = vld [vmem:[%s3 + $0x1d0] sm:$0xff]
  %v350 = vld [vmem:[%s3 + $0x1d8] sm:$0xff]
  %v351 = vld [vmem:[%s3 + $0x1e0] sm:$0xff]
  %v352 = vld [vmem:[%s3 + $0x1e8] sm:$0xff]
  %v353 = vld [vmem:[%s3 + $0x1f0] sm:$0xff]
  %v354 = vld [vmem:[%s3 + $0x1f8] sm:$0xff]
  %v355 = vld [vmem:[%s3 + $0x200] sm:$0xff]
  %v356 = vld [vmem:[%s3 + $0x208] sm:$0xff]
  %v357 = vld [vmem:[%s3 + $0x210] sm:$0xff]
  %v358 = vld [vmem:[%s3 + $0x218] sm:$0xff]
  %v359 = vld [vmem:[%s3 + $0x220] sm:$0xff]
  %v360 = vld [vmem:[%s3 + $0x228] sm:$0xff]
  %v361 = vld [vmem:[%s3 + $0x230] sm:$0xff]
  %v362 = vld [vmem:[%s3 + $0x238] sm:$0xff]
  %v363 = vld [vmem:[%s3 + $0x240] sm:$0xff]
  %v364 = vld [vmem:[%s3 + $0x248] sm:$0xff]
  %v365 = vld [vmem:[%s3 + $0x250] sm:$0xff]
  %v366 = vld [vmem:[%s3 + $0x258] sm:$0xff]
  %v367 = vld [vmem:[%s3 + $0x260] sm:$0xff]
  %v368 = vld [vmem:[%s3 + $0x268] sm:$0xff]
  %v369 = vld [vmem:[%s3 + $0x270] sm:$0xff]
  %v370 = vld [vmem:[%s3 + $0x278] sm:$0xff]
  %v371 = vld [vmem:[%s3 + $0x280] sm:$0xff]
  %v372 = vld [vmem:[%s3 + $0x288] sm:$0xff]
  %v373 = vld [vmem:[%s3 + $0x290] sm:$0xff]
  %v374 = vld [vmem:[%s3 + $0x298] sm:$0xff]
  %v375 = vld [vmem:[%s3 + $0x2a0] sm:$0xff]
  %v376 = vld [vmem:[%s3 + $0x2a8] sm:$0xff]
  %v377 = vld [vmem:[%s3 + $0x2b0] sm:$0xff]
  %v378 = vld [vmem:[%s3 + $0x2b8] sm:$0xff]
  %v379 = vld [vmem:[%s3 + $0x2c0] sm:$0xff]
  %v380 = vld [vmem:[%s3 + $0x2c8] sm:$0xff]
  %v381 = vld [vmem:[%s3 + $0x2d0] sm:$0xff]
  %v382 = vld [vmem:[%s3 + $0x2d8] sm:$0xff]
  %v383 = vld [vmem:[%s3 + $0x2e0] sm:$0xff]
  %v384 = vld [vmem:[%s3 + $0x2e8] sm:$0xff]
  %v385 = vld [vmem:[%s3 + $0x2f0] sm:$0xff]
  %v386 = vld [vmem:[%s3 + $0x2f8] sm:$0xff]
  %v387 = vld [vmem:[%s3 + $0x300] sm:$0xff]
  %v388 = vld [vmem:[%s3 + $0x308] sm:$0xff]
  %v389 = vld [vmem:[%s3 + $0x310] sm:$0xff]
  %v390 = vld [vmem:[%s3 + $0x318] sm:$0xff]
  %v391 = vld [vmem:[%s3 + $0x320] sm:$0xff]
  %v392 = vld [vmem:[%s3 + $0x328] sm:$0xff]
  %v393 = vld [vmem:[%s3 + $0x330] sm:$0xff]
  %v394 = vld [vmem:[%s3 + $0x338] sm:$0xff]
  %v395 = vld [vmem:[%s3 + $0x340] sm:$0xff]
  %v396 = vld [vmem:[%s3 + $0x348] sm:$0xff]
  %v397 = vld [vmem:[%s3 + $0x350] sm:$0xff]
  %v398 = vld [vmem:[%s3 + $0x358] sm:$0xff]
  %v399 = vld [vmem:[%s3 + $0x360] sm:$0xff]
  %v400 = vld [vmem:[%s3 + $0x368] sm:$0xff]
  %v401 = vld [vmem:[%s3 + $0x370] sm:$0xff]
  %v402 = vld [vmem:[%s3 + $0x378] sm:$0xff]
  %v403 = vld [vmem:[%s3 + $0x380] sm:$0xff]
  %v404 = vld [vmem:[%s3 + $0x388] sm:$0xff]
  %v405 = vld [vmem:[%s3 + $0x390] sm:$0xff]
  %v406 = vld [vmem:[%s3 + $0x398] sm:$0xff]
  %v407 = vld [vmem:[%s3 + $0x3a0] sm:$0xff]
  %v408 = vld [vmem:[%s3 + $0x3a8] sm:$0xff]
  %v409 = vld [vmem:[%s3 + $0x3b0] sm:$0xff]
  %v410 = vld [vmem:[%s3 + $0x3b8] sm:$0xff]
  %v411 = vld [vmem:[%s3 + $0x3c0] sm:$0xff]
  %v412 = vld [vmem:[%s3 + $0x3c8] sm:$0xff]
  %v413 = vld [vmem:[%s3 + $0x3d0] sm:$0xff]
  %v414 = vld [vmem:[%s3 + $0x3d8] sm:$0xff]
  %v415 = vld [vmem:[%s3 + $0x3e0] sm:$0xff]
  %v416 = vld [vmem:[%s3 + $0x3e8] sm:$0xff]
  %v417 = vld [vmem:[%s3 + $0x3f0] sm:$0xff]
  %v418 = vld [vmem:[%s3 + $0x3f8] sm:$0xff]
  %v419 = vld [vmem:[%s3 + $0x400] sm:$0xff]
  %v420 = vld [vmem:[%s3 + $0x408] sm:$0xff]
  %v421 = vld [vmem:[%s3 + $0x410] sm:$0xff]
  %v422 = vld [vmem:[%s3 + $0x418] sm:$0xff]
  %v423 = vld [vmem:[%s3 + $0x420] sm:$0xff]
  %v424 = vld [vmem:[%s3 + $0x428] sm:$0xff]
  %v425 = vld [vmem:[%s3 + $0x430] sm:$0xff]
  %v426 = vld [vmem:[%s3 + $0x438] sm:$0xff]
  %v427 = vld [vmem:[%s3 + $0x440] sm:$0xff]
  %v428 = vld [vmem:[%s3 + $0x448] sm:$0xff]
  %v429 = vld [vmem:[%s3 + $0x450] sm:$0xff]
  %v430 = vld [vmem:[%s3 + $0x458] sm:$0xff]
  %v431 = vld [vmem:[%s3 + $0x460] sm:$0xff]
  %v432 = vld [vmem:[%s3 + $0x468] sm:$0xff]
  %v433 = vld [vmem:[%s3 + $0x470] sm:$0xff]
  %v434 = vld [vmem:[%s3 + $0x478] sm:$0xff]
  %v435 = vld [vmem:[%s3 + $0x480] sm:$0xff]
  %v436 = vld [vmem:[%s3 + $0x488] sm:$0xff]
  %v437 = vld [vmem:[%s3 + $0x490] sm:$0xff]
  %v438 = vld [vmem:[%s3 + $0x498] sm:$0xff]
  %v439 = vld [vmem:[%s3 + $0x4a0] sm:$0xff]
  %v440 = vld [vmem:[%s3 + $0x4a8] sm:$0xff]
  %v441 = vld [vmem:[%s3 + $0x4b0] sm:$0xff]
  %v442 = vld [vmem:[%s3 + $0x4b8] sm:$0xff]
  %v443 = vld [vmem:[%s3 + $0x4c0] sm:$0xff]
  %v444 = vld [vmem:[%s3 + $0x4c8] sm:$0xff]
  %v445 = vld [vmem:[%s3 + $0x4d0] sm:$0xff]
  %v446 = vld [vmem:[%s3 + $0x4d8] sm:$0xff]
  %v447 = vld [vmem:[%s3 + $0x4e0] sm:$0xff]
  %v448 = vld [vmem:[%s3 + $0x4e8] sm:$0xff]
  %v449 = vld [vmem:[%s3 + $0x4f0] sm:$0xff]
  %v450 = vld [vmem:[%s3 + $0x4f8] sm:$0xff]
  %v451 = vld [vmem:[%s3 + $0x500] sm:$0xff]
  %v452 = vld [vmem:[%s3 + $0x508] sm:$0xff]
  %v453 = vld [vmem:[%s3 + $0x510] sm:$0xff]
  %v454 = vld [vmem:[%s3 + $0x518] sm:$0xff]
  %v455 = vld [vmem:[%s3 + $0x520] sm:$0xff]
  %v456 = vld [vmem:[%s3 + $0x528] sm:$0xff]
  %v457 = vld [vmem:[%s3 + $0x530] sm:$0xff]
  %v458 = vld [vmem:[%s3 + $0x538] sm:$0xff]
  %v459 = vld [vmem:[%s3 + $0x540] sm:$0xff]
  %v460 = vld [vmem:[%s3 + $0x548] sm:$0xff]
  %v461 = vld [vmem:[%s3 + $0x550] sm:$0xff]
  %v462 = vld [vmem:[%s3 + $0x558] sm:$0xff]
  %v463 = vld [vmem:[%s3 + $0x560] sm:$0xff]
  %v464 = vld [vmem:[%s3 + $0x568] sm:$0xff]
  %v465 = vld [vmem:[%s3 + $0x570] sm:$0xff]
  %v466 = vld [vmem:[%s3 + $0x578] sm:$0xff]
  %v467 = vld [vmem:[%s3 + $0x580] sm:$0xff]
  %v468 = vld [vmem:[%s3 + $0x588] sm:$0xff]
  %v469 = vld [vmem:[%s3 + $0x590] sm:$0xff]
  %v470 = vld [vmem:[%s3 + $0x598] sm:$0xff]
  %v471 = vld [vmem:[%s3 + $0x5a0] sm:$0xff]
  %v472 = vld [vmem:[%s3 + $0x5a8] sm:$0xff]
  %v473 = vld [vmem:[%s3 + $0x5b0] sm:$0xff]
  %v474 = vld [vmem:[%s3 + $0x5b8] sm:$0xff]
  %v475 = vld [vmem:[%s3 + $0x5c0] sm:$0xff]
  %v476 = vld [vmem:[%s3 + $0x5c8] sm:$0xff]
  %v477 = vld [vmem:[%s3 + $0x5d0] sm:$0xff]
  %v478 = vld [vmem:[%s3 + $0x5d8] sm:$0xff]
  %v479 = vld [vmem:[%s3 + $0x5e0] sm:$0xff]
  %v480 = vld [vmem:[%s3 + $0x5e8] sm:$0xff]
  %v481 = vld [vmem:[%s3 + $0x5f0] sm:$0xff]
  %v482 = vld [vmem:[%s3 + $0x5f8] sm:$0xff]
  %v483 = vld [vmem:[%s3 + $0x600] sm:$0xff]
  %v484 = vld [vmem:[%s3 + $0x608] sm:$0xff]
  %v485 = vld [vmem:[%s3 + $0x610] sm:$0xff]
  %v486 = vld [vmem:[%s3 + $0x618] sm:$0xff]
  %v487 = vld [vmem:[%s3 + $0x620] sm:$0xff]
  %v488 = vld [vmem:[%s3 + $0x628] sm:$0xff]
  %v489 = vld [vmem:[%s3 + $0x630] sm:$0xff]
  %v490 = vld [vmem:[%s3 + $0x638] sm:$0xff]
  %v491 = vld [vmem:[%s3 + $0x640] sm:$0xff]
  %v492 = vld [vmem:[%s3 + $0x648] sm:$0xff]
  %v493 = vld [vmem:[%s3 + $0x650] sm:$0xff]
  %v494 = vld [vmem:[%s3 + $0x658] sm:$0xff]
  %v495 = vld [vmem:[%s3 + $0x660] sm:$0xff]
  %v496 = vld [vmem:[%s3 + $0x668] sm:$0xff]
  %v497 = vld [vmem:[%s3 + $0x670] sm:$0xff]
  %v498 = vld [vmem:[%s3 + $0x678] sm:$0xff]
  %v499 = vld [vmem:[%s3 + $0x680] sm:$0xff]
  %v500 = vld [vmem:[%s3 + $0x688] sm:$0xff]
  %v501 = vld [vmem:[%s3 + $0x690] sm:$0xff]
  %v502 = vld [vmem:[%s3 + $0x698] sm:$0xff]
  %v503 = vld [vmem:[%s3 + $0x6a0] sm:$0xff]
  %v504 = vld [vmem:[%s3 + $0x6a8] sm:$0xff]
  %v505 = vld [vmem:[%s3 + $0x6b0] sm:$0xff]
  %v506 = vld [vmem:[%s3 + $0x6b8] sm:$0xff]
  %v507 = vld [vmem:[%s3 + $0x6c0] sm:$0xff]
  %v508 = vld [vmem:[%s3 + $0x6c8] sm:$0xff]
  %v509 = vld [vmem:[%s3 + $0x6d0] sm:$0xff]
  %v510 = vld [vmem:[%s3 + $0x6d8] sm:$0xff]
  %v511 = vld [vmem:[%s3 + $0x6e0] sm:$0xff]
  %v512 = vld [vmem:[%s3 + $0x6e8] sm:$0xff]
  %v513 = vld [vmem:[%s3 + $0x6f0] sm:$0xff]
  %v514 = vld [vmem:[%s3 + $0x6f8] sm:$0xff]
  %v515 = vld [vmem:[%s3 + $0x700] sm:$0xff]
  %v516 = vld [vmem:[%s3 + $0x708] sm:$0xff]
  %v517 = vld [vmem:[%s3 + $0x710] sm:$0xff]
  %v518 = vld [vmem:[%s3 + $0x718] sm:$0xff]
  %v519 = vld [vmem:[%s3 + $0x720] sm:$0xff]
  %v520 = vld [vmem:[%s3 + $0x728] sm:$0xff]
  %v521 = vld [vmem:[%s3 + $0x730] sm:$0xff]
  %v522 = vld [vmem:[%s3 + $0x738] sm:$0xff]
  %v523 = vld [vmem:[%s3 + $0x740] sm:$0xff]
  %v524 = vld [vmem:[%s3 + $0x748] sm:$0xff]
  %v525 = vld [vmem:[%s3 + $0x750] sm:$0xff]
  %v526 = vld [vmem:[%s3 + $0x758] sm:$0xff]
  %v527 = vld [vmem:[%s3 + $0x760] sm:$0xff]
  %v528 = vld [vmem:[%s3 + $0x768] sm:$0xff]
  %v529 = vld [vmem:[%s3 + $0x770] sm:$0xff]
  %v530 = vld [vmem:[%s3 + $0x778] sm:$0xff]
  %v531 = vld [vmem:[%s3 + $0x780] sm:$0xff]
  %v532 = vld [vmem:[%s3 + $0x788] sm:$0xff]
  %v533 = vld [vmem:[%s3 + $0x790] sm:$0xff]
  %v534 = vld [vmem:[%s3 + $0x798] sm:$0xff]
  %v535 = vld [vmem:[%s3 + $0x7a0] sm:$0xff]
  %v536 = vld [vmem:[%s3 + $0x7a8] sm:$0xff]
  %v537 = vld [vmem:[%s3 + $0x7b0] sm:$0xff]
  %v538 = vld [vmem:[%s3 + $0x7b8] sm:$0xff]
  %v539 = vld [vmem:[%s3 + $0x7c0] sm:$0xff]
  %v540 = vld [vmem:[%s3 + $0x7c8] sm:$0xff]
  %v541 = vld [vmem:[%s3 + $0x7d0] sm:$0xff]
  %v542 = vld [vmem:[%s3 + $0x7d8] sm:$0xff]
  %v543 = vld [vmem:[%s3 + $0x7e0] sm:$0xff]
  %v544 = vld [vmem:[%s3 + $0x7e8] sm:$0xff]
  %v545 = vld [vmem:[%s3 + $0x7f0] sm:$0xff]
  %v546 = vld [vmem:[%s3 + $0x7f8] sm:$0xff]
  %v547 = vld [vmem:[%s3 + $0x800] sm:$0xff]
  %v548 = vld [vmem:[%s3 + $0x808] sm:$0xff]
  %v549 = vld [vmem:[%s3 + $0x810] sm:$0xff]
  %v550 = vld [vmem:[%s3 + $0x818] sm:$0xff]
  %v551 = vld [vmem:[%s3 + $0x820] sm:$0xff]
  %v552 = vld [vmem:[%s3 + $0x828] sm:$0xff]
  %v553 = vld [vmem:[%s3 + $0x830] sm:$0xff]
  %v554 = vld [vmem:[%s3 + $0x838] sm:$0xff]
  %v555 = vld [vmem:[%s3 + $0x840] sm:$0xff]
  %v556 = vld [vmem:[%s3 + $0x848] sm:$0xff]
  %v557 = vld [vmem:[%s3 + $0x850] sm:$0xff]
  %v558 = vld [vmem:[%s3 + $0x858] sm:$0xff]
  %v559 = vld [vmem:[%s3 + $0x860] sm:$0xff]
  %v560 = vld [vmem:[%s3 + $0x868] sm:$0xff]
  %v561 = vld [vmem:[%s3 + $0x870] sm:$0xff]
  %v562 = vld [vmem:[%s3 + $0x878] sm:$0xff]
  %v563 = vld [vmem:[%s3 + $0x880] sm:$0xff]
  %v564 = vld [vmem:[%s3 + $0x888] sm:$0xff]
  %v565 = vld [vmem:[%s3 + $0x890] sm:$0xff]
  %v566 = vld [vmem:[%s3 + $0x898] sm:$0xff]
  %v567 = vld [vmem:[%s3 + $0x8a0] sm:$0xff]
  %v568 = vld [vmem:[%s3 + $0x8a8] sm:$0xff]
  %v569 = vld [vmem:[%s3 + $0x8b0] sm:$0xff]
  %v570 = vld [vmem:[%s3 + $0x8b8] sm:$0xff]
  %v571 = vld [vmem:[%s3 + $0x8c0] sm:$0xff]
  %v572 = vld [vmem:[%s3 + $0x8c8] sm:$0xff]
  %v573 = vld [vmem:[%s3 + $0x8d0] sm:$0xff]
  %v574 = vld [vmem:[%s3 + $0x8d8] sm:$0xff]
  %v575 = vld [vmem:[%s3 + $0x8e0] sm:$0xff]
  %v576 = vld [vmem:[%s3 + $0x8e8] sm:$0xff]
  %v577 = vld [vmem:[%s3 + $0x8f0] sm:$0xff]
  %v578 = vld [vmem:[%s3 + $0x8f8] sm:$0xff]
  %v579 = vld [vmem:[%s3 + $0x900] sm:$0xff]
  %v580 = vld [vmem:[%s3 + $0x908] sm:$0xff]
  %v581 = vld [vmem:[%s3 + $0x910] sm:$0xff]
  %v582 = vld [vmem:[%s3 + $0x918] sm:$0xff]
  %v583 = vld [vmem:[%s3 + $0x920] sm:$0xff]
  %v584 = vld [vmem:[%s3 + $0x928] sm:$0xff]
  %v585 = vld [vmem:[%s3 + $0x930] sm:$0xff]
  %v586 = vld [vmem:[%s3 + $0x938] sm:$0xff]
  %v587 = vld [vmem:[%s3 + $0x940] sm:$0xff]
  %v588 = vld [vmem:[%s3 + $0x948] sm:$0xff]
  %v589 = vld [vmem:[%s3 + $0x950] sm:$0xff]
  %v590 = vld [vmem:[%s3 + $0x958] sm:$0xff]
  %v591 = vld [vmem:[%s3 + $0x960] sm:$0xff]
  %v592 = vld [vmem:[%s3 + $0x968] sm:$0xff]
  %v593 = vld [vmem:[%s3 + $0x970] sm:$0xff]
  %v594 = vld [vmem:[%s3 + $0x978] sm:$0xff]
  %v595 = vld [vmem:[%s3 + $0x980] sm:$0xff]
  %v596 = vld [vmem:[%s3 + $0x988] sm:$0xff]
  %v597 = vld [vmem:[%s3 + $0x990] sm:$0xff]
  %v598 = vld [vmem:[%s3 + $0x998] sm:$0xff]
  %v599 = vld [vmem:[%s3 + $0x9a0] sm:$0xff]
  %v600 = vld [vmem:[%s3 + $0x9a8] sm:$0xff]
  %v601 = vld [vmem:[%s3 + $0x9b0] sm:$0xff]
  %v602 = vld [vmem:[%s3 + $0x9b8] sm:$0xff]
  %v603 = vld [vmem:[%s3 + $0x9c0] sm:$0xff]
  %v604 = vld [vmem:[%s3 + $0x9c8] sm:$0xff]
  %v605 = vld [vmem:[%s3 + $0x9d0] sm:$0xff]
  %v606 = vld [vmem:[%s3 + $0x9d8] sm:$0xff]
  %v607 = vld [vmem:[%s3 + $0x9e0] sm:$0xff]
  %v608 = vld [vmem:[%s3 + $0x9e8] sm:$0xff]
  %v609 = vld [vmem:[%s3 + $0x9f0] sm:$0xff]
  %v610 = vld [vmem:[%s3 + $0x9f8] sm:$0xff]
  %v611 = vld [vmem:[%s3 + $0xa00] sm:$0xff]
  %v612 = vld [vmem:[%s3 + $0xa08] sm:$0xff]
  %v613 = vld [vmem:[%s3 + $0xa10] sm:$0xff]
  %v614 = vld [vmem:[%s3 + $0xa18] sm:$0xff]
  %v615 = vld [vmem:[%s3 + $0xa20] sm:$0xff]
  %v616 = vld [vmem:[%s3 + $0xa28] sm:$0xff]
  %v617 = vld [vmem:[%s3 + $0xa30] sm:$0xff]
  %v618 = vld [vmem:[%s3 + $0xa38] sm:$0xff]
  %v619 = vld [vmem:[%s3 + $0xa40] sm:$0xff]
  %v620 = vld [vmem:[%s3 + $0xa48] sm:$0xff]
  %v621 = vld [vmem:[%s3 + $0xa50] sm:$0xff]
  %v622 = vld [vmem:[%s3 + $0xa58] sm:$0xff]
  %v623 = vld [vmem:[%s3 + $0xa60] sm:$0xff]
  %v624 = vld [vmem:[%s3 + $0xa68] sm:$0xff]
  %v625 = vld [vmem:[%s3 + $0xa70] sm:$0xff]
  %v626 = vld [vmem:[%s3 + $0xa78] sm:$0xff]
  %v627 = vld [vmem:[%s3 + $0xa80] sm:$0xff]
  %v628 = vld [vmem:[%s3 + $0xa88] sm:$0xff]
  %v629 = vld [vmem:[%s3 + $0xa90] sm:$0xff]
  %v630 = vld [vmem:[%s3 + $0xa98] sm:$0xff]
  %v631 = vld [vmem:[%s3 + $0xaa0] sm:$0xff]
  %v632 = vld [vmem:[%s3 + $0xaa8] sm:$0xff]
  %v633 = vld [vmem:[%s3 + $0xab0] sm:$0xff]
  %v634 = vld [vmem:[%s3 + $0xab8] sm:$0xff]
  %v635 = vld [vmem:[%s3 + $0xac0] sm:$0xff]
  %v636 = vld [vmem:[%s3 + $0xac8] sm:$0xff]
  %v637 = vld [vmem:[%s3 + $0xad0] sm:$0xff]
  %v638 = vld [vmem:[%s3 + $0xad8] sm:$0xff]
  %v639 = vld [vmem:[%s3 + $0xae0] sm:$0xff]
  %v640 = vld [vmem:[%s3 + $0xae8] sm:$0xff]
  %v641 = vld [vmem:[%s3 + $0xaf0] sm:$0xff]
  %v642 = vld [vmem:[%s3 + $0xaf8] sm:$0xff]
  %v643 = vld [vmem:[%s3 + $0xb00] sm:$0xff]
  %v644 = vld [vmem:[%s3 + $0xb08] sm:$0xff]
  %v645 = vld [vmem:[%s3 + $0xb10] sm:$0xff]
  %v646 = vld [vmem:[%s3 + $0xb18] sm:$0xff]
  %v647 = vld [vmem:[%s3 + $0xb20] sm:$0xff]
  %v648 = vld [vmem:[%s3 + $0xb28] sm:$0xff]
  %v649 = vld [vmem:[%s3 + $0xb30] sm:$0xff]
  %v650 = vld [vmem:[%s3 + $0xb38] sm:$0xff]
  %v651 = vld [vmem:[%s3 + $0xb40] sm:$0xff]
  %v652 = vld [vmem:[%s3 + $0xb48] sm:$0xff]
  %v653 = vld [vmem:[%s3 + $0xb50] sm:$0xff]
  %v654 = vld [vmem:[%s3 + $0xb58] sm:$0xff]
  %v655 = vld [vmem:[%s3 + $0xb60] sm:$0xff]
  %v656 = vld [vmem:[%s3 + $0xb68] sm:$0xff]
  %v657 = vld [vmem:[%s3 + $0xb70] sm:$0xff]
  %v658 = vld [vmem:[%s3 + $0xb78] sm:$0xff]
  %v659 = vld [vmem:[%s3 + $0xb80] sm:$0xff]
  %v660 = vld [vmem:[%s3 + $0xb88] sm:$0xff]
  %v661 = vld [vmem:[%s3 + $0xb90] sm:$0xff]
  %v662 = vld [vmem:[%s3 + $0xb98] sm:$0xff]
  %v663 = vld [vmem:[%s3 + $0xba0] sm:$0xff]
  %v664 = vld [vmem:[%s3 + $0xba8] sm:$0xff]
  %v665 = vld [vmem:[%s3 + $0xbb0] sm:$0xff]
  %v666 = vld [vmem:[%s3 + $0xbb8] sm:$0xff]
  %v667 = vld [vmem:[%s3 + $0xbc0] sm:$0xff]
  %v668 = vld [vmem:[%s3 + $0xbc8] sm:$0xff]
  %v669 = vld [vmem:[%s3 + $0xbd0] sm:$0xff]
  %v670 = vld [vmem:[%s3 + $0xbd8] sm:$0xff]
  %v671 = vld [vmem:[%s3 + $0xbe0] sm:$0xff]
  %v672 = vld [vmem:[%s3 + $0xbe8] sm:$0xff]
  %v673 = vld [vmem:[%s3 + $0xbf0] sm:$0xff]
  %v674 = vld [vmem:[%s3 + $0xbf8] sm:$0xff]
  %v675 = vld [vmem:[%s3 + $0xc00] sm:$0xff]
  %v676 = vld [vmem:[%s3 + $0xc08] sm:$0xff]
  %v677 = vld [vmem:[%s3 + $0xc10] sm:$0xff]
  %v678 = vld [vmem:[%s3 + $0xc18] sm:$0xff]
  %v679 = vld [vmem:[%s3 + $0xc20] sm:$0xff]
  %v680 = vld [vmem:[%s3 + $0xc28] sm:$0xff]
  %v681 = vld [vmem:[%s3 + $0xc30] sm:$0xff]
  %v682 = vld [vmem:[%s3 + $0xc38] sm:$0xff]
  %v683 = vld [vmem:[%s3 + $0xc40] sm:$0xff]
  %v684 = vld [vmem:[%s3 + $0xc48] sm:$0xff]
  %v685 = vld [vmem:[%s3 + $0xc50] sm:$0xff]
  %v686 = vld [vmem:[%s3 + $0xc58] sm:$0xff]
  %v687 = vld [vmem:[%s3 + $0xc60] sm:$0xff]
  %v688 = vld [vmem:[%s3 + $0xc68] sm:$0xff]
  %v689 = vld [vmem:[%s3 + $0xc70] sm:$0xff]
  %v690 = vld [vmem:[%s3 + $0xc78] sm:$0xff]
  %v691 = vld [vmem:[%s3 + $0xc80] sm:$0xff]
  %v692 = vld [vmem:[%s3 + $0xc88] sm:$0xff]
  %v693 = vld [vmem:[%s3 + $0xc90] sm:$0xff]
  %v694 = vld [vmem:[%s3 + $0xc98] sm:$0xff]
  %v695 = vld [vmem:[%s3 + $0xca0] sm:$0xff]
  %v696 = vld [vmem:[%s3 + $0xca8] sm:$0xff]
  %v697 = vld [vmem:[%s3 + $0xcb0] sm:$0xff]
  %v698 = vld [vmem:[%s3 + $0xcb8] sm:$0xff]
  %v699 = vld [vmem:[%s3 + $0xcc0] sm:$0xff]
  %v700 = vld [vmem:[%s3 + $0xcc8] sm:$0xff]
  %v701 = vld [vmem:[%s3 + $0xcd0] sm:$0xff]
  %v702 = vld [vmem:[%s3 + $0xcd8] sm:$0xff]
  %v703 = vld [vmem:[%s3 + $0xce0] sm:$0xff]
  %v704 = vld [vmem:[%s3 + $0xce8] sm:$0xff]
  %v705 = vld [vmem:[%s3 + $0xcf0] sm:$0xff]
  %v706 = vld [vmem:[%s3 + $0xcf8] sm:$0xff]
  %v707 = vld [vmem:[%s3 + $0xd00] sm:$0xff]
  %v708 = vld [vmem:[%s3 + $0xd08] sm:$0xff]
  %v709 = vld [vmem:[%s3 + $0xd10] sm:$0xff]
  %v710 = vld [vmem:[%s3 + $0xd18] sm:$0xff]
  %v711 = vld [vmem:[%s3 + $0xd20] sm:$0xff]
  %v712 = vld [vmem:[%s3 + $0xd28] sm:$0xff]
  %v713 = vld [vmem:[%s3 + $0xd30] sm:$0xff]
  %v714 = vld [vmem:[%s3 + $0xd38] sm:$0xff]
  %v715 = vld [vmem:[%s3 + $0xd40] sm:$0xff]
  %v716 = vld [vmem:[%s3 + $0xd48] sm:$0xff]
  %v717 = vld [vmem:[%s3 + $0xd50] sm:$0xff]
  %v718 = vld [vmem:[%s3 + $0xd58] sm:$0xff]
  %v719 = vld [vmem:[%s3 + $0xd60] sm:$0xff]
  %v720 = vld [vmem:[%s3 + $0xd68] sm:$0xff]
  %v721 = vld [vmem:[%s3 + $0xd70] sm:$0xff]
  %v722 = vld [vmem:[%s3 + $0xd78] sm:$0xff]
  %v723 = vld [vmem:[%s3 + $0xd80] sm:$0xff]
  %v724 = vld [vmem:[%s3 + $0xd88] sm:$0xff]
  %v725 = vld [vmem:[%s3 + $0xd90] sm:$0xff]
  %v726 = vld [vmem:[%s3 + $0xd98] sm:$0xff]
  %v727 = vld [vmem:[%s3 + $0xda0] sm:$0xff]
  %v728 = vld [vmem:[%s3 + $0xda8] sm:$0xff]
  %v729 = vld [vmem:[%s3 + $0xdb0] sm:$0xff]
  %v730 = vld [vmem:[%s3 + $0xdb8] sm:$0xff]
  %v731 = vld [vmem:[%s3 + $0xdc0] sm:$0xff]
  %v732 = vld [vmem:[%s3 + $0xdc8] sm:$0xff]
  %v733 = vld [vmem:[%s3 + $0xdd0] sm:$0xff]
  %v734 = vld [vmem:[%s3 + $0xdd8] sm:$0xff]
  %v735 = vld [vmem:[%s3 + $0xde0] sm:$0xff]
  %v736 = vld [vmem:[%s3 + $0xde8] sm:$0xff]
  %v737 = vld [vmem:[%s3 + $0xdf0] sm:$0xff]
  %v738 = vld [vmem:[%s3 + $0xdf8] sm:$0xff]
  %v739 = vld [vmem:[%s3 + $0xe00] sm:$0xff]
  %v740 = vld [vmem:[%s3 + $0xe08] sm:$0xff]
  %v741 = vld [vmem:[%s3 + $0xe10] sm:$0xff]
  %v742 = vld [vmem:[%s3 + $0xe18] sm:$0xff]
  %v743 = vld [vmem:[%s3 + $0xe20] sm:$0xff]
  %v744 = vld [vmem:[%s3 + $0xe28] sm:$0xff]
  %v745 = vld [vmem:[%s3 + $0xe30] sm:$0xff]
  %v746 = vld [vmem:[%s3 + $0xe38] sm:$0xff]
  %v747 = vld [vmem:[%s3 + $0xe40] sm:$0xff]
  %v748 = vld [vmem:[%s3 + $0xe48] sm:$0xff]
  %v749 = vld [vmem:[%s3 + $0xe50] sm:$0xff]
  %v750 = vld [vmem:[%s3 + $0xe58] sm:$0xff]
  %v751 = vld [vmem:[%s3 + $0xe60] sm:$0xff]
  %v752 = vld [vmem:[%s3 + $0xe68] sm:$0xff]
  %v753 = vld [vmem:[%s3 + $0xe70] sm:$0xff]
  %v754 = vld [vmem:[%s3 + $0xe78] sm:$0xff]
  %v755 = vld [vmem:[%s3 + $0xe80] sm:$0xff]
  %v756 = vld [vmem:[%s3 + $0xe88] sm:$0xff]
  %v757 = vld [vmem:[%s3 + $0xe90] sm:$0xff]
  %v758 = vld [vmem:[%s3 + $0xe98] sm:$0xff]
  %v759 = vld [vmem:[%s3 + $0xea0] sm:$0xff]
  %v760 = vld [vmem:[%s3 + $0xea8] sm:$0xff]
  %v761 = vld [vmem:[%s3 + $0xeb0] sm:$0xff]
  %v762 = vld [vmem:[%s3 + $0xeb8] sm:$0xff]
  %v763 = vld [vmem:[%s3 + $0xec0] sm:$0xff]
  %v764 = vld [vmem:[%s3 + $0xec8] sm:$0xff]
  %v765 = vld [vmem:[%s3 + $0xed0] sm:$0xff]
  %v766 = vld [vmem:[%s3 + $0xed8] sm:$0xff]
  %v767 = vld [vmem:[%s3 + $0xee0] sm:$0xff]
  %v768 = vld [vmem:[%s3 + $0xee8] sm:$0xff]
  %v769 = vld [vmem:[%s3 + $0xef0] sm:$0xff]
  %v770 = vld [vmem:[%s3 + $0xef8] sm:$0xff]
  %v771 = vld [vmem:[%s3 + $0xf00] sm:$0xff]
  %v772 = vld [vmem:[%s3 + $0xf08] sm:$0xff]
  %v773 = vld [vmem:[%s3 + $0xf10] sm:$0xff]
  %v774 = vld [vmem:[%s3 + $0xf18] sm:$0xff]
  %v775 = vld [vmem:[%s3 + $0xf20] sm:$0xff]
  %v776 = vld [vmem:[%s3 + $0xf28] sm:$0xff]
  %v777 = vld [vmem:[%s3 + $0xf30] sm:$0xff]
  %v778 = vld [vmem:[%s3 + $0xf38] sm:$0xff]
  %v779 = vld [vmem:[%s3 + $0xf40] sm:$0xff]
  %v780 = vld [vmem:[%s3 + $0xf48] sm:$0xff]
  %v781 = vld [vmem:[%s3 + $0xf50] sm:$0xff]
  %v782 = vld [vmem:[%s3 + $0xf58] sm:$0xff]
  %v783 = vld [vmem:[%s3 + $0xf60] sm:$0xff]
  %v784 = vld [vmem:[%s3 + $0xf68] sm:$0xff]
  %v785 = vld [vmem:[%s3 + $0xf70] sm:$0xff]
  %v786 = vld [vmem:[%s3 + $0xf78] sm:$0xff]
  %v787 = vld [vmem:[%s3 + $0xf80] sm:$0xff]
  %v788 = vld [vmem:[%s3 + $0xf88] sm:$0xff]
  %v789 = vld [vmem:[%s3 + $0xf90] sm:$0xff]
  %v790 = vld [vmem:[%s3 + $0xf98] sm:$0xff]
  %v791 = vld [vmem:[%s3 + $0xfa0] sm:$0xff]
  %v792 = vld [vmem:[%s3 + $0xfa8] sm:$0xff]
  %v793 = vld [vmem:[%s3 + $0xfb0] sm:$0xff]
  %v794 = vld [vmem:[%s3 + $0xfb8] sm:$0xff]
  %v795 = vld [vmem:[%s3 + $0xfc0] sm:$0xff]
  %v796 = vld [vmem:[%s3 + $0xfc8] sm:$0xff]
  %v797 = vld [vmem:[%s3 + $0xfd0] sm:$0xff]
  %v798 = vld [vmem:[%s3 + $0xfd8] sm:$0xff]
  %v799 = vld [vmem:[%s3 + $0xfe0] sm:$0xff]
  %v800 = vld [vmem:[%s3 + $0xfe8] sm:$0xff]
  %v801 = vld [vmem:[%s3 + $0xff0] sm:$0xff]
  %v802 = vld [vmem:[%s3 + $0xff8] sm:$0xff]
  %v803 = vld [vmem:[%s4] sm:$0xff]
  %v804 = vld [vmem:[%s4 + $0x8] sm:$0xff]
  %v807 = vperm.slane %v803, 0
  %v808 = vperm.slane %v803, 1
  %v809 = vperm.slane %v803, 2
  %v810 = vperm.slane %v803, 3
  %v811 = vperm.slane %v803, 4
  %v812 = vperm.slane %v803, 5
  %v813 = vperm.slane %v803, 6
  %v814 = vperm.slane %v803, 7
  %v815 = vperm.slane %v804, 0
  %v816 = vperm.slane %v804, 1
  %v817 = vperm.slane %v804, 2
  %v818 = vperm.slane %v804, 3
  %v819 = vperm.slane %v804, 4
  %v820 = vperm.slane %v804, 5
  %v821 = vperm.slane %v804, 6
  %v822 = vperm.slane %v804, 7
  %v1351 = vunpack.c.l.b16 %v291
  %v1352 = vunpack.c.h.b16 %v291
  %v1353 = vunpack.c.l.b16 %v292
  %v1354 = vunpack.c.h.b16 %v292
  %v1355 = vunpack.c.l.b16 %v293
  %v1356 = vunpack.c.h.b16 %v293
  %v1357 = vunpack.c.l.b16 %v294
  %v1358 = vunpack.c.h.b16 %v294
  %v1359 = vunpack.c.l.b16 %v295
  %v1360 = vunpack.c.h.b16 %v295
  %v1361 = vunpack.c.l.b16 %v296
  %v1362 = vunpack.c.h.b16 %v296
  %v1363 = vunpack.c.l.b16 %v297
  %v1364 = vunpack.c.h.b16 %v297
  %v1365 = vunpack.c.l.b16 %v298
  %v1366 = vunpack.c.h.b16 %v298
  %v1367 = vunpack.c.l.b16 %v299
  %v1368 = vunpack.c.h.b16 %v299
  %v1369 = vunpack.c.l.b16 %v300
  %v1370 = vunpack.c.h.b16 %v300
  %v1371 = vunpack.c.l.b16 %v301
  %v1372 = vunpack.c.h.b16 %v301
  %v1373 = vunpack.c.l.b16 %v302
  %v1374 = vunpack.c.h.b16 %v302
  %v1375 = vunpack.c.l.b16 %v303
  %v1376 = vunpack.c.h.b16 %v303
  %v1377 = vunpack.c.l.b16 %v304
  %v1378 = vunpack.c.h.b16 %v304
  %v1379 = vunpack.c.l.b16 %v305
  %v1380 = vunpack.c.h.b16 %v305
  %v1381 = vunpack.c.l.b16 %v306
  %v1382 = vunpack.c.h.b16 %v306
  %v1383 = vunpack.c.l.b16 %v307
  %v1384 = vunpack.c.h.b16 %v307
  %v1385 = vunpack.c.l.b16 %v308
  %v1386 = vunpack.c.h.b16 %v308
  %v1387 = vunpack.c.l.b16 %v309
  %v1388 = vunpack.c.h.b16 %v309
  %v1389 = vunpack.c.l.b16 %v310
  %v1390 = vunpack.c.h.b16 %v310
  %v1391 = vunpack.c.l.b16 %v311
  %v1392 = vunpack.c.h.b16 %v311
  %v1393 = vunpack.c.l.b16 %v312
  %v1394 = vunpack.c.h.b16 %v312
  %v1395 = vunpack.c.l.b16 %v313
  %v1396 = vunpack.c.h.b16 %v313
  %v1397 = vunpack.c.l.b16 %v314
  %v1398 = vunpack.c.h.b16 %v314
  %v1399 = vunpack.c.l.b16 %v315
  %v1400 = vunpack.c.h.b16 %v315
  %v1401 = vunpack.c.l.b16 %v316
  %v1402 = vunpack.c.h.b16 %v316
  %v1403 = vunpack.c.l.b16 %v317
  %v1404 = vunpack.c.h.b16 %v317
  %v1405 = vunpack.c.l.b16 %v318
  %v1406 = vunpack.c.h.b16 %v318
  %v1407 = vunpack.c.l.b16 %v319
  %v1408 = vunpack.c.h.b16 %v319
  %v1409 = vunpack.c.l.b16 %v320
  %v1410 = vunpack.c.h.b16 %v320
  %v1411 = vunpack.c.l.b16 %v321
  %v1412 = vunpack.c.h.b16 %v321
  %v1413 = vunpack.c.l.b16 %v322
  %v1414 = vunpack.c.h.b16 %v322
  %v1415 = vunpack.c.l.b16 %v323
  %v1416 = vunpack.c.h.b16 %v323
  %v1417 = vunpack.c.l.b16 %v324
  %v1418 = vunpack.c.h.b16 %v324
  %v1419 = vunpack.c.l.b16 %v325
  %v1420 = vunpack.c.h.b16 %v325
  %v1421 = vunpack.c.l.b16 %v326
  %v1422 = vunpack.c.h.b16 %v326
  %v1423 = vunpack.c.l.b16 %v327
  %v1424 = vunpack.c.h.b16 %v327
  %v1425 = vunpack.c.l.b16 %v328
  %v1426 = vunpack.c.h.b16 %v328
  %v1427 = vunpack.c.l.b16 %v329
  %v1428 = vunpack.c.h.b16 %v329
  %v1429 = vunpack.c.l.b16 %v330
  %v1430 = vunpack.c.h.b16 %v330
  %v1431 = vunpack.c.l.b16 %v331
  %v1432 = vunpack.c.h.b16 %v331
  %v1433 = vunpack.c.l.b16 %v332
  %v1434 = vunpack.c.h.b16 %v332
  %v1435 = vunpack.c.l.b16 %v333
  %v1436 = vunpack.c.h.b16 %v333
  %v1437 = vunpack.c.l.b16 %v334
  %v1438 = vunpack.c.h.b16 %v334
  %v1439 = vunpack.c.l.b16 %v335
  %v1440 = vunpack.c.h.b16 %v335
  %v1441 = vunpack.c.l.b16 %v336
  %v1442 = vunpack.c.h.b16 %v336
  %v1443 = vunpack.c.l.b16 %v337
  %v1444 = vunpack.c.h.b16 %v337
  %v1445 = vunpack.c.l.b16 %v338
  %v1446 = vunpack.c.h.b16 %v338
  %v1447 = vunpack.c.l.b16 %v339
  %v1448 = vunpack.c.h.b16 %v339
  %v1449 = vunpack.c.l.b16 %v340
  %v1450 = vunpack.c.h.b16 %v340
  %v1451 = vunpack.c.l.b16 %v341
  %v1452 = vunpack.c.h.b16 %v341
  %v1453 = vunpack.c.l.b16 %v342
  %v1454 = vunpack.c.h.b16 %v342
  %v1455 = vunpack.c.l.b16 %v343
  %v1456 = vunpack.c.h.b16 %v343
  %v1457 = vunpack.c.l.b16 %v344
  %v1458 = vunpack.c.h.b16 %v344
  %v1459 = vunpack.c.l.b16 %v345
  %v1460 = vunpack.c.h.b16 %v345
  %v1461 = vunpack.c.l.b16 %v346
  %v1462 = vunpack.c.h.b16 %v346
  %v1463 = vunpack.c.l.b16 %v347
  %v1464 = vunpack.c.h.b16 %v347
  %v1465 = vunpack.c.l.b16 %v348
  %v1466 = vunpack.c.h.b16 %v348
  %v1467 = vunpack.c.l.b16 %v349
  %v1468 = vunpack.c.h.b16 %v349
  %v1469 = vunpack.c.l.b16 %v350
  %v1470 = vunpack.c.h.b16 %v350
  %v1471 = vunpack.c.l.b16 %v351
  %v1472 = vunpack.c.h.b16 %v351
  %v1473 = vunpack.c.l.b16 %v352
  %v1474 = vunpack.c.h.b16 %v352
  %v1475 = vunpack.c.l.b16 %v353
  %v1476 = vunpack.c.h.b16 %v353
  %v1477 = vunpack.c.l.b16 %v354
  %v1478 = vunpack.c.h.b16 %v354
  %v1479 = vunpack.c.l.b16 %v355
  %v1480 = vunpack.c.h.b16 %v355
  %v1481 = vunpack.c.l.b16 %v356
  %v1482 = vunpack.c.h.b16 %v356
  %v1483 = vunpack.c.l.b16 %v357
  %v1484 = vunpack.c.h.b16 %v357
  %v1485 = vunpack.c.l.b16 %v358
  %v1486 = vunpack.c.h.b16 %v358
  %v1487 = vunpack.c.l.b16 %v359
  %v1488 = vunpack.c.h.b16 %v359
  %v1489 = vunpack.c.l.b16 %v360
  %v1490 = vunpack.c.h.b16 %v360
  %v1491 = vunpack.c.l.b16 %v361
  %v1492 = vunpack.c.h.b16 %v361
  %v1493 = vunpack.c.l.b16 %v362
  %v1494 = vunpack.c.h.b16 %v362
  %v1495 = vunpack.c.l.b16 %v363
  %v1496 = vunpack.c.h.b16 %v363
  %v1497 = vunpack.c.l.b16 %v364
  %v1498 = vunpack.c.h.b16 %v364
  %v1499 = vunpack.c.l.b16 %v365
  %v1500 = vunpack.c.h.b16 %v365
  %v1501 = vunpack.c.l.b16 %v366
  %v1502 = vunpack.c.h.b16 %v366
  %v1503 = vunpack.c.l.b16 %v367
  %v1504 = vunpack.c.h.b16 %v367
  %v1505 = vunpack.c.l.b16 %v368
  %v1506 = vunpack.c.h.b16 %v368
  %v1507 = vunpack.c.l.b16 %v369
  %v1508 = vunpack.c.h.b16 %v369
  %v1509 = vunpack.c.l.b16 %v370
  %v1510 = vunpack.c.h.b16 %v370
  %v1511 = vunpack.c.l.b16 %v371
  %v1512 = vunpack.c.h.b16 %v371
  %v1513 = vunpack.c.l.b16 %v372
  %v1514 = vunpack.c.h.b16 %v372
  %v1515 = vunpack.c.l.b16 %v373
  %v1516 = vunpack.c.h.b16 %v373
  %v1517 = vunpack.c.l.b16 %v374
  %v1518 = vunpack.c.h.b16 %v374
  %v1519 = vunpack.c.l.b16 %v375
  %v1520 = vunpack.c.h.b16 %v375
  %v1521 = vunpack.c.l.b16 %v376
  %v1522 = vunpack.c.h.b16 %v376
  %v1523 = vunpack.c.l.b16 %v377
  %v1524 = vunpack.c.h.b16 %v377
  %v1525 = vunpack.c.l.b16 %v378
  %v1526 = vunpack.c.h.b16 %v378
  %v1527 = vunpack.c.l.b16 %v379
  %v1528 = vunpack.c.h.b16 %v379
  %v1529 = vunpack.c.l.b16 %v380
  %v1530 = vunpack.c.h.b16 %v380
  %v1531 = vunpack.c.l.b16 %v381
  %v1532 = vunpack.c.h.b16 %v381
  %v1533 = vunpack.c.l.b16 %v382
  %v1534 = vunpack.c.h.b16 %v382
  %v1535 = vunpack.c.l.b16 %v383
  %v1536 = vunpack.c.h.b16 %v383
  %v1537 = vunpack.c.l.b16 %v384
  %v1538 = vunpack.c.h.b16 %v384
  %v1539 = vunpack.c.l.b16 %v385
  %v1540 = vunpack.c.h.b16 %v385
  %v1541 = vunpack.c.l.b16 %v386
  %v1542 = vunpack.c.h.b16 %v386
  %v1543 = vunpack.c.l.b16 %v387
  %v1544 = vunpack.c.h.b16 %v387
  %v1545 = vunpack.c.l.b16 %v388
  %v1546 = vunpack.c.h.b16 %v388
  %v1547 = vunpack.c.l.b16 %v389
  %v1548 = vunpack.c.h.b16 %v389
  %v1549 = vunpack.c.l.b16 %v390
  %v1550 = vunpack.c.h.b16 %v390
  %v1551 = vunpack.c.l.b16 %v391
  %v1552 = vunpack.c.h.b16 %v391
  %v1553 = vunpack.c.l.b16 %v392
  %v1554 = vunpack.c.h.b16 %v392
  %v1555 = vunpack.c.l.b16 %v393
  %v1556 = vunpack.c.h.b16 %v393
  %v1557 = vunpack.c.l.b16 %v394
  %v1558 = vunpack.c.h.b16 %v394
  %v1559 = vunpack.c.l.b16 %v395
  %v1560 = vunpack.c.h.b16 %v395
  %v1561 = vunpack.c.l.b16 %v396
  %v1562 = vunpack.c.h.b16 %v396
  %v1563 = vunpack.c.l.b16 %v397
  %v1564 = vunpack.c.h.b16 %v397
  %v1565 = vunpack.c.l.b16 %v398
  %v1566 = vunpack.c.h.b16 %v398
  %v1567 = vunpack.c.l.b16 %v399
  %v1568 = vunpack.c.h.b16 %v399
  %v1569 = vunpack.c.l.b16 %v400
  %v1570 = vunpack.c.h.b16 %v400
  %v1571 = vunpack.c.l.b16 %v401
  %v1572 = vunpack.c.h.b16 %v401
  %v1573 = vunpack.c.l.b16 %v402
  %v1574 = vunpack.c.h.b16 %v402
  %v1575 = vunpack.c.l.b16 %v403
  %v1576 = vunpack.c.h.b16 %v403
  %v1577 = vunpack.c.l.b16 %v404
  %v1578 = vunpack.c.h.b16 %v404
  %v1579 = vunpack.c.l.b16 %v405
  %v1580 = vunpack.c.h.b16 %v405
  %v1581 = vunpack.c.l.b16 %v406
  %v1582 = vunpack.c.h.b16 %v406
  %v1583 = vunpack.c.l.b16 %v407
  %v1584 = vunpack.c.h.b16 %v407
  %v1585 = vunpack.c.l.b16 %v408
  %v1586 = vunpack.c.h.b16 %v408
  %v1587 = vunpack.c.l.b16 %v409
  %v1588 = vunpack.c.h.b16 %v409
  %v1589 = vunpack.c.l.b16 %v410
  %v1590 = vunpack.c.h.b16 %v410
  %v1591 = vunpack.c.l.b16 %v411
  %v1592 = vunpack.c.h.b16 %v411
  %v1593 = vunpack.c.l.b16 %v412
  %v1594 = vunpack.c.h.b16 %v412
  %v1595 = vunpack.c.l.b16 %v413
  %v1596 = vunpack.c.h.b16 %v413
  %v1597 = vunpack.c.l.b16 %v414
  %v1598 = vunpack.c.h.b16 %v414
  %v1599 = vunpack.c.l.b16 %v415
  %v1600 = vunpack.c.h.b16 %v415
  %v1601 = vunpack.c.l.b16 %v416
  %v1602 = vunpack.c.h.b16 %v416
  %v1603 = vunpack.c.l.b16 %v417
  %v1604 = vunpack.c.h.b16 %v417
  %v1605 = vunpack.c.l.b16 %v418
  %v1606 = vunpack.c.h.b16 %v418
  %v1607 = vunpack.c.l.b16 %v419
  %v1608 = vunpack.c.h.b16 %v419
  %v1609 = vunpack.c.l.b16 %v420
  %v1610 = vunpack.c.h.b16 %v420
  %v1611 = vunpack.c.l.b16 %v421
  %v1612 = vunpack.c.h.b16 %v421
  %v1613 = vunpack.c.l.b16 %v422
  %v1614 = vunpack.c.h.b16 %v422
  %v1615 = vunpack.c.l.b16 %v423
  %v1616 = vunpack.c.h.b16 %v423
  %v1617 = vunpack.c.l.b16 %v424
  %v1618 = vunpack.c.h.b16 %v424
  %v1619 = vunpack.c.l.b16 %v425
  %v1620 = vunpack.c.h.b16 %v425
  %v1621 = vunpack.c.l.b16 %v426
  %v1622 = vunpack.c.h.b16 %v426
  %v1623 = vunpack.c.l.b16 %v427
  %v1624 = vunpack.c.h.b16 %v427
  %v1625 = vunpack.c.l.b16 %v428
  %v1626 = vunpack.c.h.b16 %v428
  %v1627 = vunpack.c.l.b16 %v429
  %v1628 = vunpack.c.h.b16 %v429
  %v1629 = vunpack.c.l.b16 %v430
  %v1630 = vunpack.c.h.b16 %v430
  %v1631 = vunpack.c.l.b16 %v431
  %v1632 = vunpack.c.h.b16 %v431
  %v1633 = vunpack.c.l.b16 %v432
  %v1634 = vunpack.c.h.b16 %v432
  %v1635 = vunpack.c.l.b16 %v433
  %v1636 = vunpack.c.h.b16 %v433
  %v1637 = vunpack.c.l.b16 %v434
  %v1638 = vunpack.c.h.b16 %v434
  %v1639 = vunpack.c.l.b16 %v435
  %v1640 = vunpack.c.h.b16 %v435
  %v1641 = vunpack.c.l.b16 %v436
  %v1642 = vunpack.c.h.b16 %v436
  %v1643 = vunpack.c.l.b16 %v437
  %v1644 = vunpack.c.h.b16 %v437
  %v1645 = vunpack.c.l.b16 %v438
  %v1646 = vunpack.c.h.b16 %v438
  %v1647 = vunpack.c.l.b16 %v439
  %v1648 = vunpack.c.h.b16 %v439
  %v1649 = vunpack.c.l.b16 %v440
  %v1650 = vunpack.c.h.b16 %v440
  %v1651 = vunpack.c.l.b16 %v441
  %v1652 = vunpack.c.h.b16 %v441
  %v1653 = vunpack.c.l.b16 %v442
  %v1654 = vunpack.c.h.b16 %v442
  %v1655 = vunpack.c.l.b16 %v443
  %v1656 = vunpack.c.h.b16 %v443
  %v1657 = vunpack.c.l.b16 %v444
  %v1658 = vunpack.c.h.b16 %v444
  %v1659 = vunpack.c.l.b16 %v445
  %v1660 = vunpack.c.h.b16 %v445
  %v1661 = vunpack.c.l.b16 %v446
  %v1662 = vunpack.c.h.b16 %v446
  %v1663 = vunpack.c.l.b16 %v447
  %v1664 = vunpack.c.h.b16 %v447
  %v1665 = vunpack.c.l.b16 %v448
  %v1666 = vunpack.c.h.b16 %v448
  %v1667 = vunpack.c.l.b16 %v449
  %v1668 = vunpack.c.h.b16 %v449
  %v1669 = vunpack.c.l.b16 %v450
  %v1670 = vunpack.c.h.b16 %v450
  %v1671 = vunpack.c.l.b16 %v451
  %v1672 = vunpack.c.h.b16 %v451
  %v1673 = vunpack.c.l.b16 %v452
  %v1674 = vunpack.c.h.b16 %v452
  %v1675 = vunpack.c.l.b16 %v453
  %v1676 = vunpack.c.h.b16 %v453
  %v1677 = vunpack.c.l.b16 %v454
  %v1678 = vunpack.c.h.b16 %v454
  %v1679 = vunpack.c.l.b16 %v455
  %v1680 = vunpack.c.h.b16 %v455
  %v1681 = vunpack.c.l.b16 %v456
  %v1682 = vunpack.c.h.b16 %v456
  %v1683 = vunpack.c.l.b16 %v457
  %v1684 = vunpack.c.h.b16 %v457
  %v1685 = vunpack.c.l.b16 %v458
  %v1686 = vunpack.c.h.b16 %v458
  %v1687 = vunpack.c.l.b16 %v459
  %v1688 = vunpack.c.h.b16 %v459
  %v1689 = vunpack.c.l.b16 %v460
  %v1690 = vunpack.c.h.b16 %v460
  %v1691 = vunpack.c.l.b16 %v461
  %v1692 = vunpack.c.h.b16 %v461
  %v1693 = vunpack.c.l.b16 %v462
  %v1694 = vunpack.c.h.b16 %v462
  %v1695 = vunpack.c.l.b16 %v463
  %v1696 = vunpack.c.h.b16 %v463
  %v1697 = vunpack.c.l.b16 %v464
  %v1698 = vunpack.c.h.b16 %v464
  %v1699 = vunpack.c.l.b16 %v465
  %v1700 = vunpack.c.h.b16 %v465
  %v1701 = vunpack.c.l.b16 %v466
  %v1702 = vunpack.c.h.b16 %v466
  %v1703 = vunpack.c.l.b16 %v467
  %v1704 = vunpack.c.h.b16 %v467
  %v1705 = vunpack.c.l.b16 %v468
  %v1706 = vunpack.c.h.b16 %v468
  %v1707 = vunpack.c.l.b16 %v469
  %v1708 = vunpack.c.h.b16 %v469
  %v1709 = vunpack.c.l.b16 %v470
  %v1710 = vunpack.c.h.b16 %v470
  %v1711 = vunpack.c.l.b16 %v471
  %v1712 = vunpack.c.h.b16 %v471
  %v1713 = vunpack.c.l.b16 %v472
  %v1714 = vunpack.c.h.b16 %v472
  %v1715 = vunpack.c.l.b16 %v473
  %v1716 = vunpack.c.h.b16 %v473
  %v1717 = vunpack.c.l.b16 %v474
  %v1718 = vunpack.c.h.b16 %v474
  %v1719 = vunpack.c.l.b16 %v475
  %v1720 = vunpack.c.h.b16 %v475
  %v1721 = vunpack.c.l.b16 %v476
  %v1722 = vunpack.c.h.b16 %v476
  %v1723 = vunpack.c.l.b16 %v477
  %v1724 = vunpack.c.h.b16 %v477
  %v1725 = vunpack.c.l.b16 %v478
  %v1726 = vunpack.c.h.b16 %v478
  %v1727 = vunpack.c.l.b16 %v479
  %v1728 = vunpack.c.h.b16 %v479
  %v1729 = vunpack.c.l.b16 %v480
  %v1730 = vunpack.c.h.b16 %v480
  %v1731 = vunpack.c.l.b16 %v481
  %v1732 = vunpack.c.h.b16 %v481
  %v1733 = vunpack.c.l.b16 %v482
  %v1734 = vunpack.c.h.b16 %v482
  %v1735 = vunpack.c.l.b16 %v483
  %v1736 = vunpack.c.h.b16 %v483
  %v1737 = vunpack.c.l.b16 %v484
  %v1738 = vunpack.c.h.b16 %v484
  %v1739 = vunpack.c.l.b16 %v485
  %v1740 = vunpack.c.h.b16 %v485
  %v1741 = vunpack.c.l.b16 %v486
  %v1742 = vunpack.c.h.b16 %v486
  %v1743 = vunpack.c.l.b16 %v487
  %v1744 = vunpack.c.h.b16 %v487
  %v1745 = vunpack.c.l.b16 %v488
  %v1746 = vunpack.c.h.b16 %v488
  %v1747 = vunpack.c.l.b16 %v489
  %v1748 = vunpack.c.h.b16 %v489
  %v1749 = vunpack.c.l.b16 %v490
  %v1750 = vunpack.c.h.b16 %v490
  %v1751 = vunpack.c.l.b16 %v491
  %v1752 = vunpack.c.h.b16 %v491
  %v1753 = vunpack.c.l.b16 %v492
  %v1754 = vunpack.c.h.b16 %v492
  %v1755 = vunpack.c.l.b16 %v493
  %v1756 = vunpack.c.h.b16 %v493
  %v1757 = vunpack.c.l.b16 %v494
  %v1758 = vunpack.c.h.b16 %v494
  %v1759 = vunpack.c.l.b16 %v495
  %v1760 = vunpack.c.h.b16 %v495
  %v1761 = vunpack.c.l.b16 %v496
  %v1762 = vunpack.c.h.b16 %v496
  %v1763 = vunpack.c.l.b16 %v497
  %v1764 = vunpack.c.h.b16 %v497
  %v1765 = vunpack.c.l.b16 %v498
  %v1766 = vunpack.c.h.b16 %v498
  %v1767 = vunpack.c.l.b16 %v499
  %v1768 = vunpack.c.h.b16 %v499
  %v1769 = vunpack.c.l.b16 %v500
  %v1770 = vunpack.c.h.b16 %v500
  %v1771 = vunpack.c.l.b16 %v501
  %v1772 = vunpack.c.h.b16 %v501
  %v1773 = vunpack.c.l.b16 %v502
  %v1774 = vunpack.c.h.b16 %v502
  %v1775 = vunpack.c.l.b16 %v503
  %v1776 = vunpack.c.h.b16 %v503
  %v1777 = vunpack.c.l.b16 %v504
  %v1778 = vunpack.c.h.b16 %v504
  %v1779 = vunpack.c.l.b16 %v505
  %v1780 = vunpack.c.h.b16 %v505
  %v1781 = vunpack.c.l.b16 %v506
  %v1782 = vunpack.c.h.b16 %v506
  %v1783 = vunpack.c.l.b16 %v507
  %v1784 = vunpack.c.h.b16 %v507
  %v1785 = vunpack.c.l.b16 %v508
  %v1786 = vunpack.c.h.b16 %v508
  %v1787 = vunpack.c.l.b16 %v509
  %v1788 = vunpack.c.h.b16 %v509
  %v1789 = vunpack.c.l.b16 %v510
  %v1790 = vunpack.c.h.b16 %v510
  %v1791 = vunpack.c.l.b16 %v511
  %v1792 = vunpack.c.h.b16 %v511
  %v1793 = vunpack.c.l.b16 %v512
  %v1794 = vunpack.c.h.b16 %v512
  %v1795 = vunpack.c.l.b16 %v513
  %v1796 = vunpack.c.h.b16 %v513
  %v1797 = vunpack.c.l.b16 %v514
  %v1798 = vunpack.c.h.b16 %v514
  %v1799 = vunpack.c.l.b16 %v515
  %v1800 = vunpack.c.h.b16 %v515
  %v1801 = vunpack.c.l.b16 %v516
  %v1802 = vunpack.c.h.b16 %v516
  %v1803 = vunpack.c.l.b16 %v517
  %v1804 = vunpack.c.h.b16 %v517
  %v1805 = vunpack.c.l.b16 %v518
  %v1806 = vunpack.c.h.b16 %v518
  %v1807 = vunpack.c.l.b16 %v519
  %v1808 = vunpack.c.h.b16 %v519
  %v1809 = vunpack.c.l.b16 %v520
  %v1810 = vunpack.c.h.b16 %v520
  %v1811 = vunpack.c.l.b16 %v521
  %v1812 = vunpack.c.h.b16 %v521
  %v1813 = vunpack.c.l.b16 %v522
  %v1814 = vunpack.c.h.b16 %v522
  %v1815 = vunpack.c.l.b16 %v523
  %v1816 = vunpack.c.h.b16 %v523
  %v1817 = vunpack.c.l.b16 %v524
  %v1818 = vunpack.c.h.b16 %v524
  %v1819 = vunpack.c.l.b16 %v525
  %v1820 = vunpack.c.h.b16 %v525
  %v1821 = vunpack.c.l.b16 %v526
  %v1822 = vunpack.c.h.b16 %v526
  %v1823 = vunpack.c.l.b16 %v527
  %v1824 = vunpack.c.h.b16 %v527
  %v1825 = vunpack.c.l.b16 %v528
  %v1826 = vunpack.c.h.b16 %v528
  %v1827 = vunpack.c.l.b16 %v529
  %v1828 = vunpack.c.h.b16 %v529
  %v1829 = vunpack.c.l.b16 %v530
  %v1830 = vunpack.c.h.b16 %v530
  %v1831 = vunpack.c.l.b16 %v531
  %v1832 = vunpack.c.h.b16 %v531
  %v1833 = vunpack.c.l.b16 %v532
  %v1834 = vunpack.c.h.b16 %v532
  %v1835 = vunpack.c.l.b16 %v533
  %v1836 = vunpack.c.h.b16 %v533
  %v1837 = vunpack.c.l.b16 %v534
  %v1838 = vunpack.c.h.b16 %v534
  %v1839 = vunpack.c.l.b16 %v535
  %v1840 = vunpack.c.h.b16 %v535
  %v1841 = vunpack.c.l.b16 %v536
  %v1842 = vunpack.c.h.b16 %v536
  %v1843 = vunpack.c.l.b16 %v537
  %v1844 = vunpack.c.h.b16 %v537
  %v1845 = vunpack.c.l.b16 %v538
  %v1846 = vunpack.c.h.b16 %v538
  %v1847 = vunpack.c.l.b16 %v539
  %v1848 = vunpack.c.h.b16 %v539
  %v1849 = vunpack.c.l.b16 %v540
  %v1850 = vunpack.c.h.b16 %v540
  %v1851 = vunpack.c.l.b16 %v541
  %v1852 = vunpack.c.h.b16 %v541
  %v1853 = vunpack.c.l.b16 %v542
  %v1854 = vunpack.c.h.b16 %v542
  %v1855 = vunpack.c.l.b16 %v543
  %v1856 = vunpack.c.h.b16 %v543
  %v1857 = vunpack.c.l.b16 %v544
  %v1858 = vunpack.c.h.b16 %v544
  %v1859 = vunpack.c.l.b16 %v545
  %v1860 = vunpack.c.h.b16 %v545
  %v1861 = vunpack.c.l.b16 %v546
  %v1862 = vunpack.c.h.b16 %v546
  %v1863 = vunpack.c.l.b16 %v547
  %v1864 = vunpack.c.h.b16 %v547
  %v1865 = vunpack.c.l.b16 %v548
  %v1866 = vunpack.c.h.b16 %v548
  %v1867 = vunpack.c.l.b16 %v549
  %v1868 = vunpack.c.h.b16 %v549
  %v1869 = vunpack.c.l.b16 %v550
  %v1870 = vunpack.c.h.b16 %v550
  %v1871 = vunpack.c.l.b16 %v551
  %v1872 = vunpack.c.h.b16 %v551
  %v1873 = vunpack.c.l.b16 %v552
  %v1874 = vunpack.c.h.b16 %v552
  %v1875 = vunpack.c.l.b16 %v553
  %v1876 = vunpack.c.h.b16 %v553
  %v1877 = vunpack.c.l.b16 %v554
  %v1878 = vunpack.c.h.b16 %v554
  %v1879 = vunpack.c.l.b16 %v555
  %v1880 = vunpack.c.h.b16 %v555
  %v1881 = vunpack.c.l.b16 %v556
  %v1882 = vunpack.c.h.b16 %v556
  %v1883 = vunpack.c.l.b16 %v557
  %v1884 = vunpack.c.h.b16 %v557
  %v1885 = vunpack.c.l.b16 %v558
  %v1886 = vunpack.c.h.b16 %v558
  %v1887 = vunpack.c.l.b16 %v559
  %v1888 = vunpack.c.h.b16 %v559
  %v1889 = vunpack.c.l.b16 %v560
  %v1890 = vunpack.c.h.b16 %v560
  %v1891 = vunpack.c.l.b16 %v561
  %v1892 = vunpack.c.h.b16 %v561
  %v1893 = vunpack.c.l.b16 %v562
  %v1894 = vunpack.c.h.b16 %v562
  %v1895 = vunpack.c.l.b16 %v563
  %v1896 = vunpack.c.h.b16 %v563
  %v1897 = vunpack.c.l.b16 %v564
  %v1898 = vunpack.c.h.b16 %v564
  %v1899 = vunpack.c.l.b16 %v565
  %v1900 = vunpack.c.h.b16 %v565
  %v1901 = vunpack.c.l.b16 %v566
  %v1902 = vunpack.c.h.b16 %v566
  %v1903 = vunpack.c.l.b16 %v567
  %v1904 = vunpack.c.h.b16 %v567
  %v1905 = vunpack.c.l.b16 %v568
  %v1906 = vunpack.c.h.b16 %v568
  %v1907 = vunpack.c.l.b16 %v569
  %v1908 = vunpack.c.h.b16 %v569
  %v1909 = vunpack.c.l.b16 %v570
  %v1910 = vunpack.c.h.b16 %v570
  %v1911 = vunpack.c.l.b16 %v571
  %v1912 = vunpack.c.h.b16 %v571
  %v1913 = vunpack.c.l.b16 %v572
  %v1914 = vunpack.c.h.b16 %v572
  %v1915 = vunpack.c.l.b16 %v573
  %v1916 = vunpack.c.h.b16 %v573
  %v1917 = vunpack.c.l.b16 %v574
  %v1918 = vunpack.c.h.b16 %v574
  %v1919 = vunpack.c.l.b16 %v575
  %v1920 = vunpack.c.h.b16 %v575
  %v1921 = vunpack.c.l.b16 %v576
  %v1922 = vunpack.c.h.b16 %v576
  %v1923 = vunpack.c.l.b16 %v577
  %v1924 = vunpack.c.h.b16 %v577
  %v1925 = vunpack.c.l.b16 %v578
  %v1926 = vunpack.c.h.b16 %v578
  %v1927 = vunpack.c.l.b16 %v579
  %v1928 = vunpack.c.h.b16 %v579
  %v1929 = vunpack.c.l.b16 %v580
  %v1930 = vunpack.c.h.b16 %v580
  %v1931 = vunpack.c.l.b16 %v581
  %v1932 = vunpack.c.h.b16 %v581
  %v1933 = vunpack.c.l.b16 %v582
  %v1934 = vunpack.c.h.b16 %v582
  %v1935 = vunpack.c.l.b16 %v583
  %v1936 = vunpack.c.h.b16 %v583
  %v1937 = vunpack.c.l.b16 %v584
  %v1938 = vunpack.c.h.b16 %v584
  %v1939 = vunpack.c.l.b16 %v585
  %v1940 = vunpack.c.h.b16 %v585
  %v1941 = vunpack.c.l.b16 %v586
  %v1942 = vunpack.c.h.b16 %v586
  %v1943 = vunpack.c.l.b16 %v587
  %v1944 = vunpack.c.h.b16 %v587
  %v1945 = vunpack.c.l.b16 %v588
  %v1946 = vunpack.c.h.b16 %v588
  %v1947 = vunpack.c.l.b16 %v589
  %v1948 = vunpack.c.h.b16 %v589
  %v1949 = vunpack.c.l.b16 %v590
  %v1950 = vunpack.c.h.b16 %v590
  %v1951 = vunpack.c.l.b16 %v591
  %v1952 = vunpack.c.h.b16 %v591
  %v1953 = vunpack.c.l.b16 %v592
  %v1954 = vunpack.c.h.b16 %v592
  %v1955 = vunpack.c.l.b16 %v593
  %v1956 = vunpack.c.h.b16 %v593
  %v1957 = vunpack.c.l.b16 %v594
  %v1958 = vunpack.c.h.b16 %v594
  %v1959 = vunpack.c.l.b16 %v595
  %v1960 = vunpack.c.h.b16 %v595
  %v1961 = vunpack.c.l.b16 %v596
  %v1962 = vunpack.c.h.b16 %v596
  %v1963 = vunpack.c.l.b16 %v597
  %v1964 = vunpack.c.h.b16 %v597
  %v1965 = vunpack.c.l.b16 %v598
  %v1966 = vunpack.c.h.b16 %v598
  %v1967 = vunpack.c.l.b16 %v599
  %v1968 = vunpack.c.h.b16 %v599
  %v1969 = vunpack.c.l.b16 %v600
  %v1970 = vunpack.c.h.b16 %v600
  %v1971 = vunpack.c.l.b16 %v601
  %v1972 = vunpack.c.h.b16 %v601
  %v1973 = vunpack.c.l.b16 %v602
  %v1974 = vunpack.c.h.b16 %v602
  %v1975 = vunpack.c.l.b16 %v603
  %v1976 = vunpack.c.h.b16 %v603
  %v1977 = vunpack.c.l.b16 %v604
  %v1978 = vunpack.c.h.b16 %v604
  %v1979 = vunpack.c.l.b16 %v605
  %v1980 = vunpack.c.h.b16 %v605
  %v1981 = vunpack.c.l.b16 %v606
  %v1982 = vunpack.c.h.b16 %v606
  %v1983 = vunpack.c.l.b16 %v607
  %v1984 = vunpack.c.h.b16 %v607
  %v1985 = vunpack.c.l.b16 %v608
  %v1986 = vunpack.c.h.b16 %v608
  %v1987 = vunpack.c.l.b16 %v609
  %v1988 = vunpack.c.h.b16 %v609
  %v1989 = vunpack.c.l.b16 %v610
  %v1990 = vunpack.c.h.b16 %v610
  %v1991 = vunpack.c.l.b16 %v611
  %v1992 = vunpack.c.h.b16 %v611
  %v1993 = vunpack.c.l.b16 %v612
  %v1994 = vunpack.c.h.b16 %v612
  %v1995 = vunpack.c.l.b16 %v613
  %v1996 = vunpack.c.h.b16 %v613
  %v1997 = vunpack.c.l.b16 %v614
  %v1998 = vunpack.c.h.b16 %v614
  %v1999 = vunpack.c.l.b16 %v615
  %v2000 = vunpack.c.h.b16 %v615
  %v2001 = vunpack.c.l.b16 %v616
  %v2002 = vunpack.c.h.b16 %v616
  %v2003 = vunpack.c.l.b16 %v617
  %v2004 = vunpack.c.h.b16 %v617
  %v2005 = vunpack.c.l.b16 %v618
  %v2006 = vunpack.c.h.b16 %v618
  %v2007 = vunpack.c.l.b16 %v619
  %v2008 = vunpack.c.h.b16 %v619
  %v2009 = vunpack.c.l.b16 %v620
  %v2010 = vunpack.c.h.b16 %v620
  %v2011 = vunpack.c.l.b16 %v621
  %v2012 = vunpack.c.h.b16 %v621
  %v2013 = vunpack.c.l.b16 %v622
  %v2014 = vunpack.c.h.b16 %v622
  %v2015 = vunpack.c.l.b16 %v623
  %v2016 = vunpack.c.h.b16 %v623
  %v2017 = vunpack.c.l.b16 %v624
  %v2018 = vunpack.c.h.b16 %v624
  %v2019 = vunpack.c.l.b16 %v625
  %v2020 = vunpack.c.h.b16 %v625
  %v2021 = vunpack.c.l.b16 %v626
  %v2022 = vunpack.c.h.b16 %v626
  %v2023 = vunpack.c.l.b16 %v627
  %v2024 = vunpack.c.h.b16 %v627
  %v2025 = vunpack.c.l.b16 %v628
  %v2026 = vunpack.c.h.b16 %v628
  %v2027 = vunpack.c.l.b16 %v629
  %v2028 = vunpack.c.h.b16 %v629
  %v2029 = vunpack.c.l.b16 %v630
  %v2030 = vunpack.c.h.b16 %v630
  %v2031 = vunpack.c.l.b16 %v631
  %v2032 = vunpack.c.h.b16 %v631
  %v2033 = vunpack.c.l.b16 %v632
  %v2034 = vunpack.c.h.b16 %v632
  %v2035 = vunpack.c.l.b16 %v633
  %v2036 = vunpack.c.h.b16 %v633
  %v2037 = vunpack.c.l.b16 %v634
  %v2038 = vunpack.c.h.b16 %v634
  %v2039 = vunpack.c.l.b16 %v635
  %v2040 = vunpack.c.h.b16 %v635
  %v2041 = vunpack.c.l.b16 %v636
  %v2042 = vunpack.c.h.b16 %v636
  %v2043 = vunpack.c.l.b16 %v637
  %v2044 = vunpack.c.h.b16 %v637
  %v2045 = vunpack.c.l.b16 %v638
  %v2046 = vunpack.c.h.b16 %v638
  %v2047 = vunpack.c.l.b16 %v639
  %v2048 = vunpack.c.h.b16 %v639
  %v2049 = vunpack.c.l.b16 %v640
  %v2050 = vunpack.c.h.b16 %v640
  %v2051 = vunpack.c.l.b16 %v641
  %v2052 = vunpack.c.h.b16 %v641
  %v2053 = vunpack.c.l.b16 %v642
  %v2054 = vunpack.c.h.b16 %v642
  %v2055 = vunpack.c.l.b16 %v643
  %v2056 = vunpack.c.h.b16 %v643
  %v2057 = vunpack.c.l.b16 %v644
  %v2058 = vunpack.c.h.b16 %v644
  %v2059 = vunpack.c.l.b16 %v645
  %v2060 = vunpack.c.h.b16 %v645
  %v2061 = vunpack.c.l.b16 %v646
  %v2062 = vunpack.c.h.b16 %v646
  %v2063 = vunpack.c.l.b16 %v647
  %v2064 = vunpack.c.h.b16 %v647
  %v2065 = vunpack.c.l.b16 %v648
  %v2066 = vunpack.c.h.b16 %v648
  %v2067 = vunpack.c.l.b16 %v649
  %v2068 = vunpack.c.h.b16 %v649
  %v2069 = vunpack.c.l.b16 %v650
  %v2070 = vunpack.c.h.b16 %v650
  %v2071 = vunpack.c.l.b16 %v651
  %v2072 = vunpack.c.h.b16 %v651
  %v2073 = vunpack.c.l.b16 %v652
  %v2074 = vunpack.c.h.b16 %v652
  %v2075 = vunpack.c.l.b16 %v653
  %v2076 = vunpack.c.h.b16 %v653
  %v2077 = vunpack.c.l.b16 %v654
  %v2078 = vunpack.c.h.b16 %v654
  %v2079 = vunpack.c.l.b16 %v655
  %v2080 = vunpack.c.h.b16 %v655
  %v2081 = vunpack.c.l.b16 %v656
  %v2082 = vunpack.c.h.b16 %v656
  %v2083 = vunpack.c.l.b16 %v657
  %v2084 = vunpack.c.h.b16 %v657
  %v2085 = vunpack.c.l.b16 %v658
  %v2086 = vunpack.c.h.b16 %v658
  %v2087 = vunpack.c.l.b16 %v659
  %v2088 = vunpack.c.h.b16 %v659
  %v2089 = vunpack.c.l.b16 %v660
  %v2090 = vunpack.c.h.b16 %v660
  %v2091 = vunpack.c.l.b16 %v661
  %v2092 = vunpack.c.h.b16 %v661
  %v2093 = vunpack.c.l.b16 %v662
  %v2094 = vunpack.c.h.b16 %v662
  %v2095 = vunpack.c.l.b16 %v663
  %v2096 = vunpack.c.h.b16 %v663
  %v2097 = vunpack.c.l.b16 %v664
  %v2098 = vunpack.c.h.b16 %v664
  %v2099 = vunpack.c.l.b16 %v665
  %v2100 = vunpack.c.h.b16 %v665
  %v2101 = vunpack.c.l.b16 %v666
  %v2102 = vunpack.c.h.b16 %v666
  %v2103 = vunpack.c.l.b16 %v667
  %v2104 = vunpack.c.h.b16 %v667
  %v2105 = vunpack.c.l.b16 %v668
  %v2106 = vunpack.c.h.b16 %v668
  %v2107 = vunpack.c.l.b16 %v669
  %v2108 = vunpack.c.h.b16 %v669
  %v2109 = vunpack.c.l.b16 %v670
  %v2110 = vunpack.c.h.b16 %v670
  %v2111 = vunpack.c.l.b16 %v671
  %v2112 = vunpack.c.h.b16 %v671
  %v2113 = vunpack.c.l.b16 %v672
  %v2114 = vunpack.c.h.b16 %v672
  %v2115 = vunpack.c.l.b16 %v673
  %v2116 = vunpack.c.h.b16 %v673
  %v2117 = vunpack.c.l.b16 %v674
  %v2118 = vunpack.c.h.b16 %v674
  %v2119 = vunpack.c.l.b16 %v675
  %v2120 = vunpack.c.h.b16 %v675
  %v2121 = vunpack.c.l.b16 %v676
  %v2122 = vunpack.c.h.b16 %v676
  %v2123 = vunpack.c.l.b16 %v677
  %v2124 = vunpack.c.h.b16 %v677
  %v2125 = vunpack.c.l.b16 %v678
  %v2126 = vunpack.c.h.b16 %v678
  %v2127 = vunpack.c.l.b16 %v679
  %v2128 = vunpack.c.h.b16 %v679
  %v2129 = vunpack.c.l.b16 %v680
  %v2130 = vunpack.c.h.b16 %v680
  %v2131 = vunpack.c.l.b16 %v681
  %v2132 = vunpack.c.h.b16 %v681
  %v2133 = vunpack.c.l.b16 %v682
  %v2134 = vunpack.c.h.b16 %v682
  %v2135 = vunpack.c.l.b16 %v683
  %v2136 = vunpack.c.h.b16 %v683
  %v2137 = vunpack.c.l.b16 %v684
  %v2138 = vunpack.c.h.b16 %v684
  %v2139 = vunpack.c.l.b16 %v685
  %v2140 = vunpack.c.h.b16 %v685
  %v2141 = vunpack.c.l.b16 %v686
  %v2142 = vunpack.c.h.b16 %v686
  %v2143 = vunpack.c.l.b16 %v687
  %v2144 = vunpack.c.h.b16 %v687
  %v2145 = vunpack.c.l.b16 %v688
  %v2146 = vunpack.c.h.b16 %v688
  %v2147 = vunpack.c.l.b16 %v689
  %v2148 = vunpack.c.h.b16 %v689
  %v2149 = vunpack.c.l.b16 %v690
  %v2150 = vunpack.c.h.b16 %v690
  %v2151 = vunpack.c.l.b16 %v691
  %v2152 = vunpack.c.h.b16 %v691
  %v2153 = vunpack.c.l.b16 %v692
  %v2154 = vunpack.c.h.b16 %v692
  %v2155 = vunpack.c.l.b16 %v693
  %v2156 = vunpack.c.h.b16 %v693
  %v2157 = vunpack.c.l.b16 %v694
  %v2158 = vunpack.c.h.b16 %v694
  %v2159 = vunpack.c.l.b16 %v695
  %v2160 = vunpack.c.h.b16 %v695
  %v2161 = vunpack.c.l.b16 %v696
  %v2162 = vunpack.c.h.b16 %v696
  %v2163 = vunpack.c.l.b16 %v697
  %v2164 = vunpack.c.h.b16 %v697
  %v2165 = vunpack.c.l.b16 %v698
  %v2166 = vunpack.c.h.b16 %v698
  %v2167 = vunpack.c.l.b16 %v699
  %v2168 = vunpack.c.h.b16 %v699
  %v2169 = vunpack.c.l.b16 %v700
  %v2170 = vunpack.c.h.b16 %v700
  %v2171 = vunpack.c.l.b16 %v701
  %v2172 = vunpack.c.h.b16 %v701
  %v2173 = vunpack.c.l.b16 %v702
  %v2174 = vunpack.c.h.b16 %v702
  %v2175 = vunpack.c.l.b16 %v703
  %v2176 = vunpack.c.h.b16 %v703
  %v2177 = vunpack.c.l.b16 %v704
  %v2178 = vunpack.c.h.b16 %v704
  %v2179 = vunpack.c.l.b16 %v705
  %v2180 = vunpack.c.h.b16 %v705
  %v2181 = vunpack.c.l.b16 %v706
  %v2182 = vunpack.c.h.b16 %v706
  %v2183 = vunpack.c.l.b16 %v707
  %v2184 = vunpack.c.h.b16 %v707
  %v2185 = vunpack.c.l.b16 %v708
  %v2186 = vunpack.c.h.b16 %v708
  %v2187 = vunpack.c.l.b16 %v709
  %v2188 = vunpack.c.h.b16 %v709
  %v2189 = vunpack.c.l.b16 %v710
  %v2190 = vunpack.c.h.b16 %v710
  %v2191 = vunpack.c.l.b16 %v711
  %v2192 = vunpack.c.h.b16 %v711
  %v2193 = vunpack.c.l.b16 %v712
  %v2194 = vunpack.c.h.b16 %v712
  %v2195 = vunpack.c.l.b16 %v713
  %v2196 = vunpack.c.h.b16 %v713
  %v2197 = vunpack.c.l.b16 %v714
  %v2198 = vunpack.c.h.b16 %v714
  %v2199 = vunpack.c.l.b16 %v715
  %v2200 = vunpack.c.h.b16 %v715
  %v2201 = vunpack.c.l.b16 %v716
  %v2202 = vunpack.c.h.b16 %v716
  %v2203 = vunpack.c.l.b16 %v717
  %v2204 = vunpack.c.h.b16 %v717
  %v2205 = vunpack.c.l.b16 %v718
  %v2206 = vunpack.c.h.b16 %v718
  %v2207 = vunpack.c.l.b16 %v719
  %v2208 = vunpack.c.h.b16 %v719
  %v2209 = vunpack.c.l.b16 %v720
  %v2210 = vunpack.c.h.b16 %v720
  %v2211 = vunpack.c.l.b16 %v721
  %v2212 = vunpack.c.h.b16 %v721
  %v2213 = vunpack.c.l.b16 %v722
  %v2214 = vunpack.c.h.b16 %v722
  %v2215 = vunpack.c.l.b16 %v723
  %v2216 = vunpack.c.h.b16 %v723
  %v2217 = vunpack.c.l.b16 %v724
  %v2218 = vunpack.c.h.b16 %v724
  %v2219 = vunpack.c.l.b16 %v725
  %v2220 = vunpack.c.h.b16 %v725
  %v2221 = vunpack.c.l.b16 %v726
  %v2222 = vunpack.c.h.b16 %v726
  %v2223 = vunpack.c.l.b16 %v727
  %v2224 = vunpack.c.h.b16 %v727
  %v2225 = vunpack.c.l.b16 %v728
  %v2226 = vunpack.c.h.b16 %v728
  %v2227 = vunpack.c.l.b16 %v729
  %v2228 = vunpack.c.h.b16 %v729
  %v2229 = vunpack.c.l.b16 %v730
  %v2230 = vunpack.c.h.b16 %v730
  %v2231 = vunpack.c.l.b16 %v731
  %v2232 = vunpack.c.h.b16 %v731
  %v2233 = vunpack.c.l.b16 %v732
  %v2234 = vunpack.c.h.b16 %v732
  %v2235 = vunpack.c.l.b16 %v733
  %v2236 = vunpack.c.h.b16 %v733
  %v2237 = vunpack.c.l.b16 %v734
  %v2238 = vunpack.c.h.b16 %v734
  %v2239 = vunpack.c.l.b16 %v735
  %v2240 = vunpack.c.h.b16 %v735
  %v2241 = vunpack.c.l.b16 %v736
  %v2242 = vunpack.c.h.b16 %v736
  %v2243 = vunpack.c.l.b16 %v737
  %v2244 = vunpack.c.h.b16 %v737
  %v2245 = vunpack.c.l.b16 %v738
  %v2246 = vunpack.c.h.b16 %v738
  %v2247 = vunpack.c.l.b16 %v739
  %v2248 = vunpack.c.h.b16 %v739
  %v2249 = vunpack.c.l.b16 %v740
  %v2250 = vunpack.c.h.b16 %v740
  %v2251 = vunpack.c.l.b16 %v741
  %v2252 = vunpack.c.h.b16 %v741
  %v2253 = vunpack.c.l.b16 %v742
  %v2254 = vunpack.c.h.b16 %v742
  %v2255 = vunpack.c.l.b16 %v743
  %v2256 = vunpack.c.h.b16 %v743
  %v2257 = vunpack.c.l.b16 %v744
  %v2258 = vunpack.c.h.b16 %v744
  %v2259 = vunpack.c.l.b16 %v745
  %v2260 = vunpack.c.h.b16 %v745
  %v2261 = vunpack.c.l.b16 %v746
  %v2262 = vunpack.c.h.b16 %v746
  %v2263 = vunpack.c.l.b16 %v747
  %v2264 = vunpack.c.h.b16 %v747
  %v2265 = vunpack.c.l.b16 %v748
  %v2266 = vunpack.c.h.b16 %v748
  %v2267 = vunpack.c.l.b16 %v749
  %v2268 = vunpack.c.h.b16 %v749
  %v2269 = vunpack.c.l.b16 %v750
  %v2270 = vunpack.c.h.b16 %v750
  %v2271 = vunpack.c.l.b16 %v751
  %v2272 = vunpack.c.h.b16 %v751
  %v2273 = vunpack.c.l.b16 %v752
  %v2274 = vunpack.c.h.b16 %v752
  %v2275 = vunpack.c.l.b16 %v753
  %v2276 = vunpack.c.h.b16 %v753
  %v2277 = vunpack.c.l.b16 %v754
  %v2278 = vunpack.c.h.b16 %v754
  %v2279 = vunpack.c.l.b16 %v755
  %v2280 = vunpack.c.h.b16 %v755
  %v2281 = vunpack.c.l.b16 %v756
  %v2282 = vunpack.c.h.b16 %v756
  %v2283 = vunpack.c.l.b16 %v757
  %v2284 = vunpack.c.h.b16 %v757
  %v2285 = vunpack.c.l.b16 %v758
  %v2286 = vunpack.c.h.b16 %v758
  %v2287 = vunpack.c.l.b16 %v759
  %v2288 = vunpack.c.h.b16 %v759
  %v2289 = vunpack.c.l.b16 %v760
  %v2290 = vunpack.c.h.b16 %v760
  %v2291 = vunpack.c.l.b16 %v761
  %v2292 = vunpack.c.h.b16 %v761
  %v2293 = vunpack.c.l.b16 %v762
  %v2294 = vunpack.c.h.b16 %v762
  %v2295 = vunpack.c.l.b16 %v763
  %v2296 = vunpack.c.h.b16 %v763
  %v2297 = vunpack.c.l.b16 %v764
  %v2298 = vunpack.c.h.b16 %v764
  %v2299 = vunpack.c.l.b16 %v765
  %v2300 = vunpack.c.h.b16 %v765
  %v2301 = vunpack.c.l.b16 %v766
  %v2302 = vunpack.c.h.b16 %v766
  %v2303 = vunpack.c.l.b16 %v767
  %v2304 = vunpack.c.h.b16 %v767
  %v2305 = vunpack.c.l.b16 %v768
  %v2306 = vunpack.c.h.b16 %v768
  %v2307 = vunpack.c.l.b16 %v769
  %v2308 = vunpack.c.h.b16 %v769
  %v2309 = vunpack.c.l.b16 %v770
  %v2310 = vunpack.c.h.b16 %v770
  %v2311 = vunpack.c.l.b16 %v771
  %v2312 = vunpack.c.h.b16 %v771
  %v2313 = vunpack.c.l.b16 %v772
  %v2314 = vunpack.c.h.b16 %v772
  %v2315 = vunpack.c.l.b16 %v773
  %v2316 = vunpack.c.h.b16 %v773
  %v2317 = vunpack.c.l.b16 %v774
  %v2318 = vunpack.c.h.b16 %v774
  %v2319 = vunpack.c.l.b16 %v775
  %v2320 = vunpack.c.h.b16 %v775
  %v2321 = vunpack.c.l.b16 %v776
  %v2322 = vunpack.c.h.b16 %v776
  %v2323 = vunpack.c.l.b16 %v777
  %v2324 = vunpack.c.h.b16 %v777
  %v2325 = vunpack.c.l.b16 %v778
  %v2326 = vunpack.c.h.b16 %v778
  %v2327 = vunpack.c.l.b16 %v779
  %v2328 = vunpack.c.h.b16 %v779
  %v2329 = vunpack.c.l.b16 %v780
  %v2330 = vunpack.c.h.b16 %v780
  %v2331 = vunpack.c.l.b16 %v781
  %v2332 = vunpack.c.h.b16 %v781
  %v2333 = vunpack.c.l.b16 %v782
  %v2334 = vunpack.c.h.b16 %v782
  %v2335 = vunpack.c.l.b16 %v783
  %v2336 = vunpack.c.h.b16 %v783
  %v2337 = vunpack.c.l.b16 %v784
  %v2338 = vunpack.c.h.b16 %v784
  %v2339 = vunpack.c.l.b16 %v785
  %v2340 = vunpack.c.h.b16 %v785
  %v2341 = vunpack.c.l.b16 %v786
  %v2342 = vunpack.c.h.b16 %v786
  %v2343 = vunpack.c.l.b16 %v787
  %v2344 = vunpack.c.h.b16 %v787
  %v2345 = vunpack.c.l.b16 %v788
  %v2346 = vunpack.c.h.b16 %v788
  %v2347 = vunpack.c.l.b16 %v789
  %v2348 = vunpack.c.h.b16 %v789
  %v2349 = vunpack.c.l.b16 %v790
  %v2350 = vunpack.c.h.b16 %v790
  %v2351 = vunpack.c.l.b16 %v791
  %v2352 = vunpack.c.h.b16 %v791
  %v2353 = vunpack.c.l.b16 %v792
  %v2354 = vunpack.c.h.b16 %v792
  %v2355 = vunpack.c.l.b16 %v793
  %v2356 = vunpack.c.h.b16 %v793
  %v2357 = vunpack.c.l.b16 %v794
  %v2358 = vunpack.c.h.b16 %v794
  %v2359 = vunpack.c.l.b16 %v795
  %v2360 = vunpack.c.h.b16 %v795
  %v2361 = vunpack.c.l.b16 %v796
  %v2362 = vunpack.c.h.b16 %v796
  %v2363 = vunpack.c.l.b16 %v797
  %v2364 = vunpack.c.h.b16 %v797
  %v2365 = vunpack.c.l.b16 %v798
  %v2366 = vunpack.c.h.b16 %v798
  %v2367 = vunpack.c.l.b16 %v799
  %v2368 = vunpack.c.h.b16 %v799
  %v2369 = vunpack.c.l.b16 %v800
  %v2370 = vunpack.c.h.b16 %v800
  %v2371 = vunpack.c.l.b16 %v801
  %v2372 = vunpack.c.h.b16 %v801
  %v2373 = vunpack.c.l.b16 %v802
  %v2374 = vunpack.c.h.b16 %v802
  %v2375 = vpack.c.b16 %v1367, %v1351
  %v2376 = vpack.c.b16 %v1368, %v1352
  %v2377 = vpack.c.b16 %v1369, %v1353
  %v2378 = vpack.c.b16 %v1370, %v1354
  %v2379 = vpack.c.b16 %v1371, %v1355
  %v2380 = vpack.c.b16 %v1372, %v1356
  %v2381 = vpack.c.b16 %v1373, %v1357
  %v2382 = vpack.c.b16 %v1374, %v1358
  %v2383 = vpack.c.b16 %v1375, %v1359
  %v2384 = vpack.c.b16 %v1376, %v1360
  %v2385 = vpack.c.b16 %v1377, %v1361
  %v2386 = vpack.c.b16 %v1378, %v1362
  %v2387 = vpack.c.b16 %v1379, %v1363
  %v2388 = vpack.c.b16 %v1380, %v1364
  %v2389 = vpack.c.b16 %v1381, %v1365
  %v2390 = vpack.c.b16 %v1382, %v1366
  %v2391 = vpack.c.b16 %v1399, %v1383
  %v2392 = vpack.c.b16 %v1400, %v1384
  %v2393 = vpack.c.b16 %v1401, %v1385
  %v2394 = vpack.c.b16 %v1402, %v1386
  %v2395 = vpack.c.b16 %v1403, %v1387
  %v2396 = vpack.c.b16 %v1404, %v1388
  %v2397 = vpack.c.b16 %v1405, %v1389
  %v2398 = vpack.c.b16 %v1406, %v1390
  %v2399 = vpack.c.b16 %v1407, %v1391
  %v2400 = vpack.c.b16 %v1408, %v1392
  %v2401 = vpack.c.b16 %v1409, %v1393
  %v2402 = vpack.c.b16 %v1410, %v1394
  %v2403 = vpack.c.b16 %v1411, %v1395
  %v2404 = vpack.c.b16 %v1412, %v1396
  %v2405 = vpack.c.b16 %v1413, %v1397
  %v2406 = vpack.c.b16 %v1414, %v1398
  %v2407 = vpack.c.b16 %v1431, %v1415
  %v2408 = vpack.c.b16 %v1432, %v1416
  %v2409 = vpack.c.b16 %v1433, %v1417
  %v2410 = vpack.c.b16 %v1434, %v1418
  %v2411 = vpack.c.b16 %v1435, %v1419
  %v2412 = vpack.c.b16 %v1436, %v1420
  %v2413 = vpack.c.b16 %v1437, %v1421
  %v2414 = vpack.c.b16 %v1438, %v1422
  %v2415 = vpack.c.b16 %v1439, %v1423
  %v2416 = vpack.c.b16 %v1440, %v1424
  %v2417 = vpack.c.b16 %v1441, %v1425
  %v2418 = vpack.c.b16 %v1442, %v1426
  %v2419 = vpack.c.b16 %v1443, %v1427
  %v2420 = vpack.c.b16 %v1444, %v1428
  %v2421 = vpack.c.b16 %v1445, %v1429
  %v2422 = vpack.c.b16 %v1446, %v1430
  %v2423 = vpack.c.b16 %v1463, %v1447
  %v2424 = vpack.c.b16 %v1464, %v1448
  %v2425 = vpack.c.b16 %v1465, %v1449
  %v2426 = vpack.c.b16 %v1466, %v1450
  %v2427 = vpack.c.b16 %v1467, %v1451
  %v2428 = vpack.c.b16 %v1468, %v1452
  %v2429 = vpack.c.b16 %v1469, %v1453
  %v2430 = vpack.c.b16 %v1470, %v1454
  %v2431 = vpack.c.b16 %v1471, %v1455
  %v2432 = vpack.c.b16 %v1472, %v1456
  %v2433 = vpack.c.b16 %v1473, %v1457
  %v2434 = vpack.c.b16 %v1474, %v1458
  %v2435 = vpack.c.b16 %v1475, %v1459
  %v2436 = vpack.c.b16 %v1476, %v1460
  %v2437 = vpack.c.b16 %v1477, %v1461
  %v2438 = vpack.c.b16 %v1478, %v1462
  %v2439 = vpack.c.b16 %v1495, %v1479
  %v2440 = vpack.c.b16 %v1496, %v1480
  %v2441 = vpack.c.b16 %v1497, %v1481
  %v2442 = vpack.c.b16 %v1498, %v1482
  %v2443 = vpack.c.b16 %v1499, %v1483
  %v2444 = vpack.c.b16 %v1500, %v1484
  %v2445 = vpack.c.b16 %v1501, %v1485
  %v2446 = vpack.c.b16 %v1502, %v1486
  %v2447 = vpack.c.b16 %v1503, %v1487
  %v2448 = vpack.c.b16 %v1504, %v1488
  %v2449 = vpack.c.b16 %v1505, %v1489
  %v2450 = vpack.c.b16 %v1506, %v1490
  %v2451 = vpack.c.b16 %v1507, %v1491
  %v2452 = vpack.c.b16 %v1508, %v1492
  %v2453 = vpack.c.b16 %v1509, %v1493
  %v2454 = vpack.c.b16 %v1510, %v1494
  %v2455 = vpack.c.b16 %v1527, %v1511
  %v2456 = vpack.c.b16 %v1528, %v1512
  %v2457 = vpack.c.b16 %v1529, %v1513
  %v2458 = vpack.c.b16 %v1530, %v1514
  %v2459 = vpack.c.b16 %v1531, %v1515
  %v2460 = vpack.c.b16 %v1532, %v1516
  %v2461 = vpack.c.b16 %v1533, %v1517
  %v2462 = vpack.c.b16 %v1534, %v1518
  %v2463 = vpack.c.b16 %v1535, %v1519
  %v2464 = vpack.c.b16 %v1536, %v1520
  %v2465 = vpack.c.b16 %v1537, %v1521
  %v2466 = vpack.c.b16 %v1538, %v1522
  %v2467 = vpack.c.b16 %v1539, %v1523
  %v2468 = vpack.c.b16 %v1540, %v1524
  %v2469 = vpack.c.b16 %v1541, %v1525
  %v2470 = vpack.c.b16 %v1542, %v1526
  %v2471 = vpack.c.b16 %v1559, %v1543
  %v2472 = vpack.c.b16 %v1560, %v1544
  %v2473 = vpack.c.b16 %v1561, %v1545
  %v2474 = vpack.c.b16 %v1562, %v1546
  %v2475 = vpack.c.b16 %v1563, %v1547
  %v2476 = vpack.c.b16 %v1564, %v1548
  %v2477 = vpack.c.b16 %v1565, %v1549
  %v2478 = vpack.c.b16 %v1566, %v1550
  %v2479 = vpack.c.b16 %v1567, %v1551
  %v2480 = vpack.c.b16 %v1568, %v1552
  %v2481 = vpack.c.b16 %v1569, %v1553
  %v2482 = vpack.c.b16 %v1570, %v1554
  %v2483 = vpack.c.b16 %v1571, %v1555
  %v2484 = vpack.c.b16 %v1572, %v1556
  %v2485 = vpack.c.b16 %v1573, %v1557
  %v2486 = vpack.c.b16 %v1574, %v1558
  %v2487 = vpack.c.b16 %v1591, %v1575
  %v2488 = vpack.c.b16 %v1592, %v1576
  %v2489 = vpack.c.b16 %v1593, %v1577
  %v2490 = vpack.c.b16 %v1594, %v1578
  %v2491 = vpack.c.b16 %v1595, %v1579
  %v2492 = vpack.c.b16 %v1596, %v1580
  %v2493 = vpack.c.b16 %v1597, %v1581
  %v2494 = vpack.c.b16 %v1598, %v1582
  %v2495 = vpack.c.b16 %v1599, %v1583
  %v2496 = vpack.c.b16 %v1600, %v1584
  %v2497 = vpack.c.b16 %v1601, %v1585
  %v2498 = vpack.c.b16 %v1602, %v1586
  %v2499 = vpack.c.b16 %v1603, %v1587
  %v2500 = vpack.c.b16 %v1604, %v1588
  %v2501 = vpack.c.b16 %v1605, %v1589
  %v2502 = vpack.c.b16 %v1606, %v1590
  %v2503 = vpack.c.b16 %v1623, %v1607
  %v2504 = vpack.c.b16 %v1624, %v1608
  %v2505 = vpack.c.b16 %v1625, %v1609
  %v2506 = vpack.c.b16 %v1626, %v1610
  %v2507 = vpack.c.b16 %v1627, %v1611
  %v2508 = vpack.c.b16 %v1628, %v1612
  %v2509 = vpack.c.b16 %v1629, %v1613
  %v2510 = vpack.c.b16 %v1630, %v1614
  %v2511 = vpack.c.b16 %v1631, %v1615
  %v2512 = vpack.c.b16 %v1632, %v1616
  %v2513 = vpack.c.b16 %v1633, %v1617
  %v2514 = vpack.c.b16 %v1634, %v1618
  %v2515 = vpack.c.b16 %v1635, %v1619
  %v2516 = vpack.c.b16 %v1636, %v1620
  %v2517 = vpack.c.b16 %v1637, %v1621
  %v2518 = vpack.c.b16 %v1638, %v1622
  %v2519 = vpack.c.b16 %v1655, %v1639
  %v2520 = vpack.c.b16 %v1656, %v1640
  %v2521 = vpack.c.b16 %v1657, %v1641
  %v2522 = vpack.c.b16 %v1658, %v1642
  %v2523 = vpack.c.b16 %v1659, %v1643
  %v2524 = vpack.c.b16 %v1660, %v1644
  %v2525 = vpack.c.b16 %v1661, %v1645
  %v2526 = vpack.c.b16 %v1662, %v1646
  %v2527 = vpack.c.b16 %v1663, %v1647
  %v2528 = vpack.c.b16 %v1664, %v1648
  %v2529 = vpack.c.b16 %v1665, %v1649
  %v2530 = vpack.c.b16 %v1666, %v1650
  %v2531 = vpack.c.b16 %v1667, %v1651
  %v2532 = vpack.c.b16 %v1668, %v1652
  %v2533 = vpack.c.b16 %v1669, %v1653
  %v2534 = vpack.c.b16 %v1670, %v1654
  %v2535 = vpack.c.b16 %v1687, %v1671
  %v2536 = vpack.c.b16 %v1688, %v1672
  %v2537 = vpack.c.b16 %v1689, %v1673
  %v2538 = vpack.c.b16 %v1690, %v1674
  %v2539 = vpack.c.b16 %v1691, %v1675
  %v2540 = vpack.c.b16 %v1692, %v1676
  %v2541 = vpack.c.b16 %v1693, %v1677
  %v2542 = vpack.c.b16 %v1694, %v1678
  %v2543 = vpack.c.b16 %v1695, %v1679
  %v2544 = vpack.c.b16 %v1696, %v1680
  %v2545 = vpack.c.b16 %v1697, %v1681
  %v2546 = vpack.c.b16 %v1698, %v1682
  %v2547 = vpack.c.b16 %v1699, %v1683
  %v2548 = vpack.c.b16 %v1700, %v1684
  %v2549 = vpack.c.b16 %v1701, %v1685
  %v2550 = vpack.c.b16 %v1702, %v1686
  %v2551 = vpack.c.b16 %v1719, %v1703
  %v2552 = vpack.c.b16 %v1720, %v1704
  %v2553 = vpack.c.b16 %v1721, %v1705
  %v2554 = vpack.c.b16 %v1722, %v1706
  %v2555 = vpack.c.b16 %v1723, %v1707
  %v2556 = vpack.c.b16 %v1724, %v1708
  %v2557 = vpack.c.b16 %v1725, %v1709
  %v2558 = vpack.c.b16 %v1726, %v1710
  %v2559 = vpack.c.b16 %v1727, %v1711
  %v2560 = vpack.c.b16 %v1728, %v1712
  %v2561 = vpack.c.b16 %v1729, %v1713
  %v2562 = vpack.c.b16 %v1730, %v1714
  %v2563 = vpack.c.b16 %v1731, %v1715
  %v2564 = vpack.c.b16 %v1732, %v1716
  %v2565 = vpack.c.b16 %v1733, %v1717
  %v2566 = vpack.c.b16 %v1734, %v1718
  %v2567 = vpack.c.b16 %v1751, %v1735
  %v2568 = vpack.c.b16 %v1752, %v1736
  %v2569 = vpack.c.b16 %v1753, %v1737
  %v2570 = vpack.c.b16 %v1754, %v1738
  %v2571 = vpack.c.b16 %v1755, %v1739
  %v2572 = vpack.c.b16 %v1756, %v1740
  %v2573 = vpack.c.b16 %v1757, %v1741
  %v2574 = vpack.c.b16 %v1758, %v1742
  %v2575 = vpack.c.b16 %v1759, %v1743
  %v2576 = vpack.c.b16 %v1760, %v1744
  %v2577 = vpack.c.b16 %v1761, %v1745
  %v2578 = vpack.c.b16 %v1762, %v1746
  %v2579 = vpack.c.b16 %v1763, %v1747
  %v2580 = vpack.c.b16 %v1764, %v1748
  %v2581 = vpack.c.b16 %v1765, %v1749
  %v2582 = vpack.c.b16 %v1766, %v1750
  %v2583 = vpack.c.b16 %v1783, %v1767
  %v2584 = vpack.c.b16 %v1784, %v1768
  %v2585 = vpack.c.b16 %v1785, %v1769
  %v2586 = vpack.c.b16 %v1786, %v1770
  %v2587 = vpack.c.b16 %v1787, %v1771
  %v2588 = vpack.c.b16 %v1788, %v1772
  %v2589 = vpack.c.b16 %v1789, %v1773
  %v2590 = vpack.c.b16 %v1790, %v1774
  %v2591 = vpack.c.b16 %v1791, %v1775
  %v2592 = vpack.c.b16 %v1792, %v1776
  %v2593 = vpack.c.b16 %v1793, %v1777
  %v2594 = vpack.c.b16 %v1794, %v1778
  %v2595 = vpack.c.b16 %v1795, %v1779
  %v2596 = vpack.c.b16 %v1796, %v1780
  %v2597 = vpack.c.b16 %v1797, %v1781
  %v2598 = vpack.c.b16 %v1798, %v1782
  %v2599 = vpack.c.b16 %v1815, %v1799
  %v2600 = vpack.c.b16 %v1816, %v1800
  %v2601 = vpack.c.b16 %v1817, %v1801
  %v2602 = vpack.c.b16 %v1818, %v1802
  %v2603 = vpack.c.b16 %v1819, %v1803
  %v2604 = vpack.c.b16 %v1820, %v1804
  %v2605 = vpack.c.b16 %v1821, %v1805
  %v2606 = vpack.c.b16 %v1822, %v1806
  %v2607 = vpack.c.b16 %v1823, %v1807
  %v2608 = vpack.c.b16 %v1824, %v1808
  %v2609 = vpack.c.b16 %v1825, %v1809
  %v2610 = vpack.c.b16 %v1826, %v1810
  %v2611 = vpack.c.b16 %v1827, %v1811
  %v2612 = vpack.c.b16 %v1828, %v1812
  %v2613 = vpack.c.b16 %v1829, %v1813
  %v2614 = vpack.c.b16 %v1830, %v1814
  %v2615 = vpack.c.b16 %v1847, %v1831
  %v2616 = vpack.c.b16 %v1848, %v1832
  %v2617 = vpack.c.b16 %v1849, %v1833
  %v2618 = vpack.c.b16 %v1850, %v1834
  %v2619 = vpack.c.b16 %v1851, %v1835
  %v2620 = vpack.c.b16 %v1852, %v1836
  %v2621 = vpack.c.b16 %v1853, %v1837
  %v2622 = vpack.c.b16 %v1854, %v1838
  %v2623 = vpack.c.b16 %v1855, %v1839
  %v2624 = vpack.c.b16 %v1856, %v1840
  %v2625 = vpack.c.b16 %v1857, %v1841
  %v2626 = vpack.c.b16 %v1858, %v1842
  %v2627 = vpack.c.b16 %v1859, %v1843
  %v2628 = vpack.c.b16 %v1860, %v1844
  %v2629 = vpack.c.b16 %v1861, %v1845
  %v2630 = vpack.c.b16 %v1862, %v1846
  %v2631 = vpack.c.b16 %v1879, %v1863
  %v2632 = vpack.c.b16 %v1880, %v1864
  %v2633 = vpack.c.b16 %v1881, %v1865
  %v2634 = vpack.c.b16 %v1882, %v1866
  %v2635 = vpack.c.b16 %v1883, %v1867
  %v2636 = vpack.c.b16 %v1884, %v1868
  %v2637 = vpack.c.b16 %v1885, %v1869
  %v2638 = vpack.c.b16 %v1886, %v1870
  %v2639 = vpack.c.b16 %v1887, %v1871
  %v2640 = vpack.c.b16 %v1888, %v1872
  %v2641 = vpack.c.b16 %v1889, %v1873
  %v2642 = vpack.c.b16 %v1890, %v1874
  %v2643 = vpack.c.b16 %v1891, %v1875
  %v2644 = vpack.c.b16 %v1892, %v1876
  %v2645 = vpack.c.b16 %v1893, %v1877
  %v2646 = vpack.c.b16 %v1894, %v1878
  %v2647 = vpack.c.b16 %v1911, %v1895
  %v2648 = vpack.c.b16 %v1912, %v1896
  %v2649 = vpack.c.b16 %v1913, %v1897
  %v2650 = vpack.c.b16 %v1914, %v1898
  %v2651 = vpack.c.b16 %v1915, %v1899
  %v2652 = vpack.c.b16 %v1916, %v1900
  %v2653 = vpack.c.b16 %v1917, %v1901
  %v2654 = vpack.c.b16 %v1918, %v1902
  %v2655 = vpack.c.b16 %v1919, %v1903
  %v2656 = vpack.c.b16 %v1920, %v1904
  %v2657 = vpack.c.b16 %v1921, %v1905
  %v2658 = vpack.c.b16 %v1922, %v1906
  %v2659 = vpack.c.b16 %v1923, %v1907
  %v2660 = vpack.c.b16 %v1924, %v1908
  %v2661 = vpack.c.b16 %v1925, %v1909
  %v2662 = vpack.c.b16 %v1926, %v1910
  %v2663 = vpack.c.b16 %v1943, %v1927
  %v2664 = vpack.c.b16 %v1944, %v1928
  %v2665 = vpack.c.b16 %v1945, %v1929
  %v2666 = vpack.c.b16 %v1946, %v1930
  %v2667 = vpack.c.b16 %v1947, %v1931
  %v2668 = vpack.c.b16 %v1948, %v1932
  %v2669 = vpack.c.b16 %v1949, %v1933
  %v2670 = vpack.c.b16 %v1950, %v1934
  %v2671 = vpack.c.b16 %v1951, %v1935
  %v2672 = vpack.c.b16 %v1952, %v1936
  %v2673 = vpack.c.b16 %v1953, %v1937
  %v2674 = vpack.c.b16 %v1954, %v1938
  %v2675 = vpack.c.b16 %v1955, %v1939
  %v2676 = vpack.c.b16 %v1956, %v1940
  %v2677 = vpack.c.b16 %v1957, %v1941
  %v2678 = vpack.c.b16 %v1958, %v1942
  %v2679 = vpack.c.b16 %v1975, %v1959
  %v2680 = vpack.c.b16 %v1976, %v1960
  %v2681 = vpack.c.b16 %v1977, %v1961
  %v2682 = vpack.c.b16 %v1978, %v1962
  %v2683 = vpack.c.b16 %v1979, %v1963
  %v2684 = vpack.c.b16 %v1980, %v1964
  %v2685 = vpack.c.b16 %v1981, %v1965
  %v2686 = vpack.c.b16 %v1982, %v1966
  %v2687 = vpack.c.b16 %v1983, %v1967
  %v2688 = vpack.c.b16 %v1984, %v1968
  %v2689 = vpack.c.b16 %v1985, %v1969
  %v2690 = vpack.c.b16 %v1986, %v1970
  %v2691 = vpack.c.b16 %v1987, %v1971
  %v2692 = vpack.c.b16 %v1988, %v1972
  %v2693 = vpack.c.b16 %v1989, %v1973
  %v2694 = vpack.c.b16 %v1990, %v1974
  %v2695 = vpack.c.b16 %v2007, %v1991
  %v2696 = vpack.c.b16 %v2008, %v1992
  %v2697 = vpack.c.b16 %v2009, %v1993
  %v2698 = vpack.c.b16 %v2010, %v1994
  %v2699 = vpack.c.b16 %v2011, %v1995
  %v2700 = vpack.c.b16 %v2012, %v1996
  %v2701 = vpack.c.b16 %v2013, %v1997
  %v2702 = vpack.c.b16 %v2014, %v1998
  %v2703 = vpack.c.b16 %v2015, %v1999
  %v2704 = vpack.c.b16 %v2016, %v2000
  %v2705 = vpack.c.b16 %v2017, %v2001
  %v2706 = vpack.c.b16 %v2018, %v2002
  %v2707 = vpack.c.b16 %v2019, %v2003
  %v2708 = vpack.c.b16 %v2020, %v2004
  %v2709 = vpack.c.b16 %v2021, %v2005
  %v2710 = vpack.c.b16 %v2022, %v2006
  %v2711 = vpack.c.b16 %v2039, %v2023
  %v2712 = vpack.c.b16 %v2040, %v2024
  %v2713 = vpack.c.b16 %v2041, %v2025
  %v2714 = vpack.c.b16 %v2042, %v2026
  %v2715 = vpack.c.b16 %v2043, %v2027
  %v2716 = vpack.c.b16 %v2044, %v2028
  %v2717 = vpack.c.b16 %v2045, %v2029
  %v2718 = vpack.c.b16 %v2046, %v2030
  %v2719 = vpack.c.b16 %v2047, %v2031
  %v2720 = vpack.c.b16 %v2048, %v2032
  %v2721 = vpack.c.b16 %v2049, %v2033
  %v2722 = vpack.c.b16 %v2050, %v2034
  %v2723 = vpack.c.b16 %v2051, %v2035
  %v2724 = vpack.c.b16 %v2052, %v2036
  %v2725 = vpack.c.b16 %v2053, %v2037
  %v2726 = vpack.c.b16 %v2054, %v2038
  %v2727 = vpack.c.b16 %v2071, %v2055
  %v2728 = vpack.c.b16 %v2072, %v2056
  %v2729 = vpack.c.b16 %v2073, %v2057
  %v2730 = vpack.c.b16 %v2074, %v2058
  %v2731 = vpack.c.b16 %v2075, %v2059
  %v2732 = vpack.c.b16 %v2076, %v2060
  %v2733 = vpack.c.b16 %v2077, %v2061
  %v2734 = vpack.c.b16 %v2078, %v2062
  %v2735 = vpack.c.b16 %v2079, %v2063
  %v2736 = vpack.c.b16 %v2080, %v2064
  %v2737 = vpack.c.b16 %v2081, %v2065
  %v2738 = vpack.c.b16 %v2082, %v2066
  %v2739 = vpack.c.b16 %v2083, %v2067
  %v2740 = vpack.c.b16 %v2084, %v2068
  %v2741 = vpack.c.b16 %v2085, %v2069
  %v2742 = vpack.c.b16 %v2086, %v2070
  %v2743 = vpack.c.b16 %v2103, %v2087
  %v2744 = vpack.c.b16 %v2104, %v2088
  %v2745 = vpack.c.b16 %v2105, %v2089
  %v2746 = vpack.c.b16 %v2106, %v2090
  %v2747 = vpack.c.b16 %v2107, %v2091
  %v2748 = vpack.c.b16 %v2108, %v2092
  %v2749 = vpack.c.b16 %v2109, %v2093
  %v2750 = vpack.c.b16 %v2110, %v2094
  %v2751 = vpack.c.b16 %v2111, %v2095
  %v2752 = vpack.c.b16 %v2112, %v2096
  %v2753 = vpack.c.b16 %v2113, %v2097
  %v2754 = vpack.c.b16 %v2114, %v2098
  %v2755 = vpack.c.b16 %v2115, %v2099
  %v2756 = vpack.c.b16 %v2116, %v2100
  %v2757 = vpack.c.b16 %v2117, %v2101
  %v2758 = vpack.c.b16 %v2118, %v2102
  %v2759 = vpack.c.b16 %v2135, %v2119
  %v2760 = vpack.c.b16 %v2136, %v2120
  %v2761 = vpack.c.b16 %v2137, %v2121
  %v2762 = vpack.c.b16 %v2138, %v2122
  %v2763 = vpack.c.b16 %v2139, %v2123
  %v2764 = vpack.c.b16 %v2140, %v2124
  %v2765 = vpack.c.b16 %v2141, %v2125
  %v2766 = vpack.c.b16 %v2142, %v2126
  %v2767 = vpack.c.b16 %v2143, %v2127
  %v2768 = vpack.c.b16 %v2144, %v2128
  %v2769 = vpack.c.b16 %v2145, %v2129
  %v2770 = vpack.c.b16 %v2146, %v2130
  %v2771 = vpack.c.b16 %v2147, %v2131
  %v2772 = vpack.c.b16 %v2148, %v2132
  %v2773 = vpack.c.b16 %v2149, %v2133
  %v2774 = vpack.c.b16 %v2150, %v2134
  %v2775 = vpack.c.b16 %v2167, %v2151
  %v2776 = vpack.c.b16 %v2168, %v2152
  %v2777 = vpack.c.b16 %v2169, %v2153
  %v2778 = vpack.c.b16 %v2170, %v2154
  %v2779 = vpack.c.b16 %v2171, %v2155
  %v2780 = vpack.c.b16 %v2172, %v2156
  %v2781 = vpack.c.b16 %v2173, %v2157
  %v2782 = vpack.c.b16 %v2174, %v2158
  %v2783 = vpack.c.b16 %v2175, %v2159
  %v2784 = vpack.c.b16 %v2176, %v2160
  %v2785 = vpack.c.b16 %v2177, %v2161
  %v2786 = vpack.c.b16 %v2178, %v2162
  %v2787 = vpack.c.b16 %v2179, %v2163
  %v2788 = vpack.c.b16 %v2180, %v2164
  %v2789 = vpack.c.b16 %v2181, %v2165
  %v2790 = vpack.c.b16 %v2182, %v2166
  %v2791 = vpack.c.b16 %v2199, %v2183
  %v2792 = vpack.c.b16 %v2200, %v2184
  %v2793 = vpack.c.b16 %v2201, %v2185
  %v2794 = vpack.c.b16 %v2202, %v2186
  %v2795 = vpack.c.b16 %v2203, %v2187
  %v2796 = vpack.c.b16 %v2204, %v2188
  %v2797 = vpack.c.b16 %v2205, %v2189
  %v2798 = vpack.c.b16 %v2206, %v2190
  %v2799 = vpack.c.b16 %v2207, %v2191
  %v2800 = vpack.c.b16 %v2208, %v2192
  %v2801 = vpack.c.b16 %v2209, %v2193
  %v2802 = vpack.c.b16 %v2210, %v2194
  %v2803 = vpack.c.b16 %v2211, %v2195
  %v2804 = vpack.c.b16 %v2212, %v2196
  %v2805 = vpack.c.b16 %v2213, %v2197
  %v2806 = vpack.c.b16 %v2214, %v2198
  %v2807 = vpack.c.b16 %v2231, %v2215
  %v2808 = vpack.c.b16 %v2232, %v2216
  %v2809 = vpack.c.b16 %v2233, %v2217
  %v2810 = vpack.c.b16 %v2234, %v2218
  %v2811 = vpack.c.b16 %v2235, %v2219
  %v2812 = vpack.c.b16 %v2236, %v2220
  %v2813 = vpack.c.b16 %v2237, %v2221
  %v2814 = vpack.c.b16 %v2238, %v2222
  %v2815 = vpack.c.b16 %v2239, %v2223
  %v2816 = vpack.c.b16 %v2240, %v2224
  %v2817 = vpack.c.b16 %v2241, %v2225
  %v2818 = vpack.c.b16 %v2242, %v2226
  %v2819 = vpack.c.b16 %v2243, %v2227
  %v2820 = vpack.c.b16 %v2244, %v2228
  %v2821 = vpack.c.b16 %v2245, %v2229
  %v2822 = vpack.c.b16 %v2246, %v2230
  %v2823 = vpack.c.b16 %v2263, %v2247
  %v2824 = vpack.c.b16 %v2264, %v2248
  %v2825 = vpack.c.b16 %v2265, %v2249
  %v2826 = vpack.c.b16 %v2266, %v2250
  %v2827 = vpack.c.b16 %v2267, %v2251
  %v2828 = vpack.c.b16 %v2268, %v2252
  %v2829 = vpack.c.b16 %v2269, %v2253
  %v2830 = vpack.c.b16 %v2270, %v2254
  %v2831 = vpack.c.b16 %v2271, %v2255
  %v2832 = vpack.c.b16 %v2272, %v2256
  %v2833 = vpack.c.b16 %v2273, %v2257
  %v2834 = vpack.c.b16 %v2274, %v2258
  %v2835 = vpack.c.b16 %v2275, %v2259
  %v2836 = vpack.c.b16 %v2276, %v2260
  %v2837 = vpack.c.b16 %v2277, %v2261
  %v2838 = vpack.c.b16 %v2278, %v2262
  %v2839 = vpack.c.b16 %v2295, %v2279
  %v2840 = vpack.c.b16 %v2296, %v2280
  %v2841 = vpack.c.b16 %v2297, %v2281
  %v2842 = vpack.c.b16 %v2298, %v2282
  %v2843 = vpack.c.b16 %v2299, %v2283
  %v2844 = vpack.c.b16 %v2300, %v2284
  %v2845 = vpack.c.b16 %v2301, %v2285
  %v2846 = vpack.c.b16 %v2302, %v2286
  %v2847 = vpack.c.b16 %v2303, %v2287
  %v2848 = vpack.c.b16 %v2304, %v2288
  %v2849 = vpack.c.b16 %v2305, %v2289
  %v2850 = vpack.c.b16 %v2306, %v2290
  %v2851 = vpack.c.b16 %v2307, %v2291
  %v2852 = vpack.c.b16 %v2308, %v2292
  %v2853 = vpack.c.b16 %v2309, %v2293
  %v2854 = vpack.c.b16 %v2310, %v2294
  %v2855 = vpack.c.b16 %v2327, %v2311
  %v2856 = vpack.c.b16 %v2328, %v2312
  %v2857 = vpack.c.b16 %v2329, %v2313
  %v2858 = vpack.c.b16 %v2330, %v2314
  %v2859 = vpack.c.b16 %v2331, %v2315
  %v2860 = vpack.c.b16 %v2332, %v2316
  %v2861 = vpack.c.b16 %v2333, %v2317
  %v2862 = vpack.c.b16 %v2334, %v2318
  %v2863 = vpack.c.b16 %v2335, %v2319
  %v2864 = vpack.c.b16 %v2336, %v2320
  %v2865 = vpack.c.b16 %v2337, %v2321
  %v2866 = vpack.c.b16 %v2338, %v2322
  %v2867 = vpack.c.b16 %v2339, %v2323
  %v2868 = vpack.c.b16 %v2340, %v2324
  %v2869 = vpack.c.b16 %v2341, %v2325
  %v2870 = vpack.c.b16 %v2342, %v2326
  %v2871 = vpack.c.b16 %v2359, %v2343
  %v2872 = vpack.c.b16 %v2360, %v2344
  %v2873 = vpack.c.b16 %v2361, %v2345
  %v2874 = vpack.c.b16 %v2362, %v2346
  %v2875 = vpack.c.b16 %v2363, %v2347
  %v2876 = vpack.c.b16 %v2364, %v2348
  %v2877 = vpack.c.b16 %v2365, %v2349
  %v2878 = vpack.c.b16 %v2366, %v2350
  %v2879 = vpack.c.b16 %v2367, %v2351
  %v2880 = vpack.c.b16 %v2368, %v2352
  %v2881 = vpack.c.b16 %v2369, %v2353
  %v2882 = vpack.c.b16 %v2370, %v2354
  %v2883 = vpack.c.b16 %v2371, %v2355
  %v2884 = vpack.c.b16 %v2372, %v2356
  %v2885 = vpack.c.b16 %v2373, %v2357
  %v2886 = vpack.c.b16 %v2374, %v2358
  %3399 = vmatpush.bf16.msra.mxu0 %v2487
  %3400 = vmatpush.bf16.msra.mxu0 %v2471
  %3401 = vmatpush.bf16.msra.mxu0 %v2455
  %3402 = vmatpush.bf16.msra.mxu0 %v2439
  %3403 = vmatpush.bf16.msra.mxu0 %v2423
  %3404 = vmatpush.bf16.msra.mxu0 %v2407
  %3405 = vmatpush.bf16.msra.mxu0 %v2391
  %3406 = vmatpush.bf16.msra.mxu0 %v2375
  %3407 = vmatmul.bf16.gmra.mxu0 %v287
  %v3408 = vpop.f32.mrf.mxu0
  %v3409 = vadd.f32 %v807, %v3408
  %v3410 = vpop.f32.mrf.mxu0
  %3411 = vdwg.mxu0
  %3412 = vmatpush.bf16.msra.mxu0 %v2615
  %3413 = vmatpush.bf16.msra.mxu0 %v2599
  %3414 = vmatpush.bf16.msra.mxu0 %v2583
  %3415 = vmatpush.bf16.msra.mxu0 %v2567
  %3416 = vmatpush.bf16.msra.mxu0 %v2551
  %3417 = vmatpush.bf16.msra.mxu0 %v2535
  %3418 = vmatpush.bf16.msra.mxu0 %v2519
  %3419 = vmatpush.bf16.msra.mxu0 %v2503
  %3420 = vmatmul.bf16.gmra.mxu0 %v288
  %v3421 = vpop.f32.mrf.mxu0
  %v3422 = vadd.f32 %v3409, %v3421
  %v3423 = vpop.f32.mrf.mxu0
  %3424 = vdwg.mxu0
  %3425 = vmatpush.bf16.msra.mxu0 %v2743
  %3426 = vmatpush.bf16.msra.mxu0 %v2727
  %3427 = vmatpush.bf16.msra.mxu0 %v2711
  %3428 = vmatpush.bf16.msra.mxu0 %v2695
  %3429 = vmatpush.bf16.msra.mxu0 %v2679
  %3430 = vmatpush.bf16.msra.mxu0 %v2663
  %3431 = vmatpush.bf16.msra.mxu0 %v2647
  %3432 = vmatpush.bf16.msra.mxu0 %v2631
  %3433 = vmatmul.bf16.gmra.mxu0 %v289
  %v3434 = vpop.f32.mrf.mxu0
  %v3435 = vadd.f32 %v3422, %v3434
  %v3436 = vpop.f32.mrf.mxu0
  %3437 = vdwg.mxu0
  %3438 = vmatpush.bf16.msra.mxu0 %v2871
  %3439 = vmatpush.bf16.msra.mxu0 %v2855
  %3440 = vmatpush.bf16.msra.mxu0 %v2839
  %3441 = vmatpush.bf16.msra.mxu0 %v2823
  %3442 = vmatpush.bf16.msra.mxu0 %v2807
  %3443 = vmatpush.bf16.msra.mxu0 %v2791
  %3444 = vmatpush.bf16.msra.mxu0 %v2775
  %3445 = vmatpush.bf16.msra.mxu0 %v2759
  %3446 = vmatmul.bf16.gmra.mxu0 %v290
  %v3447 = vpop.f32.mrf.mxu0
  %v3448 = vadd.f32 %v3435, %v3447
  %v3449 = vpop.f32.mrf.mxu0
  %3450 = vdwg.mxu0
  %3451 = vmatpush.bf16.msra.mxu0 %v2488
  %3452 = vmatpush.bf16.msra.mxu0 %v2472
  %3453 = vmatpush.bf16.msra.mxu0 %v2456
  %3454 = vmatpush.bf16.msra.mxu0 %v2440
  %3455 = vmatpush.bf16.msra.mxu0 %v2424
  %3456 = vmatpush.bf16.msra.mxu0 %v2408
  %3457 = vmatpush.bf16.msra.mxu0 %v2392
  %3458 = vmatpush.bf16.msra.mxu0 %v2376
  %3459 = vmatmul.bf16.gmra.mxu0 %v287
  %v3460 = vpop.f32.mrf.mxu0
  %v3461 = vadd.f32 %v808, %v3460
  %v3462 = vpop.f32.mrf.mxu0
  %3463 = vdwg.mxu0
  %3464 = vmatpush.bf16.msra.mxu0 %v2616
  %3465 = vmatpush.bf16.msra.mxu0 %v2600
  %3466 = vmatpush.bf16.msra.mxu0 %v2584
  %3467 = vmatpush.bf16.msra.mxu0 %v2568
  %3468 = vmatpush.bf16.msra.mxu0 %v2552
  %3469 = vmatpush.bf16.msra.mxu0 %v2536
  %3470 = vmatpush.bf16.msra.mxu0 %v2520
  %3471 = vmatpush.bf16.msra.mxu0 %v2504
  %3472 = vmatmul.bf16.gmra.mxu0 %v288
  %v3473 = vpop.f32.mrf.mxu0
  %v3474 = vadd.f32 %v3461, %v3473
  %v3475 = vpop.f32.mrf.mxu0
  %3476 = vdwg.mxu0
  %3477 = vmatpush.bf16.msra.mxu0 %v2744
  %3478 = vmatpush.bf16.msra.mxu0 %v2728
  %3479 = vmatpush.bf16.msra.mxu0 %v2712
  %3480 = vmatpush.bf16.msra.mxu0 %v2696
  %3481 = vmatpush.bf16.msra.mxu0 %v2680
  %3482 = vmatpush.bf16.msra.mxu0 %v2664
  %3483 = vmatpush.bf16.msra.mxu0 %v2648
  %3484 = vmatpush.bf16.msra.mxu0 %v2632
  %3485 = vmatmul.bf16.gmra.mxu0 %v289
  %v3486 = vpop.f32.mrf.mxu0
  %v3487 = vadd.f32 %v3474, %v3486
  %v3488 = vpop.f32.mrf.mxu0
  %3489 = vdwg.mxu0
  %3490 = vmatpush.bf16.msra.mxu0 %v2872
  %3491 = vmatpush.bf16.msra.mxu0 %v2856
  %3492 = vmatpush.bf16.msra.mxu0 %v2840
  %3493 = vmatpush.bf16.msra.mxu0 %v2824
  %3494 = vmatpush.bf16.msra.mxu0 %v2808
  %3495 = vmatpush.bf16.msra.mxu0 %v2792
  %3496 = vmatpush.bf16.msra.mxu0 %v2776
  %3497 = vmatpush.bf16.msra.mxu0 %v2760
  %3498 = vmatmul.bf16.gmra.mxu0 %v290
  %v3499 = vpop.f32.mrf.mxu0
  %v3500 = vadd.f32 %v3487, %v3499
  %v3501 = vpop.f32.mrf.mxu0
  %3502 = vdwg.mxu0
  %3503 = vmatpush.bf16.msra.mxu0 %v2489
  %3504 = vmatpush.bf16.msra.mxu0 %v2473
  %3505 = vmatpush.bf16.msra.mxu0 %v2457
  %3506 = vmatpush.bf16.msra.mxu0 %v2441
  %3507 = vmatpush.bf16.msra.mxu0 %v2425
  %3508 = vmatpush.bf16.msra.mxu0 %v2409
  %3509 = vmatpush.bf16.msra.mxu0 %v2393
  %3510 = vmatpush.bf16.msra.mxu0 %v2377
  %3511 = vmatmul.bf16.gmra.mxu0 %v287
  %v3512 = vpop.f32.mrf.mxu0
  %v3513 = vadd.f32 %v809, %v3512
  %v3514 = vpop.f32.mrf.mxu0
  %3515 = vdwg.mxu0
  %3516 = vmatpush.bf16.msra.mxu0 %v2617
  %3517 = vmatpush.bf16.msra.mxu0 %v2601
  %3518 = vmatpush.bf16.msra.mxu0 %v2585
  %3519 = vmatpush.bf16.msra.mxu0 %v2569
  %3520 = vmatpush.bf16.msra.mxu0 %v2553
  %3521 = vmatpush.bf16.msra.mxu0 %v2537
  %3522 = vmatpush.bf16.msra.mxu0 %v2521
  %3523 = vmatpush.bf16.msra.mxu0 %v2505
  %3524 = vmatmul.bf16.gmra.mxu0 %v288
  %v3525 = vpop.f32.mrf.mxu0
  %v3526 = vadd.f32 %v3513, %v3525
  %v3527 = vpop.f32.mrf.mxu0
  %3528 = vdwg.mxu0
  %3529 = vmatpush.bf16.msra.mxu0 %v2745
  %3530 = vmatpush.bf16.msra.mxu0 %v2729
  %3531 = vmatpush.bf16.msra.mxu0 %v2713
  %3532 = vmatpush.bf16.msra.mxu0 %v2697
  %3533 = vmatpush.bf16.msra.mxu0 %v2681
  %3534 = vmatpush.bf16.msra.mxu0 %v2665
  %3535 = vmatpush.bf16.msra.mxu0 %v2649
  %3536 = vmatpush.bf16.msra.mxu0 %v2633
  %3537 = vmatmul.bf16.gmra.mxu0 %v289
  %v3538 = vpop.f32.mrf.mxu0
  %v3539 = vadd.f32 %v3526, %v3538
  %v3540 = vpop.f32.mrf.mxu0
  %3541 = vdwg.mxu0
  %3542 = vmatpush.bf16.msra.mxu0 %v2873
  %3543 = vmatpush.bf16.msra.mxu0 %v2857
  %3544 = vmatpush.bf16.msra.mxu0 %v2841
  %3545 = vmatpush.bf16.msra.mxu0 %v2825
  %3546 = vmatpush.bf16.msra.mxu0 %v2809
  %3547 = vmatpush.bf16.msra.mxu0 %v2793
  %3548 = vmatpush.bf16.msra.mxu0 %v2777
  %3549 = vmatpush.bf16.msra.mxu0 %v2761
  %3550 = vmatmul.bf16.gmra.mxu0 %v290
  %v3551 = vpop.f32.mrf.mxu0
  %v3552 = vadd.f32 %v3539, %v3551
  %v3553 = vpop.f32.mrf.mxu0
  %3554 = vdwg.mxu0
  %3555 = vmatpush.bf16.msra.mxu0 %v2490
  %3556 = vmatpush.bf16.msra.mxu0 %v2474
  %3557 = vmatpush.bf16.msra.mxu0 %v2458
  %3558 = vmatpush.bf16.msra.mxu0 %v2442
  %3559 = vmatpush.bf16.msra.mxu0 %v2426
  %3560 = vmatpush.bf16.msra.mxu0 %v2410
  %3561 = vmatpush.bf16.msra.mxu0 %v2394
  %3562 = vmatpush.bf16.msra.mxu0 %v2378
  %3563 = vmatmul.bf16.gmra.mxu0 %v287
  %v3564 = vpop.f32.mrf.mxu0
  %v3565 = vadd.f32 %v810, %v3564
  %v3566 = vpop.f32.mrf.mxu0
  %3567 = vdwg.mxu0
  %3568 = vmatpush.bf16.msra.mxu0 %v2618
  %3569 = vmatpush.bf16.msra.mxu0 %v2602
  %3570 = vmatpush.bf16.msra.mxu0 %v2586
  %3571 = vmatpush.bf16.msra.mxu0 %v2570
  %3572 = vmatpush.bf16.msra.mxu0 %v2554
  %3573 = vmatpush.bf16.msra.mxu0 %v2538
  %3574 = vmatpush.bf16.msra.mxu0 %v2522
  %3575 = vmatpush.bf16.msra.mxu0 %v2506
  %3576 = vmatmul.bf16.gmra.mxu0 %v288
  %v3577 = vpop.f32.mrf.mxu0
  %v3578 = vadd.f32 %v3565, %v3577
  %v3579 = vpop.f32.mrf.mxu0
  %3580 = vdwg.mxu0
  %3581 = vmatpush.bf16.msra.mxu0 %v2746
  %3582 = vmatpush.bf16.msra.mxu0 %v2730
  %3583 = vmatpush.bf16.msra.mxu0 %v2714
  %3584 = vmatpush.bf16.msra.mxu0 %v2698
  %3585 = vmatpush.bf16.msra.mxu0 %v2682
  %3586 = vmatpush.bf16.msra.mxu0 %v2666
  %3587 = vmatpush.bf16.msra.mxu0 %v2650
  %3588 = vmatpush.bf16.msra.mxu0 %v2634
  %3589 = vmatmul.bf16.gmra.mxu0 %v289
  %v3590 = vpop.f32.mrf.mxu0
  %v3591 = vadd.f32 %v3578, %v3590
  %v3592 = vpop.f32.mrf.mxu0
  %3593 = vdwg.mxu0
  %3594 = vmatpush.bf16.msra.mxu0 %v2874
  %3595 = vmatpush.bf16.msra.mxu0 %v2858
  %3596 = vmatpush.bf16.msra.mxu0 %v2842
  %3597 = vmatpush.bf16.msra.mxu0 %v2826
  %3598 = vmatpush.bf16.msra.mxu0 %v2810
  %3599 = vmatpush.bf16.msra.mxu0 %v2794
  %3600 = vmatpush.bf16.msra.mxu0 %v2778
  %3601 = vmatpush.bf16.msra.mxu0 %v2762
  %3602 = vmatmul.bf16.gmra.mxu0 %v290
  %v3603 = vpop.f32.mrf.mxu0
  %v3604 = vadd.f32 %v3591, %v3603
  %v3605 = vpop.f32.mrf.mxu0
  %3606 = vdwg.mxu0
  %3607 = vmatpush.bf16.msra.mxu0 %v2491
  %3608 = vmatpush.bf16.msra.mxu0 %v2475
  %3609 = vmatpush.bf16.msra.mxu0 %v2459
  %3610 = vmatpush.bf16.msra.mxu0 %v2443
  %3611 = vmatpush.bf16.msra.mxu0 %v2427
  %3612 = vmatpush.bf16.msra.mxu0 %v2411
  %3613 = vmatpush.bf16.msra.mxu0 %v2395
  %3614 = vmatpush.bf16.msra.mxu0 %v2379
  %3615 = vmatmul.bf16.gmra.mxu0 %v287
  %v3616 = vpop.f32.mrf.mxu0
  %v3617 = vadd.f32 %v811, %v3616
  %v3618 = vpop.f32.mrf.mxu0
  %3619 = vdwg.mxu0
  %3620 = vmatpush.bf16.msra.mxu0 %v2619
  %3621 = vmatpush.bf16.msra.mxu0 %v2603
  %3622 = vmatpush.bf16.msra.mxu0 %v2587
  %3623 = vmatpush.bf16.msra.mxu0 %v2571
  %3624 = vmatpush.bf16.msra.mxu0 %v2555
  %3625 = vmatpush.bf16.msra.mxu0 %v2539
  %3626 = vmatpush.bf16.msra.mxu0 %v2523
  %3627 = vmatpush.bf16.msra.mxu0 %v2507
  %3628 = vmatmul.bf16.gmra.mxu0 %v288
  %v3629 = vpop.f32.mrf.mxu0
  %v3630 = vadd.f32 %v3617, %v3629
  %v3631 = vpop.f32.mrf.mxu0
  %3632 = vdwg.mxu0
  %3633 = vmatpush.bf16.msra.mxu0 %v2747
  %3634 = vmatpush.bf16.msra.mxu0 %v2731
  %3635 = vmatpush.bf16.msra.mxu0 %v2715
  %3636 = vmatpush.bf16.msra.mxu0 %v2699
  %3637 = vmatpush.bf16.msra.mxu0 %v2683
  %3638 = vmatpush.bf16.msra.mxu0 %v2667
  %3639 = vmatpush.bf16.msra.mxu0 %v2651
  %3640 = vmatpush.bf16.msra.mxu0 %v2635
  %3641 = vmatmul.bf16.gmra.mxu0 %v289
  %v3642 = vpop.f32.mrf.mxu0
  %v3643 = vadd.f32 %v3630, %v3642
  %v3644 = vpop.f32.mrf.mxu0
  %3645 = vdwg.mxu0
  %3646 = vmatpush.bf16.msra.mxu0 %v2875
  %3647 = vmatpush.bf16.msra.mxu0 %v2859
  %3648 = vmatpush.bf16.msra.mxu0 %v2843
  %3649 = vmatpush.bf16.msra.mxu0 %v2827
  %3650 = vmatpush.bf16.msra.mxu0 %v2811
  %3651 = vmatpush.bf16.msra.mxu0 %v2795
  %3652 = vmatpush.bf16.msra.mxu0 %v2779
  %3653 = vmatpush.bf16.msra.mxu0 %v2763
  %3654 = vmatmul.bf16.gmra.mxu0 %v290
  %v3655 = vpop.f32.mrf.mxu0
  %v3656 = vadd.f32 %v3643, %v3655
  %v3657 = vpop.f32.mrf.mxu0
  %3658 = vdwg.mxu0
  %3659 = vmatpush.bf16.msra.mxu0 %v2492
  %3660 = vmatpush.bf16.msra.mxu0 %v2476
  %3661 = vmatpush.bf16.msra.mxu0 %v2460
  %3662 = vmatpush.bf16.msra.mxu0 %v2444
  %3663 = vmatpush.bf16.msra.mxu0 %v2428
  %3664 = vmatpush.bf16.msra.mxu0 %v2412
  %3665 = vmatpush.bf16.msra.mxu0 %v2396
  %3666 = vmatpush.bf16.msra.mxu0 %v2380
  %3667 = vmatmul.bf16.gmra.mxu0 %v287
  %v3668 = vpop.f32.mrf.mxu0
  %v3669 = vadd.f32 %v812, %v3668
  %v3670 = vpop.f32.mrf.mxu0
  %3671 = vdwg.mxu0
  %3672 = vmatpush.bf16.msra.mxu0 %v2620
  %3673 = vmatpush.bf16.msra.mxu0 %v2604
  %3674 = vmatpush.bf16.msra.mxu0 %v2588
  %3675 = vmatpush.bf16.msra.mxu0 %v2572
  %3676 = vmatpush.bf16.msra.mxu0 %v2556
  %3677 = vmatpush.bf16.msra.mxu0 %v2540
  %3678 = vmatpush.bf16.msra.mxu0 %v2524
  %3679 = vmatpush.bf16.msra.mxu0 %v2508
  %3680 = vmatmul.bf16.gmra.mxu0 %v288
  %v3681 = vpop.f32.mrf.mxu0
  %v3682 = vadd.f32 %v3669, %v3681
  %v3683 = vpop.f32.mrf.mxu0
  %3684 = vdwg.mxu0
  %3685 = vmatpush.bf16.msra.mxu0 %v2748
  %3686 = vmatpush.bf16.msra.mxu0 %v2732
  %3687 = vmatpush.bf16.msra.mxu0 %v2716
  %3688 = vmatpush.bf16.msra.mxu0 %v2700
  %3689 = vmatpush.bf16.msra.mxu0 %v2684
  %3690 = vmatpush.bf16.msra.mxu0 %v2668
  %3691 = vmatpush.bf16.msra.mxu0 %v2652
  %3692 = vmatpush.bf16.msra.mxu0 %v2636
  %3693 = vmatmul.bf16.gmra.mxu0 %v289
  %v3694 = vpop.f32.mrf.mxu0
  %v3695 = vadd.f32 %v3682, %v3694
  %v3696 = vpop.f32.mrf.mxu0
  %3697 = vdwg.mxu0
  %3698 = vmatpush.bf16.msra.mxu0 %v2876
  %3699 = vmatpush.bf16.msra.mxu0 %v2860
  %3700 = vmatpush.bf16.msra.mxu0 %v2844
  %3701 = vmatpush.bf16.msra.mxu0 %v2828
  %3702 = vmatpush.bf16.msra.mxu0 %v2812
  %3703 = vmatpush.bf16.msra.mxu0 %v2796
  %3704 = vmatpush.bf16.msra.mxu0 %v2780
  %3705 = vmatpush.bf16.msra.mxu0 %v2764
  %3706 = vmatmul.bf16.gmra.mxu0 %v290
  %v3707 = vpop.f32.mrf.mxu0
  %v3708 = vadd.f32 %v3695, %v3707
  %v3709 = vpop.f32.mrf.mxu0
  %3710 = vdwg.mxu0
  %3711 = vmatpush.bf16.msra.mxu0 %v2493
  %3712 = vmatpush.bf16.msra.mxu0 %v2477
  %3713 = vmatpush.bf16.msra.mxu0 %v2461
  %3714 = vmatpush.bf16.msra.mxu0 %v2445
  %3715 = vmatpush.bf16.msra.mxu0 %v2429
  %3716 = vmatpush.bf16.msra.mxu0 %v2413
  %3717 = vmatpush.bf16.msra.mxu0 %v2397
  %3718 = vmatpush.bf16.msra.mxu0 %v2381
  %3719 = vmatmul.bf16.gmra.mxu0 %v287
  %v3720 = vpop.f32.mrf.mxu0
  %v3721 = vadd.f32 %v813, %v3720
  %v3722 = vpop.f32.mrf.mxu0
  %3723 = vdwg.mxu0
  %3724 = vmatpush.bf16.msra.mxu0 %v2621
  %3725 = vmatpush.bf16.msra.mxu0 %v2605
  %3726 = vmatpush.bf16.msra.mxu0 %v2589
  %3727 = vmatpush.bf16.msra.mxu0 %v2573
  %3728 = vmatpush.bf16.msra.mxu0 %v2557
  %3729 = vmatpush.bf16.msra.mxu0 %v2541
  %3730 = vmatpush.bf16.msra.mxu0 %v2525
  %3731 = vmatpush.bf16.msra.mxu0 %v2509
  %3732 = vmatmul.bf16.gmra.mxu0 %v288
  %v3733 = vpop.f32.mrf.mxu0
  %v3734 = vadd.f32 %v3721, %v3733
  %v3735 = vpop.f32.mrf.mxu0
  %3736 = vdwg.mxu0
  %3737 = vmatpush.bf16.msra.mxu0 %v2749
  %3738 = vmatpush.bf16.msra.mxu0 %v2733
  %3739 = vmatpush.bf16.msra.mxu0 %v2717
  %3740 = vmatpush.bf16.msra.mxu0 %v2701
  %3741 = vmatpush.bf16.msra.mxu0 %v2685
  %3742 = vmatpush.bf16.msra.mxu0 %v2669
  %3743 = vmatpush.bf16.msra.mxu0 %v2653
  %3744 = vmatpush.bf16.msra.mxu0 %v2637
  %3745 = vmatmul.bf16.gmra.mxu0 %v289
  %v3746 = vpop.f32.mrf.mxu0
  %v3747 = vadd.f32 %v3734, %v3746
  %v3748 = vpop.f32.mrf.mxu0
  %3749 = vdwg.mxu0
  %3750 = vmatpush.bf16.msra.mxu0 %v2877
  %3751 = vmatpush.bf16.msra.mxu0 %v2861
  %3752 = vmatpush.bf16.msra.mxu0 %v2845
  %3753 = vmatpush.bf16.msra.mxu0 %v2829
  %3754 = vmatpush.bf16.msra.mxu0 %v2813
  %3755 = vmatpush.bf16.msra.mxu0 %v2797
  %3756 = vmatpush.bf16.msra.mxu0 %v2781
  %3757 = vmatpush.bf16.msra.mxu0 %v2765
  %3758 = vmatmul.bf16.gmra.mxu0 %v290
  %v3759 = vpop.f32.mrf.mxu0
  %v3760 = vadd.f32 %v3747, %v3759
  %v3761 = vpop.f32.mrf.mxu0
  %3762 = vdwg.mxu0
  %3763 = vmatpush.bf16.msra.mxu0 %v2494
  %3764 = vmatpush.bf16.msra.mxu0 %v2478
  %3765 = vmatpush.bf16.msra.mxu0 %v2462
  %3766 = vmatpush.bf16.msra.mxu0 %v2446
  %3767 = vmatpush.bf16.msra.mxu0 %v2430
  %3768 = vmatpush.bf16.msra.mxu0 %v2414
  %3769 = vmatpush.bf16.msra.mxu0 %v2398
  %3770 = vmatpush.bf16.msra.mxu0 %v2382
  %3771 = vmatmul.bf16.gmra.mxu0 %v287
  %v3772 = vpop.f32.mrf.mxu0
  %v3773 = vadd.f32 %v814, %v3772
  %v3774 = vpop.f32.mrf.mxu0
  %3775 = vdwg.mxu0
  %3776 = vmatpush.bf16.msra.mxu0 %v2622
  %3777 = vmatpush.bf16.msra.mxu0 %v2606
  %3778 = vmatpush.bf16.msra.mxu0 %v2590
  %3779 = vmatpush.bf16.msra.mxu0 %v2574
  %3780 = vmatpush.bf16.msra.mxu0 %v2558
  %3781 = vmatpush.bf16.msra.mxu0 %v2542
  %3782 = vmatpush.bf16.msra.mxu0 %v2526
  %3783 = vmatpush.bf16.msra.mxu0 %v2510
  %3784 = vmatmul.bf16.gmra.mxu0 %v288
  %v3785 = vpop.f32.mrf.mxu0
  %v3786 = vadd.f32 %v3773, %v3785
  %v3787 = vpop.f32.mrf.mxu0
  %3788 = vdwg.mxu0
  %3789 = vmatpush.bf16.msra.mxu0 %v2750
  %3790 = vmatpush.bf16.msra.mxu0 %v2734
  %3791 = vmatpush.bf16.msra.mxu0 %v2718
  %3792 = vmatpush.bf16.msra.mxu0 %v2702
  %3793 = vmatpush.bf16.msra.mxu0 %v2686
  %3794 = vmatpush.bf16.msra.mxu0 %v2670
  %3795 = vmatpush.bf16.msra.mxu0 %v2654
  %3796 = vmatpush.bf16.msra.mxu0 %v2638
  %3797 = vmatmul.bf16.gmra.mxu0 %v289
  %v3798 = vpop.f32.mrf.mxu0
  %v3799 = vadd.f32 %v3786, %v3798
  %v3800 = vpop.f32.mrf.mxu0
  %3801 = vdwg.mxu0
  %3802 = vmatpush.bf16.msra.mxu0 %v2878
  %3803 = vmatpush.bf16.msra.mxu0 %v2862
  %3804 = vmatpush.bf16.msra.mxu0 %v2846
  %3805 = vmatpush.bf16.msra.mxu0 %v2830
  %3806 = vmatpush.bf16.msra.mxu0 %v2814
  %3807 = vmatpush.bf16.msra.mxu0 %v2798
  %3808 = vmatpush.bf16.msra.mxu0 %v2782
  %3809 = vmatpush.bf16.msra.mxu0 %v2766
  %3810 = vmatmul.bf16.gmra.mxu0 %v290
  %v3811 = vpop.f32.mrf.mxu0
  %v3812 = vadd.f32 %v3799, %v3811
  %v3813 = vpop.f32.mrf.mxu0
  %3814 = vdwg.mxu0
  %3815 = vmatpush.bf16.msra.mxu0 %v2495
  %3816 = vmatpush.bf16.msra.mxu0 %v2479
  %3817 = vmatpush.bf16.msra.mxu0 %v2463
  %3818 = vmatpush.bf16.msra.mxu0 %v2447
  %3819 = vmatpush.bf16.msra.mxu0 %v2431
  %3820 = vmatpush.bf16.msra.mxu0 %v2415
  %3821 = vmatpush.bf16.msra.mxu0 %v2399
  %3822 = vmatpush.bf16.msra.mxu0 %v2383
  %3823 = vmatmul.bf16.gmra.mxu0 %v287
  %v3824 = vpop.f32.mrf.mxu0
  %v3825 = vadd.f32 %v815, %v3824
  %v3826 = vpop.f32.mrf.mxu0
  %3827 = vdwg.mxu0
  %3828 = vmatpush.bf16.msra.mxu0 %v2623
  %3829 = vmatpush.bf16.msra.mxu0 %v2607
  %3830 = vmatpush.bf16.msra.mxu0 %v2591
  %3831 = vmatpush.bf16.msra.mxu0 %v2575
  %3832 = vmatpush.bf16.msra.mxu0 %v2559
  %3833 = vmatpush.bf16.msra.mxu0 %v2543
  %3834 = vmatpush.bf16.msra.mxu0 %v2527
  %3835 = vmatpush.bf16.msra.mxu0 %v2511
  %3836 = vmatmul.bf16.gmra.mxu0 %v288
  %v3837 = vpop.f32.mrf.mxu0
  %v3838 = vadd.f32 %v3825, %v3837
  %v3839 = vpop.f32.mrf.mxu0
  %3840 = vdwg.mxu0
  %3841 = vmatpush.bf16.msra.mxu0 %v2751
  %3842 = vmatpush.bf16.msra.mxu0 %v2735
  %3843 = vmatpush.bf16.msra.mxu0 %v2719
  %3844 = vmatpush.bf16.msra.mxu0 %v2703
  %3845 = vmatpush.bf16.msra.mxu0 %v2687
  %3846 = vmatpush.bf16.msra.mxu0 %v2671
  %3847 = vmatpush.bf16.msra.mxu0 %v2655
  %3848 = vmatpush.bf16.msra.mxu0 %v2639
  %3849 = vmatmul.bf16.gmra.mxu0 %v289
  %v3850 = vpop.f32.mrf.mxu0
  %v3851 = vadd.f32 %v3838, %v3850
  %v3852 = vpop.f32.mrf.mxu0
  %3853 = vdwg.mxu0
  %3854 = vmatpush.bf16.msra.mxu0 %v2879
  %3855 = vmatpush.bf16.msra.mxu0 %v2863
  %3856 = vmatpush.bf16.msra.mxu0 %v2847
  %3857 = vmatpush.bf16.msra.mxu0 %v2831
  %3858 = vmatpush.bf16.msra.mxu0 %v2815
  %3859 = vmatpush.bf16.msra.mxu0 %v2799
  %3860 = vmatpush.bf16.msra.mxu0 %v2783
  %3861 = vmatpush.bf16.msra.mxu0 %v2767
  %3862 = vmatmul.bf16.gmra.mxu0 %v290
  %v3863 = vpop.f32.mrf.mxu0
  %v3864 = vadd.f32 %v3851, %v3863
  %v3865 = vpop.f32.mrf.mxu0
  %3866 = vdwg.mxu0
  %3867 = vmatpush.bf16.msra.mxu0 %v2496
  %3868 = vmatpush.bf16.msra.mxu0 %v2480
  %3869 = vmatpush.bf16.msra.mxu0 %v2464
  %3870 = vmatpush.bf16.msra.mxu0 %v2448
  %3871 = vmatpush.bf16.msra.mxu0 %v2432
  %3872 = vmatpush.bf16.msra.mxu0 %v2416
  %3873 = vmatpush.bf16.msra.mxu0 %v2400
  %3874 = vmatpush.bf16.msra.mxu0 %v2384
  %3875 = vmatmul.bf16.gmra.mxu0 %v287
  %v3876 = vpop.f32.mrf.mxu0
  %v3877 = vadd.f32 %v816, %v3876
  %v3878 = vpop.f32.mrf.mxu0
  %3879 = vdwg.mxu0
  %3880 = vmatpush.bf16.msra.mxu0 %v2624
  %3881 = vmatpush.bf16.msra.mxu0 %v2608
  %3882 = vmatpush.bf16.msra.mxu0 %v2592
  %3883 = vmatpush.bf16.msra.mxu0 %v2576
  %3884 = vmatpush.bf16.msra.mxu0 %v2560
  %3885 = vmatpush.bf16.msra.mxu0 %v2544
  %3886 = vmatpush.bf16.msra.mxu0 %v2528
  %3887 = vmatpush.bf16.msra.mxu0 %v2512
  %3888 = vmatmul.bf16.gmra.mxu0 %v288
  %v3889 = vpop.f32.mrf.mxu0
  %v3890 = vadd.f32 %v3877, %v3889
  %v3891 = vpop.f32.mrf.mxu0
  %3892 = vdwg.mxu0
  %3893 = vmatpush.bf16.msra.mxu0 %v2752
  %3894 = vmatpush.bf16.msra.mxu0 %v2736
  %3895 = vmatpush.bf16.msra.mxu0 %v2720
  %3896 = vmatpush.bf16.msra.mxu0 %v2704
  %3897 = vmatpush.bf16.msra.mxu0 %v2688
  %3898 = vmatpush.bf16.msra.mxu0 %v2672
  %3899 = vmatpush.bf16.msra.mxu0 %v2656
  %3900 = vmatpush.bf16.msra.mxu0 %v2640
  %3901 = vmatmul.bf16.gmra.mxu0 %v289
  %v3902 = vpop.f32.mrf.mxu0
  %v3903 = vadd.f32 %v3890, %v3902
  %v3904 = vpop.f32.mrf.mxu0
  %3905 = vdwg.mxu0
  %3906 = vmatpush.bf16.msra.mxu0 %v2880
  %3907 = vmatpush.bf16.msra.mxu0 %v2864
  %3908 = vmatpush.bf16.msra.mxu0 %v2848
  %3909 = vmatpush.bf16.msra.mxu0 %v2832
  %3910 = vmatpush.bf16.msra.mxu0 %v2816
  %3911 = vmatpush.bf16.msra.mxu0 %v2800
  %3912 = vmatpush.bf16.msra.mxu0 %v2784
  %3913 = vmatpush.bf16.msra.mxu0 %v2768
  %3914 = vmatmul.bf16.gmra.mxu0 %v290
  %v3915 = vpop.f32.mrf.mxu0
  %v3916 = vadd.f32 %v3903, %v3915
  %v3917 = vpop.f32.mrf.mxu0
  %3918 = vdwg.mxu0
  %3919 = vmatpush.bf16.msra.mxu0 %v2497
  %3920 = vmatpush.bf16.msra.mxu0 %v2481
  %3921 = vmatpush.bf16.msra.mxu0 %v2465
  %3922 = vmatpush.bf16.msra.mxu0 %v2449
  %3923 = vmatpush.bf16.msra.mxu0 %v2433
  %3924 = vmatpush.bf16.msra.mxu0 %v2417
  %3925 = vmatpush.bf16.msra.mxu0 %v2401
  %3926 = vmatpush.bf16.msra.mxu0 %v2385
  %3927 = vmatmul.bf16.gmra.mxu0 %v287
  %v3928 = vpop.f32.mrf.mxu0
  %v3929 = vadd.f32 %v817, %v3928
  %v3930 = vpop.f32.mrf.mxu0
  %3931 = vdwg.mxu0
  %3932 = vmatpush.bf16.msra.mxu0 %v2625
  %3933 = vmatpush.bf16.msra.mxu0 %v2609
  %3934 = vmatpush.bf16.msra.mxu0 %v2593
  %3935 = vmatpush.bf16.msra.mxu0 %v2577
  %3936 = vmatpush.bf16.msra.mxu0 %v2561
  %3937 = vmatpush.bf16.msra.mxu0 %v2545
  %3938 = vmatpush.bf16.msra.mxu0 %v2529
  %3939 = vmatpush.bf16.msra.mxu0 %v2513
  %3940 = vmatmul.bf16.gmra.mxu0 %v288
  %v3941 = vpop.f32.mrf.mxu0
  %v3942 = vadd.f32 %v3929, %v3941
  %v3943 = vpop.f32.mrf.mxu0
  %3944 = vdwg.mxu0
  %3945 = vmatpush.bf16.msra.mxu0 %v2753
  %3946 = vmatpush.bf16.msra.mxu0 %v2737
  %3947 = vmatpush.bf16.msra.mxu0 %v2721
  %3948 = vmatpush.bf16.msra.mxu0 %v2705
  %3949 = vmatpush.bf16.msra.mxu0 %v2689
  %3950 = vmatpush.bf16.msra.mxu0 %v2673
  %3951 = vmatpush.bf16.msra.mxu0 %v2657
  %3952 = vmatpush.bf16.msra.mxu0 %v2641
  %3953 = vmatmul.bf16.gmra.mxu0 %v289
  %v3954 = vpop.f32.mrf.mxu0
  %v3955 = vadd.f32 %v3942, %v3954
  %v3956 = vpop.f32.mrf.mxu0
  %3957 = vdwg.mxu0
  %3958 = vmatpush.bf16.msra.mxu0 %v2881
  %3959 = vmatpush.bf16.msra.mxu0 %v2865
  %3960 = vmatpush.bf16.msra.mxu0 %v2849
  %3961 = vmatpush.bf16.msra.mxu0 %v2833
  %3962 = vmatpush.bf16.msra.mxu0 %v2817
  %3963 = vmatpush.bf16.msra.mxu0 %v2801
  %3964 = vmatpush.bf16.msra.mxu0 %v2785
  %3965 = vmatpush.bf16.msra.mxu0 %v2769
  %3966 = vmatmul.bf16.gmra.mxu0 %v290
  %v3967 = vpop.f32.mrf.mxu0
  %v3968 = vadd.f32 %v3955, %v3967
  %v3969 = vpop.f32.mrf.mxu0
  %3970 = vdwg.mxu0
  %3971 = vmatpush.bf16.msra.mxu0 %v2498
  %3972 = vmatpush.bf16.msra.mxu0 %v2482
  %3973 = vmatpush.bf16.msra.mxu0 %v2466
  %3974 = vmatpush.bf16.msra.mxu0 %v2450
  %3975 = vmatpush.bf16.msra.mxu0 %v2434
  %3976 = vmatpush.bf16.msra.mxu0 %v2418
  %3977 = vmatpush.bf16.msra.mxu0 %v2402
  %3978 = vmatpush.bf16.msra.mxu0 %v2386
  %3979 = vmatmul.bf16.gmra.mxu0 %v287
  %v3980 = vpop.f32.mrf.mxu0
  %v3981 = vadd.f32 %v818, %v3980
  %v3982 = vpop.f32.mrf.mxu0
  %3983 = vdwg.mxu0
  %3984 = vmatpush.bf16.msra.mxu0 %v2626
  %3985 = vmatpush.bf16.msra.mxu0 %v2610
  %3986 = vmatpush.bf16.msra.mxu0 %v2594
  %3987 = vmatpush.bf16.msra.mxu0 %v2578
  %3988 = vmatpush.bf16.msra.mxu0 %v2562
  %3989 = vmatpush.bf16.msra.mxu0 %v2546
  %3990 = vmatpush.bf16.msra.mxu0 %v2530
  %3991 = vmatpush.bf16.msra.mxu0 %v2514
  %3992 = vmatmul.bf16.gmra.mxu0 %v288
  %v3993 = vpop.f32.mrf.mxu0
  %v3994 = vadd.f32 %v3981, %v3993
  %v3995 = vpop.f32.mrf.mxu0
  %3996 = vdwg.mxu0
  %3997 = vmatpush.bf16.msra.mxu0 %v2754
  %3998 = vmatpush.bf16.msra.mxu0 %v2738
  %3999 = vmatpush.bf16.msra.mxu0 %v2722
  %4000 = vmatpush.bf16.msra.mxu0 %v2706
  %4001 = vmatpush.bf16.msra.mxu0 %v2690
  %4002 = vmatpush.bf16.msra.mxu0 %v2674
  %4003 = vmatpush.bf16.msra.mxu0 %v2658
  %4004 = vmatpush.bf16.msra.mxu0 %v2642
  %4005 = vmatmul.bf16.gmra.mxu0 %v289
  %v4006 = vpop.f32.mrf.mxu0
  %v4007 = vadd.f32 %v3994, %v4006
  %v4008 = vpop.f32.mrf.mxu0
  %4009 = vdwg.mxu0
  %4010 = vmatpush.bf16.msra.mxu0 %v2882
  %4011 = vmatpush.bf16.msra.mxu0 %v2866
  %4012 = vmatpush.bf16.msra.mxu0 %v2850
  %4013 = vmatpush.bf16.msra.mxu0 %v2834
  %4014 = vmatpush.bf16.msra.mxu0 %v2818
  %4015 = vmatpush.bf16.msra.mxu0 %v2802
  %4016 = vmatpush.bf16.msra.mxu0 %v2786
  %4017 = vmatpush.bf16.msra.mxu0 %v2770
  %4018 = vmatmul.bf16.gmra.mxu0 %v290
  %v4019 = vpop.f32.mrf.mxu0
  %v4020 = vadd.f32 %v4007, %v4019
  %v4021 = vpop.f32.mrf.mxu0
  %4022 = vdwg.mxu0
  %4023 = vmatpush.bf16.msra.mxu0 %v2499
  %4024 = vmatpush.bf16.msra.mxu0 %v2483
  %4025 = vmatpush.bf16.msra.mxu0 %v2467
  %4026 = vmatpush.bf16.msra.mxu0 %v2451
  %4027 = vmatpush.bf16.msra.mxu0 %v2435
  %4028 = vmatpush.bf16.msra.mxu0 %v2419
  %4029 = vmatpush.bf16.msra.mxu0 %v2403
  %4030 = vmatpush.bf16.msra.mxu0 %v2387
  %4031 = vmatmul.bf16.gmra.mxu0 %v287
  %v4032 = vpop.f32.mrf.mxu0
  %v4033 = vadd.f32 %v819, %v4032
  %v4034 = vpop.f32.mrf.mxu0
  %4035 = vdwg.mxu0
  %4036 = vmatpush.bf16.msra.mxu0 %v2627
  %4037 = vmatpush.bf16.msra.mxu0 %v2611
  %4038 = vmatpush.bf16.msra.mxu0 %v2595
  %4039 = vmatpush.bf16.msra.mxu0 %v2579
  %4040 = vmatpush.bf16.msra.mxu0 %v2563
  %4041 = vmatpush.bf16.msra.mxu0 %v2547
  %4042 = vmatpush.bf16.msra.mxu0 %v2531
  %4043 = vmatpush.bf16.msra.mxu0 %v2515
  %4044 = vmatmul.bf16.gmra.mxu0 %v288
  %v4045 = vpop.f32.mrf.mxu0
  %v4046 = vadd.f32 %v4033, %v4045
  %v4047 = vpop.f32.mrf.mxu0
  %4048 = vdwg.mxu0
  %4049 = vmatpush.bf16.msra.mxu0 %v2755
  %4050 = vmatpush.bf16.msra.mxu0 %v2739
  %4051 = vmatpush.bf16.msra.mxu0 %v2723
  %4052 = vmatpush.bf16.msra.mxu0 %v2707
  %4053 = vmatpush.bf16.msra.mxu0 %v2691
  %4054 = vmatpush.bf16.msra.mxu0 %v2675
  %4055 = vmatpush.bf16.msra.mxu0 %v2659
  %4056 = vmatpush.bf16.msra.mxu0 %v2643
  %4057 = vmatmul.bf16.gmra.mxu0 %v289
  %v4058 = vpop.f32.mrf.mxu0
  %v4059 = vadd.f32 %v4046, %v4058
  %v4060 = vpop.f32.mrf.mxu0
  %4061 = vdwg.mxu0
  %4062 = vmatpush.bf16.msra.mxu0 %v2883
  %4063 = vmatpush.bf16.msra.mxu0 %v2867
  %4064 = vmatpush.bf16.msra.mxu0 %v2851
  %4065 = vmatpush.bf16.msra.mxu0 %v2835
  %4066 = vmatpush.bf16.msra.mxu0 %v2819
  %4067 = vmatpush.bf16.msra.mxu0 %v2803
  %4068 = vmatpush.bf16.msra.mxu0 %v2787
  %4069 = vmatpush.bf16.msra.mxu0 %v2771
  %4070 = vmatmul.bf16.gmra.mxu0 %v290
  %v4071 = vpop.f32.mrf.mxu0
  %v4072 = vadd.f32 %v4059, %v4071
  %v4073 = vpop.f32.mrf.mxu0
  %4074 = vdwg.mxu0
  %4075 = vmatpush.bf16.msra.mxu0 %v2500
  %4076 = vmatpush.bf16.msra.mxu0 %v2484
  %4077 = vmatpush.bf16.msra.mxu0 %v2468
  %4078 = vmatpush.bf16.msra.mxu0 %v2452
  %4079 = vmatpush.bf16.msra.mxu0 %v2436
  %4080 = vmatpush.bf16.msra.mxu0 %v2420
  %4081 = vmatpush.bf16.msra.mxu0 %v2404
  %4082 = vmatpush.bf16.msra.mxu0 %v2388
  %4083 = vmatmul.bf16.gmra.mxu0 %v287
  %v4084 = vpop.f32.mrf.mxu0
  %v4085 = vadd.f32 %v820, %v4084
  %v4086 = vpop.f32.mrf.mxu0
  %4087 = vdwg.mxu0
  %4088 = vmatpush.bf16.msra.mxu0 %v2628
  %4089 = vmatpush.bf16.msra.mxu0 %v2612
  %4090 = vmatpush.bf16.msra.mxu0 %v2596
  %4091 = vmatpush.bf16.msra.mxu0 %v2580
  %4092 = vmatpush.bf16.msra.mxu0 %v2564
  %4093 = vmatpush.bf16.msra.mxu0 %v2548
  %4094 = vmatpush.bf16.msra.mxu0 %v2532
  %4095 = vmatpush.bf16.msra.mxu0 %v2516
  %4096 = vmatmul.bf16.gmra.mxu0 %v288
  %v4097 = vpop.f32.mrf.mxu0
  %v4098 = vadd.f32 %v4085, %v4097
  %v4099 = vpop.f32.mrf.mxu0
  %4100 = vdwg.mxu0
  %4101 = vmatpush.bf16.msra.mxu0 %v2756
  %4102 = vmatpush.bf16.msra.mxu0 %v2740
  %4103 = vmatpush.bf16.msra.mxu0 %v2724
  %4104 = vmatpush.bf16.msra.mxu0 %v2708
  %4105 = vmatpush.bf16.msra.mxu0 %v2692
  %4106 = vmatpush.bf16.msra.mxu0 %v2676
  %4107 = vmatpush.bf16.msra.mxu0 %v2660
  %4108 = vmatpush.bf16.msra.mxu0 %v2644
  %4109 = vmatmul.bf16.gmra.mxu0 %v289
  %v4110 = vpop.f32.mrf.mxu0
  %v4111 = vadd.f32 %v4098, %v4110
  %v4112 = vpop.f32.mrf.mxu0
  %4113 = vdwg.mxu0
  %4114 = vmatpush.bf16.msra.mxu0 %v2884
  %4115 = vmatpush.bf16.msra.mxu0 %v2868
  %4116 = vmatpush.bf16.msra.mxu0 %v2852
  %4117 = vmatpush.bf16.msra.mxu0 %v2836
  %4118 = vmatpush.bf16.msra.mxu0 %v2820
  %4119 = vmatpush.bf16.msra.mxu0 %v2804
  %4120 = vmatpush.bf16.msra.mxu0 %v2788
  %4121 = vmatpush.bf16.msra.mxu0 %v2772
  %4122 = vmatmul.bf16.gmra.mxu0 %v290
  %v4123 = vpop.f32.mrf.mxu0
  %v4124 = vadd.f32 %v4111, %v4123
  %v4125 = vpop.f32.mrf.mxu0
  %4126 = vdwg.mxu0
  %4127 = vmatpush.bf16.msra.mxu0 %v2501
  %4128 = vmatpush.bf16.msra.mxu0 %v2485
  %4129 = vmatpush.bf16.msra.mxu0 %v2469
  %4130 = vmatpush.bf16.msra.mxu0 %v2453
  %4131 = vmatpush.bf16.msra.mxu0 %v2437
  %4132 = vmatpush.bf16.msra.mxu0 %v2421
  %4133 = vmatpush.bf16.msra.mxu0 %v2405
  %4134 = vmatpush.bf16.msra.mxu0 %v2389
  %4135 = vmatmul.bf16.gmra.mxu0 %v287
  %v4136 = vpop.f32.mrf.mxu0
  %v4137 = vadd.f32 %v821, %v4136
  %v4138 = vpop.f32.mrf.mxu0
  %4139 = vdwg.mxu0
  %4140 = vmatpush.bf16.msra.mxu0 %v2629
  %4141 = vmatpush.bf16.msra.mxu0 %v2613
  %4142 = vmatpush.bf16.msra.mxu0 %v2597
  %4143 = vmatpush.bf16.msra.mxu0 %v2581
  %4144 = vmatpush.bf16.msra.mxu0 %v2565
  %4145 = vmatpush.bf16.msra.mxu0 %v2549
  %4146 = vmatpush.bf16.msra.mxu0 %v2533
  %4147 = vmatpush.bf16.msra.mxu0 %v2517
  %4148 = vmatmul.bf16.gmra.mxu0 %v288
  %v4149 = vpop.f32.mrf.mxu0
  %v4150 = vadd.f32 %v4137, %v4149
  %v4151 = vpop.f32.mrf.mxu0
  %4152 = vdwg.mxu0
  %4153 = vmatpush.bf16.msra.mxu0 %v2757
  %4154 = vmatpush.bf16.msra.mxu0 %v2741
  %4155 = vmatpush.bf16.msra.mxu0 %v2725
  %4156 = vmatpush.bf16.msra.mxu0 %v2709
  %4157 = vmatpush.bf16.msra.mxu0 %v2693
  %4158 = vmatpush.bf16.msra.mxu0 %v2677
  %4159 = vmatpush.bf16.msra.mxu0 %v2661
  %4160 = vmatpush.bf16.msra.mxu0 %v2645
  %4161 = vmatmul.bf16.gmra.mxu0 %v289
  %v4162 = vpop.f32.mrf.mxu0
  %v4163 = vadd.f32 %v4150, %v4162
  %v4164 = vpop.f32.mrf.mxu0
  %4165 = vdwg.mxu0
  %4166 = vmatpush.bf16.msra.mxu0 %v2885
  %4167 = vmatpush.bf16.msra.mxu0 %v2869
  %4168 = vmatpush.bf16.msra.mxu0 %v2853
  %4169 = vmatpush.bf16.msra.mxu0 %v2837
  %4170 = vmatpush.bf16.msra.mxu0 %v2821
  %4171 = vmatpush.bf16.msra.mxu0 %v2805
  %4172 = vmatpush.bf16.msra.mxu0 %v2789
  %4173 = vmatpush.bf16.msra.mxu0 %v2773
  %4174 = vmatmul.bf16.gmra.mxu0 %v290
  %v4175 = vpop.f32.mrf.mxu0
  %v4176 = vadd.f32 %v4163, %v4175
  %v4177 = vpop.f32.mrf.mxu0
  %4178 = vdwg.mxu0
  %4179 = vmatpush.bf16.msra.mxu0 %v2502
  %4180 = vmatpush.bf16.msra.mxu0 %v2486
  %4181 = vmatpush.bf16.msra.mxu0 %v2470
  %4182 = vmatpush.bf16.msra.mxu0 %v2454
  %4183 = vmatpush.bf16.msra.mxu0 %v2438
  %4184 = vmatpush.bf16.msra.mxu0 %v2422
  %4185 = vmatpush.bf16.msra.mxu0 %v2406
  %4186 = vmatpush.bf16.msra.mxu0 %v2390
  %4187 = vmatmul.bf16.gmra.mxu0 %v287
  %v4188 = vpop.f32.mrf.mxu0
  %v4189 = vadd.f32 %v822, %v4188
  %v4190 = vpop.f32.mrf.mxu0
  %4191 = vdwg.mxu0
  %4192 = vmatpush.bf16.msra.mxu0 %v2630
  %4193 = vmatpush.bf16.msra.mxu0 %v2614
  %4194 = vmatpush.bf16.msra.mxu0 %v2598
  %4195 = vmatpush.bf16.msra.mxu0 %v2582
  %4196 = vmatpush.bf16.msra.mxu0 %v2566
  %4197 = vmatpush.bf16.msra.mxu0 %v2550
  %4198 = vmatpush.bf16.msra.mxu0 %v2534
  %4199 = vmatpush.bf16.msra.mxu0 %v2518
  %4200 = vmatmul.bf16.gmra.mxu0 %v288
  %v4201 = vpop.f32.mrf.mxu0
  %v4202 = vadd.f32 %v4189, %v4201
  %v4203 = vpop.f32.mrf.mxu0
  %4204 = vdwg.mxu0
  %4205 = vmatpush.bf16.msra.mxu0 %v2758
  %4206 = vmatpush.bf16.msra.mxu0 %v2742
  %4207 = vmatpush.bf16.msra.mxu0 %v2726
  %4208 = vmatpush.bf16.msra.mxu0 %v2710
  %4209 = vmatpush.bf16.msra.mxu0 %v2694
  %4210 = vmatpush.bf16.msra.mxu0 %v2678
  %4211 = vmatpush.bf16.msra.mxu0 %v2662
  %4212 = vmatpush.bf16.msra.mxu0 %v2646
  %4213 = vmatmul.bf16.gmra.mxu0 %v289
  %v4214 = vpop.f32.mrf.mxu0
  %v4215 = vadd.f32 %v4202, %v4214
  %v4216 = vpop.f32.mrf.mxu0
  %4217 = vdwg.mxu0
  %4218 = vmatpush.bf16.msra.mxu0 %v2886
  %4219 = vmatpush.bf16.msra.mxu0 %v2870
  %4220 = vmatpush.bf16.msra.mxu0 %v2854
  %4221 = vmatpush.bf16.msra.mxu0 %v2838
  %4222 = vmatpush.bf16.msra.mxu0 %v2822
  %4223 = vmatpush.bf16.msra.mxu0 %v2806
  %4224 = vmatpush.bf16.msra.mxu0 %v2790
  %4225 = vmatpush.bf16.msra.mxu0 %v2774
  %4226 = vmatmul.bf16.gmra.mxu0 %v290
  %v4227 = vpop.f32.mrf.mxu0
  %v4228 = vadd.f32 %v4215, %v4227
  %v4229 = vpop.f32.mrf.mxu0
  %4230 = vdwg.mxu0
  %v4231 = vpack.c.bf16 %v3500, %v3448
  %v4232 = vpack.c.bf16 %v3604, %v3552
  %v4233 = vpack.c.bf16 %v3708, %v3656
  %v4234 = vpack.c.bf16 %v3812, %v3760
  %v4235 = vpack.c.bf16 %v3916, %v3864
  %v4236 = vpack.c.bf16 %v4020, %v3968
  %v4237 = vpack.c.bf16 %v4124, %v4072
  %v4238 = vpack.c.bf16 %v4228, %v4176
  %v4247 = vrot.slane %v4231, 3
  %v4248 = vrot.slane %v4232, 6
  %v4249 = vrot.slane %v4232, 1
  %v4250 = vrot.slane %v4233, 4
  %v4251 = vrot.slane %v4233, 7
  %v4252 = vrot.slane %v4234, 2
  %v4253 = vrot.slane %v4234, 5
  %v4254 = vrot.slane %v4235, 3
  %v4255 = vrot.slane %v4236, 6
  %v4256 = vrot.slane %v4236, 1
  %v4257 = vrot.slane %v4237, 4
  %v4258 = vrot.slane %v4237, 7
  %v4259 = vrot.slane %v4238, 2
  %v4260 = vrot.slane %v4238, 5
  %vm4261 = vcmask 1040384
  %v4264 = vsel %vm4261, %v4231, %v4247
  %vm4265 = vcmask 1042434
  %v4268 = vsel %vm4265, %v4248, %v4249
  %vm4269 = vcmask 1041408
  %v4270 = vsel %vm4269, %v4264, %v4268
  %vm4271 = vcmask 1044484
  %v4274 = vsel %vm4271, %v4250, %v4251
  %vm4275 = vcmask 1046534
  %v4278 = vsel %vm4275, %v4252, %v4253
  %vm4279 = vcmask 1045508
  %v4280 = vsel %vm4279, %v4274, %v4278
  %vm4281 = vcmask 1043456
  %v4282 = vsel %vm4281, %v4270, %v4280
  %v4285 = vsel %vm4261, %v4235, %v4254
  %v4288 = vsel %vm4265, %v4255, %v4256
  %v4289 = vsel %vm4269, %v4285, %v4288
  %v4292 = vsel %vm4271, %v4257, %v4258
  %v4295 = vsel %vm4275, %v4259, %v4260
  %v4296 = vsel %vm4279, %v4292, %v4295
  %v4297 = vsel %vm4281, %v4289, %v4296
  %4300 = vst [vmem:[%s5] sm:$0xff] %v4282
  %4301 = vst [vmem:[%s5 + $0x8] sm:$0xff] %v4297
  // Predicated region
  $region22: #{generator_forward.5} parent=0 // pred_check
    _
  $region23: #{generator_forward.5} parent=0 // pred_check_branch
    %4303 = sbr.rel (0) target = $region25
  $region24: #{generator_forward.5} parent=0 // pred_region
    _
  $region25: #{generator_forward.5} parent=0 // pred_fallthru
    _
  // Predicated region
  $region26: #{generator_forward.5} parent=0 // pred_check
    _
  $region27: #{generator_forward.5} parent=0 // pred_check_branch
    %4305 = sbr.rel (0) target = $region29
  $region28: #{generator_forward.5} parent=0 // pred_region
    _
  $region29: #{generator_forward.5} parent=0 // pred_fallthru
    _

// kernel: tile.18
$region0: #{tile.18}
  #allocation0 [shape = 's32[1]{0}', space=sflag, size = 0x4, scoped, tag = 'scoped memory for tile.18']
  %s0 = inlined_call_operand.vmem [shape: f32[64], index: 0, kind: input, shape index: {}]
  %s1 = inlined_call_operand.vmem [shape: f32[4,64], index: 1, kind: output, shape index: {}]
  // Predicated region
  $region2: #{tile.18} parent=0 // pred_check
    _
  $region3: #{tile.18} parent=0 // pred_check_branch
    %3 = sbr.rel (0) target = $region5
  $region4: #{tile.18} parent=0 // pred_region
    _
  $region5: #{tile.18} parent=0 // pred_fallthru
    _
  %v4 = vld [vmem:[%s0] ss:$0 sm:$0xff]
  %5 = vst [vmem:[%s1] sm:$0xf] %v4

// kernel: tile.0
$region0: #{tile.0}
  %s0 = inlined_call_operand.vmem [shape: f32[4,64], index: 0, kind: input, shape index: {}]
  %s1 = inlined_call_operand.vmem [shape: f32[256,1], index: 1, kind: output, shape index: {}]
  $region1: #{tile.0} parent=0
    #allocation0 [shape = 'u8[4096]{0}', space=vmem, size = 0x1000, scoped, tag = 'scoped mem for input reshape']
    %s3 = ssub.s32 16, 1
    %v4 = vld [vmem:[%s0] sm:%s3]
    %5 = vst [vmem:[#allocation0] sm:%s3] %v4
    %v6 = vld [vmem:[#allocation0] sm:$0xf]
    %vm7 = vcmask 7168
    %8 = vst.msk [vmem:[%s1] sm:$0x1] %vm7, %v6
    %s9 = scalar_lea.vmem %s1, 63
    %10 = vst.msk [vmem:[%s9] sm:$0x2] %vm7, %v6
    %s11 = scalar_lea.vmem %s1, 126
    %12 = vst.msk [vmem:[%s11] sm:$0x4] %vm7, %v6
    %s13 = scalar_lea.vmem %s1, 189
    %14 = vst.msk [vmem:[%s13] sm:$0x8] %vm7, %v6
    %v15 = vld [vmem:[#allocation0] sm:$0xf]
    %16 = vrot.lane.b32.xlu0 %v15, 127
    %v17 = vpop.permute.xlu0 %16
    %vm18 = vcmask 7168
    %s19 = scalar_lea.vmem %s1, 1
    %20 = vst.msk [vmem:[%s19] sm:$0x1] %vm18, %v17
    %s21 = scalar_lea.vmem %s1, 64
    %22 = vst.msk [vmem:[%s21] sm:$0x2] %vm18, %v17
    %s23 = scalar_lea.vmem %s1, 127
    %24 = vst.msk [vmem:[%s23] sm:$0x4] %vm18, %v17
    %s25 = scalar_lea.vmem %s1, 190
    %26 = vst.msk [vmem:[%s25] sm:$0x8] %vm18, %v17
    %v27 = vld [vmem:[#allocation0] sm:$0xf]
    %28 = vrot.lane.b32.xlu0 %v27, 126
    %v29 = vpop.permute.xlu0 %28
    %vm30 = vcmask 7168
    %s31 = scalar_lea.vmem %s1, 2
    %32 = vst.msk [vmem:[%s31] sm:$0x1] %vm30, %v29
    %s33 = scalar_lea.vmem %s1, 65
    %34 = vst.msk [vmem:[%s33] sm:$0x2] %vm30, %v29
    %s35 = scalar_lea.vmem %s1, 128
    %36 = vst.msk [vmem:[%s35] sm:$0x4] %vm30, %v29
    %s37 = scalar_lea.vmem %s1, 191
    %38 = vst.msk [vmem:[%s37] sm:$0x8] %vm30, %v29
    %v39 = vld [vmem:[#allocation0] sm:$0xf]
    %40 = vrot.lane.b32.xlu0 %v39, 125
    %v41 = vpop.permute.xlu0 %40
    %vm42 = vcmask 7168
    %s43 = scalar_lea.vmem %s1, 3
    %44 = vst.msk [vmem:[%s43] sm:$0x1] %vm42, %v41
    %s45 = scalar_lea.vmem %s1, 66
    %46 = vst.msk [vmem:[%s45] sm:$0x2] %vm42, %v41
    %s47 = scalar_lea.vmem %s1, 129
    %48 = vst.msk [vmem:[%s47] sm:$0x4] %vm42, %v41
    %s49 = scalar_lea.vmem %s1, 192
    %50 = vst.msk [vmem:[%s49] sm:$0x8] %vm42, %v41
    %v51 = vld [vmem:[#allocation0] sm:$0xf]
    %52 = vrot.lane.b32.xlu0 %v51, 124
    %v53 = vpop.permute.xlu0 %52
    %vm54 = vcmask 7168
    %s55 = scalar_lea.vmem %s1, 4
    %56 = vst.msk [vmem:[%s55] sm:$0x1] %vm54, %v53
    %s57 = scalar_lea.vmem %s1, 67
    %58 = vst.msk [vmem:[%s57] sm:$0x2] %vm54, %v53
    %s59 = scalar_lea.vmem %s1, 130
    %60 = vst.msk [vmem:[%s59] sm:$0x4] %vm54, %v53
    %s61 = scalar_lea.vmem %s1, 193
    %62 = vst.msk [vmem:[%s61] sm:$0x8] %vm54, %v53
    %v63 = vld [vmem:[#allocation0] sm:$0xf]
    %64 = vrot.lane.b32.xlu0 %v63, 123
    %v65 = vpop.permute.xlu0 %64
    %vm66 = vcmask 7168
    %s67 = scalar_lea.vmem %s1, 5
    %68 = vst.msk [vmem:[%s67] sm:$0x1] %vm66, %v65
    %s69 = scalar_lea.vmem %s1, 68
    %70 = vst.msk [vmem:[%s69] sm:$0x2] %vm66, %v65
    %s71 = scalar_lea.vmem %s1, 131
    %72 = vst.msk [vmem:[%s71] sm:$0x4] %vm66, %v65
    %s73 = scalar_lea.vmem %s1, 194
    %74 = vst.msk [vmem:[%s73] sm:$0x8] %vm66, %v65
    %v75 = vld [vmem:[#allocation0] sm:$0xf]
    %76 = vrot.lane.b32.xlu0 %v75, 122
    %v77 = vpop.permute.xlu0 %76
    %vm78 = vcmask 7168
    %s79 = scalar_lea.vmem %s1, 6
    %80 = vst.msk [vmem:[%s79] sm:$0x1] %vm78, %v77
    %s81 = scalar_lea.vmem %s1, 69
    %82 = vst.msk [vmem:[%s81] sm:$0x2] %vm78, %v77
    %s83 = scalar_lea.vmem %s1, 132
    %84 = vst.msk [vmem:[%s83] sm:$0x4] %vm78, %v77
    %s85 = scalar_lea.vmem %s1, 195
    %86 = vst.msk [vmem:[%s85] sm:$0x8] %vm78, %v77
    %v87 = vld [vmem:[#allocation0] sm:$0xf]
    %88 = vrot.lane.b32.xlu0 %v87, 121
    %v89 = vpop.permute.xlu0 %88
    %vm90 = vcmask 7168
    %s91 = scalar_lea.vmem %s1, 7
    %92 = vst.msk [vmem:[%s91] sm:$0x1] %vm90, %v89
    %s93 = scalar_lea.vmem %s1, 70
    %94 = vst.msk [vmem:[%s93] sm:$0x2] %vm90, %v89
    %s95 = scalar_lea.vmem %s1, 133
    %96 = vst.msk [vmem:[%s95] sm:$0x4] %vm90, %v89
    %s97 = scalar_lea.vmem %s1, 196
    %98 = vst.msk [vmem:[%s97] sm:$0x8] %vm90, %v89
    %v99 = vld [vmem:[#allocation0] sm:$0xf]
    %100 = vrot.lane.b32.xlu0 %v99, 120
    %v101 = vpop.permute.xlu0 %100
    %vm102 = vcmask 7168
    %s103 = scalar_lea.vmem %s1, 8
    %104 = vst.msk [vmem:[%s103] sm:$0x1] %vm102, %v101
    %s105 = scalar_lea.vmem %s1, 71
    %106 = vst.msk [vmem:[%s105] sm:$0x2] %vm102, %v101
    %s107 = scalar_lea.vmem %s1, 134
    %108 = vst.msk [vmem:[%s107] sm:$0x4] %vm102, %v101
    %s109 = scalar_lea.vmem %s1, 197
    %110 = vst.msk [vmem:[%s109] sm:$0x8] %vm102, %v101
    %v111 = vld [vmem:[#allocation0] sm:$0xf]
    %112 = vrot.lane.b32.xlu0 %v111, 119
    %v113 = vpop.permute.xlu0 %112
    %vm114 = vcmask 7168
    %s115 = scalar_lea.vmem %s1, 9
    %116 = vst.msk [vmem:[%s115] sm:$0x1] %vm114, %v113
    %s117 = scalar_lea.vmem %s1, 72
    %118 = vst.msk [vmem:[%s117] sm:$0x2] %vm114, %v113
    %s119 = scalar_lea.vmem %s1, 135
    %120 = vst.msk [vmem:[%s119] sm:$0x4] %vm114, %v113
    %s121 = scalar_lea.vmem %s1, 198
    %122 = vst.msk [vmem:[%s121] sm:$0x8] %vm114, %v113
    %v123 = vld [vmem:[#allocation0] sm:$0xf]
    %124 = vrot.lane.b32.xlu0 %v123, 118
    %v125 = vpop.permute.xlu0 %124
    %vm126 = vcmask 7168
    %s127 = scalar_lea.vmem %s1, 10
    %128 = vst.msk [vmem:[%s127] sm:$0x1] %vm126, %v125
    %s129 = scalar_lea.vmem %s1, 73
    %130 = vst.msk [vmem:[%s129] sm:$0x2] %vm126, %v125
    %s131 = scalar_lea.vmem %s1, 136
    %132 = vst.msk [vmem:[%s131] sm:$0x4] %vm126, %v125
    %s133 = scalar_lea.vmem %s1, 199
    %134 = vst.msk [vmem:[%s133] sm:$0x8] %vm126, %v125
    %v135 = vld [vmem:[#allocation0] sm:$0xf]
    %136 = vrot.lane.b32.xlu0 %v135, 117
    %v137 = vpop.permute.xlu0 %136
    %vm138 = vcmask 7168
    %s139 = scalar_lea.vmem %s1, 11
    %140 = vst.msk [vmem:[%s139] sm:$0x1] %vm138, %v137
    %s141 = scalar_lea.vmem %s1, 74
    %142 = vst.msk [vmem:[%s141] sm:$0x2] %vm138, %v137
    %s143 = scalar_lea.vmem %s1, 137
    %144 = vst.msk [vmem:[%s143] sm:$0x4] %vm138, %v137
    %s145 = scalar_lea.vmem %s1, 200
    %146 = vst.msk [vmem:[%s145] sm:$0x8] %vm138, %v137
    %v147 = vld [vmem:[#allocation0] sm:$0xf]
    %148 = vrot.lane.b32.xlu0 %v147, 116
    %v149 = vpop.permute.xlu0 %148
    %vm150 = vcmask 7168
    %s151 = scalar_lea.vmem %s1, 12
    %152 = vst.msk [vmem:[%s151] sm:$0x1] %vm150, %v149
    %s153 = scalar_lea.vmem %s1, 75
    %154 = vst.msk [vmem:[%s153] sm:$0x2] %vm150, %v149
    %s155 = scalar_lea.vmem %s1, 138
    %156 = vst.msk [vmem:[%s155] sm:$0x4] %vm150, %v149
    %s157 = scalar_lea.vmem %s1, 201
    %158 = vst.msk [vmem:[%s157] sm:$0x8] %vm150, %v149
    %v159 = vld [vmem:[#allocation0] sm:$0xf]
    %160 = vrot.lane.b32.xlu0 %v159, 115
    %v161 = vpop.permute.xlu0 %160
    %vm162 = vcmask 7168
    %s163 = scalar_lea.vmem %s1, 13
    %164 = vst.msk [vmem:[%s163] sm:$0x1] %vm162, %v161
    %s165 = scalar_lea.vmem %s1, 76
    %166 = vst.msk [vmem:[%s165] sm:$0x2] %vm162, %v161
    %s167 = scalar_lea.vmem %s1, 139
    %168 = vst.msk [vmem:[%s167] sm:$0x4] %vm162, %v161
    %s169 = scalar_lea.vmem %s1, 202
    %170 = vst.msk [vmem:[%s169] sm:$0x8] %vm162, %v161
    %v171 = vld [vmem:[#allocation0] sm:$0xf]
    %172 = vrot.lane.b32.xlu0 %v171, 114
    %v173 = vpop.permute.xlu0 %172
    %vm174 = vcmask 7168
    %s175 = scalar_lea.vmem %s1, 14
    %176 = vst.msk [vmem:[%s175] sm:$0x1] %vm174, %v173
    %s177 = scalar_lea.vmem %s1, 77
    %178 = vst.msk [vmem:[%s177] sm:$0x2] %vm174, %v173
    %s179 = scalar_lea.vmem %s1, 140
    %180 = vst.msk [vmem:[%s179] sm:$0x4] %vm174, %v173
    %s181 = scalar_lea.vmem %s1, 203
    %182 = vst.msk [vmem:[%s181] sm:$0x8] %vm174, %v173
    %v183 = vld [vmem:[#allocation0] sm:$0xf]
    %184 = vrot.lane.b32.xlu0 %v183, 113
    %v185 = vpop.permute.xlu0 %184
    %vm186 = vcmask 7168
    %s187 = scalar_lea.vmem %s1, 15
    %188 = vst.msk [vmem:[%s187] sm:$0x1] %vm186, %v185
    %s189 = scalar_lea.vmem %s1, 78
    %190 = vst.msk [vmem:[%s189] sm:$0x2] %vm186, %v185
    %s191 = scalar_lea.vmem %s1, 141
    %192 = vst.msk [vmem:[%s191] sm:$0x4] %vm186, %v185
    %s193 = scalar_lea.vmem %s1, 204
    %194 = vst.msk [vmem:[%s193] sm:$0x8] %vm186, %v185
    %v195 = vld [vmem:[#allocation0] sm:$0xf]
    %196 = vrot.lane.b32.xlu0 %v195, 112
    %v197 = vpop.permute.xlu0 %196
    %vm198 = vcmask 7168
    %s199 = scalar_lea.vmem %s1, 16
    %200 = vst.msk [vmem:[%s199] sm:$0x1] %vm198, %v197
    %s201 = scalar_lea.vmem %s1, 79
    %202 = vst.msk [vmem:[%s201] sm:$0x2] %vm198, %v197
    %s203 = scalar_lea.vmem %s1, 142
    %204 = vst.msk [vmem:[%s203] sm:$0x4] %vm198, %v197
    %s205 = scalar_lea.vmem %s1, 205
    %206 = vst.msk [vmem:[%s205] sm:$0x8] %vm198, %v197
    %v207 = vld [vmem:[#allocation0] sm:$0xf]
    %208 = vrot.lane.b32.xlu0 %v207, 111
    %v209 = vpop.permute.xlu0 %208
    %vm210 = vcmask 7168
    %s211 = scalar_lea.vmem %s1, 17
    %212 = vst.msk [vmem:[%s211] sm:$0x1] %vm210, %v209
    %s213 = scalar_lea.vmem %s1, 80
    %214 = vst.msk [vmem:[%s213] sm:$0x2] %vm210, %v209
    %s215 = scalar_lea.vmem %s1, 143
    %216 = vst.msk [vmem:[%s215] sm:$0x4] %vm210, %v209
    %s217 = scalar_lea.vmem %s1, 206
    %218 = vst.msk [vmem:[%s217] sm:$0x8] %vm210, %v209
    %v219 = vld [vmem:[#allocation0] sm:$0xf]
    %220 = vrot.lane.b32.xlu0 %v219, 110
    %v221 = vpop.permute.xlu0 %220
    %vm222 = vcmask 7168
    %s223 = scalar_lea.vmem %s1, 18
    %224 = vst.msk [vmem:[%s223] sm:$0x1] %vm222, %v221
    %s225 = scalar_lea.vmem %s1, 81
    %226 = vst.msk [vmem:[%s225] sm:$0x2] %vm222, %v221
    %s227 = scalar_lea.vmem %s1, 144
    %228 = vst.msk [vmem:[%s227] sm:$0x4] %vm222, %v221
    %s229 = scalar_lea.vmem %s1, 207
    %230 = vst.msk [vmem:[%s229] sm:$0x8] %vm222, %v221
    %v231 = vld [vmem:[#allocation0] sm:$0xf]
    %232 = vrot.lane.b32.xlu0 %v231, 109
    %v233 = vpop.permute.xlu0 %232
    %vm234 = vcmask 7168
    %s235 = scalar_lea.vmem %s1, 19
    %236 = vst.msk [vmem:[%s235] sm:$0x1] %vm234, %v233
    %s237 = scalar_lea.vmem %s1, 82
    %238 = vst.msk [vmem:[%s237] sm:$0x2] %vm234, %v233
    %s239 = scalar_lea.vmem %s1, 145
    %240 = vst.msk [vmem:[%s239] sm:$0x4] %vm234, %v233
    %s241 = scalar_lea.vmem %s1, 208
    %242 = vst.msk [vmem:[%s241] sm:$0x8] %vm234, %v233
    %v243 = vld [vmem:[#allocation0] sm:$0xf]
    %244 = vrot.lane.b32.xlu0 %v243, 108
    %v245 = vpop.permute.xlu0 %244
    %vm246 = vcmask 7168
    %s247 = scalar_lea.vmem %s1, 20
    %248 = vst.msk [vmem:[%s247] sm:$0x1] %vm246, %v245
    %s249 = scalar_lea.vmem %s1, 83
    %250 = vst.msk [vmem:[%s249] sm:$0x2] %vm246, %v245
    %s251 = scalar_lea.vmem %s1, 146
    %252 = vst.msk [vmem:[%s251] sm:$0x4] %vm246, %v245
    %s253 = scalar_lea.vmem %s1, 209
    %254 = vst.msk [vmem:[%s253] sm:$0x8] %vm246, %v245
    %v255 = vld [vmem:[#allocation0] sm:$0xf]
    %256 = vrot.lane.b32.xlu0 %v255, 107
    %v257 = vpop.permute.xlu0 %256
    %vm258 = vcmask 7168
    %s259 = scalar_lea.vmem %s1, 21
    %260 = vst.msk [vmem:[%s259] sm:$0x1] %vm258, %v257
    %s261 = scalar_lea.vmem %s1, 84
    %262 = vst.msk [vmem:[%s261] sm:$0x2] %vm258, %v257
    %s263 = scalar_lea.vmem %s1, 147
    %264 = vst.msk [vmem:[%s263] sm:$0x4] %vm258, %v257
    %s265 = scalar_lea.vmem %s1, 210
    %266 = vst.msk [vmem:[%s265] sm:$0x8] %vm258, %v257
    %v267 = vld [vmem:[#allocation0] sm:$0xf]
    %268 = vrot.lane.b32.xlu0 %v267, 106
    %v269 = vpop.permute.xlu0 %268
    %vm270 = vcmask 7168
    %s271 = scalar_lea.vmem %s1, 22
    %272 = vst.msk [vmem:[%s271] sm:$0x1] %vm270, %v269
    %s273 = scalar_lea.vmem %s1, 85
    %274 = vst.msk [vmem:[%s273] sm:$0x2] %vm270, %v269
    %s275 = scalar_lea.vmem %s1, 148
    %276 = vst.msk [vmem:[%s275] sm:$0x4] %vm270, %v269
    %s277 = scalar_lea.vmem %s1, 211
    %278 = vst.msk [vmem:[%s277] sm:$0x8] %vm270, %v269
    %v279 = vld [vmem:[#allocation0] sm:$0xf]
    %280 = vrot.lane.b32.xlu0 %v279, 105
    %v281 = vpop.permute.xlu0 %280
    %vm282 = vcmask 7168
    %s283 = scalar_lea.vmem %s1, 23
    %284 = vst.msk [vmem:[%s283] sm:$0x1] %vm282, %v281
    %s285 = scalar_lea.vmem %s1, 86
    %286 = vst.msk [vmem:[%s285] sm:$0x2] %vm282, %v281
    %s287 = scalar_lea.vmem %s1, 149
    %288 = vst.msk [vmem:[%s287] sm:$0x4] %vm282, %v281
    %s289 = scalar_lea.vmem %s1, 212
    %290 = vst.msk [vmem:[%s289] sm:$0x8] %vm282, %v281
    %v291 = vld [vmem:[#allocation0] sm:$0xf]
    %292 = vrot.lane.b32.xlu0 %v291, 104
    %v293 = vpop.permute.xlu0 %292
    %vm294 = vcmask 7168
    %s295 = scalar_lea.vmem %s1, 24
    %296 = vst.msk [vmem:[%s295] sm:$0x1] %vm294, %v293
    %s297 = scalar_lea.vmem %s1, 87
    %298 = vst.msk [vmem:[%s297] sm:$0x2] %vm294, %v293
    %s299 = scalar_lea.vmem %s1, 150
    %300 = vst.msk [vmem:[%s299] sm:$0x4] %vm294, %v293
    %s301 = scalar_lea.vmem %s1, 213
    %302 = vst.msk [vmem:[%s301] sm:$0x8] %vm294, %v293
    %v303 = vld [vmem:[#allocation0] sm:$0xf]
    %304 = vrot.lane.b32.xlu0 %v303, 103
    %v305 = vpop.permute.xlu0 %304
    %vm306 = vcmask 7168
    %s307 = scalar_lea.vmem %s1, 25
    %308 = vst.msk [vmem:[%s307] sm:$0x1] %vm306, %v305
    %s309 = scalar_lea.vmem %s1, 88
    %310 = vst.msk [vmem:[%s309] sm:$0x2] %vm306, %v305
    %s311 = scalar_lea.vmem %s1, 151
    %312 = vst.msk [vmem:[%s311] sm:$0x4] %vm306, %v305
    %s313 = scalar_lea.vmem %s1, 214
    %314 = vst.msk [vmem:[%s313] sm:$0x8] %vm306, %v305
    %v315 = vld [vmem:[#allocation0] sm:$0xf]
    %316 = vrot.lane.b32.xlu0 %v315, 102
    %v317 = vpop.permute.xlu0 %316
    %vm318 = vcmask 7168
    %s319 = scalar_lea.vmem %s1, 26
    %320 = vst.msk [vmem:[%s319] sm:$0x1] %vm318, %v317
    %s321 = scalar_lea.vmem %s1, 89
    %322 = vst.msk [vmem:[%s321] sm:$0x2] %vm318, %v317
    %s323 = scalar_lea.vmem %s1, 152
    %324 = vst.msk [vmem:[%s323] sm:$0x4] %vm318, %v317
    %s325 = scalar_lea.vmem %s1, 215
    %326 = vst.msk [vmem:[%s325] sm:$0x8] %vm318, %v317
    %v327 = vld [vmem:[#allocation0] sm:$0xf]
    %328 = vrot.lane.b32.xlu0 %v327, 101
    %v329 = vpop.permute.xlu0 %328
    %vm330 = vcmask 7168
    %s331 = scalar_lea.vmem %s1, 27
    %332 = vst.msk [vmem:[%s331] sm:$0x1] %vm330, %v329
    %s333 = scalar_lea.vmem %s1, 90
    %334 = vst.msk [vmem:[%s333] sm:$0x2] %vm330, %v329
    %s335 = scalar_lea.vmem %s1, 153
    %336 = vst.msk [vmem:[%s335] sm:$0x4] %vm330, %v329
    %s337 = scalar_lea.vmem %s1, 216
    %338 = vst.msk [vmem:[%s337] sm:$0x8] %vm330, %v329
    %v339 = vld [vmem:[#allocation0] sm:$0xf]
    %340 = vrot.lane.b32.xlu0 %v339, 100
    %v341 = vpop.permute.xlu0 %340
    %vm342 = vcmask 7168
    %s343 = scalar_lea.vmem %s1, 28
    %344 = vst.msk [vmem:[%s343] sm:$0x1] %vm342, %v341
    %s345 = scalar_lea.vmem %s1, 91
    %346 = vst.msk [vmem:[%s345] sm:$0x2] %vm342, %v341
    %s347 = scalar_lea.vmem %s1, 154
    %348 = vst.msk [vmem:[%s347] sm:$0x4] %vm342, %v341
    %s349 = scalar_lea.vmem %s1, 217
    %350 = vst.msk [vmem:[%s349] sm:$0x8] %vm342, %v341
    %v351 = vld [vmem:[#allocation0] sm:$0xf]
    %352 = vrot.lane.b32.xlu0 %v351, 99
    %v353 = vpop.permute.xlu0 %352
    %vm354 = vcmask 7168
    %s355 = scalar_lea.vmem %s1, 29
    %356 = vst.msk [vmem:[%s355] sm:$0x1] %vm354, %v353
    %s357 = scalar_lea.vmem %s1, 92
    %358 = vst.msk [vmem:[%s357] sm:$0x2] %vm354, %v353
    %s359 = scalar_lea.vmem %s1, 155
    %360 = vst.msk [vmem:[%s359] sm:$0x4] %vm354, %v353
    %s361 = scalar_lea.vmem %s1, 218
    %362 = vst.msk [vmem:[%s361] sm:$0x8] %vm354, %v353
    %v363 = vld [vmem:[#allocation0] sm:$0xf]
    %364 = vrot.lane.b32.xlu0 %v363, 98
    %v365 = vpop.permute.xlu0 %364
    %vm366 = vcmask 7168
    %s367 = scalar_lea.vmem %s1, 30
    %368 = vst.msk [vmem:[%s367] sm:$0x1] %vm366, %v365
    %s369 = scalar_lea.vmem %s1, 93
    %370 = vst.msk [vmem:[%s369] sm:$0x2] %vm366, %v365
    %s371 = scalar_lea.vmem %s1, 156
    %372 = vst.msk [vmem:[%s371] sm:$0x4] %vm366, %v365
    %s373 = scalar_lea.vmem %s1, 219
    %374 = vst.msk [vmem:[%s373] sm:$0x8] %vm366, %v365
    %v375 = vld [vmem:[#allocation0] sm:$0xf]
    %376 = vrot.lane.b32.xlu0 %v375, 97
    %v377 = vpop.permute.xlu0 %376
    %vm378 = vcmask 7168
    %s379 = scalar_lea.vmem %s1, 31
    %380 = vst.msk [vmem:[%s379] sm:$0x1] %vm378, %v377
    %s381 = scalar_lea.vmem %s1, 94
    %382 = vst.msk [vmem:[%s381] sm:$0x2] %vm378, %v377
    %s383 = scalar_lea.vmem %s1, 157
    %384 = vst.msk [vmem:[%s383] sm:$0x4] %vm378, %v377
    %s385 = scalar_lea.vmem %s1, 220
    %386 = vst.msk [vmem:[%s385] sm:$0x8] %vm378, %v377
    %v387 = vld [vmem:[#allocation0] sm:$0xf]
    %388 = vrot.lane.b32.xlu0 %v387, 96
    %v389 = vpop.permute.xlu0 %388
    %vm390 = vcmask 7168
    %s391 = scalar_lea.vmem %s1, 32
    %392 = vst.msk [vmem:[%s391] sm:$0x1] %vm390, %v389
    %s393 = scalar_lea.vmem %s1, 95
    %394 = vst.msk [vmem:[%s393] sm:$0x2] %vm390, %v389
    %s395 = scalar_lea.vmem %s1, 158
    %396 = vst.msk [vmem:[%s395] sm:$0x4] %vm390, %v389
    %s397 = scalar_lea.vmem %s1, 221
    %398 = vst.msk [vmem:[%s397] sm:$0x8] %vm390, %v389
    %v399 = vld [vmem:[#allocation0] sm:$0xf]
    %400 = vrot.lane.b32.xlu0 %v399, 95
    %v401 = vpop.permute.xlu0 %400
    %vm402 = vcmask 7168
    %s403 = scalar_lea.vmem %s1, 33
    %404 = vst.msk [vmem:[%s403] sm:$0x1] %vm402, %v401
    %s405 = scalar_lea.vmem %s1, 96
    %406 = vst.msk [vmem:[%s405] sm:$0x2] %vm402, %v401
    %s407 = scalar_lea.vmem %s1, 159
    %408 = vst.msk [vmem:[%s407] sm:$0x4] %vm402, %v401
    %s409 = scalar_lea.vmem %s1, 222
    %410 = vst.msk [vmem:[%s409] sm:$0x8] %vm402, %v401
    %v411 = vld [vmem:[#allocation0] sm:$0xf]
    %412 = vrot.lane.b32.xlu0 %v411, 94
    %v413 = vpop.permute.xlu0 %412
    %vm414 = vcmask 7168
    %s415 = scalar_lea.vmem %s1, 34
    %416 = vst.msk [vmem:[%s415] sm:$0x1] %vm414, %v413
    %s417 = scalar_lea.vmem %s1, 97
    %418 = vst.msk [vmem:[%s417] sm:$0x2] %vm414, %v413
    %s419 = scalar_lea.vmem %s1, 160
    %420 = vst.msk [vmem:[%s419] sm:$0x4] %vm414, %v413
    %s421 = scalar_lea.vmem %s1, 223
    %422 = vst.msk [vmem:[%s421] sm:$0x8] %vm414, %v413
    %v423 = vld [vmem:[#allocation0] sm:$0xf]
    %424 = vrot.lane.b32.xlu0 %v423, 93
    %v425 = vpop.permute.xlu0 %424
    %vm426 = vcmask 7168
    %s427 = scalar_lea.vmem %s1, 35
    %428 = vst.msk [vmem:[%s427] sm:$0x1] %vm426, %v425
    %s429 = scalar_lea.vmem %s1, 98
    %430 = vst.msk [vmem:[%s429] sm:$0x2] %vm426, %v425
    %s431 = scalar_lea.vmem %s1, 161
    %432 = vst.msk [vmem:[%s431] sm:$0x4] %vm426, %v425
    %s433 = scalar_lea.vmem %s1, 224
    %434 = vst.msk [vmem:[%s433] sm:$0x8] %vm426, %v425
    %v435 = vld [vmem:[#allocation0] sm:$0xf]
    %436 = vrot.lane.b32.xlu0 %v435, 92
    %v437 = vpop.permute.xlu0 %436
    %vm438 = vcmask 7168
    %s439 = scalar_lea.vmem %s1, 36
    %440 = vst.msk [vmem:[%s439] sm:$0x1] %vm438, %v437
    %s441 = scalar_lea.vmem %s1, 99
    %442 = vst.msk [vmem:[%s441] sm:$0x2] %vm438, %v437
    %s443 = scalar_lea.vmem %s1, 162
    %444 = vst.msk [vmem:[%s443] sm:$0x4] %vm438, %v437
    %s445 = scalar_lea.vmem %s1, 225
    %446 = vst.msk [vmem:[%s445] sm:$0x8] %vm438, %v437
    %v447 = vld [vmem:[#allocation0] sm:$0xf]
    %448 = vrot.lane.b32.xlu0 %v447, 91
    %v449 = vpop.permute.xlu0 %448
    %vm450 = vcmask 7168
    %s451 = scalar_lea.vmem %s1, 37
    %452 = vst.msk [vmem:[%s451] sm:$0x1] %vm450, %v449
    %s453 = scalar_lea.vmem %s1, 100
    %454 = vst.msk [vmem:[%s453] sm:$0x2] %vm450, %v449
    %s455 = scalar_lea.vmem %s1, 163
    %456 = vst.msk [vmem:[%s455] sm:$0x4] %vm450, %v449
    %s457 = scalar_lea.vmem %s1, 226
    %458 = vst.msk [vmem:[%s457] sm:$0x8] %vm450, %v449
    %v459 = vld [vmem:[#allocation0] sm:$0xf]
    %460 = vrot.lane.b32.xlu0 %v459, 90
    %v461 = vpop.permute.xlu0 %460
    %vm462 = vcmask 7168
    %s463 = scalar_lea.vmem %s1, 38
    %464 = vst.msk [vmem:[%s463] sm:$0x1] %vm462, %v461
    %s465 = scalar_lea.vmem %s1, 101
    %466 = vst.msk [vmem:[%s465] sm:$0x2] %vm462, %v461
    %s467 = scalar_lea.vmem %s1, 164
    %468 = vst.msk [vmem:[%s467] sm:$0x4] %vm462, %v461
    %s469 = scalar_lea.vmem %s1, 227
    %470 = vst.msk [vmem:[%s469] sm:$0x8] %vm462, %v461
    %v471 = vld [vmem:[#allocation0] sm:$0xf]
    %472 = vrot.lane.b32.xlu0 %v471, 89
    %v473 = vpop.permute.xlu0 %472
    %vm474 = vcmask 7168
    %s475 = scalar_lea.vmem %s1, 39
    %476 = vst.msk [vmem:[%s475] sm:$0x1] %vm474, %v473
    %s477 = scalar_lea.vmem %s1, 102
    %478 = vst.msk [vmem:[%s477] sm:$0x2] %vm474, %v473
    %s479 = scalar_lea.vmem %s1, 165
    %480 = vst.msk [vmem:[%s479] sm:$0x4] %vm474, %v473
    %s481 = scalar_lea.vmem %s1, 228
    %482 = vst.msk [vmem:[%s481] sm:$0x8] %vm474, %v473
    %v483 = vld [vmem:[#allocation0] sm:$0xf]
    %484 = vrot.lane.b32.xlu0 %v483, 88
    %v485 = vpop.permute.xlu0 %484
    %vm486 = vcmask 7168
    %s487 = scalar_lea.vmem %s1, 40
    %488 = vst.msk [vmem:[%s487] sm:$0x1] %vm486, %v485
    %s489 = scalar_lea.vmem %s1, 103
    %490 = vst.msk [vmem:[%s489] sm:$0x2] %vm486, %v485
    %s491 = scalar_lea.vmem %s1, 166
    %492 = vst.msk [vmem:[%s491] sm:$0x4] %vm486, %v485
    %s493 = scalar_lea.vmem %s1, 229
    %494 = vst.msk [vmem:[%s493] sm:$0x8] %vm486, %v485
    %v495 = vld [vmem:[#allocation0] sm:$0xf]
    %496 = vrot.lane.b32.xlu0 %v495, 87
    %v497 = vpop.permute.xlu0 %496
    %vm498 = vcmask 7168
    %s499 = scalar_lea.vmem %s1, 41
    %500 = vst.msk [vmem:[%s499] sm:$0x1] %vm498, %v497
    %s501 = scalar_lea.vmem %s1, 104
    %502 = vst.msk [vmem:[%s501] sm:$0x2] %vm498, %v497
    %s503 = scalar_lea.vmem %s1, 167
    %504 = vst.msk [vmem:[%s503] sm:$0x4] %vm498, %v497
    %s505 = scalar_lea.vmem %s1, 230
    %506 = vst.msk [vmem:[%s505] sm:$0x8] %vm498, %v497
    %v507 = vld [vmem:[#allocation0] sm:$0xf]
    %508 = vrot.lane.b32.xlu0 %v507, 86
    %v509 = vpop.permute.xlu0 %508
    %vm510 = vcmask 7168
    %s511 = scalar_lea.vmem %s1, 42
    %512 = vst.msk [vmem:[%s511] sm:$0x1] %vm510, %v509
    %s513 = scalar_lea.vmem %s1, 105
    %514 = vst.msk [vmem:[%s513] sm:$0x2] %vm510, %v509
    %s515 = scalar_lea.vmem %s1, 168
    %516 = vst.msk [vmem:[%s515] sm:$0x4] %vm510, %v509
    %s517 = scalar_lea.vmem %s1, 231
    %518 = vst.msk [vmem:[%s517] sm:$0x8] %vm510, %v509
    %v519 = vld [vmem:[#allocation0] sm:$0xf]
    %520 = vrot.lane.b32.xlu0 %v519, 85
    %v521 = vpop.permute.xlu0 %520
    %vm522 = vcmask 7168
    %s523 = scalar_lea.vmem %s1, 43
    %524 = vst.msk [vmem:[%s523] sm:$0x1] %vm522, %v521
    %s525 = scalar_lea.vmem %s1, 106
    %526 = vst.msk [vmem:[%s525] sm:$0x2] %vm522, %v521
    %s527 = scalar_lea.vmem %s1, 169
    %528 = vst.msk [vmem:[%s527] sm:$0x4] %vm522, %v521
    %s529 = scalar_lea.vmem %s1, 232
    %530 = vst.msk [vmem:[%s529] sm:$0x8] %vm522, %v521
    %v531 = vld [vmem:[#allocation0] sm:$0xf]
    %532 = vrot.lane.b32.xlu0 %v531, 84
    %v533 = vpop.permute.xlu0 %532
    %vm534 = vcmask 7168
    %s535 = scalar_lea.vmem %s1, 44
    %536 = vst.msk [vmem:[%s535] sm:$0x1] %vm534, %v533
    %s537 = scalar_lea.vmem %s1, 107
    %538 = vst.msk [vmem:[%s537] sm:$0x2] %vm534, %v533
    %s539 = scalar_lea.vmem %s1, 170
    %540 = vst.msk [vmem:[%s539] sm:$0x4] %vm534, %v533
    %s541 = scalar_lea.vmem %s1, 233
    %542 = vst.msk [vmem:[%s541] sm:$0x8] %vm534, %v533
    %v543 = vld [vmem:[#allocation0] sm:$0xf]
    %544 = vrot.lane.b32.xlu0 %v543, 83
    %v545 = vpop.permute.xlu0 %544
    %vm546 = vcmask 7168
    %s547 = scalar_lea.vmem %s1, 45
    %548 = vst.msk [vmem:[%s547] sm:$0x1] %vm546, %v545
    %s549 = scalar_lea.vmem %s1, 108
    %550 = vst.msk [vmem:[%s549] sm:$0x2] %vm546, %v545
    %s551 = scalar_lea.vmem %s1, 171
    %552 = vst.msk [vmem:[%s551] sm:$0x4] %vm546, %v545
    %s553 = scalar_lea.vmem %s1, 234
    %554 = vst.msk [vmem:[%s553] sm:$0x8] %vm546, %v545
    %v555 = vld [vmem:[#allocation0] sm:$0xf]
    %556 = vrot.lane.b32.xlu0 %v555, 82
    %v557 = vpop.permute.xlu0 %556
    %vm558 = vcmask 7168
    %s559 = scalar_lea.vmem %s1, 46
    %560 = vst.msk [vmem:[%s559] sm:$0x1] %vm558, %v557
    %s561 = scalar_lea.vmem %s1, 109
    %562 = vst.msk [vmem:[%s561] sm:$0x2] %vm558, %v557
    %s563 = scalar_lea.vmem %s1, 172
    %564 = vst.msk [vmem:[%s563] sm:$0x4] %vm558, %v557
    %s565 = scalar_lea.vmem %s1, 235
    %566 = vst.msk [vmem:[%s565] sm:$0x8] %vm558, %v557
    %v567 = vld [vmem:[#allocation0] sm:$0xf]
    %568 = vrot.lane.b32.xlu0 %v567, 81
    %v569 = vpop.permute.xlu0 %568
    %vm570 = vcmask 7168
    %s571 = scalar_lea.vmem %s1, 47
    %572 = vst.msk [vmem:[%s571] sm:$0x1] %vm570, %v569
    %s573 = scalar_lea.vmem %s1, 110
    %574 = vst.msk [vmem:[%s573] sm:$0x2] %vm570, %v569
    %s575 = scalar_lea.vmem %s1, 173
    %576 = vst.msk [vmem:[%s575] sm:$0x4] %vm570, %v569
    %s577 = scalar_lea.vmem %s1, 236
    %578 = vst.msk [vmem:[%s577] sm:$0x8] %vm570, %v569
    %v579 = vld [vmem:[#allocation0] sm:$0xf]
    %580 = vrot.lane.b32.xlu0 %v579, 80
    %v581 = vpop.permute.xlu0 %580
    %vm582 = vcmask 7168
    %s583 = scalar_lea.vmem %s1, 48
    %584 = vst.msk [vmem:[%s583] sm:$0x1] %vm582, %v581
    %s585 = scalar_lea.vmem %s1, 111
    %586 = vst.msk [vmem:[%s585] sm:$0x2] %vm582, %v581
    %s587 = scalar_lea.vmem %s1, 174
    %588 = vst.msk [vmem:[%s587] sm:$0x4] %vm582, %v581
    %s589 = scalar_lea.vmem %s1, 237
    %590 = vst.msk [vmem:[%s589] sm:$0x8] %vm582, %v581
    %v591 = vld [vmem:[#allocation0] sm:$0xf]
    %592 = vrot.lane.b32.xlu0 %v591, 79
    %v593 = vpop.permute.xlu0 %592
    %vm594 = vcmask 7168
    %s595 = scalar_lea.vmem %s1, 49
    %596 = vst.msk [vmem:[%s595] sm:$0x1] %vm594, %v593
    %s597 = scalar_lea.vmem %s1, 112
    %598 = vst.msk [vmem:[%s597] sm:$0x2] %vm594, %v593
    %s599 = scalar_lea.vmem %s1, 175
    %600 = vst.msk [vmem:[%s599] sm:$0x4] %vm594, %v593
    %s601 = scalar_lea.vmem %s1, 238
    %602 = vst.msk [vmem:[%s601] sm:$0x8] %vm594, %v593
    %v603 = vld [vmem:[#allocation0] sm:$0xf]
    %604 = vrot.lane.b32.xlu0 %v603, 78
    %v605 = vpop.permute.xlu0 %604
    %vm606 = vcmask 7168
    %s607 = scalar_lea.vmem %s1, 50
    %608 = vst.msk [vmem:[%s607] sm:$0x1] %vm606, %v605
    %s609 = scalar_lea.vmem %s1, 113
    %610 = vst.msk [vmem:[%s609] sm:$0x2] %vm606, %v605
    %s611 = scalar_lea.vmem %s1, 176
    %612 = vst.msk [vmem:[%s611] sm:$0x4] %vm606, %v605
    %s613 = scalar_lea.vmem %s1, 239
    %614 = vst.msk [vmem:[%s613] sm:$0x8] %vm606, %v605
    %v615 = vld [vmem:[#allocation0] sm:$0xf]
    %616 = vrot.lane.b32.xlu0 %v615, 77
    %v617 = vpop.permute.xlu0 %616
    %vm618 = vcmask 7168
    %s619 = scalar_lea.vmem %s1, 51
    %620 = vst.msk [vmem:[%s619] sm:$0x1] %vm618, %v617
    %s621 = scalar_lea.vmem %s1, 114
    %622 = vst.msk [vmem:[%s621] sm:$0x2] %vm618, %v617
    %s623 = scalar_lea.vmem %s1, 177
    %624 = vst.msk [vmem:[%s623] sm:$0x4] %vm618, %v617
    %s625 = scalar_lea.vmem %s1, 240
    %626 = vst.msk [vmem:[%s625] sm:$0x8] %vm618, %v617
    %v627 = vld [vmem:[#allocation0] sm:$0xf]
    %628 = vrot.lane.b32.xlu0 %v627, 76
    %v629 = vpop.permute.xlu0 %628
    %vm630 = vcmask 7168
    %s631 = scalar_lea.vmem %s1, 52
    %632 = vst.msk [vmem:[%s631] sm:$0x1] %vm630, %v629
    %s633 = scalar_lea.vmem %s1, 115
    %634 = vst.msk [vmem:[%s633] sm:$0x2] %vm630, %v629
    %s635 = scalar_lea.vmem %s1, 178
    %636 = vst.msk [vmem:[%s635] sm:$0x4] %vm630, %v629
    %s637 = scalar_lea.vmem %s1, 241
    %638 = vst.msk [vmem:[%s637] sm:$0x8] %vm630, %v629
    %v639 = vld [vmem:[#allocation0] sm:$0xf]
    %640 = vrot.lane.b32.xlu0 %v639, 75
    %v641 = vpop.permute.xlu0 %640
    %vm642 = vcmask 7168
    %s643 = scalar_lea.vmem %s1, 53
    %644 = vst.msk [vmem:[%s643] sm:$0x1] %vm642, %v641
    %s645 = scalar_lea.vmem %s1, 116
    %646 = vst.msk [vmem:[%s645] sm:$0x2] %vm642, %v641
    %s647 = scalar_lea.vmem %s1, 179
    %648 = vst.msk [vmem:[%s647] sm:$0x4] %vm642, %v641
    %s649 = scalar_lea.vmem %s1, 242
    %650 = vst.msk [vmem:[%s649] sm:$0x8] %vm642, %v641
    %v651 = vld [vmem:[#allocation0] sm:$0xf]
    %652 = vrot.lane.b32.xlu0 %v651, 74
    %v653 = vpop.permute.xlu0 %652
    %vm654 = vcmask 7168
    %s655 = scalar_lea.vmem %s1, 54
    %656 = vst.msk [vmem:[%s655] sm:$0x1] %vm654, %v653
    %s657 = scalar_lea.vmem %s1, 117
    %658 = vst.msk [vmem:[%s657] sm:$0x2] %vm654, %v653
    %s659 = scalar_lea.vmem %s1, 180
    %660 = vst.msk [vmem:[%s659] sm:$0x4] %vm654, %v653
    %s661 = scalar_lea.vmem %s1, 243
    %662 = vst.msk [vmem:[%s661] sm:$0x8] %vm654, %v653
    %v663 = vld [vmem:[#allocation0] sm:$0xf]
    %664 = vrot.lane.b32.xlu0 %v663, 73
    %v665 = vpop.permute.xlu0 %664
    %vm666 = vcmask 7168
    %s667 = scalar_lea.vmem %s1, 55
    %668 = vst.msk [vmem:[%s667] sm:$0x1] %vm666, %v665
    %s669 = scalar_lea.vmem %s1, 118
    %670 = vst.msk [vmem:[%s669] sm:$0x2] %vm666, %v665
    %s671 = scalar_lea.vmem %s1, 181
    %672 = vst.msk [vmem:[%s671] sm:$0x4] %vm666, %v665
    %s673 = scalar_lea.vmem %s1, 244
    %674 = vst.msk [vmem:[%s673] sm:$0x8] %vm666, %v665
    %v675 = vld [vmem:[#allocation0] sm:$0xf]
    %676 = vrot.lane.b32.xlu0 %v675, 72
    %v677 = vpop.permute.xlu0 %676
    %vm678 = vcmask 7168
    %s679 = scalar_lea.vmem %s1, 56
    %680 = vst.msk [vmem:[%s679] sm:$0x1] %vm678, %v677
    %s681 = scalar_lea.vmem %s1, 119
    %682 = vst.msk [vmem:[%s681] sm:$0x2] %vm678, %v677
    %s683 = scalar_lea.vmem %s1, 182
    %684 = vst.msk [vmem:[%s683] sm:$0x4] %vm678, %v677
    %s685 = scalar_lea.vmem %s1, 245
    %686 = vst.msk [vmem:[%s685] sm:$0x8] %vm678, %v677
    %v687 = vld [vmem:[#allocation0] sm:$0xf]
    %688 = vrot.lane.b32.xlu0 %v687, 71
    %v689 = vpop.permute.xlu0 %688
    %vm690 = vcmask 7168
    %s691 = scalar_lea.vmem %s1, 57
    %692 = vst.msk [vmem:[%s691] sm:$0x1] %vm690, %v689
    %s693 = scalar_lea.vmem %s1, 120
    %694 = vst.msk [vmem:[%s693] sm:$0x2] %vm690, %v689
    %s695 = scalar_lea.vmem %s1, 183
    %696 = vst.msk [vmem:[%s695] sm:$0x4] %vm690, %v689
    %s697 = scalar_lea.vmem %s1, 246
    %698 = vst.msk [vmem:[%s697] sm:$0x8] %vm690, %v689
    %v699 = vld [vmem:[#allocation0] sm:$0xf]
    %700 = vrot.lane.b32.xlu0 %v699, 70
    %v701 = vpop.permute.xlu0 %700
    %vm702 = vcmask 7168
    %s703 = scalar_lea.vmem %s1, 58
    %704 = vst.msk [vmem:[%s703] sm:$0x1] %vm702, %v701
    %s705 = scalar_lea.vmem %s1, 121
    %706 = vst.msk [vmem:[%s705] sm:$0x2] %vm702, %v701
    %s707 = scalar_lea.vmem %s1, 184
    %708 = vst.msk [vmem:[%s707] sm:$0x4] %vm702, %v701
    %s709 = scalar_lea.vmem %s1, 247
    %710 = vst.msk [vmem:[%s709] sm:$0x8] %vm702, %v701
    %v711 = vld [vmem:[#allocation0] sm:$0xf]
    %712 = vrot.lane.b32.xlu0 %v711, 69
    %v713 = vpop.permute.xlu0 %712
    %vm714 = vcmask 7168
    %s715 = scalar_lea.vmem %s1, 59
    %716 = vst.msk [vmem:[%s715] sm:$0x1] %vm714, %v713
    %s717 = scalar_lea.vmem %s1, 122
    %718 = vst.msk [vmem:[%s717] sm:$0x2] %vm714, %v713
    %s719 = scalar_lea.vmem %s1, 185
    %720 = vst.msk [vmem:[%s719] sm:$0x4] %vm714, %v713
    %s721 = scalar_lea.vmem %s1, 248
    %722 = vst.msk [vmem:[%s721] sm:$0x8] %vm714, %v713
    %v723 = vld [vmem:[#allocation0] sm:$0xf]
    %724 = vrot.lane.b32.xlu0 %v723, 68
    %v725 = vpop.permute.xlu0 %724
    %vm726 = vcmask 7168
    %s727 = scalar_lea.vmem %s1, 60
    %728 = vst.msk [vmem:[%s727] sm:$0x1] %vm726, %v725
    %s729 = scalar_lea.vmem %s1, 123
    %730 = vst.msk [vmem:[%s729] sm:$0x2] %vm726, %v725
    %s731 = scalar_lea.vmem %s1, 186
    %732 = vst.msk [vmem:[%s731] sm:$0x4] %vm726, %v725
    %s733 = scalar_lea.vmem %s1, 249
    %734 = vst.msk [vmem:[%s733] sm:$0x8] %vm726, %v725
    %v735 = vld [vmem:[#allocation0] sm:$0xf]
    %736 = vrot.lane.b32.xlu0 %v735, 67
    %v737 = vpop.permute.xlu0 %736
    %vm738 = vcmask 7168
    %s739 = scalar_lea.vmem %s1, 61
    %740 = vst.msk [vmem:[%s739] sm:$0x1] %vm738, %v737
    %s741 = scalar_lea.vmem %s1, 124
    %742 = vst.msk [vmem:[%s741] sm:$0x2] %vm738, %v737
    %s743 = scalar_lea.vmem %s1, 187
    %744 = vst.msk [vmem:[%s743] sm:$0x4] %vm738, %v737
    %s745 = scalar_lea.vmem %s1, 250
    %746 = vst.msk [vmem:[%s745] sm:$0x8] %vm738, %v737
    %v747 = vld [vmem:[#allocation0] sm:$0xf]
    %748 = vrot.lane.b32.xlu0 %v747, 66
    %v749 = vpop.permute.xlu0 %748
    %vm750 = vcmask 7168
    %s751 = scalar_lea.vmem %s1, 62
    %752 = vst.msk [vmem:[%s751] sm:$0x1] %vm750, %v749
    %s753 = scalar_lea.vmem %s1, 125
    %754 = vst.msk [vmem:[%s753] sm:$0x2] %vm750, %v749
    %s755 = scalar_lea.vmem %s1, 188
    %756 = vst.msk [vmem:[%s755] sm:$0x4] %vm750, %v749
    %s757 = scalar_lea.vmem %s1, 251
    %758 = vst.msk [vmem:[%s757] sm:$0x8] %vm750, %v749
    %v759 = vld [vmem:[#allocation0] sm:$0xf]
    %760 = vrot.lane.b32.xlu0 %v759, 65
    %v761 = vpop.permute.xlu0 %760
    %vm762 = vcmask 7168
    %s763 = scalar_lea.vmem %s1, 63
    %764 = vst.msk [vmem:[%s763] sm:$0x1] %vm762, %v761
    %s765 = scalar_lea.vmem %s1, 126
    %766 = vst.msk [vmem:[%s765] sm:$0x2] %vm762, %v761
    %s767 = scalar_lea.vmem %s1, 189
    %768 = vst.msk [vmem:[%s767] sm:$0x4] %vm762, %v761
    %s769 = scalar_lea.vmem %s1, 252
    %770 = vst.msk [vmem:[%s769] sm:$0x8] %vm762, %v761

// kernel: generator_forward.6
$region0: #{generator_forward.6}
  #allocation0 [shape = 'u32[]', space=smem, size = 0x4, offset = 0x4, fixed_abs, tag = 'smem constant byte address 0x4 - core index']
  #allocation1 [shape = 'u32[72,128]{1,0:T(1,128)}', space=vmem, size = 0x9000, scoped, tag = 'internal scratch']
  %s0 = inlined_call_operand.vmem [shape: bf16[2,128,142], index: 0, kind: input, shape index: {}]
  %s1 = inlined_call_operand.vmem [shape: bf16[256,1152], index: 1, kind: input, shape index: {}]
  %s2 = inlined_call_operand.vmem [shape: f32[256,1], index: 2, kind: input, shape index: {}]
  %s3 = inlined_call_operand.vmem [shape: bf16[2,256,128], index: 3, kind: output, shape index: {}]
  %s4 = sld [smem:[#allocation0]]
  $region45: #{generator_forward.6} parent=0
    _
  %s6 = ssub.s32 1, %s4
  %s7 = scalar_select 0, %s6, %s4
  loop: start=0, step=1, limit=4
  $region2: #{generator_forward.6} parent=0 // loop_pre_header
    _
  $region3: #{generator_forward.6} parent=0 // loop_header
    %s9 = sphi 0, %s13
    %p10 = scmp.ge.s32.totalorder %s9, 4
    %s19 = sphi 0, %s21
    %s22 = sphi 0, %s19
    %s23 = sphi 0, %s22
    %s39 = sphi 0, %s23
    %s43 = sphi 0, %s43
    %s45 = sphi 0, %s43
    %s46 = sphi 0, %s45
    %s60 = sphi 0, %s46
    %s64 = sphi 0, %s64
    %s66 = sphi 0, %s64
    %s67 = sphi 0, %s66
    %s81 = sphi 0, %s67
    %s87 = sphi 0, %s89
    %s90 = sphi 0, %s87
    %s91 = sphi 0, %s90
    %s107 = sphi 0, %s91
  $region4: #{generator_forward.6} parent=0 // loop_header_branch
    %12 = sbr.rel (%p10) target = $region8
  $region5: #{generator_forward.6} parent=0 // loop_body
    %s14 = ssub.s32 %s9, 1
    %s15 = ssub.s32 %s9, 2
    %s16 = sadd.s32 %s9, 1
    %s17 = ssub.s32 %s9, %s16
    %p18 = scmp.eq.s32.totalorder %s17, 0
    %s20 = sadd.s32 %s19, 1
    %s21 = scalar_select %p18, %s19, %s20
    %p24 = pneg %p18
    %p25 = scmp.eq.s32.totalorder %s9, 1
    %p26 = por %p24, %p25
    %p27 = scmp.ne.s32.totalorder %s19, %s22
    %p28 = scmp.eq.s32.totalorder %s9, 0
    %p29 = por %p27, %p28
    %p30 = scmp.ne.s32.totalorder %s19, %s22
    %p31 = scmp.eq.s32.totalorder %s14, 1
    %p32 = por %p30, %p31
    %p33 = scmp.ne.s32.totalorder %s22, %s23
    %p34 = scmp.eq.s32.totalorder %s14, 0
    %p35 = por %p33, %p34
    %p36 = scmp.ne.s32.totalorder %s22, %s23
    %p37 = scmp.eq.s32.totalorder %s15, 1
    %p38 = por %p36, %p37
    %p40 = scmp.ne.s32.totalorder %s23, %s39
    %p41 = scmp.eq.s32.totalorder %s15, 0
    %p42 = por %p40, %p41
    %s44 = sadd.s32 %s43, 1
    %p47 = scmp.eq.s32.totalorder %s9, 1
    %p48 = scmp.ne.s32.totalorder %s43, %s45
    %p49 = scmp.eq.s32.totalorder %s9, 0
    %p50 = por %p48, %p49
    %p51 = scmp.ne.s32.totalorder %s43, %s45
    %p52 = scmp.eq.s32.totalorder %s14, 1
    %p53 = por %p51, %p52
    %p54 = scmp.ne.s32.totalorder %s45, %s46
    %p55 = scmp.eq.s32.totalorder %s14, 0
    %p56 = por %p54, %p55
    %p57 = scmp.ne.s32.totalorder %s45, %s46
    %p58 = scmp.eq.s32.totalorder %s15, 1
    %p59 = por %p57, %p58
    %p61 = scmp.ne.s32.totalorder %s46, %s60
    %p62 = scmp.eq.s32.totalorder %s15, 0
    %p63 = por %p61, %p62
    %s65 = sadd.s32 %s64, 1
    %p68 = scmp.eq.s32.totalorder %s9, 1
    %p69 = scmp.ne.s32.totalorder %s64, %s66
    %p70 = scmp.eq.s32.totalorder %s9, 0
    %p71 = por %p69, %p70
    %p72 = scmp.ne.s32.totalorder %s64, %s66
    %p73 = scmp.eq.s32.totalorder %s14, 1
    %p74 = por %p72, %p73
    %p75 = scmp.ne.s32.totalorder %s66, %s67
    %p76 = scmp.eq.s32.totalorder %s14, 0
    %p77 = por %p75, %p76
    %p78 = scmp.ne.s32.totalorder %s66, %s67
    %p79 = scmp.eq.s32.totalorder %s15, 1
    %p80 = por %p78, %p79
    %p82 = scmp.ne.s32.totalorder %s67, %s81
    %p83 = scmp.eq.s32.totalorder %s15, 0
    %p84 = por %p82, %p83
    %s85 = ssub.s32 %s9, %s16
    %p86 = scmp.eq.s32.totalorder %s85, 0
    %s88 = sadd.s32 %s87, 1
    %s89 = scalar_select %p86, %s87, %s88
    %p92 = pneg %p86
    %p93 = scmp.eq.s32.totalorder %s9, 1
    %p94 = por %p92, %p93
    %p95 = scmp.ne.s32.totalorder %s87, %s90
    %p96 = scmp.eq.s32.totalorder %s9, 0
    %p97 = por %p95, %p96
    %p98 = scmp.ne.s32.totalorder %s87, %s90
    %p99 = scmp.eq.s32.totalorder %s14, 1
    %p100 = por %p98, %p99
    %p101 = scmp.ne.s32.totalorder %s90, %s91
    %p102 = scmp.eq.s32.totalorder %s14, 0
    %p103 = por %p101, %p102
    %p104 = scmp.ne.s32.totalorder %s90, %s91
    %p105 = scmp.eq.s32.totalorder %s15, 1
    %p106 = por %p104, %p105
    %p108 = scmp.ne.s32.totalorder %s91, %s107
    %p109 = scmp.eq.s32.totalorder %s15, 0
    %p110 = por %p108, %p109
    %p111 = scmp.le.s32.totalorder 1, %s9
    %p112 = scmp.lt.s32.totalorder %s9, 3
    %p113 = pnand %p111, %p112
    %p114 = pneg %p113
    // Predicated region
    $region9: #{generator_forward.6} parent=5 // pred_check
      _
    $region10: #{generator_forward.6} parent=5 // pred_check_branch
      %116 = sbr.rel (%p113) target = $region12
    $region11: #{generator_forward.6} parent=5 // pred_region
      %s117 = ssub.s32 %s9, 1
      // Predicated region
      $region13: #{generator_forward.6} parent=11 // pred_check
        %p118 = pneg %p56
      $region14: #{generator_forward.6} parent=11 // pred_check_branch
        %120 = sbr.rel (%p118) target = $region16
      $region15: #{generator_forward.6} parent=11 // pred_region
        _
      $region16: #{generator_forward.6} parent=11 // pred_fallthru
        _
      // Predicated region
      $region17: #{generator_forward.6} parent=11 // pred_check
        %p121 = pneg %p77
      $region18: #{generator_forward.6} parent=11 // pred_check_branch
        %123 = sbr.rel (%p121) target = $region20
      $region19: #{generator_forward.6} parent=11 // pred_region
        _
      $region20: #{generator_forward.6} parent=11 // pred_fallthru
        _
    $region12: #{generator_forward.6} parent=5 // pred_fallthru
      _
    %p124 = scmp.lt.s32.totalorder %s9, 2
    // Predicated region
    $region21: #{generator_forward.6} parent=5 // pred_check
      %p125 = pneg %p124
    $region22: #{generator_forward.6} parent=5 // pred_check_branch
      %127 = sbr.rel (%p125) target = $region24
    $region23: #{generator_forward.6} parent=5 // pred_region
      // Predicated region
      $region25: #{generator_forward.6} parent=23 // pred_check
        %p128 = pneg %p29
      $region26: #{generator_forward.6} parent=23 // pred_check_branch
        %130 = sbr.rel (%p128) target = $region28
      $region27: #{generator_forward.6} parent=23 // pred_region
        %p131 = scmp.lt.s32.totalorder %s9, 1
        %s132 = scalar_select %p131, %s9, 1
        %s133 = smul.addr %s132, 32
        %s134 = smul.addr %s133, 4
        %s135 = scalar_lea.vmem %s0, %s134
      $region28: #{generator_forward.6} parent=23 // pred_fallthru
        _
    $region24: #{generator_forward.6} parent=5 // pred_fallthru
      _
    %p136 = scmp.le.s32.totalorder 1, %s9
    %p137 = scmp.lt.s32.totalorder %s9, 3
    %p138 = pnand %p136, %p137
    %p139 = pneg %p138
    // Predicated region
    $region29: #{generator_forward.6} parent=5 // pred_check
      _
    $region30: #{generator_forward.6} parent=5 // pred_check_branch
      %141 = sbr.rel (%p138) target = $region32
    $region31: #{generator_forward.6} parent=5 // pred_region
      %s142 = ssub.s32 %s9, 1
      %p143 = scmp.lt.s32.totalorder %s14, 1
      %s144 = scalar_select %p143, %s14, 1
      %s145 = smul.addr %s144, 32
      %s146 = smul.addr %s145, 4
      %s147 = scalar_lea.vmem %s0, %s146
      %p148 = pneg %p35
      %p149 = pneg %p32
      %p150 = pneg %p56
      %p151 = pneg %p53
      %p152 = pneg %p77
      %p153 = pneg %p74
      %p154 = pneg %p103
      %p155 = pneg %p100
      %p156 = scmp.lt.s32.totalorder %s14, 1
      %s157 = scalar_select %p156, %s14, 1
      %s158 = smul.addr %s157, 32
      %s159 = smul.addr %s158, 4
      %s160 = scalar_lea.vmem %s3, %s159
      %p161 = scmp.lt.s32.totalorder %s14, 1
      %s162 = scalar_select %p161, %s14, 1
      %s163 = smul.addr %s162, 32
      %s164 = smul.addr %s163, 4
      %s165 = scalar_lea.vmem %s0, %s164
      %p166 = scmp.lt.s32.totalorder %s14, 1
      %s167 = scalar_select %p166, %s14, 1
      %s168 = smul.addr %s167, 32
      %s169 = smul.addr %s168, 4
      %s170 = scalar_lea.vmem %s3, %s169
      %v171 = vld [vmem:[%s165] sm:$0xff]
      %v172 = vld [vmem:[%s165 + $0x8] sm:$0xff]
      %v173 = vld [vmem:[%s165 + $0x10] sm:$0xff]
      %v174 = vld [vmem:[%s165 + $0x18] sm:$0xff]
      %v175 = vld [vmem:[%s165 + $0x20] sm:$0xff]
      %v176 = vld [vmem:[%s165 + $0x28] sm:$0xff]
      %v177 = vld [vmem:[%s165 + $0x30] sm:$0xff]
      %v178 = vld [vmem:[%s165 + $0x38] sm:$0xff]
      %v179 = vld [vmem:[%s165 + $0x40] sm:$0xff]
      %v180 = vld [vmem:[%s165 + $0x48] sm:$0xff]
      %v181 = vld [vmem:[%s165 + $0x50] sm:$0xff]
      %v182 = vld [vmem:[%s165 + $0x58] sm:$0xff]
      %v183 = vld [vmem:[%s165 + $0x60] sm:$0xff]
      %v184 = vld [vmem:[%s165 + $0x68] sm:$0xff]
      %v185 = vld [vmem:[%s165 + $0x70] sm:$0xff]
      %v186 = vld [vmem:[%s165 + $0x78] sm:$0xff]
      %v203 = vunpack.c.l.b16 %v171
      %v204 = vunpack.c.l.b16 %v172
      %v205 = vunpack.c.l.b16 %v173
      %v206 = vunpack.c.l.b16 %v174
      %v207 = vunpack.c.l.b16 %v175
      %v208 = vunpack.c.l.b16 %v176
      %v209 = vunpack.c.l.b16 %v177
      %v210 = vunpack.c.l.b16 %v178
      %v211 = vunpack.c.l.b16 %v179
      %v212 = vunpack.c.l.b16 %v180
      %v213 = vunpack.c.l.b16 %v181
      %v214 = vunpack.c.l.b16 %v182
      %v215 = vunpack.c.l.b16 %v183
      %v216 = vunpack.c.l.b16 %v184
      %v217 = vunpack.c.l.b16 %v185
      %v218 = vunpack.c.l.b16 %v186
      %v219 = vpack.c.b16 %v204, %v203
      %v220 = vpack.c.b16 %v206, %v205
      %v221 = vpack.c.b16 %v208, %v207
      %v222 = vpack.c.b16 %v210, %v209
      %v223 = vpack.c.b16 %v212, %v211
      %v224 = vpack.c.b16 %v214, %v213
      %v225 = vpack.c.b16 %v216, %v215
      %v226 = vpack.c.b16 %v218, %v217
      %v235 = vunpack.c.h.b16 %v171
      %v236 = vunpack.c.h.b16 %v172
      %v237 = vunpack.c.h.b16 %v173
      %v238 = vunpack.c.h.b16 %v174
      %v239 = vunpack.c.h.b16 %v175
      %v240 = vunpack.c.h.b16 %v176
      %v241 = vunpack.c.h.b16 %v177
      %v242 = vunpack.c.h.b16 %v178
      %v243 = vunpack.c.h.b16 %v179
      %v244 = vunpack.c.h.b16 %v180
      %v245 = vunpack.c.h.b16 %v181
      %v246 = vunpack.c.h.b16 %v182
      %v247 = vunpack.c.h.b16 %v183
      %v248 = vunpack.c.h.b16 %v184
      %v249 = vunpack.c.h.b16 %v185
      %v250 = vunpack.c.h.b16 %v186
      %v251 = vpack.c.b16 %v236, %v235
      %v252 = vpack.c.b16 %v238, %v237
      %v253 = vpack.c.b16 %v240, %v239
      %v254 = vpack.c.b16 %v242, %v241
      %v255 = vpack.c.b16 %v244, %v243
      %v256 = vpack.c.b16 %v246, %v245
      %v257 = vpack.c.b16 %v248, %v247
      %v258 = vpack.c.b16 %v250, %v249
      %259 = vrot.lane.b32.xlu0 %v219, 127
      %v260 = vpop.permute.xlu0 %259
      %261 = vrot.lane.b32.xlu0 %v251, 127
      %v262 = vpop.permute.xlu0 %261
      %263 = vrot.lane.b32.xlu0 %v220, 127
      %v264 = vpop.permute.xlu0 %263
      %265 = vrot.lane.b32.xlu0 %v252, 127
      %v266 = vpop.permute.xlu0 %265
      %267 = vrot.lane.b32.xlu0 %v221, 127
      %v268 = vpop.permute.xlu0 %267
      %269 = vrot.lane.b32.xlu0 %v253, 127
      %v270 = vpop.permute.xlu0 %269
      %271 = vrot.lane.b32.xlu0 %v222, 127
      %v272 = vpop.permute.xlu0 %271
      %273 = vrot.lane.b32.xlu0 %v254, 127
      %v274 = vpop.permute.xlu0 %273
      %275 = vrot.lane.b32.xlu0 %v223, 127
      %v276 = vpop.permute.xlu0 %275
      %277 = vrot.lane.b32.xlu0 %v255, 127
      %v278 = vpop.permute.xlu0 %277
      %279 = vrot.lane.b32.xlu0 %v224, 127
      %v280 = vpop.permute.xlu0 %279
      %281 = vrot.lane.b32.xlu0 %v256, 127
      %v282 = vpop.permute.xlu0 %281
      %283 = vrot.lane.b32.xlu0 %v225, 127
      %v284 = vpop.permute.xlu0 %283
      %285 = vrot.lane.b32.xlu0 %v257, 127
      %v286 = vpop.permute.xlu0 %285
      %287 = vrot.lane.b32.xlu0 %v226, 127
      %v288 = vpop.permute.xlu0 %287
      %289 = vrot.lane.b32.xlu0 %v258, 127
      %v290 = vpop.permute.xlu0 %289
      %vm291 = vcmask 1039360
      %v292 = vsel %vm291, %v260, %v262
      %v293 = vsel %vm291, %v264, %v266
      %v294 = vsel %vm291, %v268, %v270
      %v295 = vsel %vm291, %v272, %v274
      %v296 = vsel %vm291, %v276, %v278
      %v297 = vsel %vm291, %v280, %v282
      %v298 = vsel %vm291, %v284, %v286
      %v299 = vsel %vm291, %v288, %v290
      %308 = vrot.lane.b32.xlu0 %v219, 126
      %v309 = vpop.permute.xlu0 %308
      %310 = vrot.lane.b32.xlu0 %v251, 126
      %v311 = vpop.permute.xlu0 %310
      %312 = vrot.lane.b32.xlu0 %v220, 126
      %v313 = vpop.permute.xlu0 %312
      %314 = vrot.lane.b32.xlu0 %v252, 126
      %v315 = vpop.permute.xlu0 %314
      %316 = vrot.lane.b32.xlu0 %v221, 126
      %v317 = vpop.permute.xlu0 %316
      %318 = vrot.lane.b32.xlu0 %v253, 126
      %v319 = vpop.permute.xlu0 %318
      %320 = vrot.lane.b32.xlu0 %v222, 126
      %v321 = vpop.permute.xlu0 %320
      %322 = vrot.lane.b32.xlu0 %v254, 126
      %v323 = vpop.permute.xlu0 %322
      %324 = vrot.lane.b32.xlu0 %v223, 126
      %v325 = vpop.permute.xlu0 %324
      %326 = vrot.lane.b32.xlu0 %v255, 126
      %v327 = vpop.permute.xlu0 %326
      %328 = vrot.lane.b32.xlu0 %v224, 126
      %v329 = vpop.permute.xlu0 %328
      %330 = vrot.lane.b32.xlu0 %v256, 126
      %v331 = vpop.permute.xlu0 %330
      %332 = vrot.lane.b32.xlu0 %v225, 126
      %v333 = vpop.permute.xlu0 %332
      %334 = vrot.lane.b32.xlu0 %v257, 126
      %v335 = vpop.permute.xlu0 %334
      %336 = vrot.lane.b32.xlu0 %v226, 126
      %v337 = vpop.permute.xlu0 %336
      %338 = vrot.lane.b32.xlu0 %v258, 126
      %v339 = vpop.permute.xlu0 %338
      %vm340 = vcmask 1031168
      %v341 = vsel %vm340, %v309, %v311
      %v342 = vsel %vm340, %v313, %v315
      %v343 = vsel %vm340, %v317, %v319
      %v344 = vsel %vm340, %v321, %v323
      %v345 = vsel %vm340, %v325, %v327
      %v346 = vsel %vm340, %v329, %v331
      %v347 = vsel %vm340, %v333, %v335
      %v348 = vsel %vm340, %v337, %v339
      %357 = vrot.lane.b32.xlu0 %v219, 122
      %v358 = vpop.permute.xlu0 %357
      %359 = vrot.lane.b32.xlu0 %v251, 122
      %v360 = vpop.permute.xlu0 %359
      %361 = vrot.lane.b32.xlu0 %v220, 122
      %v362 = vpop.permute.xlu0 %361
      %363 = vrot.lane.b32.xlu0 %v252, 122
      %v364 = vpop.permute.xlu0 %363
      %365 = vrot.lane.b32.xlu0 %v221, 122
      %v366 = vpop.permute.xlu0 %365
      %367 = vrot.lane.b32.xlu0 %v253, 122
      %v368 = vpop.permute.xlu0 %367
      %369 = vrot.lane.b32.xlu0 %v222, 122
      %v370 = vpop.permute.xlu0 %369
      %371 = vrot.lane.b32.xlu0 %v254, 122
      %v372 = vpop.permute.xlu0 %371
      %373 = vrot.lane.b32.xlu0 %v223, 122
      %v374 = vpop.permute.xlu0 %373
      %375 = vrot.lane.b32.xlu0 %v255, 122
      %v376 = vpop.permute.xlu0 %375
      %377 = vrot.lane.b32.xlu0 %v224, 122
      %v378 = vpop.permute.xlu0 %377
      %379 = vrot.lane.b32.xlu0 %v256, 122
      %v380 = vpop.permute.xlu0 %379
      %381 = vrot.lane.b32.xlu0 %v225, 122
      %v382 = vpop.permute.xlu0 %381
      %383 = vrot.lane.b32.xlu0 %v257, 122
      %v384 = vpop.permute.xlu0 %383
      %385 = vrot.lane.b32.xlu0 %v226, 122
      %v386 = vpop.permute.xlu0 %385
      %387 = vrot.lane.b32.xlu0 %v258, 122
      %v388 = vpop.permute.xlu0 %387
      %vm389 = vcmask 998400
      %v390 = vsel %vm389, %v358, %v360
      %v391 = vsel %vm389, %v362, %v364
      %v392 = vsel %vm389, %v366, %v368
      %v393 = vsel %vm389, %v370, %v372
      %v394 = vsel %vm389, %v374, %v376
      %v395 = vsel %vm389, %v378, %v380
      %v396 = vsel %vm389, %v382, %v384
      %v397 = vsel %vm389, %v386, %v388
      %406 = vrot.lane.b32.xlu0 %v219, 121
      %v407 = vpop.permute.xlu0 %406
      %408 = vrot.lane.b32.xlu0 %v251, 121
      %v409 = vpop.permute.xlu0 %408
      %410 = vrot.lane.b32.xlu0 %v220, 121
      %v411 = vpop.permute.xlu0 %410
      %412 = vrot.lane.b32.xlu0 %v252, 121
      %v413 = vpop.permute.xlu0 %412
      %414 = vrot.lane.b32.xlu0 %v221, 121
      %v415 = vpop.permute.xlu0 %414
      %416 = vrot.lane.b32.xlu0 %v253, 121
      %v417 = vpop.permute.xlu0 %416
      %418 = vrot.lane.b32.xlu0 %v222, 121
      %v419 = vpop.permute.xlu0 %418
      %420 = vrot.lane.b32.xlu0 %v254, 121
      %v421 = vpop.permute.xlu0 %420
      %422 = vrot.lane.b32.xlu0 %v223, 121
      %v423 = vpop.permute.xlu0 %422
      %424 = vrot.lane.b32.xlu0 %v255, 121
      %v425 = vpop.permute.xlu0 %424
      %426 = vrot.lane.b32.xlu0 %v224, 121
      %v427 = vpop.permute.xlu0 %426
      %428 = vrot.lane.b32.xlu0 %v256, 121
      %v429 = vpop.permute.xlu0 %428
      %430 = vrot.lane.b32.xlu0 %v225, 121
      %v431 = vpop.permute.xlu0 %430
      %432 = vrot.lane.b32.xlu0 %v257, 121
      %v433 = vpop.permute.xlu0 %432
      %434 = vrot.lane.b32.xlu0 %v226, 121
      %v435 = vpop.permute.xlu0 %434
      %436 = vrot.lane.b32.xlu0 %v258, 121
      %v437 = vpop.permute.xlu0 %436
      %vm438 = vcmask 990208
      %v439 = vsel %vm438, %v407, %v409
      %v440 = vsel %vm438, %v411, %v413
      %v441 = vsel %vm438, %v415, %v417
      %v442 = vsel %vm438, %v419, %v421
      %v443 = vsel %vm438, %v423, %v425
      %v444 = vsel %vm438, %v427, %v429
      %v445 = vsel %vm438, %v431, %v433
      %v446 = vsel %vm438, %v435, %v437
      %455 = vrot.lane.b32.xlu0 %v219, 120
      %v456 = vpop.permute.xlu0 %455
      %457 = vrot.lane.b32.xlu0 %v251, 120
      %v458 = vpop.permute.xlu0 %457
      %459 = vrot.lane.b32.xlu0 %v220, 120
      %v460 = vpop.permute.xlu0 %459
      %461 = vrot.lane.b32.xlu0 %v252, 120
      %v462 = vpop.permute.xlu0 %461
      %463 = vrot.lane.b32.xlu0 %v221, 120
      %v464 = vpop.permute.xlu0 %463
      %465 = vrot.lane.b32.xlu0 %v253, 120
      %v466 = vpop.permute.xlu0 %465
      %467 = vrot.lane.b32.xlu0 %v222, 120
      %v468 = vpop.permute.xlu0 %467
      %469 = vrot.lane.b32.xlu0 %v254, 120
      %v470 = vpop.permute.xlu0 %469
      %471 = vrot.lane.b32.xlu0 %v223, 120
      %v472 = vpop.permute.xlu0 %471
      %473 = vrot.lane.b32.xlu0 %v255, 120
      %v474 = vpop.permute.xlu0 %473
      %475 = vrot.lane.b32.xlu0 %v224, 120
      %v476 = vpop.permute.xlu0 %475
      %477 = vrot.lane.b32.xlu0 %v256, 120
      %v478 = vpop.permute.xlu0 %477
      %479 = vrot.lane.b32.xlu0 %v225, 120
      %v480 = vpop.permute.xlu0 %479
      %481 = vrot.lane.b32.xlu0 %v257, 120
      %v482 = vpop.permute.xlu0 %481
      %483 = vrot.lane.b32.xlu0 %v226, 120
      %v484 = vpop.permute.xlu0 %483
      %485 = vrot.lane.b32.xlu0 %v258, 120
      %v486 = vpop.permute.xlu0 %485
      %vm487 = vcmask 982016
      %v488 = vsel %vm487, %v456, %v458
      %v489 = vsel %vm487, %v460, %v462
      %v490 = vsel %vm487, %v464, %v466
      %v491 = vsel %vm487, %v468, %v470
      %v492 = vsel %vm487, %v472, %v474
      %v493 = vsel %vm487, %v476, %v478
      %v494 = vsel %vm487, %v480, %v482
      %v495 = vsel %vm487, %v484, %v486
      %504 = vrot.lane.b32.xlu0 %v219, 116
      %v505 = vpop.permute.xlu0 %504
      %506 = vrot.lane.b32.xlu0 %v251, 116
      %v507 = vpop.permute.xlu0 %506
      %508 = vrot.lane.b32.xlu0 %v220, 116
      %v509 = vpop.permute.xlu0 %508
      %510 = vrot.lane.b32.xlu0 %v252, 116
      %v511 = vpop.permute.xlu0 %510
      %512 = vrot.lane.b32.xlu0 %v221, 116
      %v513 = vpop.permute.xlu0 %512
      %514 = vrot.lane.b32.xlu0 %v253, 116
      %v515 = vpop.permute.xlu0 %514
      %516 = vrot.lane.b32.xlu0 %v222, 116
      %v517 = vpop.permute.xlu0 %516
      %518 = vrot.lane.b32.xlu0 %v254, 116
      %v519 = vpop.permute.xlu0 %518
      %520 = vrot.lane.b32.xlu0 %v223, 116
      %v521 = vpop.permute.xlu0 %520
      %522 = vrot.lane.b32.xlu0 %v255, 116
      %v523 = vpop.permute.xlu0 %522
      %524 = vrot.lane.b32.xlu0 %v224, 116
      %v525 = vpop.permute.xlu0 %524
      %526 = vrot.lane.b32.xlu0 %v256, 116
      %v527 = vpop.permute.xlu0 %526
      %528 = vrot.lane.b32.xlu0 %v225, 116
      %v529 = vpop.permute.xlu0 %528
      %530 = vrot.lane.b32.xlu0 %v257, 116
      %v531 = vpop.permute.xlu0 %530
      %532 = vrot.lane.b32.xlu0 %v226, 116
      %v533 = vpop.permute.xlu0 %532
      %534 = vrot.lane.b32.xlu0 %v258, 116
      %v535 = vpop.permute.xlu0 %534
      %vm536 = vcmask 949248
      %v537 = vsel %vm536, %v505, %v507
      %v538 = vsel %vm536, %v509, %v511
      %v539 = vsel %vm536, %v513, %v515
      %v540 = vsel %vm536, %v517, %v519
      %v541 = vsel %vm536, %v521, %v523
      %v542 = vsel %vm536, %v525, %v527
      %v543 = vsel %vm536, %v529, %v531
      %v544 = vsel %vm536, %v533, %v535
      %553 = vrot.lane.b32.xlu0 %v219, 115
      %v554 = vpop.permute.xlu0 %553
      %555 = vrot.lane.b32.xlu0 %v251, 115
      %v556 = vpop.permute.xlu0 %555
      %557 = vrot.lane.b32.xlu0 %v220, 115
      %v558 = vpop.permute.xlu0 %557
      %559 = vrot.lane.b32.xlu0 %v252, 115
      %v560 = vpop.permute.xlu0 %559
      %561 = vrot.lane.b32.xlu0 %v221, 115
      %v562 = vpop.permute.xlu0 %561
      %563 = vrot.lane.b32.xlu0 %v253, 115
      %v564 = vpop.permute.xlu0 %563
      %565 = vrot.lane.b32.xlu0 %v222, 115
      %v566 = vpop.permute.xlu0 %565
      %567 = vrot.lane.b32.xlu0 %v254, 115
      %v568 = vpop.permute.xlu0 %567
      %569 = vrot.lane.b32.xlu0 %v223, 115
      %v570 = vpop.permute.xlu0 %569
      %571 = vrot.lane.b32.xlu0 %v255, 115
      %v572 = vpop.permute.xlu0 %571
      %573 = vrot.lane.b32.xlu0 %v224, 115
      %v574 = vpop.permute.xlu0 %573
      %575 = vrot.lane.b32.xlu0 %v256, 115
      %v576 = vpop.permute.xlu0 %575
      %577 = vrot.lane.b32.xlu0 %v225, 115
      %v578 = vpop.permute.xlu0 %577
      %579 = vrot.lane.b32.xlu0 %v257, 115
      %v580 = vpop.permute.xlu0 %579
      %581 = vrot.lane.b32.xlu0 %v226, 115
      %v582 = vpop.permute.xlu0 %581
      %583 = vrot.lane.b32.xlu0 %v258, 115
      %v584 = vpop.permute.xlu0 %583
      %vm585 = vcmask 941056
      %v586 = vsel %vm585, %v554, %v556
      %v587 = vsel %vm585, %v558, %v560
      %v588 = vsel %vm585, %v562, %v564
      %v589 = vsel %vm585, %v566, %v568
      %v590 = vsel %vm585, %v570, %v572
      %v591 = vsel %vm585, %v574, %v576
      %v592 = vsel %vm585, %v578, %v580
      %v593 = vsel %vm585, %v582, %v584
      %602 = vrot.lane.b32.xlu0 %v219, 114
      %v603 = vpop.permute.xlu0 %602
      %604 = vrot.lane.b32.xlu0 %v251, 114
      %v605 = vpop.permute.xlu0 %604
      %606 = vrot.lane.b32.xlu0 %v220, 114
      %v607 = vpop.permute.xlu0 %606
      %608 = vrot.lane.b32.xlu0 %v252, 114
      %v609 = vpop.permute.xlu0 %608
      %610 = vrot.lane.b32.xlu0 %v221, 114
      %v611 = vpop.permute.xlu0 %610
      %612 = vrot.lane.b32.xlu0 %v253, 114
      %v613 = vpop.permute.xlu0 %612
      %614 = vrot.lane.b32.xlu0 %v222, 114
      %v615 = vpop.permute.xlu0 %614
      %616 = vrot.lane.b32.xlu0 %v254, 114
      %v617 = vpop.permute.xlu0 %616
      %618 = vrot.lane.b32.xlu0 %v223, 114
      %v619 = vpop.permute.xlu0 %618
      %620 = vrot.lane.b32.xlu0 %v255, 114
      %v621 = vpop.permute.xlu0 %620
      %622 = vrot.lane.b32.xlu0 %v224, 114
      %v623 = vpop.permute.xlu0 %622
      %624 = vrot.lane.b32.xlu0 %v256, 114
      %v625 = vpop.permute.xlu0 %624
      %626 = vrot.lane.b32.xlu0 %v225, 114
      %v627 = vpop.permute.xlu0 %626
      %628 = vrot.lane.b32.xlu0 %v257, 114
      %v629 = vpop.permute.xlu0 %628
      %630 = vrot.lane.b32.xlu0 %v226, 114
      %v631 = vpop.permute.xlu0 %630
      %632 = vrot.lane.b32.xlu0 %v258, 114
      %v633 = vpop.permute.xlu0 %632
      %vm634 = vcmask 932864
      %v635 = vsel %vm634, %v603, %v605
      %v636 = vsel %vm634, %v607, %v609
      %v637 = vsel %vm634, %v611, %v613
      %v638 = vsel %vm634, %v615, %v617
      %v639 = vsel %vm634, %v619, %v621
      %v640 = vsel %vm634, %v623, %v625
      %v641 = vsel %vm634, %v627, %v629
      %v642 = vsel %vm634, %v631, %v633
      %v651 = vld [vmem:[%s1] sm:$0xff]
      %v652 = vld [vmem:[%s1 + $0x8] sm:$0xff]
      %v653 = vld [vmem:[%s1 + $0x10] sm:$0xff]
      %v654 = vld [vmem:[%s1 + $0x18] sm:$0xff]
      %v655 = vld [vmem:[%s1 + $0x20] sm:$0xf]
      %v656 = vld [vmem:[%s1 + $0x24] sm:$0xff]
      %v657 = vld [vmem:[%s1 + $0x2c] sm:$0xff]
      %v658 = vld [vmem:[%s1 + $0x34] sm:$0xff]
      %v659 = vld [vmem:[%s1 + $0x3c] sm:$0xff]
      %v660 = vld [vmem:[%s1 + $0x44] sm:$0xf]
      %v661 = vld [vmem:[%s1 + $0x48] sm:$0xff]
      %v662 = vld [vmem:[%s1 + $0x50] sm:$0xff]
      %v663 = vld [vmem:[%s1 + $0x58] sm:$0xff]
      %v664 = vld [vmem:[%s1 + $0x60] sm:$0xff]
      %v665 = vld [vmem:[%s1 + $0x68] sm:$0xf]
      %v666 = vld [vmem:[%s1 + $0x6c] sm:$0xff]
      %v667 = vld [vmem:[%s1 + $0x74] sm:$0xff]
      %v668 = vld [vmem:[%s1 + $0x7c] sm:$0xff]
      %v669 = vld [vmem:[%s1 + $0x84] sm:$0xff]
      %v670 = vld [vmem:[%s1 + $0x8c] sm:$0xf]
      %v671 = vld [vmem:[%s1 + $0x90] sm:$0xff]
      %v672 = vld [vmem:[%s1 + $0x98] sm:$0xff]
      %v673 = vld [vmem:[%s1 + $0xa0] sm:$0xff]
      %v674 = vld [vmem:[%s1 + $0xa8] sm:$0xff]
      %v675 = vld [vmem:[%s1 + $0xb0] sm:$0xf]
      %v676 = vld [vmem:[%s1 + $0xb4] sm:$0xff]
      %v677 = vld [vmem:[%s1 + $0xbc] sm:$0xff]
      %v678 = vld [vmem:[%s1 + $0xc4] sm:$0xff]
      %v679 = vld [vmem:[%s1 + $0xcc] sm:$0xff]
      %v680 = vld [vmem:[%s1 + $0xd4] sm:$0xf]
      %v681 = vld [vmem:[%s1 + $0xd8] sm:$0xff]
      %v682 = vld [vmem:[%s1 + $0xe0] sm:$0xff]
      %v683 = vld [vmem:[%s1 + $0xe8] sm:$0xff]
      %v684 = vld [vmem:[%s1 + $0xf0] sm:$0xff]
      %v685 = vld [vmem:[%s1 + $0xf8] sm:$0xf]
      %v686 = vld [vmem:[%s1 + $0xfc] sm:$0xff]
      %v687 = vld [vmem:[%s1 + $0x104] sm:$0xff]
      %v688 = vld [vmem:[%s1 + $0x10c] sm:$0xff]
      %v689 = vld [vmem:[%s1 + $0x114] sm:$0xff]
      %v690 = vld [vmem:[%s1 + $0x11c] sm:$0xf]
      %v691 = vld [vmem:[%s1 + $0x120] sm:$0xff]
      %v692 = vld [vmem:[%s1 + $0x128] sm:$0xff]
      %v693 = vld [vmem:[%s1 + $0x130] sm:$0xff]
      %v694 = vld [vmem:[%s1 + $0x138] sm:$0xff]
      %v695 = vld [vmem:[%s1 + $0x140] sm:$0xf]
      %v696 = vld [vmem:[%s1 + $0x144] sm:$0xff]
      %v697 = vld [vmem:[%s1 + $0x14c] sm:$0xff]
      %v698 = vld [vmem:[%s1 + $0x154] sm:$0xff]
      %v699 = vld [vmem:[%s1 + $0x15c] sm:$0xff]
      %v700 = vld [vmem:[%s1 + $0x164] sm:$0xf]
      %v701 = vld [vmem:[%s1 + $0x168] sm:$0xff]
      %v702 = vld [vmem:[%s1 + $0x170] sm:$0xff]
      %v703 = vld [vmem:[%s1 + $0x178] sm:$0xff]
      %v704 = vld [vmem:[%s1 + $0x180] sm:$0xff]
      %v705 = vld [vmem:[%s1 + $0x188] sm:$0xf]
      %v706 = vld [vmem:[%s1 + $0x18c] sm:$0xff]
      %v707 = vld [vmem:[%s1 + $0x194] sm:$0xff]
      %v708 = vld [vmem:[%s1 + $0x19c] sm:$0xff]
      %v709 = vld [vmem:[%s1 + $0x1a4] sm:$0xff]
      %v710 = vld [vmem:[%s1 + $0x1ac] sm:$0xf]
      %v711 = vld [vmem:[%s1 + $0x1b0] sm:$0xff]
      %v712 = vld [vmem:[%s1 + $0x1b8] sm:$0xff]
      %v713 = vld [vmem:[%s1 + $0x1c0] sm:$0xff]
      %v714 = vld [vmem:[%s1 + $0x1c8] sm:$0xff]
      %v715 = vld [vmem:[%s1 + $0x1d0] sm:$0xf]
      %v716 = vld [vmem:[%s1 + $0x1d4] sm:$0xff]
      %v717 = vld [vmem:[%s1 + $0x1dc] sm:$0xff]
      %v718 = vld [vmem:[%s1 + $0x1e4] sm:$0xff]
      %v719 = vld [vmem:[%s1 + $0x1ec] sm:$0xff]
      %v720 = vld [vmem:[%s1 + $0x1f4] sm:$0xf]
      %v721 = vld [vmem:[%s1 + $0x1f8] sm:$0xff]
      %v722 = vld [vmem:[%s1 + $0x200] sm:$0xff]
      %v723 = vld [vmem:[%s1 + $0x208] sm:$0xff]
      %v724 = vld [vmem:[%s1 + $0x210] sm:$0xff]
      %v725 = vld [vmem:[%s1 + $0x218] sm:$0xf]
      %v726 = vld [vmem:[%s1 + $0x21c] sm:$0xff]
      %v727 = vld [vmem:[%s1 + $0x224] sm:$0xff]
      %v728 = vld [vmem:[%s1 + $0x22c] sm:$0xff]
      %v729 = vld [vmem:[%s1 + $0x234] sm:$0xff]
      %v730 = vld [vmem:[%s1 + $0x23c] sm:$0xf]
      %v731 = vld [vmem:[%s1 + $0x240] sm:$0xff]
      %v732 = vld [vmem:[%s1 + $0x248] sm:$0xff]
      %v733 = vld [vmem:[%s1 + $0x250] sm:$0xff]
      %v734 = vld [vmem:[%s1 + $0x258] sm:$0xff]
      %v735 = vld [vmem:[%s1 + $0x260] sm:$0xf]
      %v736 = vld [vmem:[%s1 + $0x264] sm:$0xff]
      %v737 = vld [vmem:[%s1 + $0x26c] sm:$0xff]
      %v738 = vld [vmem:[%s1 + $0x274] sm:$0xff]
      %v739 = vld [vmem:[%s1 + $0x27c] sm:$0xff]
      %v740 = vld [vmem:[%s1 + $0x284] sm:$0xf]
      %v741 = vld [vmem:[%s1 + $0x288] sm:$0xff]
      %v742 = vld [vmem:[%s1 + $0x290] sm:$0xff]
      %v743 = vld [vmem:[%s1 + $0x298] sm:$0xff]
      %v744 = vld [vmem:[%s1 + $0x2a0] sm:$0xff]
      %v745 = vld [vmem:[%s1 + $0x2a8] sm:$0xf]
      %v746 = vld [vmem:[%s1 + $0x2ac] sm:$0xff]
      %v747 = vld [vmem:[%s1 + $0x2b4] sm:$0xff]
      %v748 = vld [vmem:[%s1 + $0x2bc] sm:$0xff]
      %v749 = vld [vmem:[%s1 + $0x2c4] sm:$0xff]
      %v750 = vld [vmem:[%s1 + $0x2cc] sm:$0xf]
      %v751 = vld [vmem:[%s1 + $0x2d0] sm:$0xff]
      %v752 = vld [vmem:[%s1 + $0x2d8] sm:$0xff]
      %v753 = vld [vmem:[%s1 + $0x2e0] sm:$0xff]
      %v754 = vld [vmem:[%s1 + $0x2e8] sm:$0xff]
      %v755 = vld [vmem:[%s1 + $0x2f0] sm:$0xf]
      %v756 = vld [vmem:[%s1 + $0x2f4] sm:$0xff]
      %v757 = vld [vmem:[%s1 + $0x2fc] sm:$0xff]
      %v758 = vld [vmem:[%s1 + $0x304] sm:$0xff]
      %v759 = vld [vmem:[%s1 + $0x30c] sm:$0xff]
      %v760 = vld [vmem:[%s1 + $0x314] sm:$0xf]
      %v761 = vld [vmem:[%s1 + $0x318] sm:$0xff]
      %v762 = vld [vmem:[%s1 + $0x320] sm:$0xff]
      %v763 = vld [vmem:[%s1 + $0x328] sm:$0xff]
      %v764 = vld [vmem:[%s1 + $0x330] sm:$0xff]
      %v765 = vld [vmem:[%s1 + $0x338] sm:$0xf]
      %v766 = vld [vmem:[%s1 + $0x33c] sm:$0xff]
      %v767 = vld [vmem:[%s1 + $0x344] sm:$0xff]
      %v768 = vld [vmem:[%s1 + $0x34c] sm:$0xff]
      %v769 = vld [vmem:[%s1 + $0x354] sm:$0xff]
      %v770 = vld [vmem:[%s1 + $0x35c] sm:$0xf]
      %v771 = vld [vmem:[%s1 + $0x360] sm:$0xff]
      %v772 = vld [vmem:[%s1 + $0x368] sm:$0xff]
      %v773 = vld [vmem:[%s1 + $0x370] sm:$0xff]
      %v774 = vld [vmem:[%s1 + $0x378] sm:$0xff]
      %v775 = vld [vmem:[%s1 + $0x380] sm:$0xf]
      %v776 = vld [vmem:[%s1 + $0x384] sm:$0xff]
      %v777 = vld [vmem:[%s1 + $0x38c] sm:$0xff]
      %v778 = vld [vmem:[%s1 + $0x394] sm:$0xff]
      %v779 = vld [vmem:[%s1 + $0x39c] sm:$0xff]
      %v780 = vld [vmem:[%s1 + $0x3a4] sm:$0xf]
      %v781 = vld [vmem:[%s1 + $0x3a8] sm:$0xff]
      %v782 = vld [vmem:[%s1 + $0x3b0] sm:$0xff]
      %v783 = vld [vmem:[%s1 + $0x3b8] sm:$0xff]
      %v784 = vld [vmem:[%s1 + $0x3c0] sm:$0xff]
      %v785 = vld [vmem:[%s1 + $0x3c8] sm:$0xf]
      %v786 = vld [vmem:[%s1 + $0x3cc] sm:$0xff]
      %v787 = vld [vmem:[%s1 + $0x3d4] sm:$0xff]
      %v788 = vld [vmem:[%s1 + $0x3dc] sm:$0xff]
      %v789 = vld [vmem:[%s1 + $0x3e4] sm:$0xff]
      %v790 = vld [vmem:[%s1 + $0x3ec] sm:$0xf]
      %v791 = vld [vmem:[%s1 + $0x3f0] sm:$0xff]
      %v792 = vld [vmem:[%s1 + $0x3f8] sm:$0xff]
      %v793 = vld [vmem:[%s1 + $0x400] sm:$0xff]
      %v794 = vld [vmem:[%s1 + $0x408] sm:$0xff]
      %v795 = vld [vmem:[%s1 + $0x410] sm:$0xf]
      %v796 = vld [vmem:[%s1 + $0x414] sm:$0xff]
      %v797 = vld [vmem:[%s1 + $0x41c] sm:$0xff]
      %v798 = vld [vmem:[%s1 + $0x424] sm:$0xff]
      %v799 = vld [vmem:[%s1 + $0x42c] sm:$0xff]
      %v800 = vld [vmem:[%s1 + $0x434] sm:$0xf]
      %v801 = vld [vmem:[%s1 + $0x438] sm:$0xff]
      %v802 = vld [vmem:[%s1 + $0x440] sm:$0xff]
      %v803 = vld [vmem:[%s1 + $0x448] sm:$0xff]
      %v804 = vld [vmem:[%s1 + $0x450] sm:$0xff]
      %v805 = vld [vmem:[%s1 + $0x458] sm:$0xf]
      %v806 = vld [vmem:[%s1 + $0x45c] sm:$0xff]
      %v807 = vld [vmem:[%s1 + $0x464] sm:$0xff]
      %v808 = vld [vmem:[%s1 + $0x46c] sm:$0xff]
      %v809 = vld [vmem:[%s1 + $0x474] sm:$0xff]
      %v810 = vld [vmem:[%s1 + $0x47c] sm:$0xf]
      %v811 = vld [vmem:[%s2] sm:$0xff]
      %v812 = vld [vmem:[%s2 + $0x8] sm:$0xff]
      %v813 = vld [vmem:[%s2 + $0x10] sm:$0xff]
      %v814 = vld [vmem:[%s2 + $0x18] sm:$0xff]
      %v815 = vld [vmem:[%s2 + $0x20] sm:$0xff]
      %v816 = vld [vmem:[%s2 + $0x28] sm:$0xff]
      %v817 = vld [vmem:[%s2 + $0x30] sm:$0xff]
      %v818 = vld [vmem:[%s2 + $0x38] sm:$0xff]
      %v819 = vld [vmem:[%s2 + $0x40] sm:$0xff]
      %v820 = vld [vmem:[%s2 + $0x48] sm:$0xff]
      %v821 = vld [vmem:[%s2 + $0x50] sm:$0xff]
      %v822 = vld [vmem:[%s2 + $0x58] sm:$0xff]
      %v823 = vld [vmem:[%s2 + $0x60] sm:$0xff]
      %v824 = vld [vmem:[%s2 + $0x68] sm:$0xff]
      %v825 = vld [vmem:[%s2 + $0x70] sm:$0xff]
      %v826 = vld [vmem:[%s2 + $0x78] sm:$0xff]
      %v827 = vld [vmem:[%s2 + $0x80] sm:$0xff]
      %v828 = vld [vmem:[%s2 + $0x88] sm:$0xff]
      %v829 = vld [vmem:[%s2 + $0x90] sm:$0xff]
      %v830 = vld [vmem:[%s2 + $0x98] sm:$0xff]
      %v831 = vld [vmem:[%s2 + $0xa0] sm:$0xff]
      %v832 = vld [vmem:[%s2 + $0xa8] sm:$0xff]
      %v833 = vld [vmem:[%s2 + $0xb0] sm:$0xff]
      %v834 = vld [vmem:[%s2 + $0xb8] sm:$0xff]
      %v835 = vld [vmem:[%s2 + $0xc0] sm:$0xff]
      %v836 = vld [vmem:[%s2 + $0xc8] sm:$0xff]
      %v837 = vld [vmem:[%s2 + $0xd0] sm:$0xff]
      %v838 = vld [vmem:[%s2 + $0xd8] sm:$0xff]
      %v839 = vld [vmem:[%s2 + $0xe0] sm:$0xff]
      %v840 = vld [vmem:[%s2 + $0xe8] sm:$0xff]
      %v841 = vld [vmem:[%s2 + $0xf0] sm:$0xff]
      %v842 = vld [vmem:[%s2 + $0xf8] sm:$0xff]
      %844 = vset.pattern.permute.xlu0 0
      %845 = vperm.xlu0 %844, %v811
      %v846 = vpop.permute.xlu0 %845
      %849 = vset.pattern.permute.xlu0 0
      %850 = vperm.xlu0 %849, %v812
      %v851 = vpop.permute.xlu0 %850
      %854 = vset.pattern.permute.xlu0 0
      %855 = vperm.xlu0 %854, %v813
      %v856 = vpop.permute.xlu0 %855
      %859 = vset.pattern.permute.xlu0 0
      %860 = vperm.xlu0 %859, %v814
      %v861 = vpop.permute.xlu0 %860
      %864 = vset.pattern.permute.xlu0 0
      %865 = vperm.xlu0 %864, %v815
      %v866 = vpop.permute.xlu0 %865
      %869 = vset.pattern.permute.xlu0 0
      %870 = vperm.xlu0 %869, %v816
      %v871 = vpop.permute.xlu0 %870
      %874 = vset.pattern.permute.xlu0 0
      %875 = vperm.xlu0 %874, %v817
      %v876 = vpop.permute.xlu0 %875
      %879 = vset.pattern.permute.xlu0 0
      %880 = vperm.xlu0 %879, %v818
      %v881 = vpop.permute.xlu0 %880
      %884 = vset.pattern.permute.xlu0 0
      %885 = vperm.xlu0 %884, %v819
      %v886 = vpop.permute.xlu0 %885
      %889 = vset.pattern.permute.xlu0 0
      %890 = vperm.xlu0 %889, %v820
      %v891 = vpop.permute.xlu0 %890
      %894 = vset.pattern.permute.xlu0 0
      %895 = vperm.xlu0 %894, %v821
      %v896 = vpop.permute.xlu0 %895
      %899 = vset.pattern.permute.xlu0 0
      %900 = vperm.xlu0 %899, %v822
      %v901 = vpop.permute.xlu0 %900
      %904 = vset.pattern.permute.xlu0 0
      %905 = vperm.xlu0 %904, %v823
      %v906 = vpop.permute.xlu0 %905
      %909 = vset.pattern.permute.xlu0 0
      %910 = vperm.xlu0 %909, %v824
      %v911 = vpop.permute.xlu0 %910
      %914 = vset.pattern.permute.xlu0 0
      %915 = vperm.xlu0 %914, %v825
      %v916 = vpop.permute.xlu0 %915
      %919 = vset.pattern.permute.xlu0 0
      %920 = vperm.xlu0 %919, %v826
      %v921 = vpop.permute.xlu0 %920
      %924 = vset.pattern.permute.xlu0 0
      %925 = vperm.xlu0 %924, %v827
      %v926 = vpop.permute.xlu0 %925
      %929 = vset.pattern.permute.xlu0 0
      %930 = vperm.xlu0 %929, %v828
      %v931 = vpop.permute.xlu0 %930
      %934 = vset.pattern.permute.xlu0 0
      %935 = vperm.xlu0 %934, %v829
      %v936 = vpop.permute.xlu0 %935
      %939 = vset.pattern.permute.xlu0 0
      %940 = vperm.xlu0 %939, %v830
      %v941 = vpop.permute.xlu0 %940
      %944 = vset.pattern.permute.xlu0 0
      %945 = vperm.xlu0 %944, %v831
      %v946 = vpop.permute.xlu0 %945
      %949 = vset.pattern.permute.xlu0 0
      %950 = vperm.xlu0 %949, %v832
      %v951 = vpop.permute.xlu0 %950
      %954 = vset.pattern.permute.xlu0 0
      %955 = vperm.xlu0 %954, %v833
      %v956 = vpop.permute.xlu0 %955
      %959 = vset.pattern.permute.xlu0 0
      %960 = vperm.xlu0 %959, %v834
      %v961 = vpop.permute.xlu0 %960
      %964 = vset.pattern.permute.xlu0 0
      %965 = vperm.xlu0 %964, %v835
      %v966 = vpop.permute.xlu0 %965
      %969 = vset.pattern.permute.xlu0 0
      %970 = vperm.xlu0 %969, %v836
      %v971 = vpop.permute.xlu0 %970
      %974 = vset.pattern.permute.xlu0 0
      %975 = vperm.xlu0 %974, %v837
      %v976 = vpop.permute.xlu0 %975
      %979 = vset.pattern.permute.xlu0 0
      %980 = vperm.xlu0 %979, %v838
      %v981 = vpop.permute.xlu0 %980
      %984 = vset.pattern.permute.xlu0 0
      %985 = vperm.xlu0 %984, %v839
      %v986 = vpop.permute.xlu0 %985
      %989 = vset.pattern.permute.xlu0 0
      %990 = vperm.xlu0 %989, %v840
      %v991 = vpop.permute.xlu0 %990
      %994 = vset.pattern.permute.xlu0 0
      %995 = vperm.xlu0 %994, %v841
      %v996 = vpop.permute.xlu0 %995
      %999 = vset.pattern.permute.xlu0 0
      %1000 = vperm.xlu0 %999, %v842
      %v1001 = vpop.permute.xlu0 %1000
      %v1163 = vunpack.c.l.b16 %v651
      %v1164 = vunpack.c.h.b16 %v651
      %v1165 = vunpack.c.l.b16 %v652
      %v1166 = vunpack.c.h.b16 %v652
      %v1167 = vunpack.c.l.b16 %v653
      %v1168 = vunpack.c.h.b16 %v653
      %v1169 = vunpack.c.l.b16 %v654
      %v1170 = vunpack.c.h.b16 %v654
      %v1171 = vunpack.c.l.b16 %v655
      %v1172 = vunpack.c.l.b16 %v656
      %v1173 = vunpack.c.h.b16 %v656
      %v1174 = vunpack.c.l.b16 %v657
      %v1175 = vunpack.c.h.b16 %v657
      %v1176 = vunpack.c.l.b16 %v658
      %v1177 = vunpack.c.h.b16 %v658
      %v1178 = vunpack.c.l.b16 %v659
      %v1179 = vunpack.c.h.b16 %v659
      %v1180 = vunpack.c.l.b16 %v660
      %v1181 = vunpack.c.l.b16 %v661
      %v1182 = vunpack.c.h.b16 %v661
      %v1183 = vunpack.c.l.b16 %v662
      %v1184 = vunpack.c.h.b16 %v662
      %v1185 = vunpack.c.l.b16 %v663
      %v1186 = vunpack.c.h.b16 %v663
      %v1187 = vunpack.c.l.b16 %v664
      %v1188 = vunpack.c.h.b16 %v664
      %v1189 = vunpack.c.l.b16 %v665
      %v1190 = vunpack.c.l.b16 %v666
      %v1191 = vunpack.c.h.b16 %v666
      %v1192 = vunpack.c.l.b16 %v667
      %v1193 = vunpack.c.h.b16 %v667
      %v1194 = vunpack.c.l.b16 %v668
      %v1195 = vunpack.c.h.b16 %v668
      %v1196 = vunpack.c.l.b16 %v669
      %v1197 = vunpack.c.h.b16 %v669
      %v1198 = vunpack.c.l.b16 %v670
      %v1199 = vunpack.c.l.b16 %v671
      %v1200 = vunpack.c.h.b16 %v671
      %v1201 = vunpack.c.l.b16 %v672
      %v1202 = vunpack.c.h.b16 %v672
      %v1203 = vunpack.c.l.b16 %v673
      %v1204 = vunpack.c.h.b16 %v673
      %v1205 = vunpack.c.l.b16 %v674
      %v1206 = vunpack.c.h.b16 %v674
      %v1207 = vunpack.c.l.b16 %v675
      %v1208 = vunpack.c.l.b16 %v676
      %v1209 = vunpack.c.h.b16 %v676
      %v1210 = vunpack.c.l.b16 %v677
      %v1211 = vunpack.c.h.b16 %v677
      %v1212 = vunpack.c.l.b16 %v678
      %v1213 = vunpack.c.h.b16 %v678
      %v1214 = vunpack.c.l.b16 %v679
      %v1215 = vunpack.c.h.b16 %v679
      %v1216 = vunpack.c.l.b16 %v680
      %v1217 = vunpack.c.l.b16 %v681
      %v1218 = vunpack.c.h.b16 %v681
      %v1219 = vunpack.c.l.b16 %v682
      %v1220 = vunpack.c.h.b16 %v682
      %v1221 = vunpack.c.l.b16 %v683
      %v1222 = vunpack.c.h.b16 %v683
      %v1223 = vunpack.c.l.b16 %v684
      %v1224 = vunpack.c.h.b16 %v684
      %v1225 = vunpack.c.l.b16 %v685
      %v1226 = vunpack.c.l.b16 %v686
      %v1227 = vunpack.c.h.b16 %v686
      %v1228 = vunpack.c.l.b16 %v687
      %v1229 = vunpack.c.h.b16 %v687
      %v1230 = vunpack.c.l.b16 %v688
      %v1231 = vunpack.c.h.b16 %v688
      %v1232 = vunpack.c.l.b16 %v689
      %v1233 = vunpack.c.h.b16 %v689
      %v1234 = vunpack.c.l.b16 %v690
      %v1235 = vunpack.c.l.b16 %v691
      %v1236 = vunpack.c.h.b16 %v691
      %v1237 = vunpack.c.l.b16 %v692
      %v1238 = vunpack.c.h.b16 %v692
      %v1239 = vunpack.c.l.b16 %v693
      %v1240 = vunpack.c.h.b16 %v693
      %v1241 = vunpack.c.l.b16 %v694
      %v1242 = vunpack.c.h.b16 %v694
      %v1243 = vunpack.c.l.b16 %v695
      %v1244 = vunpack.c.l.b16 %v696
      %v1245 = vunpack.c.h.b16 %v696
      %v1246 = vunpack.c.l.b16 %v697
      %v1247 = vunpack.c.h.b16 %v697
      %v1248 = vunpack.c.l.b16 %v698
      %v1249 = vunpack.c.h.b16 %v698
      %v1250 = vunpack.c.l.b16 %v699
      %v1251 = vunpack.c.h.b16 %v699
      %v1252 = vunpack.c.l.b16 %v700
      %v1253 = vunpack.c.l.b16 %v701
      %v1254 = vunpack.c.h.b16 %v701
      %v1255 = vunpack.c.l.b16 %v702
      %v1256 = vunpack.c.h.b16 %v702
      %v1257 = vunpack.c.l.b16 %v703
      %v1258 = vunpack.c.h.b16 %v703
      %v1259 = vunpack.c.l.b16 %v704
      %v1260 = vunpack.c.h.b16 %v704
      %v1261 = vunpack.c.l.b16 %v705
      %v1262 = vunpack.c.l.b16 %v706
      %v1263 = vunpack.c.h.b16 %v706
      %v1264 = vunpack.c.l.b16 %v707
      %v1265 = vunpack.c.h.b16 %v707
      %v1266 = vunpack.c.l.b16 %v708
      %v1267 = vunpack.c.h.b16 %v708
      %v1268 = vunpack.c.l.b16 %v709
      %v1269 = vunpack.c.h.b16 %v709
      %v1270 = vunpack.c.l.b16 %v710
      %v1271 = vunpack.c.l.b16 %v711
      %v1272 = vunpack.c.h.b16 %v711
      %v1273 = vunpack.c.l.b16 %v712
      %v1274 = vunpack.c.h.b16 %v712
      %v1275 = vunpack.c.l.b16 %v713
      %v1276 = vunpack.c.h.b16 %v713
      %v1277 = vunpack.c.l.b16 %v714
      %v1278 = vunpack.c.h.b16 %v714
      %v1279 = vunpack.c.l.b16 %v715
      %v1280 = vunpack.c.l.b16 %v716
      %v1281 = vunpack.c.h.b16 %v716
      %v1282 = vunpack.c.l.b16 %v717
      %v1283 = vunpack.c.h.b16 %v717
      %v1284 = vunpack.c.l.b16 %v718
      %v1285 = vunpack.c.h.b16 %v718
      %v1286 = vunpack.c.l.b16 %v719
      %v1287 = vunpack.c.h.b16 %v719
      %v1288 = vunpack.c.l.b16 %v720
      %v1289 = vunpack.c.l.b16 %v721
      %v1290 = vunpack.c.h.b16 %v721
      %v1291 = vunpack.c.l.b16 %v722
      %v1292 = vunpack.c.h.b16 %v722
      %v1293 = vunpack.c.l.b16 %v723
      %v1294 = vunpack.c.h.b16 %v723
      %v1295 = vunpack.c.l.b16 %v724
      %v1296 = vunpack.c.h.b16 %v724
      %v1297 = vunpack.c.l.b16 %v725
      %v1298 = vunpack.c.l.b16 %v726
      %v1299 = vunpack.c.h.b16 %v726
      %v1300 = vunpack.c.l.b16 %v727
      %v1301 = vunpack.c.h.b16 %v727
      %v1302 = vunpack.c.l.b16 %v728
      %v1303 = vunpack.c.h.b16 %v728
      %v1304 = vunpack.c.l.b16 %v729
      %v1305 = vunpack.c.h.b16 %v729
      %v1306 = vunpack.c.l.b16 %v730
      %v1307 = vunpack.c.l.b16 %v731
      %v1308 = vunpack.c.h.b16 %v731
      %v1309 = vunpack.c.l.b16 %v732
      %v1310 = vunpack.c.h.b16 %v732
      %v1311 = vunpack.c.l.b16 %v733
      %v1312 = vunpack.c.h.b16 %v733
      %v1313 = vunpack.c.l.b16 %v734
      %v1314 = vunpack.c.h.b16 %v734
      %v1315 = vunpack.c.l.b16 %v735
      %v1316 = vunpack.c.l.b16 %v736
      %v1317 = vunpack.c.h.b16 %v736
      %v1318 = vunpack.c.l.b16 %v737
      %v1319 = vunpack.c.h.b16 %v737
      %v1320 = vunpack.c.l.b16 %v738
      %v1321 = vunpack.c.h.b16 %v738
      %v1322 = vunpack.c.l.b16 %v739
      %v1323 = vunpack.c.h.b16 %v739
      %v1324 = vunpack.c.l.b16 %v740
      %v1325 = vunpack.c.l.b16 %v741
      %v1326 = vunpack.c.h.b16 %v741
      %v1327 = vunpack.c.l.b16 %v742
      %v1328 = vunpack.c.h.b16 %v742
      %v1329 = vunpack.c.l.b16 %v743
      %v1330 = vunpack.c.h.b16 %v743
      %v1331 = vunpack.c.l.b16 %v744
      %v1332 = vunpack.c.h.b16 %v744
      %v1333 = vunpack.c.l.b16 %v745
      %v1334 = vunpack.c.l.b16 %v746
      %v1335 = vunpack.c.h.b16 %v746
      %v1336 = vunpack.c.l.b16 %v747
      %v1337 = vunpack.c.h.b16 %v747
      %v1338 = vunpack.c.l.b16 %v748
      %v1339 = vunpack.c.h.b16 %v748
      %v1340 = vunpack.c.l.b16 %v749
      %v1341 = vunpack.c.h.b16 %v749
      %v1342 = vunpack.c.l.b16 %v750
      %v1343 = vunpack.c.l.b16 %v751
      %v1344 = vunpack.c.h.b16 %v751
      %v1345 = vunpack.c.l.b16 %v752
      %v1346 = vunpack.c.h.b16 %v752
      %v1347 = vunpack.c.l.b16 %v753
      %v1348 = vunpack.c.h.b16 %v753
      %v1349 = vunpack.c.l.b16 %v754
      %v1350 = vunpack.c.h.b16 %v754
      %v1351 = vunpack.c.l.b16 %v755
      %v1352 = vunpack.c.l.b16 %v756
      %v1353 = vunpack.c.h.b16 %v756
      %v1354 = vunpack.c.l.b16 %v757
      %v1355 = vunpack.c.h.b16 %v757
      %v1356 = vunpack.c.l.b16 %v758
      %v1357 = vunpack.c.h.b16 %v758
      %v1358 = vunpack.c.l.b16 %v759
      %v1359 = vunpack.c.h.b16 %v759
      %v1360 = vunpack.c.l.b16 %v760
      %v1361 = vunpack.c.l.b16 %v761
      %v1362 = vunpack.c.h.b16 %v761
      %v1363 = vunpack.c.l.b16 %v762
      %v1364 = vunpack.c.h.b16 %v762
      %v1365 = vunpack.c.l.b16 %v763
      %v1366 = vunpack.c.h.b16 %v763
      %v1367 = vunpack.c.l.b16 %v764
      %v1368 = vunpack.c.h.b16 %v764
      %v1369 = vunpack.c.l.b16 %v765
      %v1370 = vunpack.c.l.b16 %v766
      %v1371 = vunpack.c.h.b16 %v766
      %v1372 = vunpack.c.l.b16 %v767
      %v1373 = vunpack.c.h.b16 %v767
      %v1374 = vunpack.c.l.b16 %v768
      %v1375 = vunpack.c.h.b16 %v768
      %v1376 = vunpack.c.l.b16 %v769
      %v1377 = vunpack.c.h.b16 %v769
      %v1378 = vunpack.c.l.b16 %v770
      %v1379 = vunpack.c.l.b16 %v771
      %v1380 = vunpack.c.h.b16 %v771
      %v1381 = vunpack.c.l.b16 %v772
      %v1382 = vunpack.c.h.b16 %v772
      %v1383 = vunpack.c.l.b16 %v773
      %v1384 = vunpack.c.h.b16 %v773
      %v1385 = vunpack.c.l.b16 %v774
      %v1386 = vunpack.c.h.b16 %v774
      %v1387 = vunpack.c.l.b16 %v775
      %v1388 = vunpack.c.l.b16 %v776
      %v1389 = vunpack.c.h.b16 %v776
      %v1390 = vunpack.c.l.b16 %v777
      %v1391 = vunpack.c.h.b16 %v777
      %v1392 = vunpack.c.l.b16 %v778
      %v1393 = vunpack.c.h.b16 %v778
      %v1394 = vunpack.c.l.b16 %v779
      %v1395 = vunpack.c.h.b16 %v779
      %v1396 = vunpack.c.l.b16 %v780
      %v1397 = vunpack.c.l.b16 %v781
      %v1398 = vunpack.c.h.b16 %v781
      %v1399 = vunpack.c.l.b16 %v782
      %v1400 = vunpack.c.h.b16 %v782
      %v1401 = vunpack.c.l.b16 %v783
      %v1402 = vunpack.c.h.b16 %v783
      %v1403 = vunpack.c.l.b16 %v784
      %v1404 = vunpack.c.h.b16 %v784
      %v1405 = vunpack.c.l.b16 %v785
      %v1406 = vunpack.c.l.b16 %v786
      %v1407 = vunpack.c.h.b16 %v786
      %v1408 = vunpack.c.l.b16 %v787
      %v1409 = vunpack.c.h.b16 %v787
      %v1410 = vunpack.c.l.b16 %v788
      %v1411 = vunpack.c.h.b16 %v788
      %v1412 = vunpack.c.l.b16 %v789
      %v1413 = vunpack.c.h.b16 %v789
      %v1414 = vunpack.c.l.b16 %v790
      %v1415 = vunpack.c.l.b16 %v791
      %v1416 = vunpack.c.h.b16 %v791
      %v1417 = vunpack.c.l.b16 %v792
      %v1418 = vunpack.c.h.b16 %v792
      %v1419 = vunpack.c.l.b16 %v793
      %v1420 = vunpack.c.h.b16 %v793
      %v1421 = vunpack.c.l.b16 %v794
      %v1422 = vunpack.c.h.b16 %v794
      %v1423 = vunpack.c.l.b16 %v795
      %v1424 = vunpack.c.l.b16 %v796
      %v1425 = vunpack.c.h.b16 %v796
      %v1426 = vunpack.c.l.b16 %v797
      %v1427 = vunpack.c.h.b16 %v797
      %v1428 = vunpack.c.l.b16 %v798
      %v1429 = vunpack.c.h.b16 %v798
      %v1430 = vunpack.c.l.b16 %v799
      %v1431 = vunpack.c.h.b16 %v799
      %v1432 = vunpack.c.l.b16 %v800
      %v1433 = vunpack.c.l.b16 %v801
      %v1434 = vunpack.c.h.b16 %v801
      %v1435 = vunpack.c.l.b16 %v802
      %v1436 = vunpack.c.h.b16 %v802
      %v1437 = vunpack.c.l.b16 %v803
      %v1438 = vunpack.c.h.b16 %v803
      %v1439 = vunpack.c.l.b16 %v804
      %v1440 = vunpack.c.h.b16 %v804
      %v1441 = vunpack.c.l.b16 %v805
      %v1442 = vunpack.c.l.b16 %v806
      %v1443 = vunpack.c.h.b16 %v806
      %v1444 = vunpack.c.l.b16 %v807
      %v1445 = vunpack.c.h.b16 %v807
      %v1446 = vunpack.c.l.b16 %v808
      %v1447 = vunpack.c.h.b16 %v808
      %v1448 = vunpack.c.l.b16 %v809
      %v1449 = vunpack.c.h.b16 %v809
      %v1450 = vunpack.c.l.b16 %v810
      %v1451 = vpack.c.b16 %v1172, %v1163
      %v1452 = vpack.c.b16 %v1173, %v1164
      %v1453 = vpack.c.b16 %v1174, %v1165
      %v1454 = vpack.c.b16 %v1175, %v1166
      %v1455 = vpack.c.b16 %v1176, %v1167
      %v1456 = vpack.c.b16 %v1177, %v1168
      %v1457 = vpack.c.b16 %v1178, %v1169
      %v1458 = vpack.c.b16 %v1179, %v1170
      %v1459 = vpack.c.b16 %v1180, %v1171
      %v1460 = vpack.c.b16 %v1190, %v1181
      %v1461 = vpack.c.b16 %v1191, %v1182
      %v1462 = vpack.c.b16 %v1192, %v1183
      %v1463 = vpack.c.b16 %v1193, %v1184
      %v1464 = vpack.c.b16 %v1194, %v1185
      %v1465 = vpack.c.b16 %v1195, %v1186
      %v1466 = vpack.c.b16 %v1196, %v1187
      %v1467 = vpack.c.b16 %v1197, %v1188
      %v1468 = vpack.c.b16 %v1198, %v1189
      %v1469 = vpack.c.b16 %v1208, %v1199
      %v1470 = vpack.c.b16 %v1209, %v1200
      %v1471 = vpack.c.b16 %v1210, %v1201
      %v1472 = vpack.c.b16 %v1211, %v1202
      %v1473 = vpack.c.b16 %v1212, %v1203
      %v1474 = vpack.c.b16 %v1213, %v1204
      %v1475 = vpack.c.b16 %v1214, %v1205
      %v1476 = vpack.c.b16 %v1215, %v1206
      %v1477 = vpack.c.b16 %v1216, %v1207
      %v1478 = vpack.c.b16 %v1226, %v1217
      %v1479 = vpack.c.b16 %v1227, %v1218
      %v1480 = vpack.c.b16 %v1228, %v1219
      %v1481 = vpack.c.b16 %v1229, %v1220
      %v1482 = vpack.c.b16 %v1230, %v1221
      %v1483 = vpack.c.b16 %v1231, %v1222
      %v1484 = vpack.c.b16 %v1232, %v1223
      %v1485 = vpack.c.b16 %v1233, %v1224
      %v1486 = vpack.c.b16 %v1234, %v1225
      %v1487 = vpack.c.b16 %v1244, %v1235
      %v1488 = vpack.c.b16 %v1245, %v1236
      %v1489 = vpack.c.b16 %v1246, %v1237
      %v1490 = vpack.c.b16 %v1247, %v1238
      %v1491 = vpack.c.b16 %v1248, %v1239
      %v1492 = vpack.c.b16 %v1249, %v1240
      %v1493 = vpack.c.b16 %v1250, %v1241
      %v1494 = vpack.c.b16 %v1251, %v1242
      %v1495 = vpack.c.b16 %v1252, %v1243
      %v1496 = vpack.c.b16 %v1262, %v1253
      %v1497 = vpack.c.b16 %v1263, %v1254
      %v1498 = vpack.c.b16 %v1264, %v1255
      %v1499 = vpack.c.b16 %v1265, %v1256
      %v1500 = vpack.c.b16 %v1266, %v1257
      %v1501 = vpack.c.b16 %v1267, %v1258
      %v1502 = vpack.c.b16 %v1268, %v1259
      %v1503 = vpack.c.b16 %v1269, %v1260
      %v1504 = vpack.c.b16 %v1270, %v1261
      %v1505 = vpack.c.b16 %v1280, %v1271
      %v1506 = vpack.c.b16 %v1281, %v1272
      %v1507 = vpack.c.b16 %v1282, %v1273
      %v1508 = vpack.c.b16 %v1283, %v1274
      %v1509 = vpack.c.b16 %v1284, %v1275
      %v1510 = vpack.c.b16 %v1285, %v1276
      %v1511 = vpack.c.b16 %v1286, %v1277
      %v1512 = vpack.c.b16 %v1287, %v1278
      %v1513 = vpack.c.b16 %v1288, %v1279
      %v1514 = vpack.c.b16 %v1298, %v1289
      %v1515 = vpack.c.b16 %v1299, %v1290
      %v1516 = vpack.c.b16 %v1300, %v1291
      %v1517 = vpack.c.b16 %v1301, %v1292
      %v1518 = vpack.c.b16 %v1302, %v1293
      %v1519 = vpack.c.b16 %v1303, %v1294
      %v1520 = vpack.c.b16 %v1304, %v1295
      %v1521 = vpack.c.b16 %v1305, %v1296
      %v1522 = vpack.c.b16 %v1306, %v1297
      %v1523 = vpack.c.b16 %v1316, %v1307
      %v1524 = vpack.c.b16 %v1317, %v1308
      %v1525 = vpack.c.b16 %v1318, %v1309
      %v1526 = vpack.c.b16 %v1319, %v1310
      %v1527 = vpack.c.b16 %v1320, %v1311
      %v1528 = vpack.c.b16 %v1321, %v1312
      %v1529 = vpack.c.b16 %v1322, %v1313
      %v1530 = vpack.c.b16 %v1323, %v1314
      %v1531 = vpack.c.b16 %v1324, %v1315
      %v1532 = vpack.c.b16 %v1334, %v1325
      %v1533 = vpack.c.b16 %v1335, %v1326
      %v1534 = vpack.c.b16 %v1336, %v1327
      %v1535 = vpack.c.b16 %v1337, %v1328
      %v1536 = vpack.c.b16 %v1338, %v1329
      %v1537 = vpack.c.b16 %v1339, %v1330
      %v1538 = vpack.c.b16 %v1340, %v1331
      %v1539 = vpack.c.b16 %v1341, %v1332
      %v1540 = vpack.c.b16 %v1342, %v1333
      %v1541 = vpack.c.b16 %v1352, %v1343
      %v1542 = vpack.c.b16 %v1353, %v1344
      %v1543 = vpack.c.b16 %v1354, %v1345
      %v1544 = vpack.c.b16 %v1355, %v1346
      %v1545 = vpack.c.b16 %v1356, %v1347
      %v1546 = vpack.c.b16 %v1357, %v1348
      %v1547 = vpack.c.b16 %v1358, %v1349
      %v1548 = vpack.c.b16 %v1359, %v1350
      %v1549 = vpack.c.b16 %v1360, %v1351
      %v1550 = vpack.c.b16 %v1370, %v1361
      %v1551 = vpack.c.b16 %v1371, %v1362
      %v1552 = vpack.c.b16 %v1372, %v1363
      %v1553 = vpack.c.b16 %v1373, %v1364
      %v1554 = vpack.c.b16 %v1374, %v1365
      %v1555 = vpack.c.b16 %v1375, %v1366
      %v1556 = vpack.c.b16 %v1376, %v1367
      %v1557 = vpack.c.b16 %v1377, %v1368
      %v1558 = vpack.c.b16 %v1378, %v1369
      %v1559 = vpack.c.b16 %v1388, %v1379
      %v1560 = vpack.c.b16 %v1389, %v1380
      %v1561 = vpack.c.b16 %v1390, %v1381
      %v1562 = vpack.c.b16 %v1391, %v1382
      %v1563 = vpack.c.b16 %v1392, %v1383
      %v1564 = vpack.c.b16 %v1393, %v1384
      %v1565 = vpack.c.b16 %v1394, %v1385
      %v1566 = vpack.c.b16 %v1395, %v1386
      %v1567 = vpack.c.b16 %v1396, %v1387
      %v1568 = vpack.c.b16 %v1406, %v1397
      %v1569 = vpack.c.b16 %v1407, %v1398
      %v1570 = vpack.c.b16 %v1408, %v1399
      %v1571 = vpack.c.b16 %v1409, %v1400
      %v1572 = vpack.c.b16 %v1410, %v1401
      %v1573 = vpack.c.b16 %v1411, %v1402
      %v1574 = vpack.c.b16 %v1412, %v1403
      %v1575 = vpack.c.b16 %v1413, %v1404
      %v1576 = vpack.c.b16 %v1414, %v1405
      %v1577 = vpack.c.b16 %v1424, %v1415
      %v1578 = vpack.c.b16 %v1425, %v1416
      %v1579 = vpack.c.b16 %v1426, %v1417
      %v1580 = vpack.c.b16 %v1427, %v1418
      %v1581 = vpack.c.b16 %v1428, %v1419
      %v1582 = vpack.c.b16 %v1429, %v1420
      %v1583 = vpack.c.b16 %v1430, %v1421
      %v1584 = vpack.c.b16 %v1431, %v1422
      %v1585 = vpack.c.b16 %v1432, %v1423
      %v1586 = vpack.c.b16 %v1442, %v1433
      %v1587 = vpack.c.b16 %v1443, %v1434
      %v1588 = vpack.c.b16 %v1444, %v1435
      %v1589 = vpack.c.b16 %v1445, %v1436
      %v1590 = vpack.c.b16 %v1446, %v1437
      %v1591 = vpack.c.b16 %v1447, %v1438
      %v1592 = vpack.c.b16 %v1448, %v1439
      %v1593 = vpack.c.b16 %v1449, %v1440
      %v1594 = vpack.c.b16 %v1450, %v1441
      %1739 = vmatpush.bf16.msra.mxu0 %v226
      %1740 = vmatpush.bf16.msra.mxu0 %v225
      %1741 = vmatpush.bf16.msra.mxu0 %v224
      %1742 = vmatpush.bf16.msra.mxu0 %v223
      %1743 = vmatpush.bf16.msra.mxu0 %v222
      %1744 = vmatpush.bf16.msra.mxu0 %v221
      %1745 = vmatpush.bf16.msra.mxu0 %v220
      %1746 = vmatpush.bf16.msra.mxu0 %v219
      %1747 = vmatmul.bf16.gmra.mxu0 %v1451
      %v1748 = vpop.f32.mrf.mxu0
      %v1749 = vadd.f32 %v846, %v1748
      %v1750 = vpop.f32.mrf.mxu0
      %v1751 = vadd.f32 %v851, %v1750
      %1752 = vmatmul.bf16.gmra.mxu0 %v1460
      %v1753 = vpop.f32.mrf.mxu0
      %v1754 = vadd.f32 %v856, %v1753
      %v1755 = vpop.f32.mrf.mxu0
      %v1756 = vadd.f32 %v861, %v1755
      %1757 = vmatmul.bf16.gmra.mxu0 %v1469
      %v1758 = vpop.f32.mrf.mxu0
      %v1759 = vadd.f32 %v866, %v1758
      %v1760 = vpop.f32.mrf.mxu0
      %v1761 = vadd.f32 %v871, %v1760
      %1762 = vmatmul.bf16.gmra.mxu0 %v1478
      %v1763 = vpop.f32.mrf.mxu0
      %v1764 = vadd.f32 %v876, %v1763
      %v1765 = vpop.f32.mrf.mxu0
      %v1766 = vadd.f32 %v881, %v1765
      %1767 = vmatmul.bf16.gmra.mxu0 %v1487
      %v1768 = vpop.f32.mrf.mxu0
      %v1769 = vadd.f32 %v886, %v1768
      %v1770 = vpop.f32.mrf.mxu0
      %v1771 = vadd.f32 %v891, %v1770
      %1772 = vmatmul.bf16.gmra.mxu0 %v1496
      %v1773 = vpop.f32.mrf.mxu0
      %v1774 = vadd.f32 %v896, %v1773
      %v1775 = vpop.f32.mrf.mxu0
      %v1776 = vadd.f32 %v901, %v1775
      %1777 = vmatmul.bf16.gmra.mxu0 %v1505
      %v1778 = vpop.f32.mrf.mxu0
      %v1779 = vadd.f32 %v906, %v1778
      %v1780 = vpop.f32.mrf.mxu0
      %v1781 = vadd.f32 %v911, %v1780
      %1782 = vmatmul.bf16.gmra.mxu0 %v1514
      %v1783 = vpop.f32.mrf.mxu0
      %v1784 = vadd.f32 %v916, %v1783
      %v1785 = vpop.f32.mrf.mxu0
      %v1786 = vadd.f32 %v921, %v1785
      %1787 = vmatmul.bf16.gmra.mxu0 %v1523
      %v1788 = vpop.f32.mrf.mxu0
      %v1789 = vadd.f32 %v926, %v1788
      %v1790 = vpop.f32.mrf.mxu0
      %v1791 = vadd.f32 %v931, %v1790
      %1792 = vmatmul.bf16.gmra.mxu0 %v1532
      %v1793 = vpop.f32.mrf.mxu0
      %v1794 = vadd.f32 %v936, %v1793
      %v1795 = vpop.f32.mrf.mxu0
      %v1796 = vadd.f32 %v941, %v1795
      %1797 = vmatmul.bf16.gmra.mxu0 %v1541
      %v1798 = vpop.f32.mrf.mxu0
      %v1799 = vadd.f32 %v946, %v1798
      %v1800 = vpop.f32.mrf.mxu0
      %v1801 = vadd.f32 %v951, %v1800
      %1802 = vmatmul.bf16.gmra.mxu0 %v1550
      %v1803 = vpop.f32.mrf.mxu0
      %v1804 = vadd.f32 %v956, %v1803
      %v1805 = vpop.f32.mrf.mxu0
      %v1806 = vadd.f32 %v961, %v1805
      %1807 = vmatmul.bf16.gmra.mxu0 %v1559
      %v1808 = vpop.f32.mrf.mxu0
      %v1809 = vadd.f32 %v966, %v1808
      %v1810 = vpop.f32.mrf.mxu0
      %v1811 = vadd.f32 %v971, %v1810
      %1812 = vmatmul.bf16.gmra.mxu0 %v1568
      %v1813 = vpop.f32.mrf.mxu0
      %v1814 = vadd.f32 %v976, %v1813
      %v1815 = vpop.f32.mrf.mxu0
      %v1816 = vadd.f32 %v981, %v1815
      %1817 = vmatmul.bf16.gmra.mxu0 %v1577
      %v1818 = vpop.f32.mrf.mxu0
      %v1819 = vadd.f32 %v986, %v1818
      %v1820 = vpop.f32.mrf.mxu0
      %v1821 = vadd.f32 %v991, %v1820
      %1822 = vmatmul.bf16.gmra.mxu0 %v1586
      %v1823 = vpop.f32.mrf.mxu0
      %v1824 = vadd.f32 %v996, %v1823
      %v1825 = vpop.f32.mrf.mxu0
      %v1826 = vadd.f32 %v1001, %v1825
      %1827 = vdwg.mxu0
      %1828 = vmatpush.bf16.msra.mxu0 %v299
      %1829 = vmatpush.bf16.msra.mxu0 %v298
      %1830 = vmatpush.bf16.msra.mxu0 %v297
      %1831 = vmatpush.bf16.msra.mxu0 %v296
      %1832 = vmatpush.bf16.msra.mxu0 %v295
      %1833 = vmatpush.bf16.msra.mxu0 %v294
      %1834 = vmatpush.bf16.msra.mxu0 %v293
      %1835 = vmatpush.bf16.msra.mxu0 %v292
      %1836 = vmatmul.bf16.gmra.mxu0 %v1452
      %v1837 = vpop.f32.mrf.mxu0
      %v1838 = vadd.f32 %v1749, %v1837
      %v1839 = vpop.f32.mrf.mxu0
      %v1840 = vadd.f32 %v1751, %v1839
      %1841 = vmatmul.bf16.gmra.mxu0 %v1461
      %v1842 = vpop.f32.mrf.mxu0
      %v1843 = vadd.f32 %v1754, %v1842
      %v1844 = vpop.f32.mrf.mxu0
      %v1845 = vadd.f32 %v1756, %v1844
      %1846 = vmatmul.bf16.gmra.mxu0 %v1470
      %v1847 = vpop.f32.mrf.mxu0
      %v1848 = vadd.f32 %v1759, %v1847
      %v1849 = vpop.f32.mrf.mxu0
      %v1850 = vadd.f32 %v1761, %v1849
      %1851 = vmatmul.bf16.gmra.mxu0 %v1479
      %v1852 = vpop.f32.mrf.mxu0
      %v1853 = vadd.f32 %v1764, %v1852
      %v1854 = vpop.f32.mrf.mxu0
      %v1855 = vadd.f32 %v1766, %v1854
      %1856 = vmatmul.bf16.gmra.mxu0 %v1488
      %v1857 = vpop.f32.mrf.mxu0
      %v1858 = vadd.f32 %v1769, %v1857
      %v1859 = vpop.f32.mrf.mxu0
      %v1860 = vadd.f32 %v1771, %v1859
      %1861 = vmatmul.bf16.gmra.mxu0 %v1497
      %v1862 = vpop.f32.mrf.mxu0
      %v1863 = vadd.f32 %v1774, %v1862
      %v1864 = vpop.f32.mrf.mxu0
      %v1865 = vadd.f32 %v1776, %v1864
      %1866 = vmatmul.bf16.gmra.mxu0 %v1506
      %v1867 = vpop.f32.mrf.mxu0
      %v1868 = vadd.f32 %v1779, %v1867
      %v1869 = vpop.f32.mrf.mxu0
      %v1870 = vadd.f32 %v1781, %v1869
      %1871 = vmatmul.bf16.gmra.mxu0 %v1515
      %v1872 = vpop.f32.mrf.mxu0
      %v1873 = vadd.f32 %v1784, %v1872
      %v1874 = vpop.f32.mrf.mxu0
      %v1875 = vadd.f32 %v1786, %v1874
      %1876 = vmatmul.bf16.gmra.mxu0 %v1524
      %v1877 = vpop.f32.mrf.mxu0
      %v1878 = vadd.f32 %v1789, %v1877
      %v1879 = vpop.f32.mrf.mxu0
      %v1880 = vadd.f32 %v1791, %v1879
      %1881 = vmatmul.bf16.gmra.mxu0 %v1533
      %v1882 = vpop.f32.mrf.mxu0
      %v1883 = vadd.f32 %v1794, %v1882
      %v1884 = vpop.f32.mrf.mxu0
      %v1885 = vadd.f32 %v1796, %v1884
      %1886 = vmatmul.bf16.gmra.mxu0 %v1542
      %v1887 = vpop.f32.mrf.mxu0
      %v1888 = vadd.f32 %v1799, %v1887
      %v1889 = vpop.f32.mrf.mxu0
      %v1890 = vadd.f32 %v1801, %v1889
      %1891 = vmatmul.bf16.gmra.mxu0 %v1551
      %v1892 = vpop.f32.mrf.mxu0
      %v1893 = vadd.f32 %v1804, %v1892
      %v1894 = vpop.f32.mrf.mxu0
      %v1895 = vadd.f32 %v1806, %v1894
      %1896 = vmatmul.bf16.gmra.mxu0 %v1560
      %v1897 = vpop.f32.mrf.mxu0
      %v1898 = vadd.f32 %v1809, %v1897
      %v1899 = vpop.f32.mrf.mxu0
      %v1900 = vadd.f32 %v1811, %v1899
      %1901 = vmatmul.bf16.gmra.mxu0 %v1569
      %v1902 = vpop.f32.mrf.mxu0
      %v1903 = vadd.f32 %v1814, %v1902
      %v1904 = vpop.f32.mrf.mxu0
      %v1905 = vadd.f32 %v1816, %v1904
      %1906 = vmatmul.bf16.gmra.mxu0 %v1578
      %v1907 = vpop.f32.mrf.mxu0
      %v1908 = vadd.f32 %v1819, %v1907
      %v1909 = vpop.f32.mrf.mxu0
      %v1910 = vadd.f32 %v1821, %v1909
      %1911 = vmatmul.bf16.gmra.mxu0 %v1587
      %v1912 = vpop.f32.mrf.mxu0
      %v1913 = vadd.f32 %v1824, %v1912
      %v1914 = vpop.f32.mrf.mxu0
      %v1915 = vadd.f32 %v1826, %v1914
      %1916 = vdwg.mxu0
      %1917 = vmatpush.bf16.msra.mxu0 %v348
      %1918 = vmatpush.bf16.msra.mxu0 %v347
      %1919 = vmatpush.bf16.msra.mxu0 %v346
      %1920 = vmatpush.bf16.msra.mxu0 %v345
      %1921 = vmatpush.bf16.msra.mxu0 %v344
      %1922 = vmatpush.bf16.msra.mxu0 %v343
      %1923 = vmatpush.bf16.msra.mxu0 %v342
      %1924 = vmatpush.bf16.msra.mxu0 %v341
      %1925 = vmatmul.bf16.gmra.mxu0 %v1453
      %v1926 = vpop.f32.mrf.mxu0
      %v1927 = vadd.f32 %v1838, %v1926
      %v1928 = vpop.f32.mrf.mxu0
      %v1929 = vadd.f32 %v1840, %v1928
      %1930 = vmatmul.bf16.gmra.mxu0 %v1462
      %v1931 = vpop.f32.mrf.mxu0
      %v1932 = vadd.f32 %v1843, %v1931
      %v1933 = vpop.f32.mrf.mxu0
      %v1934 = vadd.f32 %v1845, %v1933
      %1935 = vmatmul.bf16.gmra.mxu0 %v1471
      %v1936 = vpop.f32.mrf.mxu0
      %v1937 = vadd.f32 %v1848, %v1936
      %v1938 = vpop.f32.mrf.mxu0
      %v1939 = vadd.f32 %v1850, %v1938
      %1940 = vmatmul.bf16.gmra.mxu0 %v1480
      %v1941 = vpop.f32.mrf.mxu0
      %v1942 = vadd.f32 %v1853, %v1941
      %v1943 = vpop.f32.mrf.mxu0
      %v1944 = vadd.f32 %v1855, %v1943
      %1945 = vmatmul.bf16.gmra.mxu0 %v1489
      %v1946 = vpop.f32.mrf.mxu0
      %v1947 = vadd.f32 %v1858, %v1946
      %v1948 = vpop.f32.mrf.mxu0
      %v1949 = vadd.f32 %v1860, %v1948
      %1950 = vmatmul.bf16.gmra.mxu0 %v1498
      %v1951 = vpop.f32.mrf.mxu0
      %v1952 = vadd.f32 %v1863, %v1951
      %v1953 = vpop.f32.mrf.mxu0
      %v1954 = vadd.f32 %v1865, %v1953
      %1955 = vmatmul.bf16.gmra.mxu0 %v1507
      %v1956 = vpop.f32.mrf.mxu0
      %v1957 = vadd.f32 %v1868, %v1956
      %v1958 = vpop.f32.mrf.mxu0
      %v1959 = vadd.f32 %v1870, %v1958
      %1960 = vmatmul.bf16.gmra.mxu0 %v1516
      %v1961 = vpop.f32.mrf.mxu0
      %v1962 = vadd.f32 %v1873, %v1961
      %v1963 = vpop.f32.mrf.mxu0
      %v1964 = vadd.f32 %v1875, %v1963
      %1965 = vmatmul.bf16.gmra.mxu0 %v1525
      %v1966 = vpop.f32.mrf.mxu0
      %v1967 = vadd.f32 %v1878, %v1966
      %v1968 = vpop.f32.mrf.mxu0
      %v1969 = vadd.f32 %v1880, %v1968
      %1970 = vmatmul.bf16.gmra.mxu0 %v1534
      %v1971 = vpop.f32.mrf.mxu0
      %v1972 = vadd.f32 %v1883, %v1971
      %v1973 = vpop.f32.mrf.mxu0
      %v1974 = vadd.f32 %v1885, %v1973
      %1975 = vmatmul.bf16.gmra.mxu0 %v1543
      %v1976 = vpop.f32.mrf.mxu0
      %v1977 = vadd.f32 %v1888, %v1976
      %v1978 = vpop.f32.mrf.mxu0
      %v1979 = vadd.f32 %v1890, %v1978
      %1980 = vmatmul.bf16.gmra.mxu0 %v1552
      %v1981 = vpop.f32.mrf.mxu0
      %v1982 = vadd.f32 %v1893, %v1981
      %v1983 = vpop.f32.mrf.mxu0
      %v1984 = vadd.f32 %v1895, %v1983
      %1985 = vmatmul.bf16.gmra.mxu0 %v1561
      %v1986 = vpop.f32.mrf.mxu0
      %v1987 = vadd.f32 %v1898, %v1986
      %v1988 = vpop.f32.mrf.mxu0
      %v1989 = vadd.f32 %v1900, %v1988
      %1990 = vmatmul.bf16.gmra.mxu0 %v1570
      %v1991 = vpop.f32.mrf.mxu0
      %v1992 = vadd.f32 %v1903, %v1991
      %v1993 = vpop.f32.mrf.mxu0
      %v1994 = vadd.f32 %v1905, %v1993
      %1995 = vmatmul.bf16.gmra.mxu0 %v1579
      %v1996 = vpop.f32.mrf.mxu0
      %v1997 = vadd.f32 %v1908, %v1996
      %v1998 = vpop.f32.mrf.mxu0
      %v1999 = vadd.f32 %v1910, %v1998
      %2000 = vmatmul.bf16.gmra.mxu0 %v1588
      %v2001 = vpop.f32.mrf.mxu0
      %v2002 = vadd.f32 %v1913, %v2001
      %v2003 = vpop.f32.mrf.mxu0
      %v2004 = vadd.f32 %v1915, %v2003
      %2005 = vdwg.mxu0
      %2006 = vmatpush.bf16.msra.mxu0 %v397
      %2007 = vmatpush.bf16.msra.mxu0 %v396
      %2008 = vmatpush.bf16.msra.mxu0 %v395
      %2009 = vmatpush.bf16.msra.mxu0 %v394
      %2010 = vmatpush.bf16.msra.mxu0 %v393
      %2011 = vmatpush.bf16.msra.mxu0 %v392
      %2012 = vmatpush.bf16.msra.mxu0 %v391
      %2013 = vmatpush.bf16.msra.mxu0 %v390
      %2014 = vmatmul.bf16.gmra.mxu0 %v1454
      %v2015 = vpop.f32.mrf.mxu0
      %v2016 = vadd.f32 %v1927, %v2015
      %v2017 = vpop.f32.mrf.mxu0
      %v2018 = vadd.f32 %v1929, %v2017
      %2019 = vmatmul.bf16.gmra.mxu0 %v1463
      %v2020 = vpop.f32.mrf.mxu0
      %v2021 = vadd.f32 %v1932, %v2020
      %v2022 = vpop.f32.mrf.mxu0
      %v2023 = vadd.f32 %v1934, %v2022
      %2024 = vmatmul.bf16.gmra.mxu0 %v1472
      %v2025 = vpop.f32.mrf.mxu0
      %v2026 = vadd.f32 %v1937, %v2025
      %v2027 = vpop.f32.mrf.mxu0
      %v2028 = vadd.f32 %v1939, %v2027
      %2029 = vmatmul.bf16.gmra.mxu0 %v1481
      %v2030 = vpop.f32.mrf.mxu0
      %v2031 = vadd.f32 %v1942, %v2030
      %v2032 = vpop.f32.mrf.mxu0
      %v2033 = vadd.f32 %v1944, %v2032
      %2034 = vmatmul.bf16.gmra.mxu0 %v1490
      %v2035 = vpop.f32.mrf.mxu0
      %v2036 = vadd.f32 %v1947, %v2035
      %v2037 = vpop.f32.mrf.mxu0
      %v2038 = vadd.f32 %v1949, %v2037
      %2039 = vmatmul.bf16.gmra.mxu0 %v1499
      %v2040 = vpop.f32.mrf.mxu0
      %v2041 = vadd.f32 %v1952, %v2040
      %v2042 = vpop.f32.mrf.mxu0
      %v2043 = vadd.f32 %v1954, %v2042
      %2044 = vmatmul.bf16.gmra.mxu0 %v1508
      %v2045 = vpop.f32.mrf.mxu0
      %v2046 = vadd.f32 %v1957, %v2045
      %v2047 = vpop.f32.mrf.mxu0
      %v2048 = vadd.f32 %v1959, %v2047
      %2049 = vmatmul.bf16.gmra.mxu0 %v1517
      %v2050 = vpop.f32.mrf.mxu0
      %v2051 = vadd.f32 %v1962, %v2050
      %v2052 = vpop.f32.mrf.mxu0
      %v2053 = vadd.f32 %v1964, %v2052
      %2054 = vmatmul.bf16.gmra.mxu0 %v1526
      %v2055 = vpop.f32.mrf.mxu0
      %v2056 = vadd.f32 %v1967, %v2055
      %v2057 = vpop.f32.mrf.mxu0
      %v2058 = vadd.f32 %v1969, %v2057
      %2059 = vmatmul.bf16.gmra.mxu0 %v1535
      %v2060 = vpop.f32.mrf.mxu0
      %v2061 = vadd.f32 %v1972, %v2060
      %v2062 = vpop.f32.mrf.mxu0
      %v2063 = vadd.f32 %v1974, %v2062
      %2064 = vmatmul.bf16.gmra.mxu0 %v1544
      %v2065 = vpop.f32.mrf.mxu0
      %v2066 = vadd.f32 %v1977, %v2065
      %v2067 = vpop.f32.mrf.mxu0
      %v2068 = vadd.f32 %v1979, %v2067
      %2069 = vmatmul.bf16.gmra.mxu0 %v1553
      %v2070 = vpop.f32.mrf.mxu0
      %v2071 = vadd.f32 %v1982, %v2070
      %v2072 = vpop.f32.mrf.mxu0
      %v2073 = vadd.f32 %v1984, %v2072
      %2074 = vmatmul.bf16.gmra.mxu0 %v1562
      %v2075 = vpop.f32.mrf.mxu0
      %v2076 = vadd.f32 %v1987, %v2075
      %v2077 = vpop.f32.mrf.mxu0
      %v2078 = vadd.f32 %v1989, %v2077
      %2079 = vmatmul.bf16.gmra.mxu0 %v1571
      %v2080 = vpop.f32.mrf.mxu0
      %v2081 = vadd.f32 %v1992, %v2080
      %v2082 = vpop.f32.mrf.mxu0
      %v2083 = vadd.f32 %v1994, %v2082
      %2084 = vmatmul.bf16.gmra.mxu0 %v1580
      %v2085 = vpop.f32.mrf.mxu0
      %v2086 = vadd.f32 %v1997, %v2085
      %v2087 = vpop.f32.mrf.mxu0
      %v2088 = vadd.f32 %v1999, %v2087
      %2089 = vmatmul.bf16.gmra.mxu0 %v1589
      %v2090 = vpop.f32.mrf.mxu0
      %v2091 = vadd.f32 %v2002, %v2090
      %v2092 = vpop.f32.mrf.mxu0
      %v2093 = vadd.f32 %v2004, %v2092
      %2094 = vdwg.mxu0
      %2095 = vmatpush.bf16.msra.mxu0 %v446
      %2096 = vmatpush.bf16.msra.mxu0 %v445
      %2097 = vmatpush.bf16.msra.mxu0 %v444
      %2098 = vmatpush.bf16.msra.mxu0 %v443
      %2099 = vmatpush.bf16.msra.mxu0 %v442
      %2100 = vmatpush.bf16.msra.mxu0 %v441
      %2101 = vmatpush.bf16.msra.mxu0 %v440
      %2102 = vmatpush.bf16.msra.mxu0 %v439
      %2103 = vmatmul.bf16.gmra.mxu0 %v1455
      %v2104 = vpop.f32.mrf.mxu0
      %v2105 = vadd.f32 %v2016, %v2104
      %v2106 = vpop.f32.mrf.mxu0
      %v2107 = vadd.f32 %v2018, %v2106
      %2108 = vmatmul.bf16.gmra.mxu0 %v1464
      %v2109 = vpop.f32.mrf.mxu0
      %v2110 = vadd.f32 %v2021, %v2109
      %v2111 = vpop.f32.mrf.mxu0
      %v2112 = vadd.f32 %v2023, %v2111
      %2113 = vmatmul.bf16.gmra.mxu0 %v1473
      %v2114 = vpop.f32.mrf.mxu0
      %v2115 = vadd.f32 %v2026, %v2114
      %v2116 = vpop.f32.mrf.mxu0
      %v2117 = vadd.f32 %v2028, %v2116
      %2118 = vmatmul.bf16.gmra.mxu0 %v1482
      %v2119 = vpop.f32.mrf.mxu0
      %v2120 = vadd.f32 %v2031, %v2119
      %v2121 = vpop.f32.mrf.mxu0
      %v2122 = vadd.f32 %v2033, %v2121
      %2123 = vmatmul.bf16.gmra.mxu0 %v1491
      %v2124 = vpop.f32.mrf.mxu0
      %v2125 = vadd.f32 %v2036, %v2124
      %v2126 = vpop.f32.mrf.mxu0
      %v2127 = vadd.f32 %v2038, %v2126
      %2128 = vmatmul.bf16.gmra.mxu0 %v1500
      %v2129 = vpop.f32.mrf.mxu0
      %v2130 = vadd.f32 %v2041, %v2129
      %v2131 = vpop.f32.mrf.mxu0
      %v2132 = vadd.f32 %v2043, %v2131
      %2133 = vmatmul.bf16.gmra.mxu0 %v1509
      %v2134 = vpop.f32.mrf.mxu0
      %v2135 = vadd.f32 %v2046, %v2134
      %v2136 = vpop.f32.mrf.mxu0
      %v2137 = vadd.f32 %v2048, %v2136
      %2138 = vmatmul.bf16.gmra.mxu0 %v1518
      %v2139 = vpop.f32.mrf.mxu0
      %v2140 = vadd.f32 %v2051, %v2139
      %v2141 = vpop.f32.mrf.mxu0
      %v2142 = vadd.f32 %v2053, %v2141
      %2143 = vmatmul.bf16.gmra.mxu0 %v1527
      %v2144 = vpop.f32.mrf.mxu0
      %v2145 = vadd.f32 %v2056, %v2144
      %v2146 = vpop.f32.mrf.mxu0
      %v2147 = vadd.f32 %v2058, %v2146
      %2148 = vmatmul.bf16.gmra.mxu0 %v1536
      %v2149 = vpop.f32.mrf.mxu0
      %v2150 = vadd.f32 %v2061, %v2149
      %v2151 = vpop.f32.mrf.mxu0
      %v2152 = vadd.f32 %v2063, %v2151
      %2153 = vmatmul.bf16.gmra.mxu0 %v1545
      %v2154 = vpop.f32.mrf.mxu0
      %v2155 = vadd.f32 %v2066, %v2154
      %v2156 = vpop.f32.mrf.mxu0
      %v2157 = vadd.f32 %v2068, %v2156
      %2158 = vmatmul.bf16.gmra.mxu0 %v1554
      %v2159 = vpop.f32.mrf.mxu0
      %v2160 = vadd.f32 %v2071, %v2159
      %v2161 = vpop.f32.mrf.mxu0
      %v2162 = vadd.f32 %v2073, %v2161
      %2163 = vmatmul.bf16.gmra.mxu0 %v1563
      %v2164 = vpop.f32.mrf.mxu0
      %v2165 = vadd.f32 %v2076, %v2164
      %v2166 = vpop.f32.mrf.mxu0
      %v2167 = vadd.f32 %v2078, %v2166
      %2168 = vmatmul.bf16.gmra.mxu0 %v1572
      %v2169 = vpop.f32.mrf.mxu0
      %v2170 = vadd.f32 %v2081, %v2169
      %v2171 = vpop.f32.mrf.mxu0
      %v2172 = vadd.f32 %v2083, %v2171
      %2173 = vmatmul.bf16.gmra.mxu0 %v1581
      %v2174 = vpop.f32.mrf.mxu0
      %v2175 = vadd.f32 %v2086, %v2174
      %v2176 = vpop.f32.mrf.mxu0
      %v2177 = vadd.f32 %v2088, %v2176
      %2178 = vmatmul.bf16.gmra.mxu0 %v1590
      %v2179 = vpop.f32.mrf.mxu0
      %v2180 = vadd.f32 %v2091, %v2179
      %v2181 = vpop.f32.mrf.mxu0
      %v2182 = vadd.f32 %v2093, %v2181
      %2183 = vdwg.mxu0
      %2184 = vmatpush.bf16.msra.mxu0 %v495
      %2185 = vmatpush.bf16.msra.mxu0 %v494
      %2186 = vmatpush.bf16.msra.mxu0 %v493
      %2187 = vmatpush.bf16.msra.mxu0 %v492
      %2188 = vmatpush.bf16.msra.mxu0 %v491
      %2189 = vmatpush.bf16.msra.mxu0 %v490
      %2190 = vmatpush.bf16.msra.mxu0 %v489
      %2191 = vmatpush.bf16.msra.mxu0 %v488
      %2192 = vmatmul.bf16.gmra.mxu0 %v1456
      %v2193 = vpop.f32.mrf.mxu0
      %v2194 = vadd.f32 %v2105, %v2193
      %v2195 = vpop.f32.mrf.mxu0
      %v2196 = vadd.f32 %v2107, %v2195
      %2197 = vmatmul.bf16.gmra.mxu0 %v1465
      %v2198 = vpop.f32.mrf.mxu0
      %v2199 = vadd.f32 %v2110, %v2198
      %v2200 = vpop.f32.mrf.mxu0
      %v2201 = vadd.f32 %v2112, %v2200
      %2202 = vmatmul.bf16.gmra.mxu0 %v1474
      %v2203 = vpop.f32.mrf.mxu0
      %v2204 = vadd.f32 %v2115, %v2203
      %v2205 = vpop.f32.mrf.mxu0
      %v2206 = vadd.f32 %v2117, %v2205
      %2207 = vmatmul.bf16.gmra.mxu0 %v1483
      %v2208 = vpop.f32.mrf.mxu0
      %v2209 = vadd.f32 %v2120, %v2208
      %v2210 = vpop.f32.mrf.mxu0
      %v2211 = vadd.f32 %v2122, %v2210
      %2212 = vmatmul.bf16.gmra.mxu0 %v1492
      %v2213 = vpop.f32.mrf.mxu0
      %v2214 = vadd.f32 %v2125, %v2213
      %v2215 = vpop.f32.mrf.mxu0
      %v2216 = vadd.f32 %v2127, %v2215
      %2217 = vmatmul.bf16.gmra.mxu0 %v1501
      %v2218 = vpop.f32.mrf.mxu0
      %v2219 = vadd.f32 %v2130, %v2218
      %v2220 = vpop.f32.mrf.mxu0
      %v2221 = vadd.f32 %v2132, %v2220
      %2222 = vmatmul.bf16.gmra.mxu0 %v1510
      %v2223 = vpop.f32.mrf.mxu0
      %v2224 = vadd.f32 %v2135, %v2223
      %v2225 = vpop.f32.mrf.mxu0
      %v2226 = vadd.f32 %v2137, %v2225
      %2227 = vmatmul.bf16.gmra.mxu0 %v1519
      %v2228 = vpop.f32.mrf.mxu0
      %v2229 = vadd.f32 %v2140, %v2228
      %v2230 = vpop.f32.mrf.mxu0
      %v2231 = vadd.f32 %v2142, %v2230
      %2232 = vmatmul.bf16.gmra.mxu0 %v1528
      %v2233 = vpop.f32.mrf.mxu0
      %v2234 = vadd.f32 %v2145, %v2233
      %v2235 = vpop.f32.mrf.mxu0
      %v2236 = vadd.f32 %v2147, %v2235
      %2237 = vmatmul.bf16.gmra.mxu0 %v1537
      %v2238 = vpop.f32.mrf.mxu0
      %v2239 = vadd.f32 %v2150, %v2238
      %v2240 = vpop.f32.mrf.mxu0
      %v2241 = vadd.f32 %v2152, %v2240
      %2242 = vmatmul.bf16.gmra.mxu0 %v1546
      %v2243 = vpop.f32.mrf.mxu0
      %v2244 = vadd.f32 %v2155, %v2243
      %v2245 = vpop.f32.mrf.mxu0
      %v2246 = vadd.f32 %v2157, %v2245
      %2247 = vmatmul.bf16.gmra.mxu0 %v1555
      %v2248 = vpop.f32.mrf.mxu0
      %v2249 = vadd.f32 %v2160, %v2248
      %v2250 = vpop.f32.mrf.mxu0
      %v2251 = vadd.f32 %v2162, %v2250
      %2252 = vmatmul.bf16.gmra.mxu0 %v1564
      %v2253 = vpop.f32.mrf.mxu0
      %v2254 = vadd.f32 %v2165, %v2253
      %v2255 = vpop.f32.mrf.mxu0
      %v2256 = vadd.f32 %v2167, %v2255
      %2257 = vmatmul.bf16.gmra.mxu0 %v1573
      %v2258 = vpop.f32.mrf.mxu0
      %v2259 = vadd.f32 %v2170, %v2258
      %v2260 = vpop.f32.mrf.mxu0
      %v2261 = vadd.f32 %v2172, %v2260
      %2262 = vmatmul.bf16.gmra.mxu0 %v1582
      %v2263 = vpop.f32.mrf.mxu0
      %v2264 = vadd.f32 %v2175, %v2263
      %v2265 = vpop.f32.mrf.mxu0
      %v2266 = vadd.f32 %v2177, %v2265
      %2267 = vmatmul.bf16.gmra.mxu0 %v1591
      %v2268 = vpop.f32.mrf.mxu0
      %v2269 = vadd.f32 %v2180, %v2268
      %v2270 = vpop.f32.mrf.mxu0
      %v2271 = vadd.f32 %v2182, %v2270
      %2272 = vdwg.mxu0
      %2273 = vmatpush.bf16.msra.mxu0 %v544
      %2274 = vmatpush.bf16.msra.mxu0 %v543
      %2275 = vmatpush.bf16.msra.mxu0 %v542
      %2276 = vmatpush.bf16.msra.mxu0 %v541
      %2277 = vmatpush.bf16.msra.mxu0 %v540
      %2278 = vmatpush.bf16.msra.mxu0 %v539
      %2279 = vmatpush.bf16.msra.mxu0 %v538
      %2280 = vmatpush.bf16.msra.mxu0 %v537
      %2281 = vmatmul.bf16.gmra.mxu0 %v1457
      %v2282 = vpop.f32.mrf.mxu0
      %v2283 = vadd.f32 %v2194, %v2282
      %v2284 = vpop.f32.mrf.mxu0
      %v2285 = vadd.f32 %v2196, %v2284
      %2286 = vmatmul.bf16.gmra.mxu0 %v1466
      %v2287 = vpop.f32.mrf.mxu0
      %v2288 = vadd.f32 %v2199, %v2287
      %v2289 = vpop.f32.mrf.mxu0
      %v2290 = vadd.f32 %v2201, %v2289
      %2291 = vmatmul.bf16.gmra.mxu0 %v1475
      %v2292 = vpop.f32.mrf.mxu0
      %v2293 = vadd.f32 %v2204, %v2292
      %v2294 = vpop.f32.mrf.mxu0
      %v2295 = vadd.f32 %v2206, %v2294
      %2296 = vmatmul.bf16.gmra.mxu0 %v1484
      %v2297 = vpop.f32.mrf.mxu0
      %v2298 = vadd.f32 %v2209, %v2297
      %v2299 = vpop.f32.mrf.mxu0
      %v2300 = vadd.f32 %v2211, %v2299
      %2301 = vmatmul.bf16.gmra.mxu0 %v1493
      %v2302 = vpop.f32.mrf.mxu0
      %v2303 = vadd.f32 %v2214, %v2302
      %v2304 = vpop.f32.mrf.mxu0
      %v2305 = vadd.f32 %v2216, %v2304
      %2306 = vmatmul.bf16.gmra.mxu0 %v1502
      %v2307 = vpop.f32.mrf.mxu0
      %v2308 = vadd.f32 %v2219, %v2307
      %v2309 = vpop.f32.mrf.mxu0
      %v2310 = vadd.f32 %v2221, %v2309
      %2311 = vmatmul.bf16.gmra.mxu0 %v1511
      %v2312 = vpop.f32.mrf.mxu0
      %v2313 = vadd.f32 %v2224, %v2312
      %v2314 = vpop.f32.mrf.mxu0
      %v2315 = vadd.f32 %v2226, %v2314
      %2316 = vmatmul.bf16.gmra.mxu0 %v1520
      %v2317 = vpop.f32.mrf.mxu0
      %v2318 = vadd.f32 %v2229, %v2317
      %v2319 = vpop.f32.mrf.mxu0
      %v2320 = vadd.f32 %v2231, %v2319
      %2321 = vmatmul.bf16.gmra.mxu0 %v1529
      %v2322 = vpop.f32.mrf.mxu0
      %v2323 = vadd.f32 %v2234, %v2322
      %v2324 = vpop.f32.mrf.mxu0
      %v2325 = vadd.f32 %v2236, %v2324
      %2326 = vmatmul.bf16.gmra.mxu0 %v1538
      %v2327 = vpop.f32.mrf.mxu0
      %v2328 = vadd.f32 %v2239, %v2327
      %v2329 = vpop.f32.mrf.mxu0
      %v2330 = vadd.f32 %v2241, %v2329
      %2331 = vmatmul.bf16.gmra.mxu0 %v1547
      %v2332 = vpop.f32.mrf.mxu0
      %v2333 = vadd.f32 %v2244, %v2332
      %v2334 = vpop.f32.mrf.mxu0
      %v2335 = vadd.f32 %v2246, %v2334
      %2336 = vmatmul.bf16.gmra.mxu0 %v1556
      %v2337 = vpop.f32.mrf.mxu0
      %v2338 = vadd.f32 %v2249, %v2337
      %v2339 = vpop.f32.mrf.mxu0
      %v2340 = vadd.f32 %v2251, %v2339
      %2341 = vmatmul.bf16.gmra.mxu0 %v1565
      %v2342 = vpop.f32.mrf.mxu0
      %v2343 = vadd.f32 %v2254, %v2342
      %v2344 = vpop.f32.mrf.mxu0
      %v2345 = vadd.f32 %v2256, %v2344
      %2346 = vmatmul.bf16.gmra.mxu0 %v1574
      %v2347 = vpop.f32.mrf.mxu0
      %v2348 = vadd.f32 %v2259, %v2347
      %v2349 = vpop.f32.mrf.mxu0
      %v2350 = vadd.f32 %v2261, %v2349
      %2351 = vmatmul.bf16.gmra.mxu0 %v1583
      %v2352 = vpop.f32.mrf.mxu0
      %v2353 = vadd.f32 %v2264, %v2352
      %v2354 = vpop.f32.mrf.mxu0
      %v2355 = vadd.f32 %v2266, %v2354
      %2356 = vmatmul.bf16.gmra.mxu0 %v1592
      %v2357 = vpop.f32.mrf.mxu0
      %v2358 = vadd.f32 %v2269, %v2357
      %v2359 = vpop.f32.mrf.mxu0
      %v2360 = vadd.f32 %v2271, %v2359
      %2361 = vdwg.mxu0
      %2362 = vmatpush.bf16.msra.mxu0 %v593
      %2363 = vmatpush.bf16.msra.mxu0 %v592
      %2364 = vmatpush.bf16.msra.mxu0 %v591
      %2365 = vmatpush.bf16.msra.mxu0 %v590
      %2366 = vmatpush.bf16.msra.mxu0 %v589
      %2367 = vmatpush.bf16.msra.mxu0 %v588
      %2368 = vmatpush.bf16.msra.mxu0 %v587
      %2369 = vmatpush.bf16.msra.mxu0 %v586
      %2370 = vmatmul.bf16.gmra.mxu0 %v1458
      %v2371 = vpop.f32.mrf.mxu0
      %v2372 = vadd.f32 %v2283, %v2371
      %v2373 = vpop.f32.mrf.mxu0
      %v2374 = vadd.f32 %v2285, %v2373
      %2375 = vmatmul.bf16.gmra.mxu0 %v1467
      %v2376 = vpop.f32.mrf.mxu0
      %v2377 = vadd.f32 %v2288, %v2376
      %v2378 = vpop.f32.mrf.mxu0
      %v2379 = vadd.f32 %v2290, %v2378
      %2380 = vmatmul.bf16.gmra.mxu0 %v1476
      %v2381 = vpop.f32.mrf.mxu0
      %v2382 = vadd.f32 %v2293, %v2381
      %v2383 = vpop.f32.mrf.mxu0
      %v2384 = vadd.f32 %v2295, %v2383
      %2385 = vmatmul.bf16.gmra.mxu0 %v1485
      %v2386 = vpop.f32.mrf.mxu0
      %v2387 = vadd.f32 %v2298, %v2386
      %v2388 = vpop.f32.mrf.mxu0
      %v2389 = vadd.f32 %v2300, %v2388
      %2390 = vmatmul.bf16.gmra.mxu0 %v1494
      %v2391 = vpop.f32.mrf.mxu0
      %v2392 = vadd.f32 %v2303, %v2391
      %v2393 = vpop.f32.mrf.mxu0
      %v2394 = vadd.f32 %v2305, %v2393
      %2395 = vmatmul.bf16.gmra.mxu0 %v1503
      %v2396 = vpop.f32.mrf.mxu0
      %v2397 = vadd.f32 %v2308, %v2396
      %v2398 = vpop.f32.mrf.mxu0
      %v2399 = vadd.f32 %v2310, %v2398
      %2400 = vmatmul.bf16.gmra.mxu0 %v1512
      %v2401 = vpop.f32.mrf.mxu0
      %v2402 = vadd.f32 %v2313, %v2401
      %v2403 = vpop.f32.mrf.mxu0
      %v2404 = vadd.f32 %v2315, %v2403
      %2405 = vmatmul.bf16.gmra.mxu0 %v1521
      %v2406 = vpop.f32.mrf.mxu0
      %v2407 = vadd.f32 %v2318, %v2406
      %v2408 = vpop.f32.mrf.mxu0
      %v2409 = vadd.f32 %v2320, %v2408
      %2410 = vmatmul.bf16.gmra.mxu0 %v1530
      %v2411 = vpop.f32.mrf.mxu0
      %v2412 = vadd.f32 %v2323, %v2411
      %v2413 = vpop.f32.mrf.mxu0
      %v2414 = vadd.f32 %v2325, %v2413
      %2415 = vmatmul.bf16.gmra.mxu0 %v1539
      %v2416 = vpop.f32.mrf.mxu0
      %v2417 = vadd.f32 %v2328, %v2416
      %v2418 = vpop.f32.mrf.mxu0
      %v2419 = vadd.f32 %v2330, %v2418
      %2420 = vmatmul.bf16.gmra.mxu0 %v1548
      %v2421 = vpop.f32.mrf.mxu0
      %v2422 = vadd.f32 %v2333, %v2421
      %v2423 = vpop.f32.mrf.mxu0
      %v2424 = vadd.f32 %v2335, %v2423
      %2425 = vmatmul.bf16.gmra.mxu0 %v1557
      %v2426 = vpop.f32.mrf.mxu0
      %v2427 = vadd.f32 %v2338, %v2426
      %v2428 = vpop.f32.mrf.mxu0
      %v2429 = vadd.f32 %v2340, %v2428
      %2430 = vmatmul.bf16.gmra.mxu0 %v1566
      %v2431 = vpop.f32.mrf.mxu0
      %v2432 = vadd.f32 %v2343, %v2431
      %v2433 = vpop.f32.mrf.mxu0
      %v2434 = vadd.f32 %v2345, %v2433
      %2435 = vmatmul.bf16.gmra.mxu0 %v1575
      %v2436 = vpop.f32.mrf.mxu0
      %v2437 = vadd.f32 %v2348, %v2436
      %v2438 = vpop.f32.mrf.mxu0
      %v2439 = vadd.f32 %v2350, %v2438
      %2440 = vmatmul.bf16.gmra.mxu0 %v1584
      %v2441 = vpop.f32.mrf.mxu0
      %v2442 = vadd.f32 %v2353, %v2441
      %v2443 = vpop.f32.mrf.mxu0
      %v2444 = vadd.f32 %v2355, %v2443
      %2445 = vmatmul.bf16.gmra.mxu0 %v1593
      %v2446 = vpop.f32.mrf.mxu0
      %v2447 = vadd.f32 %v2358, %v2446
      %v2448 = vpop.f32.mrf.mxu0
      %v2449 = vadd.f32 %v2360, %v2448
      %2450 = vdwg.mxu0
      %2451 = vmatpush.bf16.msra.mxu0 %v642
      %2452 = vmatpush.bf16.msra.mxu0 %v641
      %2453 = vmatpush.bf16.msra.mxu0 %v640
      %2454 = vmatpush.bf16.msra.mxu0 %v639
      %2455 = vmatpush.bf16.msra.mxu0 %v638
      %2456 = vmatpush.bf16.msra.mxu0 %v637
      %2457 = vmatpush.bf16.msra.mxu0 %v636
      %2458 = vmatpush.bf16.msra.mxu0 %v635
      %2459 = vmatmul.bf16.gmra.mxu0 %v1459
      %v2460 = vpop.f32.mrf.mxu0
      %v2461 = vadd.f32 %v2372, %v2460
      %v2462 = vpop.f32.mrf.mxu0
      %v2463 = vadd.f32 %v2374, %v2462
      %2464 = vmatmul.bf16.gmra.mxu0 %v1468
      %v2465 = vpop.f32.mrf.mxu0
      %v2466 = vadd.f32 %v2377, %v2465
      %v2467 = vpop.f32.mrf.mxu0
      %v2468 = vadd.f32 %v2379, %v2467
      %2469 = vmatmul.bf16.gmra.mxu0 %v1477
      %v2470 = vpop.f32.mrf.mxu0
      %v2471 = vadd.f32 %v2382, %v2470
      %v2472 = vpop.f32.mrf.mxu0
      %v2473 = vadd.f32 %v2384, %v2472
      %2474 = vmatmul.bf16.gmra.mxu0 %v1486
      %v2475 = vpop.f32.mrf.mxu0
      %v2476 = vadd.f32 %v2387, %v2475
      %v2477 = vpop.f32.mrf.mxu0
      %v2478 = vadd.f32 %v2389, %v2477
      %2479 = vmatmul.bf16.gmra.mxu0 %v1495
      %v2480 = vpop.f32.mrf.mxu0
      %v2481 = vadd.f32 %v2392, %v2480
      %v2482 = vpop.f32.mrf.mxu0
      %v2483 = vadd.f32 %v2394, %v2482
      %2484 = vmatmul.bf16.gmra.mxu0 %v1504
      %v2485 = vpop.f32.mrf.mxu0
      %v2486 = vadd.f32 %v2397, %v2485
      %v2487 = vpop.f32.mrf.mxu0
      %v2488 = vadd.f32 %v2399, %v2487
      %2489 = vmatmul.bf16.gmra.mxu0 %v1513
      %v2490 = vpop.f32.mrf.mxu0
      %v2491 = vadd.f32 %v2402, %v2490
      %v2492 = vpop.f32.mrf.mxu0
      %v2493 = vadd.f32 %v2404, %v2492
      %2494 = vmatmul.bf16.gmra.mxu0 %v1522
      %v2495 = vpop.f32.mrf.mxu0
      %v2496 = vadd.f32 %v2407, %v2495
      %v2497 = vpop.f32.mrf.mxu0
      %v2498 = vadd.f32 %v2409, %v2497
      %2499 = vmatmul.bf16.gmra.mxu0 %v1531
      %v2500 = vpop.f32.mrf.mxu0
      %v2501 = vadd.f32 %v2412, %v2500
      %v2502 = vpop.f32.mrf.mxu0
      %v2503 = vadd.f32 %v2414, %v2502
      %2504 = vmatmul.bf16.gmra.mxu0 %v1540
      %v2505 = vpop.f32.mrf.mxu0
      %v2506 = vadd.f32 %v2417, %v2505
      %v2507 = vpop.f32.mrf.mxu0
      %v2508 = vadd.f32 %v2419, %v2507
      %2509 = vmatmul.bf16.gmra.mxu0 %v1549
      %v2510 = vpop.f32.mrf.mxu0
      %v2511 = vadd.f32 %v2422, %v2510
      %v2512 = vpop.f32.mrf.mxu0
      %v2513 = vadd.f32 %v2424, %v2512
      %2514 = vmatmul.bf16.gmra.mxu0 %v1558
      %v2515 = vpop.f32.mrf.mxu0
      %v2516 = vadd.f32 %v2427, %v2515
      %v2517 = vpop.f32.mrf.mxu0
      %v2518 = vadd.f32 %v2429, %v2517
      %2519 = vmatmul.bf16.gmra.mxu0 %v1567
      %v2520 = vpop.f32.mrf.mxu0
      %v2521 = vadd.f32 %v2432, %v2520
      %v2522 = vpop.f32.mrf.mxu0
      %v2523 = vadd.f32 %v2434, %v2522
      %2524 = vmatmul.bf16.gmra.mxu0 %v1576
      %v2525 = vpop.f32.mrf.mxu0
      %v2526 = vadd.f32 %v2437, %v2525
      %v2527 = vpop.f32.mrf.mxu0
      %v2528 = vadd.f32 %v2439, %v2527
      %2529 = vmatmul.bf16.gmra.mxu0 %v1585
      %v2530 = vpop.f32.mrf.mxu0
      %v2531 = vadd.f32 %v2442, %v2530
      %v2532 = vpop.f32.mrf.mxu0
      %v2533 = vadd.f32 %v2444, %v2532
      %2534 = vmatmul.bf16.gmra.mxu0 %v1594
      %v2535 = vpop.f32.mrf.mxu0
      %v2536 = vadd.f32 %v2447, %v2535
      %v2537 = vpop.f32.mrf.mxu0
      %v2538 = vadd.f32 %v2449, %v2537
      %2539 = vdwg.mxu0
      %vm2540 = vcmp.gt.f32.partialorder %v2461, 0.0
      %vm2541 = vcmp.gt.f32.partialorder %v2463, 0.0
      %vm2542 = vcmp.gt.f32.partialorder %v2466, 0.0
      %vm2543 = vcmp.gt.f32.partialorder %v2468, 0.0
      %vm2544 = vcmp.gt.f32.partialorder %v2471, 0.0
      %vm2545 = vcmp.gt.f32.partialorder %v2473, 0.0
      %vm2546 = vcmp.gt.f32.partialorder %v2476, 0.0
      %vm2547 = vcmp.gt.f32.partialorder %v2478, 0.0
      %vm2548 = vcmp.gt.f32.partialorder %v2481, 0.0
      %vm2549 = vcmp.gt.f32.partialorder %v2483, 0.0
      %vm2550 = vcmp.gt.f32.partialorder %v2486, 0.0
      %vm2551 = vcmp.gt.f32.partialorder %v2488, 0.0
      %vm2552 = vcmp.gt.f32.partialorder %v2491, 0.0
      %vm2553 = vcmp.gt.f32.partialorder %v2493, 0.0
      %vm2554 = vcmp.gt.f32.partialorder %v2496, 0.0
      %vm2555 = vcmp.gt.f32.partialorder %v2498, 0.0
      %vm2556 = vcmp.gt.f32.partialorder %v2501, 0.0
      %vm2557 = vcmp.gt.f32.partialorder %v2503, 0.0
      %vm2558 = vcmp.gt.f32.partialorder %v2506, 0.0
      %vm2559 = vcmp.gt.f32.partialorder %v2508, 0.0
      %vm2560 = vcmp.gt.f32.partialorder %v2511, 0.0
      %vm2561 = vcmp.gt.f32.partialorder %v2513, 0.0
      %vm2562 = vcmp.gt.f32.partialorder %v2516, 0.0
      %vm2563 = vcmp.gt.f32.partialorder %v2518, 0.0
      %vm2564 = vcmp.gt.f32.partialorder %v2521, 0.0
      %vm2565 = vcmp.gt.f32.partialorder %v2523, 0.0
      %vm2566 = vcmp.gt.f32.partialorder %v2526, 0.0
      %vm2567 = vcmp.gt.f32.partialorder %v2528, 0.0
      %vm2568 = vcmp.gt.f32.partialorder %v2531, 0.0
      %vm2569 = vcmp.gt.f32.partialorder %v2533, 0.0
      %vm2570 = vcmp.gt.f32.partialorder %v2536, 0.0
      %vm2571 = vcmp.gt.f32.partialorder %v2538, 0.0
      %v2572 = vmul.f32 %v2461, 0.2
      %v2573 = vmul.f32 %v2463, 0.2
      %v2574 = vmul.f32 %v2466, 0.2
      %v2575 = vmul.f32 %v2468, 0.2
      %v2576 = vmul.f32 %v2471, 0.2
      %v2577 = vmul.f32 %v2473, 0.2
      %v2578 = vmul.f32 %v2476, 0.2
      %v2579 = vmul.f32 %v2478, 0.2
      %v2580 = vmul.f32 %v2481, 0.2
      %v2581 = vmul.f32 %v2483, 0.2
      %v2582 = vmul.f32 %v2486, 0.2
      %v2583 = vmul.f32 %v2488, 0.2
      %v2584 = vmul.f32 %v2491, 0.2
      %v2585 = vmul.f32 %v2493, 0.2
      %v2586 = vmul.f32 %v2496, 0.2
      %v2587 = vmul.f32 %v2498, 0.2
      %v2588 = vmul.f32 %v2501, 0.2
      %v2589 = vmul.f32 %v2503, 0.2
      %v2590 = vmul.f32 %v2506, 0.2
      %v2591 = vmul.f32 %v2508, 0.2
      %v2592 = vmul.f32 %v2511, 0.2
      %v2593 = vmul.f32 %v2513, 0.2
      %v2594 = vmul.f32 %v2516, 0.2
      %v2595 = vmul.f32 %v2518, 0.2
      %v2596 = vmul.f32 %v2521, 0.2
      %v2597 = vmul.f32 %v2523, 0.2
      %v2598 = vmul.f32 %v2526, 0.2
      %v2599 = vmul.f32 %v2528, 0.2
      %v2600 = vmul.f32 %v2531, 0.2
      %v2601 = vmul.f32 %v2533, 0.2
      %v2602 = vmul.f32 %v2536, 0.2
      %v2603 = vmul.f32 %v2538, 0.2
      %v2604 = vsel %vm2540, %v2461, %v2572
      %v2605 = vsel %vm2541, %v2463, %v2573
      %v2606 = vsel %vm2542, %v2466, %v2574
      %v2607 = vsel %vm2543, %v2468, %v2575
      %v2608 = vsel %vm2544, %v2471, %v2576
      %v2609 = vsel %vm2545, %v2473, %v2577
      %v2610 = vsel %vm2546, %v2476, %v2578
      %v2611 = vsel %vm2547, %v2478, %v2579
      %v2612 = vsel %vm2548, %v2481, %v2580
      %v2613 = vsel %vm2549, %v2483, %v2581
      %v2614 = vsel %vm2550, %v2486, %v2582
      %v2615 = vsel %vm2551, %v2488, %v2583
      %v2616 = vsel %vm2552, %v2491, %v2584
      %v2617 = vsel %vm2553, %v2493, %v2585
      %v2618 = vsel %vm2554, %v2496, %v2586
      %v2619 = vsel %vm2555, %v2498, %v2587
      %v2620 = vsel %vm2556, %v2501, %v2588
      %v2621 = vsel %vm2557, %v2503, %v2589
      %v2622 = vsel %vm2558, %v2506, %v2590
      %v2623 = vsel %vm2559, %v2508, %v2591
      %v2624 = vsel %vm2560, %v2511, %v2592
      %v2625 = vsel %vm2561, %v2513, %v2593
      %v2626 = vsel %vm2562, %v2516, %v2594
      %v2627 = vsel %vm2563, %v2518, %v2595
      %v2628 = vsel %vm2564, %v2521, %v2596
      %v2629 = vsel %vm2565, %v2523, %v2597
      %v2630 = vsel %vm2566, %v2526, %v2598
      %v2631 = vsel %vm2567, %v2528, %v2599
      %v2632 = vsel %vm2568, %v2531, %v2600
      %v2633 = vsel %vm2569, %v2533, %v2601
      %v2634 = vsel %vm2570, %v2536, %v2602
      %v2635 = vsel %vm2571, %v2538, %v2603
      %v2636 = vpack.c.bf16 %v2604, %v2604
      %v2637 = vpack.c.bf16 %v2605, %v2605
      %v2638 = vpack.c.bf16 %v2606, %v2606
      %v2639 = vpack.c.bf16 %v2607, %v2607
      %v2640 = vpack.c.bf16 %v2608, %v2608
      %v2641 = vpack.c.bf16 %v2609, %v2609
      %v2642 = vpack.c.bf16 %v2610, %v2610
      %v2643 = vpack.c.bf16 %v2611, %v2611
      %v2644 = vpack.c.bf16 %v2612, %v2612
      %v2645 = vpack.c.bf16 %v2613, %v2613
      %v2646 = vpack.c.bf16 %v2614, %v2614
      %v2647 = vpack.c.bf16 %v2615, %v2615
      %v2648 = vpack.c.bf16 %v2616, %v2616
      %v2649 = vpack.c.bf16 %v2617, %v2617
      %v2650 = vpack.c.bf16 %v2618, %v2618
      %v2651 = vpack.c.bf16 %v2619, %v2619
      %v2652 = vpack.c.bf16 %v2620, %v2620
      %v2653 = vpack.c.bf16 %v2621, %v2621
      %v2654 = vpack.c.bf16 %v2622, %v2622
      %v2655 = vpack.c.bf16 %v2623, %v2623
      %v2656 = vpack.c.bf16 %v2624, %v2624
      %v2657 = vpack.c.bf16 %v2625, %v2625
      %v2658 = vpack.c.bf16 %v2626, %v2626
      %v2659 = vpack.c.bf16 %v2627, %v2627
      %v2660 = vpack.c.bf16 %v2628, %v2628
      %v2661 = vpack.c.bf16 %v2629, %v2629
      %v2662 = vpack.c.bf16 %v2630, %v2630
      %v2663 = vpack.c.bf16 %v2631, %v2631
      %v2664 = vpack.c.bf16 %v2632, %v2632
      %v2665 = vpack.c.bf16 %v2633, %v2633
      %v2666 = vpack.c.bf16 %v2634, %v2634
      %v2667 = vpack.c.bf16 %v2635, %v2635
      %2668 = vst [vmem:[%s170] sm:$0xf] %v2636
      %2669 = vst [vmem:[%s170 + $0x4] sm:$0xf] %v2637
      %2670 = vst [vmem:[%s170 + $0x8] sm:$0xf] %v2638
      %2671 = vst [vmem:[%s170 + $0xc] sm:$0xf] %v2639
      %2672 = vst [vmem:[%s170 + $0x10] sm:$0xf] %v2640
      %2673 = vst [vmem:[%s170 + $0x14] sm:$0xf] %v2641
      %2674 = vst [vmem:[%s170 + $0x18] sm:$0xf] %v2642
      %2675 = vst [vmem:[%s170 + $0x1c] sm:$0xf] %v2643
      %2676 = vst [vmem:[%s170 + $0x20] sm:$0xf] %v2644
      %2677 = vst [vmem:[%s170 + $0x24] sm:$0xf] %v2645
      %2678 = vst [vmem:[%s170 + $0x28] sm:$0xf] %v2646
      %2679 = vst [vmem:[%s170 + $0x2c] sm:$0xf] %v2647
      %2680 = vst [vmem:[%s170 + $0x30] sm:$0xf] %v2648
      %2681 = vst [vmem:[%s170 + $0x34] sm:$0xf] %v2649
      %2682 = vst [vmem:[%s170 + $0x38] sm:$0xf] %v2650
      %2683 = vst [vmem:[%s170 + $0x3c] sm:$0xf] %v2651
      %2684 = vst [vmem:[%s170 + $0x40] sm:$0xf] %v2652
      %2685 = vst [vmem:[%s170 + $0x44] sm:$0xf] %v2653
      %2686 = vst [vmem:[%s170 + $0x48] sm:$0xf] %v2654
      %2687 = vst [vmem:[%s170 + $0x4c] sm:$0xf] %v2655
      %2688 = vst [vmem:[%s170 + $0x50] sm:$0xf] %v2656
      %2689 = vst [vmem:[%s170 + $0x54] sm:$0xf] %v2657
      %2690 = vst [vmem:[%s170 + $0x58] sm:$0xf] %v2658
      %2691 = vst [vmem:[%s170 + $0x5c] sm:$0xf] %v2659
      %2692 = vst [vmem:[%s170 + $0x60] sm:$0xf] %v2660
      %2693 = vst [vmem:[%s170 + $0x64] sm:$0xf] %v2661
      %2694 = vst [vmem:[%s170 + $0x68] sm:$0xf] %v2662
      %2695 = vst [vmem:[%s170 + $0x6c] sm:$0xf] %v2663
      %2696 = vst [vmem:[%s170 + $0x70] sm:$0xf] %v2664
      %2697 = vst [vmem:[%s170 + $0x74] sm:$0xf] %v2665
      %2698 = vst [vmem:[%s170 + $0x78] sm:$0xf] %v2666
      %2699 = vst [vmem:[%s170 + $0x7c] sm:$0xf] %v2667
      %p2700 = scmp.lt.s32.totalorder %s14, 1
      %s2701 = scalar_select %p2700, %s14, 1
      %s2702 = smul.addr %s2701, 32
      %s2703 = smul.addr %s2702, 4
      %s2704 = scalar_lea.vmem %s3, %s2703
      // Predicated region
      $region33: #{generator_forward.6} parent=31 // pred_check
        %p2705 = pneg %p100
      $region34: #{generator_forward.6} parent=31 // pred_check_branch
        %2707 = sbr.rel (%p2705) target = $region36
      $region35: #{generator_forward.6} parent=31 // pred_region
        _
      $region36: #{generator_forward.6} parent=31 // pred_fallthru
        _
    $region32: #{generator_forward.6} parent=5 // pred_fallthru
      _
    %p2708 = scmp.le.s32.totalorder 2, %s9
    // Predicated region
    $region37: #{generator_forward.6} parent=5 // pred_check
      %p2709 = pneg %p2708
    $region38: #{generator_forward.6} parent=5 // pred_check_branch
      %2711 = sbr.rel (%p2709) target = $region40
    $region39: #{generator_forward.6} parent=5 // pred_region
      %s2712 = ssub.s32 %s9, 2
      // Predicated region
      $region41: #{generator_forward.6} parent=39 // pred_check
        %p2713 = pneg %p106
      $region42: #{generator_forward.6} parent=39 // pred_check_branch
        %2715 = sbr.rel (%p2713) target = $region44
      $region43: #{generator_forward.6} parent=39 // pred_region
        %p2716 = scmp.lt.s32.totalorder %s15, 1
        %s2717 = scalar_select %p2716, %s15, 1
        %s2718 = smul.addr %s2717, 32
        %s2719 = smul.addr %s2718, 4
        %s2720 = scalar_lea.vmem %s3, %s2719
      $region44: #{generator_forward.6} parent=39 // pred_fallthru
        _
    $region40: #{generator_forward.6} parent=5 // pred_fallthru
      _
  $region6: #{generator_forward.6} parent=0 // loop_footer
    %s13 = sadd.s32 1, %s9
  $region7: #{generator_forward.6} parent=0 // loop_footer_branch
    %8 = sbr.rel target = $region3
  $region8: #{generator_forward.6} parent=0 // loop_exit
    _

// kernel: tile.23
$region0: #{tile.23}
  #allocation0 [shape = 's32[1]{0}', space=sflag, size = 0x4, scoped, tag = 'scoped memory for tile.23']
  %s0 = inlined_call_operand.vmem [shape: f32[32], index: 0, kind: input, shape index: {}]
  %s1 = inlined_call_operand.vmem [shape: f32[4,32], index: 1, kind: output, shape index: {}]
  // Predicated region
  $region2: #{tile.23} parent=0 // pred_check
    _
  $region3: #{tile.23} parent=0 // pred_check_branch
    %3 = sbr.rel (0) target = $region5
  $region4: #{tile.23} parent=0 // pred_region
    _
  $region5: #{tile.23} parent=0 // pred_fallthru
    _
  %v4 = vld [vmem:[%s0] ss:$0 sm:$0xff]
  %5 = vst [vmem:[%s1] sm:$0xf] %v4

// kernel: tile.1
$region0: #{tile.1}
  %s0 = inlined_call_operand.vmem [shape: f32[4,32], index: 0, kind: input, shape index: {}]
  %s1 = inlined_call_operand.vmem [shape: f32[128,1], index: 1, kind: output, shape index: {}]
  $region1: #{tile.1} parent=0
    #allocation0 [shape = 'u8[4096]{0}', space=vmem, size = 0x1000, scoped, tag = 'scoped mem for input reshape']
    %s3 = ssub.s32 16, 1
    %v4 = vld [vmem:[%s0] sm:%s3]
    %5 = vst [vmem:[#allocation0] sm:%s3] %v4
    %v6 = vld [vmem:[#allocation0] sm:$0xf]
    %vm7 = vcmask 7168
    %8 = vst.msk [vmem:[%s1] sm:$0x1] %vm7, %v6
    %s9 = scalar_lea.vmem %s1, 31
    %10 = vst.msk [vmem:[%s9] sm:$0x2] %vm7, %v6
    %s11 = scalar_lea.vmem %s1, 62
    %12 = vst.msk [vmem:[%s11] sm:$0x4] %vm7, %v6
    %s13 = scalar_lea.vmem %s1, 93
    %14 = vst.msk [vmem:[%s13] sm:$0x8] %vm7, %v6
    %v15 = vld [vmem:[#allocation0] sm:$0xf]
    %16 = vrot.lane.b32.xlu0 %v15, 127
    %v17 = vpop.permute.xlu0 %16
    %vm18 = vcmask 7168
    %s19 = scalar_lea.vmem %s1, 1
    %20 = vst.msk [vmem:[%s19] sm:$0x1] %vm18, %v17
    %s21 = scalar_lea.vmem %s1, 32
    %22 = vst.msk [vmem:[%s21] sm:$0x2] %vm18, %v17
    %s23 = scalar_lea.vmem %s1, 63
    %24 = vst.msk [vmem:[%s23] sm:$0x4] %vm18, %v17
    %s25 = scalar_lea.vmem %s1, 94
    %26 = vst.msk [vmem:[%s25] sm:$0x8] %vm18, %v17
    %v27 = vld [vmem:[#allocation0] sm:$0xf]
    %28 = vrot.lane.b32.xlu0 %v27, 126
    %v29 = vpop.permute.xlu0 %28
    %vm30 = vcmask 7168
    %s31 = scalar_lea.vmem %s1, 2
    %32 = vst.msk [vmem:[%s31] sm:$0x1] %vm30, %v29
    %s33 = scalar_lea.vmem %s1, 33
    %34 = vst.msk [vmem:[%s33] sm:$0x2] %vm30, %v29
    %s35 = scalar_lea.vmem %s1, 64
    %36 = vst.msk [vmem:[%s35] sm:$0x4] %vm30, %v29
    %s37 = scalar_lea.vmem %s1, 95
    %38 = vst.msk [vmem:[%s37] sm:$0x8] %vm30, %v29
    %v39 = vld [vmem:[#allocation0] sm:$0xf]
    %40 = vrot.lane.b32.xlu0 %v39, 125
    %v41 = vpop.permute.xlu0 %40
    %vm42 = vcmask 7168
    %s43 = scalar_lea.vmem %s1, 3
    %44 = vst.msk [vmem:[%s43] sm:$0x1] %vm42, %v41
    %s45 = scalar_lea.vmem %s1, 34
    %46 = vst.msk [vmem:[%s45] sm:$0x2] %vm42, %v41
    %s47 = scalar_lea.vmem %s1, 65
    %48 = vst.msk [vmem:[%s47] sm:$0x4] %vm42, %v41
    %s49 = scalar_lea.vmem %s1, 96
    %50 = vst.msk [vmem:[%s49] sm:$0x8] %vm42, %v41
    %v51 = vld [vmem:[#allocation0] sm:$0xf]
    %52 = vrot.lane.b32.xlu0 %v51, 124
    %v53 = vpop.permute.xlu0 %52
    %vm54 = vcmask 7168
    %s55 = scalar_lea.vmem %s1, 4
    %56 = vst.msk [vmem:[%s55] sm:$0x1] %vm54, %v53
    %s57 = scalar_lea.vmem %s1, 35
    %58 = vst.msk [vmem:[%s57] sm:$0x2] %vm54, %v53
    %s59 = scalar_lea.vmem %s1, 66
    %60 = vst.msk [vmem:[%s59] sm:$0x4] %vm54, %v53
    %s61 = scalar_lea.vmem %s1, 97
    %62 = vst.msk [vmem:[%s61] sm:$0x8] %vm54, %v53
    %v63 = vld [vmem:[#allocation0] sm:$0xf]
    %64 = vrot.lane.b32.xlu0 %v63, 123
    %v65 = vpop.permute.xlu0 %64
    %vm66 = vcmask 7168
    %s67 = scalar_lea.vmem %s1, 5
    %68 = vst.msk [vmem:[%s67] sm:$0x1] %vm66, %v65
    %s69 = scalar_lea.vmem %s1, 36
    %70 = vst.msk [vmem:[%s69] sm:$0x2] %vm66, %v65
    %s71 = scalar_lea.vmem %s1, 67
    %72 = vst.msk [vmem:[%s71] sm:$0x4] %vm66, %v65
    %s73 = scalar_lea.vmem %s1, 98
    %74 = vst.msk [vmem:[%s73] sm:$0x8] %vm66, %v65
    %v75 = vld [vmem:[#allocation0] sm:$0xf]
    %76 = vrot.lane.b32.xlu0 %v75, 122
    %v77 = vpop.permute.xlu0 %76
    %vm78 = vcmask 7168
    %s79 = scalar_lea.vmem %s1, 6
    %80 = vst.msk [vmem:[%s79] sm:$0x1] %vm78, %v77
    %s81 = scalar_lea.vmem %s1, 37
    %82 = vst.msk [vmem:[%s81] sm:$0x2] %vm78, %v77
    %s83 = scalar_lea.vmem %s1, 68
    %84 = vst.msk [vmem:[%s83] sm:$0x4] %vm78, %v77
    %s85 = scalar_lea.vmem %s1, 99
    %86 = vst.msk [vmem:[%s85] sm:$0x8] %vm78, %v77
    %v87 = vld [vmem:[#allocation0] sm:$0xf]
    %88 = vrot.lane.b32.xlu0 %v87, 121
    %v89 = vpop.permute.xlu0 %88
    %vm90 = vcmask 7168
    %s91 = scalar_lea.vmem %s1, 7
    %92 = vst.msk [vmem:[%s91] sm:$0x1] %vm90, %v89
    %s93 = scalar_lea.vmem %s1, 38
    %94 = vst.msk [vmem:[%s93] sm:$0x2] %vm90, %v89
    %s95 = scalar_lea.vmem %s1, 69
    %96 = vst.msk [vmem:[%s95] sm:$0x4] %vm90, %v89
    %s97 = scalar_lea.vmem %s1, 100
    %98 = vst.msk [vmem:[%s97] sm:$0x8] %vm90, %v89
    %v99 = vld [vmem:[#allocation0] sm:$0xf]
    %100 = vrot.lane.b32.xlu0 %v99, 120
    %v101 = vpop.permute.xlu0 %100
    %vm102 = vcmask 7168
    %s103 = scalar_lea.vmem %s1, 8
    %104 = vst.msk [vmem:[%s103] sm:$0x1] %vm102, %v101
    %s105 = scalar_lea.vmem %s1, 39
    %106 = vst.msk [vmem:[%s105] sm:$0x2] %vm102, %v101
    %s107 = scalar_lea.vmem %s1, 70
    %108 = vst.msk [vmem:[%s107] sm:$0x4] %vm102, %v101
    %s109 = scalar_lea.vmem %s1, 101
    %110 = vst.msk [vmem:[%s109] sm:$0x8] %vm102, %v101
    %v111 = vld [vmem:[#allocation0] sm:$0xf]
    %112 = vrot.lane.b32.xlu0 %v111, 119
    %v113 = vpop.permute.xlu0 %112
    %vm114 = vcmask 7168
    %s115 = scalar_lea.vmem %s1, 9
    %116 = vst.msk [vmem:[%s115] sm:$0x1] %vm114, %v113
    %s117 = scalar_lea.vmem %s1, 40
    %118 = vst.msk [vmem:[%s117] sm:$0x2] %vm114, %v113
    %s119 = scalar_lea.vmem %s1, 71
    %120 = vst.msk [vmem:[%s119] sm:$0x4] %vm114, %v113
    %s121 = scalar_lea.vmem %s1, 102
    %122 = vst.msk [vmem:[%s121] sm:$0x8] %vm114, %v113
    %v123 = vld [vmem:[#allocation0] sm:$0xf]
    %124 = vrot.lane.b32.xlu0 %v123, 118
    %v125 = vpop.permute.xlu0 %124
    %vm126 = vcmask 7168
    %s127 = scalar_lea.vmem %s1, 10
    %128 = vst.msk [vmem:[%s127] sm:$0x1] %vm126, %v125
    %s129 = scalar_lea.vmem %s1, 41
    %130 = vst.msk [vmem:[%s129] sm:$0x2] %vm126, %v125
    %s131 = scalar_lea.vmem %s1, 72
    %132 = vst.msk [vmem:[%s131] sm:$0x4] %vm126, %v125
    %s133 = scalar_lea.vmem %s1, 103
    %134 = vst.msk [vmem:[%s133] sm:$0x8] %vm126, %v125
    %v135 = vld [vmem:[#allocation0] sm:$0xf]
    %136 = vrot.lane.b32.xlu0 %v135, 117
    %v137 = vpop.permute.xlu0 %136
    %vm138 = vcmask 7168
    %s139 = scalar_lea.vmem %s1, 11
    %140 = vst.msk [vmem:[%s139] sm:$0x1] %vm138, %v137
    %s141 = scalar_lea.vmem %s1, 42
    %142 = vst.msk [vmem:[%s141] sm:$0x2] %vm138, %v137
    %s143 = scalar_lea.vmem %s1, 73
    %144 = vst.msk [vmem:[%s143] sm:$0x4] %vm138, %v137
    %s145 = scalar_lea.vmem %s1, 104
    %146 = vst.msk [vmem:[%s145] sm:$0x8] %vm138, %v137
    %v147 = vld [vmem:[#allocation0] sm:$0xf]
    %148 = vrot.lane.b32.xlu0 %v147, 116
    %v149 = vpop.permute.xlu0 %148
    %vm150 = vcmask 7168
    %s151 = scalar_lea.vmem %s1, 12
    %152 = vst.msk [vmem:[%s151] sm:$0x1] %vm150, %v149
    %s153 = scalar_lea.vmem %s1, 43
    %154 = vst.msk [vmem:[%s153] sm:$0x2] %vm150, %v149
    %s155 = scalar_lea.vmem %s1, 74
    %156 = vst.msk [vmem:[%s155] sm:$0x4] %vm150, %v149
    %s157 = scalar_lea.vmem %s1, 105
    %158 = vst.msk [vmem:[%s157] sm:$0x8] %vm150, %v149
    %v159 = vld [vmem:[#allocation0] sm:$0xf]
    %160 = vrot.lane.b32.xlu0 %v159, 115
    %v161 = vpop.permute.xlu0 %160
    %vm162 = vcmask 7168
    %s163 = scalar_lea.vmem %s1, 13
    %164 = vst.msk [vmem:[%s163] sm:$0x1] %vm162, %v161
    %s165 = scalar_lea.vmem %s1, 44
    %166 = vst.msk [vmem:[%s165] sm:$0x2] %vm162, %v161
    %s167 = scalar_lea.vmem %s1, 75
    %168 = vst.msk [vmem:[%s167] sm:$0x4] %vm162, %v161
    %s169 = scalar_lea.vmem %s1, 106
    %170 = vst.msk [vmem:[%s169] sm:$0x8] %vm162, %v161
    %v171 = vld [vmem:[#allocation0] sm:$0xf]
    %172 = vrot.lane.b32.xlu0 %v171, 114
    %v173 = vpop.permute.xlu0 %172
    %vm174 = vcmask 7168
    %s175 = scalar_lea.vmem %s1, 14
    %176 = vst.msk [vmem:[%s175] sm:$0x1] %vm174, %v173
    %s177 = scalar_lea.vmem %s1, 45
    %178 = vst.msk [vmem:[%s177] sm:$0x2] %vm174, %v173
    %s179 = scalar_lea.vmem %s1, 76
    %180 = vst.msk [vmem:[%s179] sm:$0x4] %vm174, %v173
    %s181 = scalar_lea.vmem %s1, 107
    %182 = vst.msk [vmem:[%s181] sm:$0x8] %vm174, %v173
    %v183 = vld [vmem:[#allocation0] sm:$0xf]
    %184 = vrot.lane.b32.xlu0 %v183, 113
    %v185 = vpop.permute.xlu0 %184
    %vm186 = vcmask 7168
    %s187 = scalar_lea.vmem %s1, 15
    %188 = vst.msk [vmem:[%s187] sm:$0x1] %vm186, %v185
    %s189 = scalar_lea.vmem %s1, 46
    %190 = vst.msk [vmem:[%s189] sm:$0x2] %vm186, %v185
    %s191 = scalar_lea.vmem %s1, 77
    %192 = vst.msk [vmem:[%s191] sm:$0x4] %vm186, %v185
    %s193 = scalar_lea.vmem %s1, 108
    %194 = vst.msk [vmem:[%s193] sm:$0x8] %vm186, %v185
    %v195 = vld [vmem:[#allocation0] sm:$0xf]
    %196 = vrot.lane.b32.xlu0 %v195, 112
    %v197 = vpop.permute.xlu0 %196
    %vm198 = vcmask 7168
    %s199 = scalar_lea.vmem %s1, 16
    %200 = vst.msk [vmem:[%s199] sm:$0x1] %vm198, %v197
    %s201 = scalar_lea.vmem %s1, 47
    %202 = vst.msk [vmem:[%s201] sm:$0x2] %vm198, %v197
    %s203 = scalar_lea.vmem %s1, 78
    %204 = vst.msk [vmem:[%s203] sm:$0x4] %vm198, %v197
    %s205 = scalar_lea.vmem %s1, 109
    %206 = vst.msk [vmem:[%s205] sm:$0x8] %vm198, %v197
    %v207 = vld [vmem:[#allocation0] sm:$0xf]
    %208 = vrot.lane.b32.xlu0 %v207, 111
    %v209 = vpop.permute.xlu0 %208
    %vm210 = vcmask 7168
    %s211 = scalar_lea.vmem %s1, 17
    %212 = vst.msk [vmem:[%s211] sm:$0x1] %vm210, %v209
    %s213 = scalar_lea.vmem %s1, 48
    %214 = vst.msk [vmem:[%s213] sm:$0x2] %vm210, %v209
    %s215 = scalar_lea.vmem %s1, 79
    %216 = vst.msk [vmem:[%s215] sm:$0x4] %vm210, %v209
    %s217 = scalar_lea.vmem %s1, 110
    %218 = vst.msk [vmem:[%s217] sm:$0x8] %vm210, %v209
    %v219 = vld [vmem:[#allocation0] sm:$0xf]
    %220 = vrot.lane.b32.xlu0 %v219, 110
    %v221 = vpop.permute.xlu0 %220
    %vm222 = vcmask 7168
    %s223 = scalar_lea.vmem %s1, 18
    %224 = vst.msk [vmem:[%s223] sm:$0x1] %vm222, %v221
    %s225 = scalar_lea.vmem %s1, 49
    %226 = vst.msk [vmem:[%s225] sm:$0x2] %vm222, %v221
    %s227 = scalar_lea.vmem %s1, 80
    %228 = vst.msk [vmem:[%s227] sm:$0x4] %vm222, %v221
    %s229 = scalar_lea.vmem %s1, 111
    %230 = vst.msk [vmem:[%s229] sm:$0x8] %vm222, %v221
    %v231 = vld [vmem:[#allocation0] sm:$0xf]
    %232 = vrot.lane.b32.xlu0 %v231, 109
    %v233 = vpop.permute.xlu0 %232
    %vm234 = vcmask 7168
    %s235 = scalar_lea.vmem %s1, 19
    %236 = vst.msk [vmem:[%s235] sm:$0x1] %vm234, %v233
    %s237 = scalar_lea.vmem %s1, 50
    %238 = vst.msk [vmem:[%s237] sm:$0x2] %vm234, %v233
    %s239 = scalar_lea.vmem %s1, 81
    %240 = vst.msk [vmem:[%s239] sm:$0x4] %vm234, %v233
    %s241 = scalar_lea.vmem %s1, 112
    %242 = vst.msk [vmem:[%s241] sm:$0x8] %vm234, %v233
    %v243 = vld [vmem:[#allocation0] sm:$0xf]
    %244 = vrot.lane.b32.xlu0 %v243, 108
    %v245 = vpop.permute.xlu0 %244
    %vm246 = vcmask 7168
    %s247 = scalar_lea.vmem %s1, 20
    %248 = vst.msk [vmem:[%s247] sm:$0x1] %vm246, %v245
    %s249 = scalar_lea.vmem %s1, 51
    %250 = vst.msk [vmem:[%s249] sm:$0x2] %vm246, %v245
    %s251 = scalar_lea.vmem %s1, 82
    %252 = vst.msk [vmem:[%s251] sm:$0x4] %vm246, %v245
    %s253 = scalar_lea.vmem %s1, 113
    %254 = vst.msk [vmem:[%s253] sm:$0x8] %vm246, %v245
    %v255 = vld [vmem:[#allocation0] sm:$0xf]
    %256 = vrot.lane.b32.xlu0 %v255, 107
    %v257 = vpop.permute.xlu0 %256
    %vm258 = vcmask 7168
    %s259 = scalar_lea.vmem %s1, 21
    %260 = vst.msk [vmem:[%s259] sm:$0x1] %vm258, %v257
    %s261 = scalar_lea.vmem %s1, 52
    %262 = vst.msk [vmem:[%s261] sm:$0x2] %vm258, %v257
    %s263 = scalar_lea.vmem %s1, 83
    %264 = vst.msk [vmem:[%s263] sm:$0x4] %vm258, %v257
    %s265 = scalar_lea.vmem %s1, 114
    %266 = vst.msk [vmem:[%s265] sm:$0x8] %vm258, %v257
    %v267 = vld [vmem:[#allocation0] sm:$0xf]
    %268 = vrot.lane.b32.xlu0 %v267, 106
    %v269 = vpop.permute.xlu0 %268
    %vm270 = vcmask 7168
    %s271 = scalar_lea.vmem %s1, 22
    %272 = vst.msk [vmem:[%s271] sm:$0x1] %vm270, %v269
    %s273 = scalar_lea.vmem %s1, 53
    %274 = vst.msk [vmem:[%s273] sm:$0x2] %vm270, %v269
    %s275 = scalar_lea.vmem %s1, 84
    %276 = vst.msk [vmem:[%s275] sm:$0x4] %vm270, %v269
    %s277 = scalar_lea.vmem %s1, 115
    %278 = vst.msk [vmem:[%s277] sm:$0x8] %vm270, %v269
    %v279 = vld [vmem:[#allocation0] sm:$0xf]
    %280 = vrot.lane.b32.xlu0 %v279, 105
    %v281 = vpop.permute.xlu0 %280
    %vm282 = vcmask 7168
    %s283 = scalar_lea.vmem %s1, 23
    %284 = vst.msk [vmem:[%s283] sm:$0x1] %vm282, %v281
    %s285 = scalar_lea.vmem %s1, 54
    %286 = vst.msk [vmem:[%s285] sm:$0x2] %vm282, %v281
    %s287 = scalar_lea.vmem %s1, 85
    %288 = vst.msk [vmem:[%s287] sm:$0x4] %vm282, %v281
    %s289 = scalar_lea.vmem %s1, 116
    %290 = vst.msk [vmem:[%s289] sm:$0x8] %vm282, %v281
    %v291 = vld [vmem:[#allocation0] sm:$0xf]
    %292 = vrot.lane.b32.xlu0 %v291, 104
    %v293 = vpop.permute.xlu0 %292
    %vm294 = vcmask 7168
    %s295 = scalar_lea.vmem %s1, 24
    %296 = vst.msk [vmem:[%s295] sm:$0x1] %vm294, %v293
    %s297 = scalar_lea.vmem %s1, 55
    %298 = vst.msk [vmem:[%s297] sm:$0x2] %vm294, %v293
    %s299 = scalar_lea.vmem %s1, 86
    %300 = vst.msk [vmem:[%s299] sm:$0x4] %vm294, %v293
    %s301 = scalar_lea.vmem %s1, 117
    %302 = vst.msk [vmem:[%s301] sm:$0x8] %vm294, %v293
    %v303 = vld [vmem:[#allocation0] sm:$0xf]
    %304 = vrot.lane.b32.xlu0 %v303, 103
    %v305 = vpop.permute.xlu0 %304
    %vm306 = vcmask 7168
    %s307 = scalar_lea.vmem %s1, 25
    %308 = vst.msk [vmem:[%s307] sm:$0x1] %vm306, %v305
    %s309 = scalar_lea.vmem %s1, 56
    %310 = vst.msk [vmem:[%s309] sm:$0x2] %vm306, %v305
    %s311 = scalar_lea.vmem %s1, 87
    %312 = vst.msk [vmem:[%s311] sm:$0x4] %vm306, %v305
    %s313 = scalar_lea.vmem %s1, 118
    %314 = vst.msk [vmem:[%s313] sm:$0x8] %vm306, %v305
    %v315 = vld [vmem:[#allocation0] sm:$0xf]
    %316 = vrot.lane.b32.xlu0 %v315, 102
    %v317 = vpop.permute.xlu0 %316
    %vm318 = vcmask 7168
    %s319 = scalar_lea.vmem %s1, 26
    %320 = vst.msk [vmem:[%s319] sm:$0x1] %vm318, %v317
    %s321 = scalar_lea.vmem %s1, 57
    %322 = vst.msk [vmem:[%s321] sm:$0x2] %vm318, %v317
    %s323 = scalar_lea.vmem %s1, 88
    %324 = vst.msk [vmem:[%s323] sm:$0x4] %vm318, %v317
    %s325 = scalar_lea.vmem %s1, 119
    %326 = vst.msk [vmem:[%s325] sm:$0x8] %vm318, %v317
    %v327 = vld [vmem:[#allocation0] sm:$0xf]
    %328 = vrot.lane.b32.xlu0 %v327, 101
    %v329 = vpop.permute.xlu0 %328
    %vm330 = vcmask 7168
    %s331 = scalar_lea.vmem %s1, 27
    %332 = vst.msk [vmem:[%s331] sm:$0x1] %vm330, %v329
    %s333 = scalar_lea.vmem %s1, 58
    %334 = vst.msk [vmem:[%s333] sm:$0x2] %vm330, %v329
    %s335 = scalar_lea.vmem %s1, 89
    %336 = vst.msk [vmem:[%s335] sm:$0x4] %vm330, %v329
    %s337 = scalar_lea.vmem %s1, 120
    %338 = vst.msk [vmem:[%s337] sm:$0x8] %vm330, %v329
    %v339 = vld [vmem:[#allocation0] sm:$0xf]
    %340 = vrot.lane.b32.xlu0 %v339, 100
    %v341 = vpop.permute.xlu0 %340
    %vm342 = vcmask 7168
    %s343 = scalar_lea.vmem %s1, 28
    %344 = vst.msk [vmem:[%s343] sm:$0x1] %vm342, %v341
    %s345 = scalar_lea.vmem %s1, 59
    %346 = vst.msk [vmem:[%s345] sm:$0x2] %vm342, %v341
    %s347 = scalar_lea.vmem %s1, 90
    %348 = vst.msk [vmem:[%s347] sm:$0x4] %vm342, %v341
    %s349 = scalar_lea.vmem %s1, 121
    %350 = vst.msk [vmem:[%s349] sm:$0x8] %vm342, %v341
    %v351 = vld [vmem:[#allocation0] sm:$0xf]
    %352 = vrot.lane.b32.xlu0 %v351, 99
    %v353 = vpop.permute.xlu0 %352
    %vm354 = vcmask 7168
    %s355 = scalar_lea.vmem %s1, 29
    %356 = vst.msk [vmem:[%s355] sm:$0x1] %vm354, %v353
    %s357 = scalar_lea.vmem %s1, 60
    %358 = vst.msk [vmem:[%s357] sm:$0x2] %vm354, %v353
    %s359 = scalar_lea.vmem %s1, 91
    %360 = vst.msk [vmem:[%s359] sm:$0x4] %vm354, %v353
    %s361 = scalar_lea.vmem %s1, 122
    %362 = vst.msk [vmem:[%s361] sm:$0x8] %vm354, %v353
    %v363 = vld [vmem:[#allocation0] sm:$0xf]
    %364 = vrot.lane.b32.xlu0 %v363, 98
    %v365 = vpop.permute.xlu0 %364
    %vm366 = vcmask 7168
    %s367 = scalar_lea.vmem %s1, 30
    %368 = vst.msk [vmem:[%s367] sm:$0x1] %vm366, %v365
    %s369 = scalar_lea.vmem %s1, 61
    %370 = vst.msk [vmem:[%s369] sm:$0x2] %vm366, %v365
    %s371 = scalar_lea.vmem %s1, 92
    %372 = vst.msk [vmem:[%s371] sm:$0x4] %vm366, %v365
    %s373 = scalar_lea.vmem %s1, 123
    %374 = vst.msk [vmem:[%s373] sm:$0x8] %vm366, %v365
    %v375 = vld [vmem:[#allocation0] sm:$0xf]
    %376 = vrot.lane.b32.xlu0 %v375, 97
    %v377 = vpop.permute.xlu0 %376
    %vm378 = vcmask 7168
    %s379 = scalar_lea.vmem %s1, 31
    %380 = vst.msk [vmem:[%s379] sm:$0x1] %vm378, %v377
    %s381 = scalar_lea.vmem %s1, 62
    %382 = vst.msk [vmem:[%s381] sm:$0x2] %vm378, %v377
    %s383 = scalar_lea.vmem %s1, 93
    %384 = vst.msk [vmem:[%s383] sm:$0x4] %vm378, %v377
    %s385 = scalar_lea.vmem %s1, 124
    %386 = vst.msk [vmem:[%s385] sm:$0x8] %vm378, %v377

// kernel: generator_forward.7
$region0: #{generator_forward.7}
  #allocation0 [shape = 'u32[]', space=smem, size = 0x4, offset = 0x4, fixed_abs, tag = 'smem constant byte address 0x4 - core index']
  #allocation1 [shape = 'u32[72,128]{1,0:T(1,128)}', space=vmem, size = 0x9000, scoped, tag = 'internal scratch']
  %s0 = inlined_call_operand.vmem [shape: bf16[2,64,150], index: 0, kind: input, shape index: {}]
  %s1 = inlined_call_operand.vmem [shape: bf16[128,576], index: 1, kind: input, shape index: {}]
  %s2 = inlined_call_operand.vmem [shape: f32[128,1], index: 2, kind: input, shape index: {}]
  %s3 = inlined_call_operand.vmem [shape: bf16[2,128,128], index: 3, kind: output, shape index: {}]
  %s4 = sld [smem:[#allocation0]]
  $region45: #{generator_forward.7} parent=0
    _
  %s6 = ssub.s32 1, %s4
  %s7 = scalar_select 0, %s6, %s4
  loop: start=0, step=1, limit=4
  $region2: #{generator_forward.7} parent=0 // loop_pre_header
    _
  $region3: #{generator_forward.7} parent=0 // loop_header
    %s9 = sphi 0, %s13
    %p10 = scmp.ge.s32.totalorder %s9, 4
    %s19 = sphi 0, %s21
    %s22 = sphi 0, %s19
    %s23 = sphi 0, %s22
    %s39 = sphi 0, %s23
    %s43 = sphi 0, %s43
    %s45 = sphi 0, %s43
    %s46 = sphi 0, %s45
    %s60 = sphi 0, %s46
    %s64 = sphi 0, %s64
    %s66 = sphi 0, %s64
    %s67 = sphi 0, %s66
    %s81 = sphi 0, %s67
    %s87 = sphi 0, %s89
    %s90 = sphi 0, %s87
    %s91 = sphi 0, %s90
    %s107 = sphi 0, %s91
  $region4: #{generator_forward.7} parent=0 // loop_header_branch
    %12 = sbr.rel (%p10) target = $region8
  $region5: #{generator_forward.7} parent=0 // loop_body
    %s14 = ssub.s32 %s9, 1
    %s15 = ssub.s32 %s9, 2
    %s16 = sadd.s32 %s9, 1
    %s17 = ssub.s32 %s9, %s16
    %p18 = scmp.eq.s32.totalorder %s17, 0
    %s20 = sadd.s32 %s19, 1
    %s21 = scalar_select %p18, %s19, %s20
    %p24 = pneg %p18
    %p25 = scmp.eq.s32.totalorder %s9, 1
    %p26 = por %p24, %p25
    %p27 = scmp.ne.s32.totalorder %s19, %s22
    %p28 = scmp.eq.s32.totalorder %s9, 0
    %p29 = por %p27, %p28
    %p30 = scmp.ne.s32.totalorder %s19, %s22
    %p31 = scmp.eq.s32.totalorder %s14, 1
    %p32 = por %p30, %p31
    %p33 = scmp.ne.s32.totalorder %s22, %s23
    %p34 = scmp.eq.s32.totalorder %s14, 0
    %p35 = por %p33, %p34
    %p36 = scmp.ne.s32.totalorder %s22, %s23
    %p37 = scmp.eq.s32.totalorder %s15, 1
    %p38 = por %p36, %p37
    %p40 = scmp.ne.s32.totalorder %s23, %s39
    %p41 = scmp.eq.s32.totalorder %s15, 0
    %p42 = por %p40, %p41
    %s44 = sadd.s32 %s43, 1
    %p47 = scmp.eq.s32.totalorder %s9, 1
    %p48 = scmp.ne.s32.totalorder %s43, %s45
    %p49 = scmp.eq.s32.totalorder %s9, 0
    %p50 = por %p48, %p49
    %p51 = scmp.ne.s32.totalorder %s43, %s45
    %p52 = scmp.eq.s32.totalorder %s14, 1
    %p53 = por %p51, %p52
    %p54 = scmp.ne.s32.totalorder %s45, %s46
    %p55 = scmp.eq.s32.totalorder %s14, 0
    %p56 = por %p54, %p55
    %p57 = scmp.ne.s32.totalorder %s45, %s46
    %p58 = scmp.eq.s32.totalorder %s15, 1
    %p59 = por %p57, %p58
    %p61 = scmp.ne.s32.totalorder %s46, %s60
    %p62 = scmp.eq.s32.totalorder %s15, 0
    %p63 = por %p61, %p62
    %s65 = sadd.s32 %s64, 1
    %p68 = scmp.eq.s32.totalorder %s9, 1
    %p69 = scmp.ne.s32.totalorder %s64, %s66
    %p70 = scmp.eq.s32.totalorder %s9, 0
    %p71 = por %p69, %p70
    %p72 = scmp.ne.s32.totalorder %s64, %s66
    %p73 = scmp.eq.s32.totalorder %s14, 1
    %p74 = por %p72, %p73
    %p75 = scmp.ne.s32.totalorder %s66, %s67
    %p76 = scmp.eq.s32.totalorder %s14, 0
    %p77 = por %p75, %p76
    %p78 = scmp.ne.s32.totalorder %s66, %s67
    %p79 = scmp.eq.s32.totalorder %s15, 1
    %p80 = por %p78, %p79
    %p82 = scmp.ne.s32.totalorder %s67, %s81
    %p83 = scmp.eq.s32.totalorder %s15, 0
    %p84 = por %p82, %p83
    %s85 = ssub.s32 %s9, %s16
    %p86 = scmp.eq.s32.totalorder %s85, 0
    %s88 = sadd.s32 %s87, 1
    %s89 = scalar_select %p86, %s87, %s88
    %p92 = pneg %p86
    %p93 = scmp.eq.s32.totalorder %s9, 1
    %p94 = por %p92, %p93
    %p95 = scmp.ne.s32.totalorder %s87, %s90
    %p96 = scmp.eq.s32.totalorder %s9, 0
    %p97 = por %p95, %p96
    %p98 = scmp.ne.s32.totalorder %s87, %s90
    %p99 = scmp.eq.s32.totalorder %s14, 1
    %p100 = por %p98, %p99
    %p101 = scmp.ne.s32.totalorder %s90, %s91
    %p102 = scmp.eq.s32.totalorder %s14, 0
    %p103 = por %p101, %p102
    %p104 = scmp.ne.s32.totalorder %s90, %s91
    %p105 = scmp.eq.s32.totalorder %s15, 1
    %p106 = por %p104, %p105
    %p108 = scmp.ne.s32.totalorder %s91, %s107
    %p109 = scmp.eq.s32.totalorder %s15, 0
    %p110 = por %p108, %p109
    %p111 = scmp.le.s32.totalorder 1, %s9
    %p112 = scmp.lt.s32.totalorder %s9, 3
    %p113 = pnand %p111, %p112
    %p114 = pneg %p113
    // Predicated region
    $region9: #{generator_forward.7} parent=5 // pred_check
      _
    $region10: #{generator_forward.7} parent=5 // pred_check_branch
      %116 = sbr.rel (%p113) target = $region12
    $region11: #{generator_forward.7} parent=5 // pred_region
      %s117 = ssub.s32 %s9, 1
      // Predicated region
      $region13: #{generator_forward.7} parent=11 // pred_check
        %p118 = pneg %p56
      $region14: #{generator_forward.7} parent=11 // pred_check_branch
        %120 = sbr.rel (%p118) target = $region16
      $region15: #{generator_forward.7} parent=11 // pred_region
        _
      $region16: #{generator_forward.7} parent=11 // pred_fallthru
        _
      // Predicated region
      $region17: #{generator_forward.7} parent=11 // pred_check
        %p121 = pneg %p77
      $region18: #{generator_forward.7} parent=11 // pred_check_branch
        %123 = sbr.rel (%p121) target = $region20
      $region19: #{generator_forward.7} parent=11 // pred_region
        _
      $region20: #{generator_forward.7} parent=11 // pred_fallthru
        _
    $region12: #{generator_forward.7} parent=5 // pred_fallthru
      _
    %p124 = scmp.lt.s32.totalorder %s9, 2
    // Predicated region
    $region21: #{generator_forward.7} parent=5 // pred_check
      %p125 = pneg %p124
    $region22: #{generator_forward.7} parent=5 // pred_check_branch
      %127 = sbr.rel (%p125) target = $region24
    $region23: #{generator_forward.7} parent=5 // pred_region
      // Predicated region
      $region25: #{generator_forward.7} parent=23 // pred_check
        %p128 = pneg %p29
      $region26: #{generator_forward.7} parent=23 // pred_check_branch
        %130 = sbr.rel (%p128) target = $region28
      $region27: #{generator_forward.7} parent=23 // pred_region
        %p131 = scmp.lt.s32.totalorder %s9, 1
        %s132 = scalar_select %p131, %s9, 1
        %s133 = smul.addr %s132, 16
        %s134 = smul.addr %s133, 4
        %s135 = scalar_lea.vmem %s0, %s134
      $region28: #{generator_forward.7} parent=23 // pred_fallthru
        _
    $region24: #{generator_forward.7} parent=5 // pred_fallthru
      _
    %p136 = scmp.le.s32.totalorder 1, %s9
    %p137 = scmp.lt.s32.totalorder %s9, 3
    %p138 = pnand %p136, %p137
    %p139 = pneg %p138
    // Predicated region
    $region29: #{generator_forward.7} parent=5 // pred_check
      _
    $region30: #{generator_forward.7} parent=5 // pred_check_branch
      %141 = sbr.rel (%p138) target = $region32
    $region31: #{generator_forward.7} parent=5 // pred_region
      %s142 = ssub.s32 %s9, 1
      %p143 = scmp.lt.s32.totalorder %s14, 1
      %s144 = scalar_select %p143, %s14, 1
      %s145 = smul.addr %s144, 16
      %s146 = smul.addr %s145, 4
      %s147 = scalar_lea.vmem %s0, %s146
      %p148 = pneg %p35
      %p149 = pneg %p32
      %p150 = pneg %p56
      %p151 = pneg %p53
      %p152 = pneg %p77
      %p153 = pneg %p74
      %p154 = pneg %p103
      %p155 = pneg %p100
      %p156 = scmp.lt.s32.totalorder %s14, 1
      %s157 = scalar_select %p156, %s14, 1
      %s158 = smul.addr %s157, 16
      %s159 = smul.addr %s158, 4
      %s160 = scalar_lea.vmem %s3, %s159
      %p161 = scmp.lt.s32.totalorder %s14, 1
      %s162 = scalar_select %p161, %s14, 1
      %s163 = smul.addr %s162, 16
      %s164 = smul.addr %s163, 4
      %s165 = scalar_lea.vmem %s0, %s164
      %p166 = scmp.lt.s32.totalorder %s14, 1
      %s167 = scalar_select %p166, %s14, 1
      %s168 = smul.addr %s167, 16
      %s169 = smul.addr %s168, 4
      %s170 = scalar_lea.vmem %s3, %s169
      %v172 = vld [vmem:[%s165] sm:$0xff]
      %v173 = vld [vmem:[%s165 + $0x8] sm:$0xff]
      %v174 = vld [vmem:[%s165 + $0x10] sm:$0xff]
      %v175 = vld [vmem:[%s165 + $0x18] sm:$0xff]
      %v176 = vld [vmem:[%s165 + $0x20] sm:$0xff]
      %v177 = vld [vmem:[%s165 + $0x28] sm:$0xff]
      %v178 = vld [vmem:[%s165 + $0x30] sm:$0xff]
      %v179 = vld [vmem:[%s165 + $0x38] sm:$0xff]
      %v188 = vunpack.c.l.b16 %v172
      %v189 = vunpack.c.l.b16 %v173
      %v190 = vunpack.c.l.b16 %v174
      %v191 = vunpack.c.l.b16 %v175
      %v192 = vunpack.c.l.b16 %v176
      %v193 = vunpack.c.l.b16 %v177
      %v194 = vunpack.c.l.b16 %v178
      %v195 = vunpack.c.l.b16 %v179
      %v196 = vpack.c.b16 %v189, %v188
      %v197 = vpack.c.b16 %v191, %v190
      %v198 = vpack.c.b16 %v193, %v192
      %v199 = vpack.c.b16 %v195, %v194
      %v204 = vunpack.c.h.b16 %v172
      %v205 = vunpack.c.h.b16 %v173
      %v206 = vunpack.c.h.b16 %v174
      %v207 = vunpack.c.h.b16 %v175
      %v208 = vunpack.c.h.b16 %v176
      %v209 = vunpack.c.h.b16 %v177
      %v210 = vunpack.c.h.b16 %v178
      %v211 = vunpack.c.h.b16 %v179
      %v212 = vpack.c.b16 %v205, %v204
      %v213 = vpack.c.b16 %v207, %v206
      %v214 = vpack.c.b16 %v209, %v208
      %v215 = vpack.c.b16 %v211, %v210
      %216 = vrot.lane.b32.xlu0 %v196, 127
      %v217 = vpop.permute.xlu0 %216
      %218 = vrot.lane.b32.xlu0 %v212, 127
      %v219 = vpop.permute.xlu0 %218
      %220 = vrot.lane.b32.xlu0 %v197, 127
      %v221 = vpop.permute.xlu0 %220
      %222 = vrot.lane.b32.xlu0 %v213, 127
      %v223 = vpop.permute.xlu0 %222
      %224 = vrot.lane.b32.xlu0 %v198, 127
      %v225 = vpop.permute.xlu0 %224
      %226 = vrot.lane.b32.xlu0 %v214, 127
      %v227 = vpop.permute.xlu0 %226
      %228 = vrot.lane.b32.xlu0 %v199, 127
      %v229 = vpop.permute.xlu0 %228
      %230 = vrot.lane.b32.xlu0 %v215, 127
      %v231 = vpop.permute.xlu0 %230
      %vm232 = vcmask 1039360
      %v233 = vsel %vm232, %v217, %v219
      %v234 = vsel %vm232, %v221, %v223
      %v235 = vsel %vm232, %v225, %v227
      %v236 = vsel %vm232, %v229, %v231
      %241 = vrot.lane.b32.xlu0 %v196, 126
      %v242 = vpop.permute.xlu0 %241
      %243 = vrot.lane.b32.xlu0 %v212, 126
      %v244 = vpop.permute.xlu0 %243
      %245 = vrot.lane.b32.xlu0 %v197, 126
      %v246 = vpop.permute.xlu0 %245
      %247 = vrot.lane.b32.xlu0 %v213, 126
      %v248 = vpop.permute.xlu0 %247
      %249 = vrot.lane.b32.xlu0 %v198, 126
      %v250 = vpop.permute.xlu0 %249
      %251 = vrot.lane.b32.xlu0 %v214, 126
      %v252 = vpop.permute.xlu0 %251
      %253 = vrot.lane.b32.xlu0 %v199, 126
      %v254 = vpop.permute.xlu0 %253
      %255 = vrot.lane.b32.xlu0 %v215, 126
      %v256 = vpop.permute.xlu0 %255
      %vm257 = vcmask 1031168
      %v258 = vsel %vm257, %v242, %v244
      %v259 = vsel %vm257, %v246, %v248
      %v260 = vsel %vm257, %v250, %v252
      %v261 = vsel %vm257, %v254, %v256
      %266 = vrot.lane.b32.xlu0 %v196, 118
      %v267 = vpop.permute.xlu0 %266
      %268 = vrot.lane.b32.xlu0 %v212, 118
      %v269 = vpop.permute.xlu0 %268
      %270 = vrot.lane.b32.xlu0 %v197, 118
      %v271 = vpop.permute.xlu0 %270
      %272 = vrot.lane.b32.xlu0 %v213, 118
      %v273 = vpop.permute.xlu0 %272
      %274 = vrot.lane.b32.xlu0 %v198, 118
      %v275 = vpop.permute.xlu0 %274
      %276 = vrot.lane.b32.xlu0 %v214, 118
      %v277 = vpop.permute.xlu0 %276
      %278 = vrot.lane.b32.xlu0 %v199, 118
      %v279 = vpop.permute.xlu0 %278
      %280 = vrot.lane.b32.xlu0 %v215, 118
      %v281 = vpop.permute.xlu0 %280
      %vm282 = vcmask 965632
      %v283 = vsel %vm282, %v267, %v269
      %v284 = vsel %vm282, %v271, %v273
      %v285 = vsel %vm282, %v275, %v277
      %v286 = vsel %vm282, %v279, %v281
      %291 = vrot.lane.b32.xlu0 %v196, 117
      %v292 = vpop.permute.xlu0 %291
      %293 = vrot.lane.b32.xlu0 %v212, 117
      %v294 = vpop.permute.xlu0 %293
      %295 = vrot.lane.b32.xlu0 %v197, 117
      %v296 = vpop.permute.xlu0 %295
      %297 = vrot.lane.b32.xlu0 %v213, 117
      %v298 = vpop.permute.xlu0 %297
      %299 = vrot.lane.b32.xlu0 %v198, 117
      %v300 = vpop.permute.xlu0 %299
      %301 = vrot.lane.b32.xlu0 %v214, 117
      %v302 = vpop.permute.xlu0 %301
      %303 = vrot.lane.b32.xlu0 %v199, 117
      %v304 = vpop.permute.xlu0 %303
      %305 = vrot.lane.b32.xlu0 %v215, 117
      %v306 = vpop.permute.xlu0 %305
      %vm307 = vcmask 957440
      %v308 = vsel %vm307, %v292, %v294
      %v309 = vsel %vm307, %v296, %v298
      %v310 = vsel %vm307, %v300, %v302
      %v311 = vsel %vm307, %v304, %v306
      %316 = vrot.lane.b32.xlu0 %v196, 116
      %v317 = vpop.permute.xlu0 %316
      %318 = vrot.lane.b32.xlu0 %v212, 116
      %v319 = vpop.permute.xlu0 %318
      %320 = vrot.lane.b32.xlu0 %v197, 116
      %v321 = vpop.permute.xlu0 %320
      %322 = vrot.lane.b32.xlu0 %v213, 116
      %v323 = vpop.permute.xlu0 %322
      %324 = vrot.lane.b32.xlu0 %v198, 116
      %v325 = vpop.permute.xlu0 %324
      %326 = vrot.lane.b32.xlu0 %v214, 116
      %v327 = vpop.permute.xlu0 %326
      %328 = vrot.lane.b32.xlu0 %v199, 116
      %v329 = vpop.permute.xlu0 %328
      %330 = vrot.lane.b32.xlu0 %v215, 116
      %v331 = vpop.permute.xlu0 %330
      %vm332 = vcmask 949248
      %v333 = vsel %vm332, %v317, %v319
      %v334 = vsel %vm332, %v321, %v323
      %v335 = vsel %vm332, %v325, %v327
      %v336 = vsel %vm332, %v329, %v331
      %341 = vrot.lane.b32.xlu0 %v196, 108
      %v342 = vpop.permute.xlu0 %341
      %343 = vrot.lane.b32.xlu0 %v212, 108
      %v344 = vpop.permute.xlu0 %343
      %345 = vrot.lane.b32.xlu0 %v197, 108
      %v346 = vpop.permute.xlu0 %345
      %347 = vrot.lane.b32.xlu0 %v213, 108
      %v348 = vpop.permute.xlu0 %347
      %349 = vrot.lane.b32.xlu0 %v198, 108
      %v350 = vpop.permute.xlu0 %349
      %351 = vrot.lane.b32.xlu0 %v214, 108
      %v352 = vpop.permute.xlu0 %351
      %353 = vrot.lane.b32.xlu0 %v199, 108
      %v354 = vpop.permute.xlu0 %353
      %355 = vrot.lane.b32.xlu0 %v215, 108
      %v356 = vpop.permute.xlu0 %355
      %vm357 = vcmask 883712
      %v358 = vsel %vm357, %v342, %v344
      %v359 = vsel %vm357, %v346, %v348
      %v360 = vsel %vm357, %v350, %v352
      %v361 = vsel %vm357, %v354, %v356
      %366 = vrot.lane.b32.xlu0 %v196, 107
      %v367 = vpop.permute.xlu0 %366
      %368 = vrot.lane.b32.xlu0 %v212, 107
      %v369 = vpop.permute.xlu0 %368
      %370 = vrot.lane.b32.xlu0 %v197, 107
      %v371 = vpop.permute.xlu0 %370
      %372 = vrot.lane.b32.xlu0 %v213, 107
      %v373 = vpop.permute.xlu0 %372
      %374 = vrot.lane.b32.xlu0 %v198, 107
      %v375 = vpop.permute.xlu0 %374
      %376 = vrot.lane.b32.xlu0 %v214, 107
      %v377 = vpop.permute.xlu0 %376
      %378 = vrot.lane.b32.xlu0 %v199, 107
      %v379 = vpop.permute.xlu0 %378
      %380 = vrot.lane.b32.xlu0 %v215, 107
      %v381 = vpop.permute.xlu0 %380
      %vm382 = vcmask 875520
      %v383 = vsel %vm382, %v367, %v369
      %v384 = vsel %vm382, %v371, %v373
      %v385 = vsel %vm382, %v375, %v377
      %v386 = vsel %vm382, %v379, %v381
      %391 = vrot.lane.b32.xlu0 %v196, 106
      %v392 = vpop.permute.xlu0 %391
      %393 = vrot.lane.b32.xlu0 %v212, 106
      %v394 = vpop.permute.xlu0 %393
      %395 = vrot.lane.b32.xlu0 %v197, 106
      %v396 = vpop.permute.xlu0 %395
      %397 = vrot.lane.b32.xlu0 %v213, 106
      %v398 = vpop.permute.xlu0 %397
      %399 = vrot.lane.b32.xlu0 %v198, 106
      %v400 = vpop.permute.xlu0 %399
      %401 = vrot.lane.b32.xlu0 %v214, 106
      %v402 = vpop.permute.xlu0 %401
      %403 = vrot.lane.b32.xlu0 %v199, 106
      %v404 = vpop.permute.xlu0 %403
      %405 = vrot.lane.b32.xlu0 %v215, 106
      %v406 = vpop.permute.xlu0 %405
      %vm407 = vcmask 867328
      %v408 = vsel %vm407, %v392, %v394
      %v409 = vsel %vm407, %v396, %v398
      %v410 = vsel %vm407, %v400, %v402
      %v411 = vsel %vm407, %v404, %v406
      %v416 = vld [vmem:[%s1] sm:$0xff]
      %v417 = vld [vmem:[%s1 + $0x8] sm:$0xff]
      %v418 = vld [vmem:[%s1 + $0x10] sm:$0xf]
      %v419 = vld [vmem:[%s1 + $0x14] sm:$0xff]
      %v420 = vld [vmem:[%s1 + $0x1c] sm:$0xff]
      %v421 = vld [vmem:[%s1 + $0x24] sm:$0xf]
      %v422 = vld [vmem:[%s1 + $0x28] sm:$0xff]
      %v423 = vld [vmem:[%s1 + $0x30] sm:$0xff]
      %v424 = vld [vmem:[%s1 + $0x38] sm:$0xf]
      %v425 = vld [vmem:[%s1 + $0x3c] sm:$0xff]
      %v426 = vld [vmem:[%s1 + $0x44] sm:$0xff]
      %v427 = vld [vmem:[%s1 + $0x4c] sm:$0xf]
      %v428 = vld [vmem:[%s1 + $0x50] sm:$0xff]
      %v429 = vld [vmem:[%s1 + $0x58] sm:$0xff]
      %v430 = vld [vmem:[%s1 + $0x60] sm:$0xf]
      %v431 = vld [vmem:[%s1 + $0x64] sm:$0xff]
      %v432 = vld [vmem:[%s1 + $0x6c] sm:$0xff]
      %v433 = vld [vmem:[%s1 + $0x74] sm:$0xf]
      %v434 = vld [vmem:[%s1 + $0x78] sm:$0xff]
      %v435 = vld [vmem:[%s1 + $0x80] sm:$0xff]
      %v436 = vld [vmem:[%s1 + $0x88] sm:$0xf]
      %v437 = vld [vmem:[%s1 + $0x8c] sm:$0xff]
      %v438 = vld [vmem:[%s1 + $0x94] sm:$0xff]
      %v439 = vld [vmem:[%s1 + $0x9c] sm:$0xf]
      %v440 = vld [vmem:[%s1 + $0xa0] sm:$0xff]
      %v441 = vld [vmem:[%s1 + $0xa8] sm:$0xff]
      %v442 = vld [vmem:[%s1 + $0xb0] sm:$0xf]
      %v443 = vld [vmem:[%s1 + $0xb4] sm:$0xff]
      %v444 = vld [vmem:[%s1 + $0xbc] sm:$0xff]
      %v445 = vld [vmem:[%s1 + $0xc4] sm:$0xf]
      %v446 = vld [vmem:[%s1 + $0xc8] sm:$0xff]
      %v447 = vld [vmem:[%s1 + $0xd0] sm:$0xff]
      %v448 = vld [vmem:[%s1 + $0xd8] sm:$0xf]
      %v449 = vld [vmem:[%s1 + $0xdc] sm:$0xff]
      %v450 = vld [vmem:[%s1 + $0xe4] sm:$0xff]
      %v451 = vld [vmem:[%s1 + $0xec] sm:$0xf]
      %v452 = vld [vmem:[%s1 + $0xf0] sm:$0xff]
      %v453 = vld [vmem:[%s1 + $0xf8] sm:$0xff]
      %v454 = vld [vmem:[%s1 + $0x100] sm:$0xf]
      %v455 = vld [vmem:[%s1 + $0x104] sm:$0xff]
      %v456 = vld [vmem:[%s1 + $0x10c] sm:$0xff]
      %v457 = vld [vmem:[%s1 + $0x114] sm:$0xf]
      %v458 = vld [vmem:[%s1 + $0x118] sm:$0xff]
      %v459 = vld [vmem:[%s1 + $0x120] sm:$0xff]
      %v460 = vld [vmem:[%s1 + $0x128] sm:$0xf]
      %v461 = vld [vmem:[%s1 + $0x12c] sm:$0xff]
      %v462 = vld [vmem:[%s1 + $0x134] sm:$0xff]
      %v463 = vld [vmem:[%s1 + $0x13c] sm:$0xf]
      %v464 = vld [vmem:[%s2] sm:$0xff]
      %v465 = vld [vmem:[%s2 + $0x8] sm:$0xff]
      %v466 = vld [vmem:[%s2 + $0x10] sm:$0xff]
      %v467 = vld [vmem:[%s2 + $0x18] sm:$0xff]
      %v468 = vld [vmem:[%s2 + $0x20] sm:$0xff]
      %v469 = vld [vmem:[%s2 + $0x28] sm:$0xff]
      %v470 = vld [vmem:[%s2 + $0x30] sm:$0xff]
      %v471 = vld [vmem:[%s2 + $0x38] sm:$0xff]
      %v472 = vld [vmem:[%s2 + $0x40] sm:$0xff]
      %v473 = vld [vmem:[%s2 + $0x48] sm:$0xff]
      %v474 = vld [vmem:[%s2 + $0x50] sm:$0xff]
      %v475 = vld [vmem:[%s2 + $0x58] sm:$0xff]
      %v476 = vld [vmem:[%s2 + $0x60] sm:$0xff]
      %v477 = vld [vmem:[%s2 + $0x68] sm:$0xff]
      %v478 = vld [vmem:[%s2 + $0x70] sm:$0xff]
      %v479 = vld [vmem:[%s2 + $0x78] sm:$0xff]
      %481 = vset.pattern.permute.xlu0 0
      %482 = vperm.xlu0 %481, %v464
      %v483 = vpop.permute.xlu0 %482
      %486 = vset.pattern.permute.xlu0 0
      %487 = vperm.xlu0 %486, %v465
      %v488 = vpop.permute.xlu0 %487
      %491 = vset.pattern.permute.xlu0 0
      %492 = vperm.xlu0 %491, %v466
      %v493 = vpop.permute.xlu0 %492
      %496 = vset.pattern.permute.xlu0 0
      %497 = vperm.xlu0 %496, %v467
      %v498 = vpop.permute.xlu0 %497
      %501 = vset.pattern.permute.xlu0 0
      %502 = vperm.xlu0 %501, %v468
      %v503 = vpop.permute.xlu0 %502
      %506 = vset.pattern.permute.xlu0 0
      %507 = vperm.xlu0 %506, %v469
      %v508 = vpop.permute.xlu0 %507
      %511 = vset.pattern.permute.xlu0 0
      %512 = vperm.xlu0 %511, %v470
      %v513 = vpop.permute.xlu0 %512
      %516 = vset.pattern.permute.xlu0 0
      %517 = vperm.xlu0 %516, %v471
      %v518 = vpop.permute.xlu0 %517
      %521 = vset.pattern.permute.xlu0 0
      %522 = vperm.xlu0 %521, %v472
      %v523 = vpop.permute.xlu0 %522
      %526 = vset.pattern.permute.xlu0 0
      %527 = vperm.xlu0 %526, %v473
      %v528 = vpop.permute.xlu0 %527
      %531 = vset.pattern.permute.xlu0 0
      %532 = vperm.xlu0 %531, %v474
      %v533 = vpop.permute.xlu0 %532
      %536 = vset.pattern.permute.xlu0 0
      %537 = vperm.xlu0 %536, %v475
      %v538 = vpop.permute.xlu0 %537
      %541 = vset.pattern.permute.xlu0 0
      %542 = vperm.xlu0 %541, %v476
      %v543 = vpop.permute.xlu0 %542
      %546 = vset.pattern.permute.xlu0 0
      %547 = vperm.xlu0 %546, %v477
      %v548 = vpop.permute.xlu0 %547
      %551 = vset.pattern.permute.xlu0 0
      %552 = vperm.xlu0 %551, %v478
      %v553 = vpop.permute.xlu0 %552
      %556 = vset.pattern.permute.xlu0 0
      %557 = vperm.xlu0 %556, %v479
      %v558 = vpop.permute.xlu0 %557
      %v608 = vunpack.c.l.b16 %v416
      %v609 = vunpack.c.h.b16 %v416
      %v610 = vunpack.c.l.b16 %v417
      %v611 = vunpack.c.h.b16 %v417
      %v612 = vunpack.c.l.b16 %v418
      %v613 = vunpack.c.l.b16 %v419
      %v614 = vunpack.c.h.b16 %v419
      %v615 = vunpack.c.l.b16 %v420
      %v616 = vunpack.c.h.b16 %v420
      %v617 = vunpack.c.l.b16 %v421
      %v618 = vunpack.c.l.b16 %v422
      %v619 = vunpack.c.h.b16 %v422
      %v620 = vunpack.c.l.b16 %v423
      %v621 = vunpack.c.h.b16 %v423
      %v622 = vunpack.c.l.b16 %v424
      %v623 = vunpack.c.l.b16 %v425
      %v624 = vunpack.c.h.b16 %v425
      %v625 = vunpack.c.l.b16 %v426
      %v626 = vunpack.c.h.b16 %v426
      %v627 = vunpack.c.l.b16 %v427
      %v628 = vunpack.c.l.b16 %v428
      %v629 = vunpack.c.h.b16 %v428
      %v630 = vunpack.c.l.b16 %v429
      %v631 = vunpack.c.h.b16 %v429
      %v632 = vunpack.c.l.b16 %v430
      %v633 = vunpack.c.l.b16 %v431
      %v634 = vunpack.c.h.b16 %v431
      %v635 = vunpack.c.l.b16 %v432
      %v636 = vunpack.c.h.b16 %v432
      %v637 = vunpack.c.l.b16 %v433
      %v638 = vunpack.c.l.b16 %v434
      %v639 = vunpack.c.h.b16 %v434
      %v640 = vunpack.c.l.b16 %v435
      %v641 = vunpack.c.h.b16 %v435
      %v642 = vunpack.c.l.b16 %v436
      %v643 = vunpack.c.l.b16 %v437
      %v644 = vunpack.c.h.b16 %v437
      %v645 = vunpack.c.l.b16 %v438
      %v646 = vunpack.c.h.b16 %v438
      %v647 = vunpack.c.l.b16 %v439
      %v648 = vunpack.c.l.b16 %v440
      %v649 = vunpack.c.h.b16 %v440
      %v650 = vunpack.c.l.b16 %v441
      %v651 = vunpack.c.h.b16 %v441
      %v652 = vunpack.c.l.b16 %v442
      %v653 = vunpack.c.l.b16 %v443
      %v654 = vunpack.c.h.b16 %v443
      %v655 = vunpack.c.l.b16 %v444
      %v656 = vunpack.c.h.b16 %v444
      %v657 = vunpack.c.l.b16 %v445
      %v658 = vunpack.c.l.b16 %v446
      %v659 = vunpack.c.h.b16 %v446
      %v660 = vunpack.c.l.b16 %v447
      %v661 = vunpack.c.h.b16 %v447
      %v662 = vunpack.c.l.b16 %v448
      %v663 = vunpack.c.l.b16 %v449
      %v664 = vunpack.c.h.b16 %v449
      %v665 = vunpack.c.l.b16 %v450
      %v666 = vunpack.c.h.b16 %v450
      %v667 = vunpack.c.l.b16 %v451
      %v668 = vunpack.c.l.b16 %v452
      %v669 = vunpack.c.h.b16 %v452
      %v670 = vunpack.c.l.b16 %v453
      %v671 = vunpack.c.h.b16 %v453
      %v672 = vunpack.c.l.b16 %v454
      %v673 = vunpack.c.l.b16 %v455
      %v674 = vunpack.c.h.b16 %v455
      %v675 = vunpack.c.l.b16 %v456
      %v676 = vunpack.c.h.b16 %v456
      %v677 = vunpack.c.l.b16 %v457
      %v678 = vunpack.c.l.b16 %v458
      %v679 = vunpack.c.h.b16 %v458
      %v680 = vunpack.c.l.b16 %v459
      %v681 = vunpack.c.h.b16 %v459
      %v682 = vunpack.c.l.b16 %v460
      %v683 = vunpack.c.l.b16 %v461
      %v684 = vunpack.c.h.b16 %v461
      %v685 = vunpack.c.l.b16 %v462
      %v686 = vunpack.c.h.b16 %v462
      %v687 = vunpack.c.l.b16 %v463
      %v688 = vpack.c.b16 %v613, %v608
      %v689 = vpack.c.b16 %v614, %v609
      %v690 = vpack.c.b16 %v615, %v610
      %v691 = vpack.c.b16 %v616, %v611
      %v692 = vpack.c.b16 %v617, %v612
      %v693 = vpack.c.b16 %v623, %v618
      %v694 = vpack.c.b16 %v624, %v619
      %v695 = vpack.c.b16 %v625, %v620
      %v696 = vpack.c.b16 %v626, %v621
      %v697 = vpack.c.b16 %v627, %v622
      %v698 = vpack.c.b16 %v633, %v628
      %v699 = vpack.c.b16 %v634, %v629
      %v700 = vpack.c.b16 %v635, %v630
      %v701 = vpack.c.b16 %v636, %v631
      %v702 = vpack.c.b16 %v637, %v632
      %v703 = vpack.c.b16 %v643, %v638
      %v704 = vpack.c.b16 %v644, %v639
      %v705 = vpack.c.b16 %v645, %v640
      %v706 = vpack.c.b16 %v646, %v641
      %v707 = vpack.c.b16 %v647, %v642
      %v708 = vpack.c.b16 %v653, %v648
      %v709 = vpack.c.b16 %v654, %v649
      %v710 = vpack.c.b16 %v655, %v650
      %v711 = vpack.c.b16 %v656, %v651
      %v712 = vpack.c.b16 %v657, %v652
      %v713 = vpack.c.b16 %v663, %v658
      %v714 = vpack.c.b16 %v664, %v659
      %v715 = vpack.c.b16 %v665, %v660
      %v716 = vpack.c.b16 %v666, %v661
      %v717 = vpack.c.b16 %v667, %v662
      %v718 = vpack.c.b16 %v673, %v668
      %v719 = vpack.c.b16 %v674, %v669
      %v720 = vpack.c.b16 %v675, %v670
      %v721 = vpack.c.b16 %v676, %v671
      %v722 = vpack.c.b16 %v677, %v672
      %v723 = vpack.c.b16 %v683, %v678
      %v724 = vpack.c.b16 %v684, %v679
      %v725 = vpack.c.b16 %v685, %v680
      %v726 = vpack.c.b16 %v686, %v681
      %v727 = vpack.c.b16 %v687, %v682
      %vm760 = vcmask 523264
      %v762 = vsel %vm760, %v692, 0
      %v765 = vsel %vm760, %v697, 0
      %v768 = vsel %vm760, %v702, 0
      %v771 = vsel %vm760, %v707, 0
      %v774 = vsel %vm760, %v712, 0
      %v777 = vsel %vm760, %v717, 0
      %v780 = vsel %vm760, %v722, 0
      %v783 = vsel %vm760, %v727, 0
      %785 = vmatpush.bf16.msra.mxu0 %v236
      %786 = vmatpush.bf16.msra.mxu0 %v235
      %787 = vmatpush.bf16.msra.mxu0 %v234
      %788 = vmatpush.bf16.msra.mxu0 %v233
      %789 = vmatpush.bf16.msra.mxu0 %v199
      %790 = vmatpush.bf16.msra.mxu0 %v198
      %791 = vmatpush.bf16.msra.mxu0 %v197
      %792 = vmatpush.bf16.msra.mxu0 %v196
      %793 = vmatmul.bf16.gmra.mxu0 %v688
      %v794 = vpop.f32.mrf.mxu0
      %v795 = vadd.f32 %v483, %v794
      %v796 = vpop.f32.mrf.mxu0
      %v797 = vadd.f32 %v488, %v796
      %798 = vmatmul.bf16.gmra.mxu0 %v693
      %v799 = vpop.f32.mrf.mxu0
      %v800 = vadd.f32 %v493, %v799
      %v801 = vpop.f32.mrf.mxu0
      %v802 = vadd.f32 %v498, %v801
      %803 = vmatmul.bf16.gmra.mxu0 %v698
      %v804 = vpop.f32.mrf.mxu0
      %v805 = vadd.f32 %v503, %v804
      %v806 = vpop.f32.mrf.mxu0
      %v807 = vadd.f32 %v508, %v806
      %808 = vmatmul.bf16.gmra.mxu0 %v703
      %v809 = vpop.f32.mrf.mxu0
      %v810 = vadd.f32 %v513, %v809
      %v811 = vpop.f32.mrf.mxu0
      %v812 = vadd.f32 %v518, %v811
      %813 = vmatmul.bf16.gmra.mxu0 %v708
      %v814 = vpop.f32.mrf.mxu0
      %v815 = vadd.f32 %v523, %v814
      %v816 = vpop.f32.mrf.mxu0
      %v817 = vadd.f32 %v528, %v816
      %818 = vmatmul.bf16.gmra.mxu0 %v713
      %v819 = vpop.f32.mrf.mxu0
      %v820 = vadd.f32 %v533, %v819
      %v821 = vpop.f32.mrf.mxu0
      %v822 = vadd.f32 %v538, %v821
      %823 = vmatmul.bf16.gmra.mxu0 %v718
      %v824 = vpop.f32.mrf.mxu0
      %v825 = vadd.f32 %v543, %v824
      %v826 = vpop.f32.mrf.mxu0
      %v827 = vadd.f32 %v548, %v826
      %828 = vmatmul.bf16.gmra.mxu0 %v723
      %v829 = vpop.f32.mrf.mxu0
      %v830 = vadd.f32 %v553, %v829
      %v831 = vpop.f32.mrf.mxu0
      %v832 = vadd.f32 %v558, %v831
      %833 = vdwg.mxu0
      %834 = vmatpush.bf16.msra.mxu0 %v286
      %835 = vmatpush.bf16.msra.mxu0 %v285
      %836 = vmatpush.bf16.msra.mxu0 %v284
      %837 = vmatpush.bf16.msra.mxu0 %v283
      %838 = vmatpush.bf16.msra.mxu0 %v261
      %839 = vmatpush.bf16.msra.mxu0 %v260
      %840 = vmatpush.bf16.msra.mxu0 %v259
      %841 = vmatpush.bf16.msra.mxu0 %v258
      %842 = vmatmul.bf16.gmra.mxu0 %v689
      %v843 = vpop.f32.mrf.mxu0
      %v844 = vadd.f32 %v795, %v843
      %v845 = vpop.f32.mrf.mxu0
      %v846 = vadd.f32 %v797, %v845
      %847 = vmatmul.bf16.gmra.mxu0 %v694
      %v848 = vpop.f32.mrf.mxu0
      %v849 = vadd.f32 %v800, %v848
      %v850 = vpop.f32.mrf.mxu0
      %v851 = vadd.f32 %v802, %v850
      %852 = vmatmul.bf16.gmra.mxu0 %v699
      %v853 = vpop.f32.mrf.mxu0
      %v854 = vadd.f32 %v805, %v853
      %v855 = vpop.f32.mrf.mxu0
      %v856 = vadd.f32 %v807, %v855
      %857 = vmatmul.bf16.gmra.mxu0 %v704
      %v858 = vpop.f32.mrf.mxu0
      %v859 = vadd.f32 %v810, %v858
      %v860 = vpop.f32.mrf.mxu0
      %v861 = vadd.f32 %v812, %v860
      %862 = vmatmul.bf16.gmra.mxu0 %v709
      %v863 = vpop.f32.mrf.mxu0
      %v864 = vadd.f32 %v815, %v863
      %v865 = vpop.f32.mrf.mxu0
      %v866 = vadd.f32 %v817, %v865
      %867 = vmatmul.bf16.gmra.mxu0 %v714
      %v868 = vpop.f32.mrf.mxu0
      %v869 = vadd.f32 %v820, %v868
      %v870 = vpop.f32.mrf.mxu0
      %v871 = vadd.f32 %v822, %v870
      %872 = vmatmul.bf16.gmra.mxu0 %v719
      %v873 = vpop.f32.mrf.mxu0
      %v874 = vadd.f32 %v825, %v873
      %v875 = vpop.f32.mrf.mxu0
      %v876 = vadd.f32 %v827, %v875
      %877 = vmatmul.bf16.gmra.mxu0 %v724
      %v878 = vpop.f32.mrf.mxu0
      %v879 = vadd.f32 %v830, %v878
      %v880 = vpop.f32.mrf.mxu0
      %v881 = vadd.f32 %v832, %v880
      %882 = vdwg.mxu0
      %883 = vmatpush.bf16.msra.mxu0 %v336
      %884 = vmatpush.bf16.msra.mxu0 %v335
      %885 = vmatpush.bf16.msra.mxu0 %v334
      %886 = vmatpush.bf16.msra.mxu0 %v333
      %887 = vmatpush.bf16.msra.mxu0 %v311
      %888 = vmatpush.bf16.msra.mxu0 %v310
      %889 = vmatpush.bf16.msra.mxu0 %v309
      %890 = vmatpush.bf16.msra.mxu0 %v308
      %891 = vmatmul.bf16.gmra.mxu0 %v690
      %v892 = vpop.f32.mrf.mxu0
      %v893 = vadd.f32 %v844, %v892
      %v894 = vpop.f32.mrf.mxu0
      %v895 = vadd.f32 %v846, %v894
      %896 = vmatmul.bf16.gmra.mxu0 %v695
      %v897 = vpop.f32.mrf.mxu0
      %v898 = vadd.f32 %v849, %v897
      %v899 = vpop.f32.mrf.mxu0
      %v900 = vadd.f32 %v851, %v899
      %901 = vmatmul.bf16.gmra.mxu0 %v700
      %v902 = vpop.f32.mrf.mxu0
      %v903 = vadd.f32 %v854, %v902
      %v904 = vpop.f32.mrf.mxu0
      %v905 = vadd.f32 %v856, %v904
      %906 = vmatmul.bf16.gmra.mxu0 %v705
      %v907 = vpop.f32.mrf.mxu0
      %v908 = vadd.f32 %v859, %v907
      %v909 = vpop.f32.mrf.mxu0
      %v910 = vadd.f32 %v861, %v909
      %911 = vmatmul.bf16.gmra.mxu0 %v710
      %v912 = vpop.f32.mrf.mxu0
      %v913 = vadd.f32 %v864, %v912
      %v914 = vpop.f32.mrf.mxu0
      %v915 = vadd.f32 %v866, %v914
      %916 = vmatmul.bf16.gmra.mxu0 %v715
      %v917 = vpop.f32.mrf.mxu0
      %v918 = vadd.f32 %v869, %v917
      %v919 = vpop.f32.mrf.mxu0
      %v920 = vadd.f32 %v871, %v919
      %921 = vmatmul.bf16.gmra.mxu0 %v720
      %v922 = vpop.f32.mrf.mxu0
      %v923 = vadd.f32 %v874, %v922
      %v924 = vpop.f32.mrf.mxu0
      %v925 = vadd.f32 %v876, %v924
      %926 = vmatmul.bf16.gmra.mxu0 %v725
      %v927 = vpop.f32.mrf.mxu0
      %v928 = vadd.f32 %v879, %v927
      %v929 = vpop.f32.mrf.mxu0
      %v930 = vadd.f32 %v881, %v929
      %931 = vdwg.mxu0
      %932 = vmatpush.bf16.msra.mxu0 %v386
      %933 = vmatpush.bf16.msra.mxu0 %v385
      %934 = vmatpush.bf16.msra.mxu0 %v384
      %935 = vmatpush.bf16.msra.mxu0 %v383
      %936 = vmatpush.bf16.msra.mxu0 %v361
      %937 = vmatpush.bf16.msra.mxu0 %v360
      %938 = vmatpush.bf16.msra.mxu0 %v359
      %939 = vmatpush.bf16.msra.mxu0 %v358
      %940 = vmatmul.bf16.gmra.mxu0 %v691
      %v941 = vpop.f32.mrf.mxu0
      %v942 = vadd.f32 %v893, %v941
      %v943 = vpop.f32.mrf.mxu0
      %v944 = vadd.f32 %v895, %v943
      %945 = vmatmul.bf16.gmra.mxu0 %v696
      %v946 = vpop.f32.mrf.mxu0
      %v947 = vadd.f32 %v898, %v946
      %v948 = vpop.f32.mrf.mxu0
      %v949 = vadd.f32 %v900, %v948
      %950 = vmatmul.bf16.gmra.mxu0 %v701
      %v951 = vpop.f32.mrf.mxu0
      %v952 = vadd.f32 %v903, %v951
      %v953 = vpop.f32.mrf.mxu0
      %v954 = vadd.f32 %v905, %v953
      %955 = vmatmul.bf16.gmra.mxu0 %v706
      %v956 = vpop.f32.mrf.mxu0
      %v957 = vadd.f32 %v908, %v956
      %v958 = vpop.f32.mrf.mxu0
      %v959 = vadd.f32 %v910, %v958
      %960 = vmatmul.bf16.gmra.mxu0 %v711
      %v961 = vpop.f32.mrf.mxu0
      %v962 = vadd.f32 %v913, %v961
      %v963 = vpop.f32.mrf.mxu0
      %v964 = vadd.f32 %v915, %v963
      %965 = vmatmul.bf16.gmra.mxu0 %v716
      %v966 = vpop.f32.mrf.mxu0
      %v967 = vadd.f32 %v918, %v966
      %v968 = vpop.f32.mrf.mxu0
      %v969 = vadd.f32 %v920, %v968
      %970 = vmatmul.bf16.gmra.mxu0 %v721
      %v971 = vpop.f32.mrf.mxu0
      %v972 = vadd.f32 %v923, %v971
      %v973 = vpop.f32.mrf.mxu0
      %v974 = vadd.f32 %v925, %v973
      %975 = vmatmul.bf16.gmra.mxu0 %v726
      %v976 = vpop.f32.mrf.mxu0
      %v977 = vadd.f32 %v928, %v976
      %v978 = vpop.f32.mrf.mxu0
      %v979 = vadd.f32 %v930, %v978
      %980 = vdwg.mxu0
      %981 = vmatpush.bf16.msra.mxu0 0
      %982 = vmatpush.bf16.msra.mxu0 0
      %983 = vmatpush.bf16.msra.mxu0 0
      %984 = vmatpush.bf16.msra.mxu0 0
      %985 = vmatpush.bf16.msra.mxu0 %v411
      %986 = vmatpush.bf16.msra.mxu0 %v410
      %987 = vmatpush.bf16.msra.mxu0 %v409
      %988 = vmatpush.bf16.msra.mxu0 %v408
      %989 = vmatmul.bf16.gmra.mxu0 %v762
      %v990 = vpop.f32.mrf.mxu0
      %v991 = vadd.f32 %v942, %v990
      %v992 = vpop.f32.mrf.mxu0
      %v993 = vadd.f32 %v944, %v992
      %994 = vmatmul.bf16.gmra.mxu0 %v765
      %v995 = vpop.f32.mrf.mxu0
      %v996 = vadd.f32 %v947, %v995
      %v997 = vpop.f32.mrf.mxu0
      %v998 = vadd.f32 %v949, %v997
      %999 = vmatmul.bf16.gmra.mxu0 %v768
      %v1000 = vpop.f32.mrf.mxu0
      %v1001 = vadd.f32 %v952, %v1000
      %v1002 = vpop.f32.mrf.mxu0
      %v1003 = vadd.f32 %v954, %v1002
      %1004 = vmatmul.bf16.gmra.mxu0 %v771
      %v1005 = vpop.f32.mrf.mxu0
      %v1006 = vadd.f32 %v957, %v1005
      %v1007 = vpop.f32.mrf.mxu0
      %v1008 = vadd.f32 %v959, %v1007
      %1009 = vmatmul.bf16.gmra.mxu0 %v774
      %v1010 = vpop.f32.mrf.mxu0
      %v1011 = vadd.f32 %v962, %v1010
      %v1012 = vpop.f32.mrf.mxu0
      %v1013 = vadd.f32 %v964, %v1012
      %1014 = vmatmul.bf16.gmra.mxu0 %v777
      %v1015 = vpop.f32.mrf.mxu0
      %v1016 = vadd.f32 %v967, %v1015
      %v1017 = vpop.f32.mrf.mxu0
      %v1018 = vadd.f32 %v969, %v1017
      %1019 = vmatmul.bf16.gmra.mxu0 %v780
      %v1020 = vpop.f32.mrf.mxu0
      %v1021 = vadd.f32 %v972, %v1020
      %v1022 = vpop.f32.mrf.mxu0
      %v1023 = vadd.f32 %v974, %v1022
      %1024 = vmatmul.bf16.gmra.mxu0 %v783
      %v1025 = vpop.f32.mrf.mxu0
      %v1026 = vadd.f32 %v977, %v1025
      %v1027 = vpop.f32.mrf.mxu0
      %v1028 = vadd.f32 %v979, %v1027
      %1029 = vdwg.mxu0
      %vm1030 = vcmp.gt.f32.partialorder %v991, 0.0
      %vm1031 = vcmp.gt.f32.partialorder %v993, 0.0
      %vm1032 = vcmp.gt.f32.partialorder %v996, 0.0
      %vm1033 = vcmp.gt.f32.partialorder %v998, 0.0
      %vm1034 = vcmp.gt.f32.partialorder %v1001, 0.0
      %vm1035 = vcmp.gt.f32.partialorder %v1003, 0.0
      %vm1036 = vcmp.gt.f32.partialorder %v1006, 0.0
      %vm1037 = vcmp.gt.f32.partialorder %v1008, 0.0
      %vm1038 = vcmp.gt.f32.partialorder %v1011, 0.0
      %vm1039 = vcmp.gt.f32.partialorder %v1013, 0.0
      %vm1040 = vcmp.gt.f32.partialorder %v1016, 0.0
      %vm1041 = vcmp.gt.f32.partialorder %v1018, 0.0
      %vm1042 = vcmp.gt.f32.partialorder %v1021, 0.0
      %vm1043 = vcmp.gt.f32.partialorder %v1023, 0.0
      %vm1044 = vcmp.gt.f32.partialorder %v1026, 0.0
      %vm1045 = vcmp.gt.f32.partialorder %v1028, 0.0
      %v1046 = vmul.f32 %v991, 0.2
      %v1047 = vmul.f32 %v993, 0.2
      %v1048 = vmul.f32 %v996, 0.2
      %v1049 = vmul.f32 %v998, 0.2
      %v1050 = vmul.f32 %v1001, 0.2
      %v1051 = vmul.f32 %v1003, 0.2
      %v1052 = vmul.f32 %v1006, 0.2
      %v1053 = vmul.f32 %v1008, 0.2
      %v1054 = vmul.f32 %v1011, 0.2
      %v1055 = vmul.f32 %v1013, 0.2
      %v1056 = vmul.f32 %v1016, 0.2
      %v1057 = vmul.f32 %v1018, 0.2
      %v1058 = vmul.f32 %v1021, 0.2
      %v1059 = vmul.f32 %v1023, 0.2
      %v1060 = vmul.f32 %v1026, 0.2
      %v1061 = vmul.f32 %v1028, 0.2
      %v1062 = vsel %vm1030, %v991, %v1046
      %v1063 = vsel %vm1031, %v993, %v1047
      %v1064 = vsel %vm1032, %v996, %v1048
      %v1065 = vsel %vm1033, %v998, %v1049
      %v1066 = vsel %vm1034, %v1001, %v1050
      %v1067 = vsel %vm1035, %v1003, %v1051
      %v1068 = vsel %vm1036, %v1006, %v1052
      %v1069 = vsel %vm1037, %v1008, %v1053
      %v1070 = vsel %vm1038, %v1011, %v1054
      %v1071 = vsel %vm1039, %v1013, %v1055
      %v1072 = vsel %vm1040, %v1016, %v1056
      %v1073 = vsel %vm1041, %v1018, %v1057
      %v1074 = vsel %vm1042, %v1021, %v1058
      %v1075 = vsel %vm1043, %v1023, %v1059
      %v1076 = vsel %vm1044, %v1026, %v1060
      %v1077 = vsel %vm1045, %v1028, %v1061
      %v1078 = vpack.c.bf16 %v1062, %v1062
      %v1079 = vpack.c.bf16 %v1063, %v1063
      %v1080 = vpack.c.bf16 %v1064, %v1064
      %v1081 = vpack.c.bf16 %v1065, %v1065
      %v1082 = vpack.c.bf16 %v1066, %v1066
      %v1083 = vpack.c.bf16 %v1067, %v1067
      %v1084 = vpack.c.bf16 %v1068, %v1068
      %v1085 = vpack.c.bf16 %v1069, %v1069
      %v1086 = vpack.c.bf16 %v1070, %v1070
      %v1087 = vpack.c.bf16 %v1071, %v1071
      %v1088 = vpack.c.bf16 %v1072, %v1072
      %v1089 = vpack.c.bf16 %v1073, %v1073
      %v1090 = vpack.c.bf16 %v1074, %v1074
      %v1091 = vpack.c.bf16 %v1075, %v1075
      %v1092 = vpack.c.bf16 %v1076, %v1076
      %v1093 = vpack.c.bf16 %v1077, %v1077
      %1094 = vst [vmem:[%s170] sm:$0xf] %v1078
      %1095 = vst [vmem:[%s170 + $0x4] sm:$0xf] %v1079
      %1096 = vst [vmem:[%s170 + $0x8] sm:$0xf] %v1080
      %1097 = vst [vmem:[%s170 + $0xc] sm:$0xf] %v1081
      %1098 = vst [vmem:[%s170 + $0x10] sm:$0xf] %v1082
      %1099 = vst [vmem:[%s170 + $0x14] sm:$0xf] %v1083
      %1100 = vst [vmem:[%s170 + $0x18] sm:$0xf] %v1084
      %1101 = vst [vmem:[%s170 + $0x1c] sm:$0xf] %v1085
      %1102 = vst [vmem:[%s170 + $0x20] sm:$0xf] %v1086
      %1103 = vst [vmem:[%s170 + $0x24] sm:$0xf] %v1087
      %1104 = vst [vmem:[%s170 + $0x28] sm:$0xf] %v1088
      %1105 = vst [vmem:[%s170 + $0x2c] sm:$0xf] %v1089
      %1106 = vst [vmem:[%s170 + $0x30] sm:$0xf] %v1090
      %1107 = vst [vmem:[%s170 + $0x34] sm:$0xf] %v1091
      %1108 = vst [vmem:[%s170 + $0x38] sm:$0xf] %v1092
      %1109 = vst [vmem:[%s170 + $0x3c] sm:$0xf] %v1093
      %p1110 = scmp.lt.s32.totalorder %s14, 1
      %s1111 = scalar_select %p1110, %s14, 1
      %s1112 = smul.addr %s1111, 16
      %s1113 = smul.addr %s1112, 4
      %s1114 = scalar_lea.vmem %s3, %s1113
      // Predicated region
      $region33: #{generator_forward.7} parent=31 // pred_check
        %p1115 = pneg %p100
      $region34: #{generator_forward.7} parent=31 // pred_check_branch
        %1117 = sbr.rel (%p1115) target = $region36
      $region35: #{generator_forward.7} parent=31 // pred_region
        _
      $region36: #{generator_forward.7} parent=31 // pred_fallthru
        _
    $region32: #{generator_forward.7} parent=5 // pred_fallthru
      _
    %p1118 = scmp.le.s32.totalorder 2, %s9
    // Predicated region
    $region37: #{generator_forward.7} parent=5 // pred_check
      %p1119 = pneg %p1118
    $region38: #{generator_forward.7} parent=5 // pred_check_branch
      %1121 = sbr.rel (%p1119) target = $region40
    $region39: #{generator_forward.7} parent=5 // pred_region
      %s1122 = ssub.s32 %s9, 2
      // Predicated region
      $region41: #{generator_forward.7} parent=39 // pred_check
        %p1123 = pneg %p106
      $region42: #{generator_forward.7} parent=39 // pred_check_branch
        %1125 = sbr.rel (%p1123) target = $region44
      $region43: #{generator_forward.7} parent=39 // pred_region
        %p1126 = scmp.lt.s32.totalorder %s15, 1
        %s1127 = scalar_select %p1126, %s15, 1
        %s1128 = smul.addr %s1127, 16
        %s1129 = smul.addr %s1128, 4
        %s1130 = scalar_lea.vmem %s3, %s1129
      $region44: #{generator_forward.7} parent=39 // pred_fallthru
        _
    $region40: #{generator_forward.7} parent=5 // pred_fallthru
      _
  $region6: #{generator_forward.7} parent=0 // loop_footer
    %s13 = sadd.s32 1, %s9
  $region7: #{generator_forward.7} parent=0 // loop_footer_branch
    %8 = sbr.rel target = $region3
  $region8: #{generator_forward.7} parent=0 // loop_exit
    _

// kernel: tile.28
$region0: #{tile.28}
  #allocation0 [shape = 's32[1]{0}', space=sflag, size = 0x4, scoped, tag = 'scoped memory for tile.28']
  %s0 = inlined_call_operand.vmem [shape: f32[16], index: 0, kind: input, shape index: {}]
  %s1 = inlined_call_operand.vmem [shape: f32[4,16], index: 1, kind: output, shape index: {}]
  // Predicated region
  $region2: #{tile.28} parent=0 // pred_check
    _
  $region3: #{tile.28} parent=0 // pred_check_branch
    %3 = sbr.rel (0) target = $region5
  $region4: #{tile.28} parent=0 // pred_region
    _
  $region5: #{tile.28} parent=0 // pred_fallthru
    _
  %v4 = vld [vmem:[%s0] ss:$0 sm:$0xff]
  %5 = vst [vmem:[%s1] sm:$0xf] %v4

// kernel: tile.2
$region0: #{tile.2}
  %s0 = inlined_call_operand.vmem [shape: f32[4,16], index: 0, kind: input, shape index: {}]
  %s1 = inlined_call_operand.vmem [shape: f32[64,1], index: 1, kind: output, shape index: {}]
  $region1: #{tile.2} parent=0
    #allocation0 [shape = 'u8[4096]{0}', space=vmem, size = 0x1000, scoped, tag = 'scoped mem for input reshape']
    %s3 = ssub.s32 16, 1
    %v4 = vld [vmem:[%s0] sm:%s3]
    %5 = vst [vmem:[#allocation0] sm:%s3] %v4
    %v6 = vld [vmem:[#allocation0] sm:$0xf]
    %vm7 = vcmask 7168
    %8 = vst.msk [vmem:[%s1] ss:$16 sm:$0x3] %vm7, %v6
    %9 = vst.msk [vmem:[%s1] ss:$16 sm:$0xc] %vm7, %v6
    %v10 = vld [vmem:[#allocation0] sm:$0xf]
    %11 = vrot.lane.b32.xlu0 %v10, 127
    %v12 = vpop.permute.xlu0 %11
    %vm13 = vcmask 7168
    %s14 = scalar_lea.vmem %s1, 1
    %15 = vst.msk [vmem:[%s14] ss:$16 sm:$0x3] %vm13, %v12
    %s16 = scalar_lea.vmem %s1, 1
    %17 = vst.msk [vmem:[%s16] ss:$16 sm:$0xc] %vm13, %v12
    %v18 = vld [vmem:[#allocation0] sm:$0xf]
    %19 = vrot.lane.b32.xlu0 %v18, 126
    %v20 = vpop.permute.xlu0 %19
    %vm21 = vcmask 7168
    %s22 = scalar_lea.vmem %s1, 2
    %23 = vst.msk [vmem:[%s22] ss:$16 sm:$0x3] %vm21, %v20
    %s24 = scalar_lea.vmem %s1, 2
    %25 = vst.msk [vmem:[%s24] ss:$16 sm:$0xc] %vm21, %v20
    %v26 = vld [vmem:[#allocation0] sm:$0xf]
    %27 = vrot.lane.b32.xlu0 %v26, 125
    %v28 = vpop.permute.xlu0 %27
    %vm29 = vcmask 7168
    %s30 = scalar_lea.vmem %s1, 3
    %31 = vst.msk [vmem:[%s30] ss:$16 sm:$0x3] %vm29, %v28
    %s32 = scalar_lea.vmem %s1, 3
    %33 = vst.msk [vmem:[%s32] ss:$16 sm:$0xc] %vm29, %v28
    %v34 = vld [vmem:[#allocation0] sm:$0xf]
    %35 = vrot.lane.b32.xlu0 %v34, 124
    %v36 = vpop.permute.xlu0 %35
    %vm37 = vcmask 7168
    %s38 = scalar_lea.vmem %s1, 4
    %39 = vst.msk [vmem:[%s38] ss:$16 sm:$0x3] %vm37, %v36
    %s40 = scalar_lea.vmem %s1, 4
    %41 = vst.msk [vmem:[%s40] ss:$16 sm:$0xc] %vm37, %v36
    %v42 = vld [vmem:[#allocation0] sm:$0xf]
    %43 = vrot.lane.b32.xlu0 %v42, 123
    %v44 = vpop.permute.xlu0 %43
    %vm45 = vcmask 7168
    %s46 = scalar_lea.vmem %s1, 5
    %47 = vst.msk [vmem:[%s46] ss:$16 sm:$0x3] %vm45, %v44
    %s48 = scalar_lea.vmem %s1, 5
    %49 = vst.msk [vmem:[%s48] ss:$16 sm:$0xc] %vm45, %v44
    %v50 = vld [vmem:[#allocation0] sm:$0xf]
    %51 = vrot.lane.b32.xlu0 %v50, 122
    %v52 = vpop.permute.xlu0 %51
    %vm53 = vcmask 7168
    %s54 = scalar_lea.vmem %s1, 6
    %55 = vst.msk [vmem:[%s54] ss:$16 sm:$0x3] %vm53, %v52
    %s56 = scalar_lea.vmem %s1, 6
    %57 = vst.msk [vmem:[%s56] ss:$16 sm:$0xc] %vm53, %v52
    %v58 = vld [vmem:[#allocation0] sm:$0xf]
    %59 = vrot.lane.b32.xlu0 %v58, 121
    %v60 = vpop.permute.xlu0 %59
    %vm61 = vcmask 7168
    %s62 = scalar_lea.vmem %s1, 7
    %63 = vst.msk [vmem:[%s62] ss:$16 sm:$0x3] %vm61, %v60
    %s64 = scalar_lea.vmem %s1, 7
    %65 = vst.msk [vmem:[%s64] ss:$16 sm:$0xc] %vm61, %v60
    %v66 = vld [vmem:[#allocation0] sm:$0xf]
    %67 = vrot.lane.b32.xlu0 %v66, 120
    %v68 = vpop.permute.xlu0 %67
    %vm69 = vcmask 7168
    %s70 = scalar_lea.vmem %s1, 8
    %71 = vst.msk [vmem:[%s70] ss:$16 sm:$0x3] %vm69, %v68
    %s72 = scalar_lea.vmem %s1, 8
    %73 = vst.msk [vmem:[%s72] ss:$16 sm:$0xc] %vm69, %v68
    %v74 = vld [vmem:[#allocation0] sm:$0xf]
    %75 = vrot.lane.b32.xlu0 %v74, 119
    %v76 = vpop.permute.xlu0 %75
    %vm77 = vcmask 7168
    %s78 = scalar_lea.vmem %s1, 9
    %79 = vst.msk [vmem:[%s78] ss:$16 sm:$0x3] %vm77, %v76
    %s80 = scalar_lea.vmem %s1, 9
    %81 = vst.msk [vmem:[%s80] ss:$16 sm:$0xc] %vm77, %v76
    %v82 = vld [vmem:[#allocation0] sm:$0xf]
    %83 = vrot.lane.b32.xlu0 %v82, 118
    %v84 = vpop.permute.xlu0 %83
    %vm85 = vcmask 7168
    %s86 = scalar_lea.vmem %s1, 10
    %87 = vst.msk [vmem:[%s86] ss:$16 sm:$0x3] %vm85, %v84
    %s88 = scalar_lea.vmem %s1, 10
    %89 = vst.msk [vmem:[%s88] ss:$16 sm:$0xc] %vm85, %v84
    %v90 = vld [vmem:[#allocation0] sm:$0xf]
    %91 = vrot.lane.b32.xlu0 %v90, 117
    %v92 = vpop.permute.xlu0 %91
    %vm93 = vcmask 7168
    %s94 = scalar_lea.vmem %s1, 11
    %95 = vst.msk [vmem:[%s94] ss:$16 sm:$0x3] %vm93, %v92
    %s96 = scalar_lea.vmem %s1, 11
    %97 = vst.msk [vmem:[%s96] ss:$16 sm:$0xc] %vm93, %v92
    %v98 = vld [vmem:[#allocation0] sm:$0xf]
    %99 = vrot.lane.b32.xlu0 %v98, 116
    %v100 = vpop.permute.xlu0 %99
    %vm101 = vcmask 7168
    %s102 = scalar_lea.vmem %s1, 12
    %103 = vst.msk [vmem:[%s102] ss:$16 sm:$0x3] %vm101, %v100
    %s104 = scalar_lea.vmem %s1, 12
    %105 = vst.msk [vmem:[%s104] ss:$16 sm:$0xc] %vm101, %v100
    %v106 = vld [vmem:[#allocation0] sm:$0xf]
    %107 = vrot.lane.b32.xlu0 %v106, 115
    %v108 = vpop.permute.xlu0 %107
    %vm109 = vcmask 7168
    %s110 = scalar_lea.vmem %s1, 13
    %111 = vst.msk [vmem:[%s110] ss:$16 sm:$0x3] %vm109, %v108
    %s112 = scalar_lea.vmem %s1, 13
    %113 = vst.msk [vmem:[%s112] ss:$16 sm:$0xc] %vm109, %v108
    %v114 = vld [vmem:[#allocation0] sm:$0xf]
    %115 = vrot.lane.b32.xlu0 %v114, 114
    %v116 = vpop.permute.xlu0 %115
    %vm117 = vcmask 7168
    %s118 = scalar_lea.vmem %s1, 14
    %119 = vst.msk [vmem:[%s118] ss:$16 sm:$0x3] %vm117, %v116
    %s120 = scalar_lea.vmem %s1, 14
    %121 = vst.msk [vmem:[%s120] ss:$16 sm:$0xc] %vm117, %v116
    %v122 = vld [vmem:[#allocation0] sm:$0xf]
    %123 = vrot.lane.b32.xlu0 %v122, 113
    %v124 = vpop.permute.xlu0 %123
    %vm125 = vcmask 7168
    %s126 = scalar_lea.vmem %s1, 15
    %127 = vst.msk [vmem:[%s126] ss:$16 sm:$0x3] %vm125, %v124
    %s128 = scalar_lea.vmem %s1, 15
    %129 = vst.msk [vmem:[%s128] ss:$16 sm:$0xc] %vm125, %v124

// kernel: generator_forward.8
$region0: #{generator_forward.8}
  #allocation0 [shape = 'u32[]', space=smem, size = 0x4, offset = 0x4, fixed_abs, tag = 'smem constant byte address 0x4 - core index']
  #allocation1 [shape = 'u32[72,128]{1,0:T(1,128)}', space=vmem, size = 0x9000, scoped, tag = 'internal scratch']
  %s0 = inlined_call_operand.vmem [shape: bf16[2,32,422], index: 0, kind: input, shape index: {}]
  %s1 = inlined_call_operand.vmem [shape: bf16[64,288], index: 1, kind: input, shape index: {}]
  %s2 = inlined_call_operand.vmem [shape: f32[64,1], index: 2, kind: input, shape index: {}]
  %s3 = inlined_call_operand.vmem [shape: bf16[2,64,384], index: 3, kind: output, shape index: {}]
  %s4 = sld [smem:[#allocation0]]
  $region45: #{generator_forward.8} parent=0
    _
  %s6 = ssub.s32 1, %s4
  %s7 = scalar_select 0, %s6, %s4
  loop: start=0, step=1, limit=4
  $region2: #{generator_forward.8} parent=0 // loop_pre_header
    _
  $region3: #{generator_forward.8} parent=0 // loop_header
    %s9 = sphi 0, %s13
    %p10 = scmp.ge.s32.totalorder %s9, 4
    %s19 = sphi 0, %s21
    %s22 = sphi 0, %s19
    %s23 = sphi 0, %s22
    %s39 = sphi 0, %s23
    %s43 = sphi 0, %s43
    %s45 = sphi 0, %s43
    %s46 = sphi 0, %s45
    %s60 = sphi 0, %s46
    %s64 = sphi 0, %s64
    %s66 = sphi 0, %s64
    %s67 = sphi 0, %s66
    %s81 = sphi 0, %s67
    %s87 = sphi 0, %s89
    %s90 = sphi 0, %s87
    %s91 = sphi 0, %s90
    %s107 = sphi 0, %s91
  $region4: #{generator_forward.8} parent=0 // loop_header_branch
    %12 = sbr.rel (%p10) target = $region8
  $region5: #{generator_forward.8} parent=0 // loop_body
    %s14 = ssub.s32 %s9, 1
    %s15 = ssub.s32 %s9, 2
    %s16 = sadd.s32 %s9, 1
    %s17 = ssub.s32 %s9, %s16
    %p18 = scmp.eq.s32.totalorder %s17, 0
    %s20 = sadd.s32 %s19, 1
    %s21 = scalar_select %p18, %s19, %s20
    %p24 = pneg %p18
    %p25 = scmp.eq.s32.totalorder %s9, 1
    %p26 = por %p24, %p25
    %p27 = scmp.ne.s32.totalorder %s19, %s22
    %p28 = scmp.eq.s32.totalorder %s9, 0
    %p29 = por %p27, %p28
    %p30 = scmp.ne.s32.totalorder %s19, %s22
    %p31 = scmp.eq.s32.totalorder %s14, 1
    %p32 = por %p30, %p31
    %p33 = scmp.ne.s32.totalorder %s22, %s23
    %p34 = scmp.eq.s32.totalorder %s14, 0
    %p35 = por %p33, %p34
    %p36 = scmp.ne.s32.totalorder %s22, %s23
    %p37 = scmp.eq.s32.totalorder %s15, 1
    %p38 = por %p36, %p37
    %p40 = scmp.ne.s32.totalorder %s23, %s39
    %p41 = scmp.eq.s32.totalorder %s15, 0
    %p42 = por %p40, %p41
    %s44 = sadd.s32 %s43, 1
    %p47 = scmp.eq.s32.totalorder %s9, 1
    %p48 = scmp.ne.s32.totalorder %s43, %s45
    %p49 = scmp.eq.s32.totalorder %s9, 0
    %p50 = por %p48, %p49
    %p51 = scmp.ne.s32.totalorder %s43, %s45
    %p52 = scmp.eq.s32.totalorder %s14, 1
    %p53 = por %p51, %p52
    %p54 = scmp.ne.s32.totalorder %s45, %s46
    %p55 = scmp.eq.s32.totalorder %s14, 0
    %p56 = por %p54, %p55
    %p57 = scmp.ne.s32.totalorder %s45, %s46
    %p58 = scmp.eq.s32.totalorder %s15, 1
    %p59 = por %p57, %p58
    %p61 = scmp.ne.s32.totalorder %s46, %s60
    %p62 = scmp.eq.s32.totalorder %s15, 0
    %p63 = por %p61, %p62
    %s65 = sadd.s32 %s64, 1
    %p68 = scmp.eq.s32.totalorder %s9, 1
    %p69 = scmp.ne.s32.totalorder %s64, %s66
    %p70 = scmp.eq.s32.totalorder %s9, 0
    %p71 = por %p69, %p70
    %p72 = scmp.ne.s32.totalorder %s64, %s66
    %p73 = scmp.eq.s32.totalorder %s14, 1
    %p74 = por %p72, %p73
    %p75 = scmp.ne.s32.totalorder %s66, %s67
    %p76 = scmp.eq.s32.totalorder %s14, 0
    %p77 = por %p75, %p76
    %p78 = scmp.ne.s32.totalorder %s66, %s67
    %p79 = scmp.eq.s32.totalorder %s15, 1
    %p80 = por %p78, %p79
    %p82 = scmp.ne.s32.totalorder %s67, %s81
    %p83 = scmp.eq.s32.totalorder %s15, 0
    %p84 = por %p82, %p83
    %s85 = ssub.s32 %s9, %s16
    %p86 = scmp.eq.s32.totalorder %s85, 0
    %s88 = sadd.s32 %s87, 1
    %s89 = scalar_select %p86, %s87, %s88
    %p92 = pneg %p86
    %p93 = scmp.eq.s32.totalorder %s9, 1
    %p94 = por %p92, %p93
    %p95 = scmp.ne.s32.totalorder %s87, %s90
    %p96 = scmp.eq.s32.totalorder %s9, 0
    %p97 = por %p95, %p96
    %p98 = scmp.ne.s32.totalorder %s87, %s90
    %p99 = scmp.eq.s32.totalorder %s14, 1
    %p100 = por %p98, %p99
    %p101 = scmp.ne.s32.totalorder %s90, %s91
    %p102 = scmp.eq.s32.totalorder %s14, 0
    %p103 = por %p101, %p102
    %p104 = scmp.ne.s32.totalorder %s90, %s91
    %p105 = scmp.eq.s32.totalorder %s15, 1
    %p106 = por %p104, %p105
    %p108 = scmp.ne.s32.totalorder %s91, %s107
    %p109 = scmp.eq.s32.totalorder %s15, 0
    %p110 = por %p108, %p109
    %p111 = scmp.le.s32.totalorder 1, %s9
    %p112 = scmp.lt.s32.totalorder %s9, 3
    %p113 = pnand %p111, %p112
    %p114 = pneg %p113
    // Predicated region
    $region9: #{generator_forward.8} parent=5 // pred_check
      _
    $region10: #{generator_forward.8} parent=5 // pred_check_branch
      %116 = sbr.rel (%p113) target = $region12
    $region11: #{generator_forward.8} parent=5 // pred_region
      %s117 = ssub.s32 %s9, 1
      // Predicated region
      $region13: #{generator_forward.8} parent=11 // pred_check
        %p118 = pneg %p56
      $region14: #{generator_forward.8} parent=11 // pred_check_branch
        %120 = sbr.rel (%p118) target = $region16
      $region15: #{generator_forward.8} parent=11 // pred_region
        _
      $region16: #{generator_forward.8} parent=11 // pred_fallthru
        _
      // Predicated region
      $region17: #{generator_forward.8} parent=11 // pred_check
        %p121 = pneg %p77
      $region18: #{generator_forward.8} parent=11 // pred_check_branch
        %123 = sbr.rel (%p121) target = $region20
      $region19: #{generator_forward.8} parent=11 // pred_region
        _
      $region20: #{generator_forward.8} parent=11 // pred_fallthru
        _
    $region12: #{generator_forward.8} parent=5 // pred_fallthru
      _
    %p124 = scmp.lt.s32.totalorder %s9, 2
    // Predicated region
    $region21: #{generator_forward.8} parent=5 // pred_check
      %p125 = pneg %p124
    $region22: #{generator_forward.8} parent=5 // pred_check_branch
      %127 = sbr.rel (%p125) target = $region24
    $region23: #{generator_forward.8} parent=5 // pred_region
      // Predicated region
      $region25: #{generator_forward.8} parent=23 // pred_check
        %p128 = pneg %p29
      $region26: #{generator_forward.8} parent=23 // pred_check_branch
        %130 = sbr.rel (%p128) target = $region28
      $region27: #{generator_forward.8} parent=23 // pred_region
        %p131 = scmp.lt.s32.totalorder %s9, 1
        %s132 = scalar_select %p131, %s9, 1
        %s133 = smul.addr %s132, 16
        %s134 = smul.addr %s133, 4
        %s135 = scalar_lea.vmem %s0, %s134
      $region28: #{generator_forward.8} parent=23 // pred_fallthru
        _
    $region24: #{generator_forward.8} parent=5 // pred_fallthru
      _
    %p136 = scmp.le.s32.totalorder 1, %s9
    %p137 = scmp.lt.s32.totalorder %s9, 3
    %p138 = pnand %p136, %p137
    %p139 = pneg %p138
    // Predicated region
    $region29: #{generator_forward.8} parent=5 // pred_check
      _
    $region30: #{generator_forward.8} parent=5 // pred_check_branch
      %141 = sbr.rel (%p138) target = $region32
    $region31: #{generator_forward.8} parent=5 // pred_region
      %s142 = ssub.s32 %s9, 1
      %p143 = scmp.lt.s32.totalorder %s14, 1
      %s144 = scalar_select %p143, %s14, 1
      %s145 = smul.addr %s144, 16
      %s146 = smul.addr %s145, 4
      %s147 = scalar_lea.vmem %s0, %s146
      %p148 = pneg %p35
      %p149 = pneg %p32
      %p150 = pneg %p56
      %p151 = pneg %p53
      %p152 = pneg %p77
      %p153 = pneg %p74
      %p154 = pneg %p103
      %p155 = pneg %p100
      %p156 = scmp.lt.s32.totalorder %s14, 1
      %s157 = scalar_select %p156, %s14, 1
      %s158 = smul.addr %s157, 24
      %s159 = smul.addr %s158, 4
      %s160 = scalar_lea.vmem %s3, %s159
      %p161 = scmp.lt.s32.totalorder %s14, 1
      %s162 = scalar_select %p161, %s14, 1
      %s163 = smul.addr %s162, 16
      %s164 = smul.addr %s163, 4
      %s165 = scalar_lea.vmem %s0, %s164
      %p166 = scmp.lt.s32.totalorder %s14, 1
      %s167 = scalar_select %p166, %s14, 1
      %s168 = smul.addr %s167, 24
      %s169 = smul.addr %s168, 4
      %s170 = scalar_lea.vmem %s3, %s169
      %v172 = vld [vmem:[%s165] sm:$0xff]
      %v173 = vld [vmem:[%s165 + $0x8] sm:$0xff]
      %v174 = vld [vmem:[%s165 + $0x10] sm:$0xff]
      %v175 = vld [vmem:[%s165 + $0x18] sm:$0xff]
      %v176 = vld [vmem:[%s165 + $0x20] sm:$0xff]
      %v177 = vld [vmem:[%s165 + $0x28] sm:$0xff]
      %v178 = vld [vmem:[%s165 + $0x30] sm:$0xff]
      %v179 = vld [vmem:[%s165 + $0x38] sm:$0xff]
      %v188 = vunpack.c.l.b16 %v172
      %v189 = vunpack.c.h.b16 %v172
      %v190 = vunpack.c.l.b16 %v173
      %v191 = vunpack.c.l.b16 %v174
      %v192 = vunpack.c.h.b16 %v174
      %v193 = vunpack.c.l.b16 %v175
      %v194 = vunpack.c.l.b16 %v176
      %v195 = vunpack.c.h.b16 %v176
      %v196 = vunpack.c.l.b16 %v177
      %v197 = vunpack.c.l.b16 %v178
      %v198 = vunpack.c.h.b16 %v178
      %v199 = vunpack.c.l.b16 %v179
      %v200 = vpack.c.b16 %v191, %v188
      %v201 = vpack.c.b16 %v192, %v189
      %v202 = vpack.c.b16 %v193, %v190
      %v203 = vpack.c.b16 %v197, %v194
      %v204 = vpack.c.b16 %v198, %v195
      %v205 = vpack.c.b16 %v199, %v196
      %v212 = vunpack.c.h.b16 %v173
      %v213 = vunpack.c.h.b16 %v175
      %v214 = vunpack.c.h.b16 %v177
      %v215 = vunpack.c.h.b16 %v179
      %v216 = vpack.c.b16 %v213, %v212
      %v217 = vpack.c.b16 %v215, %v214
      %218 = vrot.lane.b32.xlu0 %v200, 127
      %v219 = vpop.permute.xlu0 %218
      %220 = vrot.lane.b32.xlu0 %v201, 127
      %v221 = vpop.permute.xlu0 %220
      %222 = vrot.lane.b32.xlu0 %v202, 127
      %v223 = vpop.permute.xlu0 %222
      %224 = vrot.lane.b32.xlu0 %v216, 127
      %v225 = vpop.permute.xlu0 %224
      %226 = vrot.lane.b32.xlu0 %v203, 127
      %v227 = vpop.permute.xlu0 %226
      %228 = vrot.lane.b32.xlu0 %v204, 127
      %v229 = vpop.permute.xlu0 %228
      %230 = vrot.lane.b32.xlu0 %v205, 127
      %v231 = vpop.permute.xlu0 %230
      %232 = vrot.lane.b32.xlu0 %v217, 127
      %v233 = vpop.permute.xlu0 %232
      %vm234 = vcmask 1039360
      %v235 = vsel %vm234, %v219, %v221
      %v236 = vsel %vm234, %v221, %v223
      %v237 = vsel %vm234, %v223, %v225
      %v238 = vsel %vm234, %v227, %v229
      %v239 = vsel %vm234, %v229, %v231
      %v240 = vsel %vm234, %v231, %v233
      %247 = vrot.lane.b32.xlu0 %v200, 126
      %v248 = vpop.permute.xlu0 %247
      %249 = vrot.lane.b32.xlu0 %v201, 126
      %v250 = vpop.permute.xlu0 %249
      %251 = vrot.lane.b32.xlu0 %v202, 126
      %v252 = vpop.permute.xlu0 %251
      %253 = vrot.lane.b32.xlu0 %v216, 126
      %v254 = vpop.permute.xlu0 %253
      %255 = vrot.lane.b32.xlu0 %v203, 126
      %v256 = vpop.permute.xlu0 %255
      %257 = vrot.lane.b32.xlu0 %v204, 126
      %v258 = vpop.permute.xlu0 %257
      %259 = vrot.lane.b32.xlu0 %v205, 126
      %v260 = vpop.permute.xlu0 %259
      %261 = vrot.lane.b32.xlu0 %v217, 126
      %v262 = vpop.permute.xlu0 %261
      %vm263 = vcmask 1031168
      %v264 = vsel %vm263, %v248, %v250
      %v265 = vsel %vm263, %v250, %v252
      %v266 = vsel %vm263, %v252, %v254
      %v267 = vsel %vm263, %v256, %v258
      %v268 = vsel %vm263, %v258, %v260
      %v269 = vsel %vm263, %v260, %v262
      %276 = vrot.lane.b32.xlu0 %v200, 110
      %v277 = vpop.permute.xlu0 %276
      %278 = vrot.lane.b32.xlu0 %v201, 110
      %v279 = vpop.permute.xlu0 %278
      %280 = vrot.lane.b32.xlu0 %v202, 110
      %v281 = vpop.permute.xlu0 %280
      %282 = vrot.lane.b32.xlu0 %v216, 110
      %v283 = vpop.permute.xlu0 %282
      %284 = vrot.lane.b32.xlu0 %v203, 110
      %v285 = vpop.permute.xlu0 %284
      %286 = vrot.lane.b32.xlu0 %v204, 110
      %v287 = vpop.permute.xlu0 %286
      %288 = vrot.lane.b32.xlu0 %v205, 110
      %v289 = vpop.permute.xlu0 %288
      %290 = vrot.lane.b32.xlu0 %v217, 110
      %v291 = vpop.permute.xlu0 %290
      %vm292 = vcmask 900096
      %v293 = vsel %vm292, %v277, %v279
      %v294 = vsel %vm292, %v279, %v281
      %v295 = vsel %vm292, %v281, %v283
      %v296 = vsel %vm292, %v285, %v287
      %v297 = vsel %vm292, %v287, %v289
      %v298 = vsel %vm292, %v289, %v291
      %305 = vrot.lane.b32.xlu0 %v200, 109
      %v306 = vpop.permute.xlu0 %305
      %307 = vrot.lane.b32.xlu0 %v201, 109
      %v308 = vpop.permute.xlu0 %307
      %309 = vrot.lane.b32.xlu0 %v202, 109
      %v310 = vpop.permute.xlu0 %309
      %311 = vrot.lane.b32.xlu0 %v216, 109
      %v312 = vpop.permute.xlu0 %311
      %313 = vrot.lane.b32.xlu0 %v203, 109
      %v314 = vpop.permute.xlu0 %313
      %315 = vrot.lane.b32.xlu0 %v204, 109
      %v316 = vpop.permute.xlu0 %315
      %317 = vrot.lane.b32.xlu0 %v205, 109
      %v318 = vpop.permute.xlu0 %317
      %319 = vrot.lane.b32.xlu0 %v217, 109
      %v320 = vpop.permute.xlu0 %319
      %vm321 = vcmask 891904
      %v322 = vsel %vm321, %v306, %v308
      %v323 = vsel %vm321, %v308, %v310
      %v324 = vsel %vm321, %v310, %v312
      %v325 = vsel %vm321, %v314, %v316
      %v326 = vsel %vm321, %v316, %v318
      %v327 = vsel %vm321, %v318, %v320
      %334 = vrot.lane.b32.xlu0 %v200, 108
      %v335 = vpop.permute.xlu0 %334
      %336 = vrot.lane.b32.xlu0 %v201, 108
      %v337 = vpop.permute.xlu0 %336
      %338 = vrot.lane.b32.xlu0 %v202, 108
      %v339 = vpop.permute.xlu0 %338
      %340 = vrot.lane.b32.xlu0 %v216, 108
      %v341 = vpop.permute.xlu0 %340
      %342 = vrot.lane.b32.xlu0 %v203, 108
      %v343 = vpop.permute.xlu0 %342
      %344 = vrot.lane.b32.xlu0 %v204, 108
      %v345 = vpop.permute.xlu0 %344
      %346 = vrot.lane.b32.xlu0 %v205, 108
      %v347 = vpop.permute.xlu0 %346
      %348 = vrot.lane.b32.xlu0 %v217, 108
      %v349 = vpop.permute.xlu0 %348
      %vm350 = vcmask 883712
      %v351 = vsel %vm350, %v335, %v337
      %v352 = vsel %vm350, %v337, %v339
      %v353 = vsel %vm350, %v339, %v341
      %v354 = vsel %vm350, %v343, %v345
      %v355 = vsel %vm350, %v345, %v347
      %v356 = vsel %vm350, %v347, %v349
      %363 = vrot.lane.b32.xlu0 %v200, 92
      %v364 = vpop.permute.xlu0 %363
      %365 = vrot.lane.b32.xlu0 %v201, 92
      %v366 = vpop.permute.xlu0 %365
      %367 = vrot.lane.b32.xlu0 %v202, 92
      %v368 = vpop.permute.xlu0 %367
      %369 = vrot.lane.b32.xlu0 %v216, 92
      %v370 = vpop.permute.xlu0 %369
      %371 = vrot.lane.b32.xlu0 %v203, 92
      %v372 = vpop.permute.xlu0 %371
      %373 = vrot.lane.b32.xlu0 %v204, 92
      %v374 = vpop.permute.xlu0 %373
      %375 = vrot.lane.b32.xlu0 %v205, 92
      %v376 = vpop.permute.xlu0 %375
      %377 = vrot.lane.b32.xlu0 %v217, 92
      %v378 = vpop.permute.xlu0 %377
      %vm379 = vcmask 752640
      %v380 = vsel %vm379, %v364, %v366
      %v381 = vsel %vm379, %v366, %v368
      %v382 = vsel %vm379, %v368, %v370
      %v383 = vsel %vm379, %v372, %v374
      %v384 = vsel %vm379, %v374, %v376
      %v385 = vsel %vm379, %v376, %v378
      %392 = vrot.lane.b32.xlu0 %v200, 91
      %v393 = vpop.permute.xlu0 %392
      %394 = vrot.lane.b32.xlu0 %v201, 91
      %v395 = vpop.permute.xlu0 %394
      %396 = vrot.lane.b32.xlu0 %v202, 91
      %v397 = vpop.permute.xlu0 %396
      %398 = vrot.lane.b32.xlu0 %v216, 91
      %v399 = vpop.permute.xlu0 %398
      %400 = vrot.lane.b32.xlu0 %v203, 91
      %v401 = vpop.permute.xlu0 %400
      %402 = vrot.lane.b32.xlu0 %v204, 91
      %v403 = vpop.permute.xlu0 %402
      %404 = vrot.lane.b32.xlu0 %v205, 91
      %v405 = vpop.permute.xlu0 %404
      %406 = vrot.lane.b32.xlu0 %v217, 91
      %v407 = vpop.permute.xlu0 %406
      %vm408 = vcmask 744448
      %v409 = vsel %vm408, %v393, %v395
      %v410 = vsel %vm408, %v395, %v397
      %v411 = vsel %vm408, %v397, %v399
      %v412 = vsel %vm408, %v401, %v403
      %v413 = vsel %vm408, %v403, %v405
      %v414 = vsel %vm408, %v405, %v407
      %421 = vrot.lane.b32.xlu0 %v200, 90
      %v422 = vpop.permute.xlu0 %421
      %423 = vrot.lane.b32.xlu0 %v201, 90
      %v424 = vpop.permute.xlu0 %423
      %425 = vrot.lane.b32.xlu0 %v202, 90
      %v426 = vpop.permute.xlu0 %425
      %427 = vrot.lane.b32.xlu0 %v216, 90
      %v428 = vpop.permute.xlu0 %427
      %429 = vrot.lane.b32.xlu0 %v203, 90
      %v430 = vpop.permute.xlu0 %429
      %431 = vrot.lane.b32.xlu0 %v204, 90
      %v432 = vpop.permute.xlu0 %431
      %433 = vrot.lane.b32.xlu0 %v205, 90
      %v434 = vpop.permute.xlu0 %433
      %435 = vrot.lane.b32.xlu0 %v217, 90
      %v436 = vpop.permute.xlu0 %435
      %vm437 = vcmask 736256
      %v438 = vsel %vm437, %v422, %v424
      %v439 = vsel %vm437, %v424, %v426
      %v440 = vsel %vm437, %v426, %v428
      %v441 = vsel %vm437, %v430, %v432
      %v442 = vsel %vm437, %v432, %v434
      %v443 = vsel %vm437, %v434, %v436
      %v450 = vld [vmem:[%s1] sm:$0xff]
      %v451 = vld [vmem:[%s1 + $0x8] sm:$0xf]
      %v452 = vld [vmem:[%s1 + $0xc] sm:$0xff]
      %v453 = vld [vmem:[%s1 + $0x14] sm:$0xf]
      %v454 = vld [vmem:[%s1 + $0x18] sm:$0xff]
      %v455 = vld [vmem:[%s1 + $0x20] sm:$0xf]
      %v456 = vld [vmem:[%s1 + $0x24] sm:$0xff]
      %v457 = vld [vmem:[%s1 + $0x2c] sm:$0xf]
      %v458 = vld [vmem:[%s1 + $0x30] sm:$0xff]
      %v459 = vld [vmem:[%s1 + $0x38] sm:$0xf]
      %v460 = vld [vmem:[%s1 + $0x3c] sm:$0xff]
      %v461 = vld [vmem:[%s1 + $0x44] sm:$0xf]
      %v462 = vld [vmem:[%s1 + $0x48] sm:$0xff]
      %v463 = vld [vmem:[%s1 + $0x50] sm:$0xf]
      %v464 = vld [vmem:[%s1 + $0x54] sm:$0xff]
      %v465 = vld [vmem:[%s1 + $0x5c] sm:$0xf]
      %v466 = vld [vmem:[%s2] sm:$0xff]
      %v467 = vld [vmem:[%s2 + $0x8] sm:$0xff]
      %v468 = vld [vmem:[%s2 + $0x10] sm:$0xff]
      %v469 = vld [vmem:[%s2 + $0x18] sm:$0xff]
      %v470 = vld [vmem:[%s2 + $0x20] sm:$0xff]
      %v471 = vld [vmem:[%s2 + $0x28] sm:$0xff]
      %v472 = vld [vmem:[%s2 + $0x30] sm:$0xff]
      %v473 = vld [vmem:[%s2 + $0x38] sm:$0xff]
      %475 = vset.pattern.permute.xlu0 0
      %476 = vperm.xlu0 %475, %v466
      %v477 = vpop.permute.xlu0 %476
      %480 = vset.pattern.permute.xlu0 0
      %481 = vperm.xlu0 %480, %v467
      %v482 = vpop.permute.xlu0 %481
      %485 = vset.pattern.permute.xlu0 0
      %486 = vperm.xlu0 %485, %v468
      %v487 = vpop.permute.xlu0 %486
      %490 = vset.pattern.permute.xlu0 0
      %491 = vperm.xlu0 %490, %v469
      %v492 = vpop.permute.xlu0 %491
      %495 = vset.pattern.permute.xlu0 0
      %496 = vperm.xlu0 %495, %v470
      %v497 = vpop.permute.xlu0 %496
      %500 = vset.pattern.permute.xlu0 0
      %501 = vperm.xlu0 %500, %v471
      %v502 = vpop.permute.xlu0 %501
      %505 = vset.pattern.permute.xlu0 0
      %506 = vperm.xlu0 %505, %v472
      %v507 = vpop.permute.xlu0 %506
      %510 = vset.pattern.permute.xlu0 0
      %511 = vperm.xlu0 %510, %v473
      %v512 = vpop.permute.xlu0 %511
      %v530 = vunpack.c.l.b16 %v450
      %v531 = vunpack.c.h.b16 %v450
      %v532 = vunpack.c.l.b16 %v451
      %v533 = vunpack.c.l.b16 %v452
      %v534 = vunpack.c.h.b16 %v452
      %v535 = vunpack.c.l.b16 %v453
      %v536 = vunpack.c.l.b16 %v454
      %v537 = vunpack.c.h.b16 %v454
      %v538 = vunpack.c.l.b16 %v455
      %v539 = vunpack.c.l.b16 %v456
      %v540 = vunpack.c.h.b16 %v456
      %v541 = vunpack.c.l.b16 %v457
      %v542 = vunpack.c.l.b16 %v458
      %v543 = vunpack.c.h.b16 %v458
      %v544 = vunpack.c.l.b16 %v459
      %v545 = vunpack.c.l.b16 %v460
      %v546 = vunpack.c.h.b16 %v460
      %v547 = vunpack.c.l.b16 %v461
      %v548 = vunpack.c.l.b16 %v462
      %v549 = vunpack.c.h.b16 %v462
      %v550 = vunpack.c.l.b16 %v463
      %v551 = vunpack.c.l.b16 %v464
      %v552 = vunpack.c.h.b16 %v464
      %v553 = vunpack.c.l.b16 %v465
      %v554 = vpack.c.b16 %v533, %v530
      %v555 = vpack.c.b16 %v534, %v531
      %v556 = vpack.c.b16 %v535, %v532
      %v557 = vpack.c.b16 %v539, %v536
      %v558 = vpack.c.b16 %v540, %v537
      %v559 = vpack.c.b16 %v541, %v538
      %v560 = vpack.c.b16 %v545, %v542
      %v561 = vpack.c.b16 %v546, %v543
      %v562 = vpack.c.b16 %v547, %v544
      %v563 = vpack.c.b16 %v551, %v548
      %v564 = vpack.c.b16 %v552, %v549
      %v565 = vpack.c.b16 %v553, %v550
      %vm574 = vcmask 261120
      %v576 = vsel %vm574, %v556, 0
      %v579 = vsel %vm574, %v559, 0
      %v582 = vsel %vm574, %v562, 0
      %v585 = vsel %vm574, %v565, 0
      %587 = vmatpush.bf16.msra.mxu0 %v296
      %588 = vmatpush.bf16.msra.mxu0 %v293
      %589 = vmatpush.bf16.msra.mxu0 %v267
      %590 = vmatpush.bf16.msra.mxu0 %v264
      %591 = vmatpush.bf16.msra.mxu0 %v238
      %592 = vmatpush.bf16.msra.mxu0 %v235
      %593 = vmatpush.bf16.msra.mxu0 %v203
      %594 = vmatpush.bf16.msra.mxu0 %v200
      %595 = vmatmul.bf16.gmra.mxu0 %v554
      %v596 = vpop.f32.mrf.mxu0
      %v597 = vadd.f32 %v477, %v596
      %v598 = vpop.f32.mrf.mxu0
      %v599 = vadd.f32 %v482, %v598
      %600 = vmatmul.bf16.gmra.mxu0 %v557
      %v601 = vpop.f32.mrf.mxu0
      %v602 = vadd.f32 %v487, %v601
      %v603 = vpop.f32.mrf.mxu0
      %v604 = vadd.f32 %v492, %v603
      %605 = vmatmul.bf16.gmra.mxu0 %v560
      %v606 = vpop.f32.mrf.mxu0
      %v607 = vadd.f32 %v497, %v606
      %v608 = vpop.f32.mrf.mxu0
      %v609 = vadd.f32 %v502, %v608
      %610 = vmatmul.bf16.gmra.mxu0 %v563
      %v611 = vpop.f32.mrf.mxu0
      %v612 = vadd.f32 %v507, %v611
      %v613 = vpop.f32.mrf.mxu0
      %v614 = vadd.f32 %v512, %v613
      %615 = vdwg.mxu0
      %616 = vmatpush.bf16.msra.mxu0 %v412
      %617 = vmatpush.bf16.msra.mxu0 %v409
      %618 = vmatpush.bf16.msra.mxu0 %v383
      %619 = vmatpush.bf16.msra.mxu0 %v380
      %620 = vmatpush.bf16.msra.mxu0 %v354
      %621 = vmatpush.bf16.msra.mxu0 %v351
      %622 = vmatpush.bf16.msra.mxu0 %v325
      %623 = vmatpush.bf16.msra.mxu0 %v322
      %624 = vmatmul.bf16.gmra.mxu0 %v555
      %v625 = vpop.f32.mrf.mxu0
      %v626 = vadd.f32 %v597, %v625
      %v627 = vpop.f32.mrf.mxu0
      %v628 = vadd.f32 %v599, %v627
      %629 = vmatmul.bf16.gmra.mxu0 %v558
      %v630 = vpop.f32.mrf.mxu0
      %v631 = vadd.f32 %v602, %v630
      %v632 = vpop.f32.mrf.mxu0
      %v633 = vadd.f32 %v604, %v632
      %634 = vmatmul.bf16.gmra.mxu0 %v561
      %v635 = vpop.f32.mrf.mxu0
      %v636 = vadd.f32 %v607, %v635
      %v637 = vpop.f32.mrf.mxu0
      %v638 = vadd.f32 %v609, %v637
      %639 = vmatmul.bf16.gmra.mxu0 %v564
      %v640 = vpop.f32.mrf.mxu0
      %v641 = vadd.f32 %v612, %v640
      %v642 = vpop.f32.mrf.mxu0
      %v643 = vadd.f32 %v614, %v642
      %644 = vdwg.mxu0
      %645 = vmatpush.bf16.msra.mxu0 0
      %646 = vmatpush.bf16.msra.mxu0 0
      %647 = vmatpush.bf16.msra.mxu0 0
      %648 = vmatpush.bf16.msra.mxu0 0
      %649 = vmatpush.bf16.msra.mxu0 0
      %650 = vmatpush.bf16.msra.mxu0 0
      %651 = vmatpush.bf16.msra.mxu0 %v441
      %652 = vmatpush.bf16.msra.mxu0 %v438
      %653 = vmatmul.bf16.gmra.mxu0 %v576
      %v654 = vpop.f32.mrf.mxu0
      %v655 = vadd.f32 %v626, %v654
      %v656 = vpop.f32.mrf.mxu0
      %v657 = vadd.f32 %v628, %v656
      %658 = vmatmul.bf16.gmra.mxu0 %v579
      %v659 = vpop.f32.mrf.mxu0
      %v660 = vadd.f32 %v631, %v659
      %v661 = vpop.f32.mrf.mxu0
      %v662 = vadd.f32 %v633, %v661
      %663 = vmatmul.bf16.gmra.mxu0 %v582
      %v664 = vpop.f32.mrf.mxu0
      %v665 = vadd.f32 %v636, %v664
      %v666 = vpop.f32.mrf.mxu0
      %v667 = vadd.f32 %v638, %v666
      %668 = vmatmul.bf16.gmra.mxu0 %v585
      %v669 = vpop.f32.mrf.mxu0
      %v670 = vadd.f32 %v641, %v669
      %v671 = vpop.f32.mrf.mxu0
      %v672 = vadd.f32 %v643, %v671
      %673 = vdwg.mxu0
      %674 = vmatpush.bf16.msra.mxu0 %v297
      %675 = vmatpush.bf16.msra.mxu0 %v294
      %676 = vmatpush.bf16.msra.mxu0 %v268
      %677 = vmatpush.bf16.msra.mxu0 %v265
      %678 = vmatpush.bf16.msra.mxu0 %v239
      %679 = vmatpush.bf16.msra.mxu0 %v236
      %680 = vmatpush.bf16.msra.mxu0 %v204
      %681 = vmatpush.bf16.msra.mxu0 %v201
      %682 = vmatmul.bf16.gmra.mxu0 %v554
      %v683 = vpop.f32.mrf.mxu0
      %v684 = vadd.f32 %v477, %v683
      %v685 = vpop.f32.mrf.mxu0
      %v686 = vadd.f32 %v482, %v685
      %687 = vmatmul.bf16.gmra.mxu0 %v557
      %v688 = vpop.f32.mrf.mxu0
      %v689 = vadd.f32 %v487, %v688
      %v690 = vpop.f32.mrf.mxu0
      %v691 = vadd.f32 %v492, %v690
      %692 = vmatmul.bf16.gmra.mxu0 %v560
      %v693 = vpop.f32.mrf.mxu0
      %v694 = vadd.f32 %v497, %v693
      %v695 = vpop.f32.mrf.mxu0
      %v696 = vadd.f32 %v502, %v695
      %697 = vmatmul.bf16.gmra.mxu0 %v563
      %v698 = vpop.f32.mrf.mxu0
      %v699 = vadd.f32 %v507, %v698
      %v700 = vpop.f32.mrf.mxu0
      %v701 = vadd.f32 %v512, %v700
      %702 = vdwg.mxu0
      %703 = vmatpush.bf16.msra.mxu0 %v413
      %704 = vmatpush.bf16.msra.mxu0 %v410
      %705 = vmatpush.bf16.msra.mxu0 %v384
      %706 = vmatpush.bf16.msra.mxu0 %v381
      %707 = vmatpush.bf16.msra.mxu0 %v355
      %708 = vmatpush.bf16.msra.mxu0 %v352
      %709 = vmatpush.bf16.msra.mxu0 %v326
      %710 = vmatpush.bf16.msra.mxu0 %v323
      %711 = vmatmul.bf16.gmra.mxu0 %v555
      %v712 = vpop.f32.mrf.mxu0
      %v713 = vadd.f32 %v684, %v712
      %v714 = vpop.f32.mrf.mxu0
      %v715 = vadd.f32 %v686, %v714
      %716 = vmatmul.bf16.gmra.mxu0 %v558
      %v717 = vpop.f32.mrf.mxu0
      %v718 = vadd.f32 %v689, %v717
      %v719 = vpop.f32.mrf.mxu0
      %v720 = vadd.f32 %v691, %v719
      %721 = vmatmul.bf16.gmra.mxu0 %v561
      %v722 = vpop.f32.mrf.mxu0
      %v723 = vadd.f32 %v694, %v722
      %v724 = vpop.f32.mrf.mxu0
      %v725 = vadd.f32 %v696, %v724
      %726 = vmatmul.bf16.gmra.mxu0 %v564
      %v727 = vpop.f32.mrf.mxu0
      %v728 = vadd.f32 %v699, %v727
      %v729 = vpop.f32.mrf.mxu0
      %v730 = vadd.f32 %v701, %v729
      %731 = vdwg.mxu0
      %732 = vmatpush.bf16.msra.mxu0 0
      %733 = vmatpush.bf16.msra.mxu0 0
      %734 = vmatpush.bf16.msra.mxu0 0
      %735 = vmatpush.bf16.msra.mxu0 0
      %736 = vmatpush.bf16.msra.mxu0 0
      %737 = vmatpush.bf16.msra.mxu0 0
      %738 = vmatpush.bf16.msra.mxu0 %v442
      %739 = vmatpush.bf16.msra.mxu0 %v439
      %740 = vmatmul.bf16.gmra.mxu0 %v576
      %v741 = vpop.f32.mrf.mxu0
      %v742 = vadd.f32 %v713, %v741
      %v743 = vpop.f32.mrf.mxu0
      %v744 = vadd.f32 %v715, %v743
      %745 = vmatmul.bf16.gmra.mxu0 %v579
      %v746 = vpop.f32.mrf.mxu0
      %v747 = vadd.f32 %v718, %v746
      %v748 = vpop.f32.mrf.mxu0
      %v749 = vadd.f32 %v720, %v748
      %750 = vmatmul.bf16.gmra.mxu0 %v582
      %v751 = vpop.f32.mrf.mxu0
      %v752 = vadd.f32 %v723, %v751
      %v753 = vpop.f32.mrf.mxu0
      %v754 = vadd.f32 %v725, %v753
      %755 = vmatmul.bf16.gmra.mxu0 %v585
      %v756 = vpop.f32.mrf.mxu0
      %v757 = vadd.f32 %v728, %v756
      %v758 = vpop.f32.mrf.mxu0
      %v759 = vadd.f32 %v730, %v758
      %760 = vdwg.mxu0
      %761 = vmatpush.bf16.msra.mxu0 %v298
      %762 = vmatpush.bf16.msra.mxu0 %v295
      %763 = vmatpush.bf16.msra.mxu0 %v269
      %764 = vmatpush.bf16.msra.mxu0 %v266
      %765 = vmatpush.bf16.msra.mxu0 %v240
      %766 = vmatpush.bf16.msra.mxu0 %v237
      %767 = vmatpush.bf16.msra.mxu0 %v205
      %768 = vmatpush.bf16.msra.mxu0 %v202
      %769 = vmatmul.bf16.gmra.mxu0 %v554
      %v770 = vpop.f32.mrf.mxu0
      %v771 = vadd.f32 %v477, %v770
      %v772 = vpop.f32.mrf.mxu0
      %v773 = vadd.f32 %v482, %v772
      %774 = vmatmul.bf16.gmra.mxu0 %v557
      %v775 = vpop.f32.mrf.mxu0
      %v776 = vadd.f32 %v487, %v775
      %v777 = vpop.f32.mrf.mxu0
      %v778 = vadd.f32 %v492, %v777
      %779 = vmatmul.bf16.gmra.mxu0 %v560
      %v780 = vpop.f32.mrf.mxu0
      %v781 = vadd.f32 %v497, %v780
      %v782 = vpop.f32.mrf.mxu0
      %v783 = vadd.f32 %v502, %v782
      %784 = vmatmul.bf16.gmra.mxu0 %v563
      %v785 = vpop.f32.mrf.mxu0
      %v786 = vadd.f32 %v507, %v785
      %v787 = vpop.f32.mrf.mxu0
      %v788 = vadd.f32 %v512, %v787
      %789 = vdwg.mxu0
      %790 = vmatpush.bf16.msra.mxu0 %v414
      %791 = vmatpush.bf16.msra.mxu0 %v411
      %792 = vmatpush.bf16.msra.mxu0 %v385
      %793 = vmatpush.bf16.msra.mxu0 %v382
      %794 = vmatpush.bf16.msra.mxu0 %v356
      %795 = vmatpush.bf16.msra.mxu0 %v353
      %796 = vmatpush.bf16.msra.mxu0 %v327
      %797 = vmatpush.bf16.msra.mxu0 %v324
      %798 = vmatmul.bf16.gmra.mxu0 %v555
      %v799 = vpop.f32.mrf.mxu0
      %v800 = vadd.f32 %v771, %v799
      %v801 = vpop.f32.mrf.mxu0
      %v802 = vadd.f32 %v773, %v801
      %803 = vmatmul.bf16.gmra.mxu0 %v558
      %v804 = vpop.f32.mrf.mxu0
      %v805 = vadd.f32 %v776, %v804
      %v806 = vpop.f32.mrf.mxu0
      %v807 = vadd.f32 %v778, %v806
      %808 = vmatmul.bf16.gmra.mxu0 %v561
      %v809 = vpop.f32.mrf.mxu0
      %v810 = vadd.f32 %v781, %v809
      %v811 = vpop.f32.mrf.mxu0
      %v812 = vadd.f32 %v783, %v811
      %813 = vmatmul.bf16.gmra.mxu0 %v564
      %v814 = vpop.f32.mrf.mxu0
      %v815 = vadd.f32 %v786, %v814
      %v816 = vpop.f32.mrf.mxu0
      %v817 = vadd.f32 %v788, %v816
      %818 = vdwg.mxu0
      %819 = vmatpush.bf16.msra.mxu0 0
      %820 = vmatpush.bf16.msra.mxu0 0
      %821 = vmatpush.bf16.msra.mxu0 0
      %822 = vmatpush.bf16.msra.mxu0 0
      %823 = vmatpush.bf16.msra.mxu0 0
      %824 = vmatpush.bf16.msra.mxu0 0
      %825 = vmatpush.bf16.msra.mxu0 %v443
      %826 = vmatpush.bf16.msra.mxu0 %v440
      %827 = vmatmul.bf16.gmra.mxu0 %v576
      %v828 = vpop.f32.mrf.mxu0
      %v829 = vadd.f32 %v800, %v828
      %v830 = vpop.f32.mrf.mxu0
      %v831 = vadd.f32 %v802, %v830
      %832 = vmatmul.bf16.gmra.mxu0 %v579
      %v833 = vpop.f32.mrf.mxu0
      %v834 = vadd.f32 %v805, %v833
      %v835 = vpop.f32.mrf.mxu0
      %v836 = vadd.f32 %v807, %v835
      %837 = vmatmul.bf16.gmra.mxu0 %v582
      %v838 = vpop.f32.mrf.mxu0
      %v839 = vadd.f32 %v810, %v838
      %v840 = vpop.f32.mrf.mxu0
      %v841 = vadd.f32 %v812, %v840
      %842 = vmatmul.bf16.gmra.mxu0 %v585
      %v843 = vpop.f32.mrf.mxu0
      %v844 = vadd.f32 %v815, %v843
      %v845 = vpop.f32.mrf.mxu0
      %v846 = vadd.f32 %v817, %v845
      %847 = vdwg.mxu0
      %vm848 = vcmp.gt.f32.partialorder %v655, 0.0
      %vm849 = vcmp.gt.f32.partialorder %v742, 0.0
      %vm850 = vcmp.gt.f32.partialorder %v829, 0.0
      %vm851 = vcmp.gt.f32.partialorder %v657, 0.0
      %vm852 = vcmp.gt.f32.partialorder %v744, 0.0
      %vm853 = vcmp.gt.f32.partialorder %v831, 0.0
      %vm854 = vcmp.gt.f32.partialorder %v660, 0.0
      %vm855 = vcmp.gt.f32.partialorder %v747, 0.0
      %vm856 = vcmp.gt.f32.partialorder %v834, 0.0
      %vm857 = vcmp.gt.f32.partialorder %v662, 0.0
      %vm858 = vcmp.gt.f32.partialorder %v749, 0.0
      %vm859 = vcmp.gt.f32.partialorder %v836, 0.0
      %vm860 = vcmp.gt.f32.partialorder %v665, 0.0
      %vm861 = vcmp.gt.f32.partialorder %v752, 0.0
      %vm862 = vcmp.gt.f32.partialorder %v839, 0.0
      %vm863 = vcmp.gt.f32.partialorder %v667, 0.0
      %vm864 = vcmp.gt.f32.partialorder %v754, 0.0
      %vm865 = vcmp.gt.f32.partialorder %v841, 0.0
      %vm866 = vcmp.gt.f32.partialorder %v670, 0.0
      %vm867 = vcmp.gt.f32.partialorder %v757, 0.0
      %vm868 = vcmp.gt.f32.partialorder %v844, 0.0
      %vm869 = vcmp.gt.f32.partialorder %v672, 0.0
      %vm870 = vcmp.gt.f32.partialorder %v759, 0.0
      %vm871 = vcmp.gt.f32.partialorder %v846, 0.0
      %v872 = vmul.f32 %v655, 0.2
      %v873 = vmul.f32 %v742, 0.2
      %v874 = vmul.f32 %v829, 0.2
      %v875 = vmul.f32 %v657, 0.2
      %v876 = vmul.f32 %v744, 0.2
      %v877 = vmul.f32 %v831, 0.2
      %v878 = vmul.f32 %v660, 0.2
      %v879 = vmul.f32 %v747, 0.2
      %v880 = vmul.f32 %v834, 0.2
      %v881 = vmul.f32 %v662, 0.2
      %v882 = vmul.f32 %v749, 0.2
      %v883 = vmul.f32 %v836, 0.2
      %v884 = vmul.f32 %v665, 0.2
      %v885 = vmul.f32 %v752, 0.2
      %v886 = vmul.f32 %v839, 0.2
      %v887 = vmul.f32 %v667, 0.2
      %v888 = vmul.f32 %v754, 0.2
      %v889 = vmul.f32 %v841, 0.2
      %v890 = vmul.f32 %v670, 0.2
      %v891 = vmul.f32 %v757, 0.2
      %v892 = vmul.f32 %v844, 0.2
      %v893 = vmul.f32 %v672, 0.2
      %v894 = vmul.f32 %v759, 0.2
      %v895 = vmul.f32 %v846, 0.2
      %v896 = vsel %vm848, %v655, %v872
      %v897 = vsel %vm849, %v742, %v873
      %v898 = vsel %vm850, %v829, %v874
      %v899 = vsel %vm851, %v657, %v875
      %v900 = vsel %vm852, %v744, %v876
      %v901 = vsel %vm853, %v831, %v877
      %v902 = vsel %vm854, %v660, %v878
      %v903 = vsel %vm855, %v747, %v879
      %v904 = vsel %vm856, %v834, %v880
      %v905 = vsel %vm857, %v662, %v881
      %v906 = vsel %vm858, %v749, %v882
      %v907 = vsel %vm859, %v836, %v883
      %v908 = vsel %vm860, %v665, %v884
      %v909 = vsel %vm861, %v752, %v885
      %v910 = vsel %vm862, %v839, %v886
      %v911 = vsel %vm863, %v667, %v887
      %v912 = vsel %vm864, %v754, %v888
      %v913 = vsel %vm865, %v841, %v889
      %v914 = vsel %vm866, %v670, %v890
      %v915 = vsel %vm867, %v757, %v891
      %v916 = vsel %vm868, %v844, %v892
      %v917 = vsel %vm869, %v672, %v893
      %v918 = vsel %vm870, %v759, %v894
      %v919 = vsel %vm871, %v846, %v895
      %v920 = vpack.c.bf16 %v897, %v896
      %v921 = vpack.c.bf16 %v898, %v898
      %v922 = vpack.c.bf16 %v900, %v899
      %v923 = vpack.c.bf16 %v901, %v901
      %v924 = vpack.c.bf16 %v903, %v902
      %v925 = vpack.c.bf16 %v904, %v904
      %v926 = vpack.c.bf16 %v906, %v905
      %v927 = vpack.c.bf16 %v907, %v907
      %v928 = vpack.c.bf16 %v909, %v908
      %v929 = vpack.c.bf16 %v910, %v910
      %v930 = vpack.c.bf16 %v912, %v911
      %v931 = vpack.c.bf16 %v913, %v913
      %v932 = vpack.c.bf16 %v915, %v914
      %v933 = vpack.c.bf16 %v916, %v916
      %v934 = vpack.c.bf16 %v918, %v917
      %v935 = vpack.c.bf16 %v919, %v919
      %936 = vst [vmem:[%s170] sm:$0xff] %v920
      %937 = vst [vmem:[%s170 + $0x8] sm:$0xf] %v921
      %938 = vst [vmem:[%s170 + $0xc] sm:$0xff] %v922
      %939 = vst [vmem:[%s170 + $0x14] sm:$0xf] %v923
      %940 = vst [vmem:[%s170 + $0x18] sm:$0xff] %v924
      %941 = vst [vmem:[%s170 + $0x20] sm:$0xf] %v925
      %942 = vst [vmem:[%s170 + $0x24] sm:$0xff] %v926
      %943 = vst [vmem:[%s170 + $0x2c] sm:$0xf] %v927
      %944 = vst [vmem:[%s170 + $0x30] sm:$0xff] %v928
      %945 = vst [vmem:[%s170 + $0x38] sm:$0xf] %v929
      %946 = vst [vmem:[%s170 + $0x3c] sm:$0xff] %v930
      %947 = vst [vmem:[%s170 + $0x44] sm:$0xf] %v931
      %948 = vst [vmem:[%s170 + $0x48] sm:$0xff] %v932
      %949 = vst [vmem:[%s170 + $0x50] sm:$0xf] %v933
      %950 = vst [vmem:[%s170 + $0x54] sm:$0xff] %v934
      %951 = vst [vmem:[%s170 + $0x5c] sm:$0xf] %v935
      %p952 = scmp.lt.s32.totalorder %s14, 1
      %s953 = scalar_select %p952, %s14, 1
      %s954 = smul.addr %s953, 24
      %s955 = smul.addr %s954, 4
      %s956 = scalar_lea.vmem %s3, %s955
      // Predicated region
      $region33: #{generator_forward.8} parent=31 // pred_check
        %p957 = pneg %p100
      $region34: #{generator_forward.8} parent=31 // pred_check_branch
        %959 = sbr.rel (%p957) target = $region36
      $region35: #{generator_forward.8} parent=31 // pred_region
        _
      $region36: #{generator_forward.8} parent=31 // pred_fallthru
        _
    $region32: #{generator_forward.8} parent=5 // pred_fallthru
      _
    %p960 = scmp.le.s32.totalorder 2, %s9
    // Predicated region
    $region37: #{generator_forward.8} parent=5 // pred_check
      %p961 = pneg %p960
    $region38: #{generator_forward.8} parent=5 // pred_check_branch
      %963 = sbr.rel (%p961) target = $region40
    $region39: #{generator_forward.8} parent=5 // pred_region
      %s964 = ssub.s32 %s9, 2
      // Predicated region
      $region41: #{generator_forward.8} parent=39 // pred_check
        %p965 = pneg %p106
      $region42: #{generator_forward.8} parent=39 // pred_check_branch
        %967 = sbr.rel (%p965) target = $region44
      $region43: #{generator_forward.8} parent=39 // pred_region
        %p968 = scmp.lt.s32.totalorder %s15, 1
        %s969 = scalar_select %p968, %s15, 1
        %s970 = smul.addr %s969, 24
        %s971 = smul.addr %s970, 4
        %s972 = scalar_lea.vmem %s3, %s971
      $region44: #{generator_forward.8} parent=39 // pred_fallthru
        _
    $region40: #{generator_forward.8} parent=5 // pred_fallthru
      _
  $region6: #{generator_forward.8} parent=0 // loop_footer
    %s13 = sadd.s32 1, %s9
  $region7: #{generator_forward.8} parent=0 // loop_footer_branch
    %8 = sbr.rel target = $region3
  $region8: #{generator_forward.8} parent=0 // loop_exit
    _

// kernel: generator_forward.9
$region0: #{generator_forward.9}
  #allocation0 [shape = 'u32[]', space=smem, size = 0x4, offset = 0x4, fixed_abs, tag = 'smem constant byte address 0x4 - core index']
  #allocation1 [shape = 'u32[72,128]{1,0:T(1,128)}', space=vmem, size = 0x9000, scoped, tag = 'internal scratch']
  %s0 = inlined_call_operand.vmem [shape: bf16[2,16,1350], index: 0, kind: input, shape index: {}]
  %s1 = inlined_call_operand.vmem [shape: bf16[4,144], index: 1, kind: input, shape index: {}]
  %s2 = inlined_call_operand.vmem [shape: f32[4,1], index: 2, kind: input, shape index: {}]
  %s3 = inlined_call_operand.vmem [shape: f32[2,4,1280], index: 3, kind: output, shape index: {}]
  %s4 = sld [smem:[#allocation0]]
  $region45: #{generator_forward.9} parent=0
    _
  %s6 = ssub.s32 1, %s4
  %s7 = scalar_select 0, %s6, %s4
  loop: start=0, step=1, limit=4
  $region2: #{generator_forward.9} parent=0 // loop_pre_header
    _
  $region3: #{generator_forward.9} parent=0 // loop_header
    %s9 = sphi 0, %s13
    %p10 = scmp.ge.s32.totalorder %s9, 4
    %s19 = sphi 0, %s21
    %s22 = sphi 0, %s19
    %s23 = sphi 0, %s22
    %s39 = sphi 0, %s23
    %s43 = sphi 0, %s43
    %s45 = sphi 0, %s43
    %s46 = sphi 0, %s45
    %s60 = sphi 0, %s46
    %s64 = sphi 0, %s64
    %s66 = sphi 0, %s64
    %s67 = sphi 0, %s66
    %s81 = sphi 0, %s67
    %s87 = sphi 0, %s89
    %s90 = sphi 0, %s87
    %s91 = sphi 0, %s90
    %s107 = sphi 0, %s91
  $region4: #{generator_forward.9} parent=0 // loop_header_branch
    %12 = sbr.rel (%p10) target = $region8
  $region5: #{generator_forward.9} parent=0 // loop_body
    %s14 = ssub.s32 %s9, 1
    %s15 = ssub.s32 %s9, 2
    %s16 = sadd.s32 %s9, 1
    %s17 = ssub.s32 %s9, %s16
    %p18 = scmp.eq.s32.totalorder %s17, 0
    %s20 = sadd.s32 %s19, 1
    %s21 = scalar_select %p18, %s19, %s20
    %p24 = pneg %p18
    %p25 = scmp.eq.s32.totalorder %s9, 1
    %p26 = por %p24, %p25
    %p27 = scmp.ne.s32.totalorder %s19, %s22
    %p28 = scmp.eq.s32.totalorder %s9, 0
    %p29 = por %p27, %p28
    %p30 = scmp.ne.s32.totalorder %s19, %s22
    %p31 = scmp.eq.s32.totalorder %s14, 1
    %p32 = por %p30, %p31
    %p33 = scmp.ne.s32.totalorder %s22, %s23
    %p34 = scmp.eq.s32.totalorder %s14, 0
    %p35 = por %p33, %p34
    %p36 = scmp.ne.s32.totalorder %s22, %s23
    %p37 = scmp.eq.s32.totalorder %s15, 1
    %p38 = por %p36, %p37
    %p40 = scmp.ne.s32.totalorder %s23, %s39
    %p41 = scmp.eq.s32.totalorder %s15, 0
    %p42 = por %p40, %p41
    %s44 = sadd.s32 %s43, 1
    %p47 = scmp.eq.s32.totalorder %s9, 1
    %p48 = scmp.ne.s32.totalorder %s43, %s45
    %p49 = scmp.eq.s32.totalorder %s9, 0
    %p50 = por %p48, %p49
    %p51 = scmp.ne.s32.totalorder %s43, %s45
    %p52 = scmp.eq.s32.totalorder %s14, 1
    %p53 = por %p51, %p52
    %p54 = scmp.ne.s32.totalorder %s45, %s46
    %p55 = scmp.eq.s32.totalorder %s14, 0
    %p56 = por %p54, %p55
    %p57 = scmp.ne.s32.totalorder %s45, %s46
    %p58 = scmp.eq.s32.totalorder %s15, 1
    %p59 = por %p57, %p58
    %p61 = scmp.ne.s32.totalorder %s46, %s60
    %p62 = scmp.eq.s32.totalorder %s15, 0
    %p63 = por %p61, %p62
    %s65 = sadd.s32 %s64, 1
    %p68 = scmp.eq.s32.totalorder %s9, 1
    %p69 = scmp.ne.s32.totalorder %s64, %s66
    %p70 = scmp.eq.s32.totalorder %s9, 0
    %p71 = por %p69, %p70
    %p72 = scmp.ne.s32.totalorder %s64, %s66
    %p73 = scmp.eq.s32.totalorder %s14, 1
    %p74 = por %p72, %p73
    %p75 = scmp.ne.s32.totalorder %s66, %s67
    %p76 = scmp.eq.s32.totalorder %s14, 0
    %p77 = por %p75, %p76
    %p78 = scmp.ne.s32.totalorder %s66, %s67
    %p79 = scmp.eq.s32.totalorder %s15, 1
    %p80 = por %p78, %p79
    %p82 = scmp.ne.s32.totalorder %s67, %s81
    %p83 = scmp.eq.s32.totalorder %s15, 0
    %p84 = por %p82, %p83
    %s85 = ssub.s32 %s9, %s16
    %p86 = scmp.eq.s32.totalorder %s85, 0
    %s88 = sadd.s32 %s87, 1
    %s89 = scalar_select %p86, %s87, %s88
    %p92 = pneg %p86
    %p93 = scmp.eq.s32.totalorder %s9, 1
    %p94 = por %p92, %p93
    %p95 = scmp.ne.s32.totalorder %s87, %s90
    %p96 = scmp.eq.s32.totalorder %s9, 0
    %p97 = por %p95, %p96
    %p98 = scmp.ne.s32.totalorder %s87, %s90
    %p99 = scmp.eq.s32.totalorder %s14, 1
    %p100 = por %p98, %p99
    %p101 = scmp.ne.s32.totalorder %s90, %s91
    %p102 = scmp.eq.s32.totalorder %s14, 0
    %p103 = por %p101, %p102
    %p104 = scmp.ne.s32.totalorder %s90, %s91
    %p105 = scmp.eq.s32.totalorder %s15, 1
    %p106 = por %p104, %p105
    %p108 = scmp.ne.s32.totalorder %s91, %s107
    %p109 = scmp.eq.s32.totalorder %s15, 0
    %p110 = por %p108, %p109
    %p111 = scmp.le.s32.totalorder 1, %s9
    %p112 = scmp.lt.s32.totalorder %s9, 3
    %p113 = pnand %p111, %p112
    %p114 = pneg %p113
    // Predicated region
    $region9: #{generator_forward.9} parent=5 // pred_check
      _
    $region10: #{generator_forward.9} parent=5 // pred_check_branch
      %116 = sbr.rel (%p113) target = $region12
    $region11: #{generator_forward.9} parent=5 // pred_region
      %s117 = ssub.s32 %s9, 1
      // Predicated region
      $region13: #{generator_forward.9} parent=11 // pred_check
        %p118 = pneg %p56
      $region14: #{generator_forward.9} parent=11 // pred_check_branch
        %120 = sbr.rel (%p118) target = $region16
      $region15: #{generator_forward.9} parent=11 // pred_region
        _
      $region16: #{generator_forward.9} parent=11 // pred_fallthru
        _
      // Predicated region
      $region17: #{generator_forward.9} parent=11 // pred_check
        %p121 = pneg %p77
      $region18: #{generator_forward.9} parent=11 // pred_check_branch
        %123 = sbr.rel (%p121) target = $region20
      $region19: #{generator_forward.9} parent=11 // pred_region
        _
      $region20: #{generator_forward.9} parent=11 // pred_fallthru
        _
    $region12: #{generator_forward.9} parent=5 // pred_fallthru
      _
    %p124 = scmp.lt.s32.totalorder %s9, 2
    // Predicated region
    $region21: #{generator_forward.9} parent=5 // pred_check
      %p125 = pneg %p124
    $region22: #{generator_forward.9} parent=5 // pred_check_branch
      %127 = sbr.rel (%p125) target = $region24
    $region23: #{generator_forward.9} parent=5 // pred_region
      // Predicated region
      $region25: #{generator_forward.9} parent=23 // pred_check
        %p128 = pneg %p29
      $region26: #{generator_forward.9} parent=23 // pred_check_branch
        %130 = sbr.rel (%p128) target = $region28
      $region27: #{generator_forward.9} parent=23 // pred_region
        %p131 = scmp.lt.s32.totalorder %s9, 1
        %s132 = scalar_select %p131, %s9, 1
        %s133 = smul.addr %s132, 22
        %s134 = smul.addr %s133, 4
        %s135 = scalar_lea.vmem %s0, %s134
      $region28: #{generator_forward.9} parent=23 // pred_fallthru
        _
    $region24: #{generator_forward.9} parent=5 // pred_fallthru
      _
    %p136 = scmp.le.s32.totalorder 1, %s9
    %p137 = scmp.lt.s32.totalorder %s9, 3
    %p138 = pnand %p136, %p137
    %p139 = pneg %p138
    // Predicated region
    $region29: #{generator_forward.9} parent=5 // pred_check
      _
    $region30: #{generator_forward.9} parent=5 // pred_check_branch
      %141 = sbr.rel (%p138) target = $region32
    $region31: #{generator_forward.9} parent=5 // pred_region
      %s142 = ssub.s32 %s9, 1
      %p143 = scmp.lt.s32.totalorder %s14, 1
      %s144 = scalar_select %p143, %s14, 1
      %s145 = smul.addr %s144, 22
      %s146 = smul.addr %s145, 4
      %s147 = scalar_lea.vmem %s0, %s146
      %p148 = pneg %p35
      %p149 = pneg %p32
      %p150 = pneg %p56
      %p151 = pneg %p53
      %p152 = pneg %p77
      %p153 = pneg %p74
      %p154 = pneg %p103
      %p155 = pneg %p100
      %p156 = scmp.lt.s32.totalorder %s14, 1
      %s157 = scalar_select %p156, %s14, 1
      %s158 = smul.addr %s157, 10
      %s159 = smul.addr %s158, 4
      %s160 = scalar_lea.vmem %s3, %s159
      %p161 = scmp.lt.s32.totalorder %s14, 1
      %s162 = scalar_select %p161, %s14, 1
      %s163 = smul.addr %s162, 22
      %s164 = smul.addr %s163, 4
      %s165 = scalar_lea.vmem %s0, %s164
      %p166 = scmp.lt.s32.totalorder %s14, 1
      %s167 = scalar_select %p166, %s14, 1
      %s168 = smul.addr %s167, 10
      %s169 = smul.addr %s168, 4
      %s170 = scalar_lea.vmem %s3, %s169
      %v172 = vld [vmem:[%s165] sm:$0xff]
      %v173 = vld [vmem:[%s165 + $0x8] sm:$0xff]
      %v174 = vld [vmem:[%s165 + $0x10] sm:$0xff]
      %v175 = vld [vmem:[%s165 + $0x18] sm:$0xff]
      %v176 = vld [vmem:[%s165 + $0x20] sm:$0xff]
      %v177 = vld [vmem:[%s165 + $0x28] sm:$0xf]
      %v178 = vld [vmem:[%s165 + $0x2c] sm:$0xff]
      %v179 = vld [vmem:[%s165 + $0x34] sm:$0xff]
      %v180 = vld [vmem:[%s165 + $0x3c] sm:$0xff]
      %v181 = vld [vmem:[%s165 + $0x44] sm:$0xff]
      %v182 = vld [vmem:[%s165 + $0x4c] sm:$0xff]
      %v183 = vld [vmem:[%s165 + $0x54] sm:$0xf]
      %v194 = vunpack.c.l.b16 %v172
      %v195 = vunpack.c.h.b16 %v172
      %v196 = vunpack.c.l.b16 %v173
      %v197 = vunpack.c.h.b16 %v173
      %v198 = vunpack.c.l.b16 %v174
      %v199 = vunpack.c.h.b16 %v174
      %v200 = vunpack.c.l.b16 %v175
      %v201 = vunpack.c.h.b16 %v175
      %v202 = vunpack.c.l.b16 %v176
      %v203 = vunpack.c.h.b16 %v176
      %v204 = vunpack.c.l.b16 %v178
      %v205 = vunpack.c.h.b16 %v178
      %v206 = vunpack.c.l.b16 %v179
      %v207 = vunpack.c.h.b16 %v179
      %v208 = vunpack.c.l.b16 %v180
      %v209 = vunpack.c.h.b16 %v180
      %v210 = vunpack.c.l.b16 %v181
      %v211 = vunpack.c.h.b16 %v181
      %v212 = vunpack.c.l.b16 %v182
      %v213 = vunpack.c.h.b16 %v182
      %v214 = vpack.c.b16 %v204, %v194
      %v215 = vpack.c.b16 %v205, %v195
      %v216 = vpack.c.b16 %v206, %v196
      %v217 = vpack.c.b16 %v207, %v197
      %v218 = vpack.c.b16 %v208, %v198
      %v219 = vpack.c.b16 %v209, %v199
      %v220 = vpack.c.b16 %v210, %v200
      %v221 = vpack.c.b16 %v211, %v201
      %v222 = vpack.c.b16 %v212, %v202
      %v223 = vpack.c.b16 %v213, %v203
      %v236 = vunpack.c.l.b16 %v177
      %v237 = vunpack.c.l.b16 %v183
      %v238 = vpack.c.b16 %v237, %v236
      %239 = vrot.lane.b32.xlu0 %v214, 127
      %v240 = vpop.permute.xlu0 %239
      %241 = vrot.lane.b32.xlu0 %v215, 127
      %v242 = vpop.permute.xlu0 %241
      %243 = vrot.lane.b32.xlu0 %v216, 127
      %v244 = vpop.permute.xlu0 %243
      %245 = vrot.lane.b32.xlu0 %v217, 127
      %v246 = vpop.permute.xlu0 %245
      %247 = vrot.lane.b32.xlu0 %v218, 127
      %v248 = vpop.permute.xlu0 %247
      %249 = vrot.lane.b32.xlu0 %v219, 127
      %v250 = vpop.permute.xlu0 %249
      %251 = vrot.lane.b32.xlu0 %v220, 127
      %v252 = vpop.permute.xlu0 %251
      %253 = vrot.lane.b32.xlu0 %v221, 127
      %v254 = vpop.permute.xlu0 %253
      %255 = vrot.lane.b32.xlu0 %v222, 127
      %v256 = vpop.permute.xlu0 %255
      %257 = vrot.lane.b32.xlu0 %v223, 127
      %v258 = vpop.permute.xlu0 %257
      %259 = vrot.lane.b32.xlu0 %v238, 127
      %v260 = vpop.permute.xlu0 %259
      %vm261 = vcmask 1039360
      %v262 = vsel %vm261, %v240, %v242
      %v263 = vsel %vm261, %v242, %v244
      %v264 = vsel %vm261, %v244, %v246
      %v265 = vsel %vm261, %v246, %v248
      %v266 = vsel %vm261, %v248, %v250
      %v267 = vsel %vm261, %v250, %v252
      %v268 = vsel %vm261, %v252, %v254
      %v269 = vsel %vm261, %v254, %v256
      %v270 = vsel %vm261, %v256, %v258
      %v271 = vsel %vm261, %v258, %v260
      %282 = vrot.lane.b32.xlu0 %v214, 126
      %v283 = vpop.permute.xlu0 %282
      %284 = vrot.lane.b32.xlu0 %v215, 126
      %v285 = vpop.permute.xlu0 %284
      %286 = vrot.lane.b32.xlu0 %v216, 126
      %v287 = vpop.permute.xlu0 %286
      %288 = vrot.lane.b32.xlu0 %v217, 126
      %v289 = vpop.permute.xlu0 %288
      %290 = vrot.lane.b32.xlu0 %v218, 126
      %v291 = vpop.permute.xlu0 %290
      %292 = vrot.lane.b32.xlu0 %v219, 126
      %v293 = vpop.permute.xlu0 %292
      %294 = vrot.lane.b32.xlu0 %v220, 126
      %v295 = vpop.permute.xlu0 %294
      %296 = vrot.lane.b32.xlu0 %v221, 126
      %v297 = vpop.permute.xlu0 %296
      %298 = vrot.lane.b32.xlu0 %v222, 126
      %v299 = vpop.permute.xlu0 %298
      %300 = vrot.lane.b32.xlu0 %v223, 126
      %v301 = vpop.permute.xlu0 %300
      %302 = vrot.lane.b32.xlu0 %v238, 126
      %v303 = vpop.permute.xlu0 %302
      %vm304 = vcmask 1031168
      %v305 = vsel %vm304, %v283, %v285
      %v306 = vsel %vm304, %v285, %v287
      %v307 = vsel %vm304, %v287, %v289
      %v308 = vsel %vm304, %v289, %v291
      %v309 = vsel %vm304, %v291, %v293
      %v310 = vsel %vm304, %v293, %v295
      %v311 = vsel %vm304, %v295, %v297
      %v312 = vsel %vm304, %v297, %v299
      %v313 = vsel %vm304, %v299, %v301
      %v314 = vsel %vm304, %v301, %v303
      %325 = vrot.lane.b32.xlu0 %v214, 94
      %v326 = vpop.permute.xlu0 %325
      %327 = vrot.lane.b32.xlu0 %v215, 94
      %v328 = vpop.permute.xlu0 %327
      %329 = vrot.lane.b32.xlu0 %v216, 94
      %v330 = vpop.permute.xlu0 %329
      %331 = vrot.lane.b32.xlu0 %v217, 94
      %v332 = vpop.permute.xlu0 %331
      %333 = vrot.lane.b32.xlu0 %v218, 94
      %v334 = vpop.permute.xlu0 %333
      %335 = vrot.lane.b32.xlu0 %v219, 94
      %v336 = vpop.permute.xlu0 %335
      %337 = vrot.lane.b32.xlu0 %v220, 94
      %v338 = vpop.permute.xlu0 %337
      %339 = vrot.lane.b32.xlu0 %v221, 94
      %v340 = vpop.permute.xlu0 %339
      %341 = vrot.lane.b32.xlu0 %v222, 94
      %v342 = vpop.permute.xlu0 %341
      %343 = vrot.lane.b32.xlu0 %v223, 94
      %v344 = vpop.permute.xlu0 %343
      %345 = vrot.lane.b32.xlu0 %v238, 94
      %v346 = vpop.permute.xlu0 %345
      %vm347 = vcmask 769024
      %v348 = vsel %vm347, %v326, %v328
      %v349 = vsel %vm347, %v328, %v330
      %v350 = vsel %vm347, %v330, %v332
      %v351 = vsel %vm347, %v332, %v334
      %v352 = vsel %vm347, %v334, %v336
      %v353 = vsel %vm347, %v336, %v338
      %v354 = vsel %vm347, %v338, %v340
      %v355 = vsel %vm347, %v340, %v342
      %v356 = vsel %vm347, %v342, %v344
      %v357 = vsel %vm347, %v344, %v346
      %368 = vrot.lane.b32.xlu0 %v214, 93
      %v369 = vpop.permute.xlu0 %368
      %370 = vrot.lane.b32.xlu0 %v215, 93
      %v371 = vpop.permute.xlu0 %370
      %372 = vrot.lane.b32.xlu0 %v216, 93
      %v373 = vpop.permute.xlu0 %372
      %374 = vrot.lane.b32.xlu0 %v217, 93
      %v375 = vpop.permute.xlu0 %374
      %376 = vrot.lane.b32.xlu0 %v218, 93
      %v377 = vpop.permute.xlu0 %376
      %378 = vrot.lane.b32.xlu0 %v219, 93
      %v379 = vpop.permute.xlu0 %378
      %380 = vrot.lane.b32.xlu0 %v220, 93
      %v381 = vpop.permute.xlu0 %380
      %382 = vrot.lane.b32.xlu0 %v221, 93
      %v383 = vpop.permute.xlu0 %382
      %384 = vrot.lane.b32.xlu0 %v222, 93
      %v385 = vpop.permute.xlu0 %384
      %386 = vrot.lane.b32.xlu0 %v223, 93
      %v387 = vpop.permute.xlu0 %386
      %388 = vrot.lane.b32.xlu0 %v238, 93
      %v389 = vpop.permute.xlu0 %388
      %vm390 = vcmask 760832
      %v391 = vsel %vm390, %v369, %v371
      %v392 = vsel %vm390, %v371, %v373
      %v393 = vsel %vm390, %v373, %v375
      %v394 = vsel %vm390, %v375, %v377
      %v395 = vsel %vm390, %v377, %v379
      %v396 = vsel %vm390, %v379, %v381
      %v397 = vsel %vm390, %v381, %v383
      %v398 = vsel %vm390, %v383, %v385
      %v399 = vsel %vm390, %v385, %v387
      %v400 = vsel %vm390, %v387, %v389
      %411 = vrot.lane.b32.xlu0 %v214, 92
      %v412 = vpop.permute.xlu0 %411
      %413 = vrot.lane.b32.xlu0 %v215, 92
      %v414 = vpop.permute.xlu0 %413
      %415 = vrot.lane.b32.xlu0 %v216, 92
      %v416 = vpop.permute.xlu0 %415
      %417 = vrot.lane.b32.xlu0 %v217, 92
      %v418 = vpop.permute.xlu0 %417
      %419 = vrot.lane.b32.xlu0 %v218, 92
      %v420 = vpop.permute.xlu0 %419
      %421 = vrot.lane.b32.xlu0 %v219, 92
      %v422 = vpop.permute.xlu0 %421
      %423 = vrot.lane.b32.xlu0 %v220, 92
      %v424 = vpop.permute.xlu0 %423
      %425 = vrot.lane.b32.xlu0 %v221, 92
      %v426 = vpop.permute.xlu0 %425
      %427 = vrot.lane.b32.xlu0 %v222, 92
      %v428 = vpop.permute.xlu0 %427
      %429 = vrot.lane.b32.xlu0 %v223, 92
      %v430 = vpop.permute.xlu0 %429
      %431 = vrot.lane.b32.xlu0 %v238, 92
      %v432 = vpop.permute.xlu0 %431
      %vm433 = vcmask 752640
      %v434 = vsel %vm433, %v412, %v414
      %v435 = vsel %vm433, %v414, %v416
      %v436 = vsel %vm433, %v416, %v418
      %v437 = vsel %vm433, %v418, %v420
      %v438 = vsel %vm433, %v420, %v422
      %v439 = vsel %vm433, %v422, %v424
      %v440 = vsel %vm433, %v424, %v426
      %v441 = vsel %vm433, %v426, %v428
      %v442 = vsel %vm433, %v428, %v430
      %v443 = vsel %vm433, %v430, %v432
      %454 = vrot.lane.b32.xlu0 %v214, 60
      %v455 = vpop.permute.xlu0 %454
      %456 = vrot.lane.b32.xlu0 %v215, 60
      %v457 = vpop.permute.xlu0 %456
      %458 = vrot.lane.b32.xlu0 %v216, 60
      %v459 = vpop.permute.xlu0 %458
      %460 = vrot.lane.b32.xlu0 %v217, 60
      %v461 = vpop.permute.xlu0 %460
      %462 = vrot.lane.b32.xlu0 %v218, 60
      %v463 = vpop.permute.xlu0 %462
      %464 = vrot.lane.b32.xlu0 %v219, 60
      %v465 = vpop.permute.xlu0 %464
      %466 = vrot.lane.b32.xlu0 %v220, 60
      %v467 = vpop.permute.xlu0 %466
      %468 = vrot.lane.b32.xlu0 %v221, 60
      %v469 = vpop.permute.xlu0 %468
      %470 = vrot.lane.b32.xlu0 %v222, 60
      %v471 = vpop.permute.xlu0 %470
      %472 = vrot.lane.b32.xlu0 %v223, 60
      %v473 = vpop.permute.xlu0 %472
      %474 = vrot.lane.b32.xlu0 %v238, 60
      %v475 = vpop.permute.xlu0 %474
      %vm476 = vcmask 490496
      %v477 = vsel %vm476, %v455, %v457
      %v478 = vsel %vm476, %v457, %v459
      %v479 = vsel %vm476, %v459, %v461
      %v480 = vsel %vm476, %v461, %v463
      %v481 = vsel %vm476, %v463, %v465
      %v482 = vsel %vm476, %v465, %v467
      %v483 = vsel %vm476, %v467, %v469
      %v484 = vsel %vm476, %v469, %v471
      %v485 = vsel %vm476, %v471, %v473
      %v486 = vsel %vm476, %v473, %v475
      %497 = vrot.lane.b32.xlu0 %v214, 59
      %v498 = vpop.permute.xlu0 %497
      %499 = vrot.lane.b32.xlu0 %v215, 59
      %v500 = vpop.permute.xlu0 %499
      %501 = vrot.lane.b32.xlu0 %v216, 59
      %v502 = vpop.permute.xlu0 %501
      %503 = vrot.lane.b32.xlu0 %v217, 59
      %v504 = vpop.permute.xlu0 %503
      %505 = vrot.lane.b32.xlu0 %v218, 59
      %v506 = vpop.permute.xlu0 %505
      %507 = vrot.lane.b32.xlu0 %v219, 59
      %v508 = vpop.permute.xlu0 %507
      %509 = vrot.lane.b32.xlu0 %v220, 59
      %v510 = vpop.permute.xlu0 %509
      %511 = vrot.lane.b32.xlu0 %v221, 59
      %v512 = vpop.permute.xlu0 %511
      %513 = vrot.lane.b32.xlu0 %v222, 59
      %v514 = vpop.permute.xlu0 %513
      %515 = vrot.lane.b32.xlu0 %v223, 59
      %v516 = vpop.permute.xlu0 %515
      %517 = vrot.lane.b32.xlu0 %v238, 59
      %v518 = vpop.permute.xlu0 %517
      %vm519 = vcmask 482304
      %v520 = vsel %vm519, %v498, %v500
      %v521 = vsel %vm519, %v500, %v502
      %v522 = vsel %vm519, %v502, %v504
      %v523 = vsel %vm519, %v504, %v506
      %v524 = vsel %vm519, %v506, %v508
      %v525 = vsel %vm519, %v508, %v510
      %v526 = vsel %vm519, %v510, %v512
      %v527 = vsel %vm519, %v512, %v514
      %v528 = vsel %vm519, %v514, %v516
      %v529 = vsel %vm519, %v516, %v518
      %540 = vrot.lane.b32.xlu0 %v214, 58
      %v541 = vpop.permute.xlu0 %540
      %542 = vrot.lane.b32.xlu0 %v215, 58
      %v543 = vpop.permute.xlu0 %542
      %544 = vrot.lane.b32.xlu0 %v216, 58
      %v545 = vpop.permute.xlu0 %544
      %546 = vrot.lane.b32.xlu0 %v217, 58
      %v547 = vpop.permute.xlu0 %546
      %548 = vrot.lane.b32.xlu0 %v218, 58
      %v549 = vpop.permute.xlu0 %548
      %550 = vrot.lane.b32.xlu0 %v219, 58
      %v551 = vpop.permute.xlu0 %550
      %552 = vrot.lane.b32.xlu0 %v220, 58
      %v553 = vpop.permute.xlu0 %552
      %554 = vrot.lane.b32.xlu0 %v221, 58
      %v555 = vpop.permute.xlu0 %554
      %556 = vrot.lane.b32.xlu0 %v222, 58
      %v557 = vpop.permute.xlu0 %556
      %558 = vrot.lane.b32.xlu0 %v223, 58
      %v559 = vpop.permute.xlu0 %558
      %560 = vrot.lane.b32.xlu0 %v238, 58
      %v561 = vpop.permute.xlu0 %560
      %vm562 = vcmask 474112
      %v563 = vsel %vm562, %v541, %v543
      %v564 = vsel %vm562, %v543, %v545
      %v565 = vsel %vm562, %v545, %v547
      %v566 = vsel %vm562, %v547, %v549
      %v567 = vsel %vm562, %v549, %v551
      %v568 = vsel %vm562, %v551, %v553
      %v569 = vsel %vm562, %v553, %v555
      %v570 = vsel %vm562, %v555, %v557
      %v571 = vsel %vm562, %v557, %v559
      %v572 = vsel %vm562, %v559, %v561
      %v583 = vld [vmem:[%s1] sm:$0xf]
      %v584 = vld [vmem:[%s2] sm:$0xf]
      %586 = vset.pattern.permute.xlu0 0
      %587 = vperm.xlu0 %586, %v584
      %v588 = vpop.permute.xlu0 %587
      %591 = vst [vmem:[#allocation1] ss:$4 sm:$0xff] %v583
      %v592 = vld.sshfl [vmem:[#allocation1] sm:$0xff pattern:$0x73625140]
      %v593 = vld.sshfl [vmem:[#allocation1 + $0x8] sm:$0xff pattern:$0x73625140]
      %vm595 = vcmask 130048
      %v596 = vsel %vm595, %v593, 0
      %598 = vmatpush.bf16.msra.mxu0 %v520
      %599 = vmatpush.bf16.msra.mxu0 %v477
      %600 = vmatpush.bf16.msra.mxu0 %v434
      %601 = vmatpush.bf16.msra.mxu0 %v391
      %602 = vmatpush.bf16.msra.mxu0 %v348
      %603 = vmatpush.bf16.msra.mxu0 %v305
      %604 = vmatpush.bf16.msra.mxu0 %v262
      %605 = vmatpush.bf16.msra.mxu0 %v214
      %606 = vmatmul.bf16.gmra.mxu0 %v592
      %v607 = vpop.f32.mrf.mxu0
      %v608 = vadd.f32 %v588, %v607
      %v609 = vpop.f32.mrf.mxu0
      %610 = vdwg.mxu0
      %611 = vmatpush.bf16.msra.mxu0 0
      %612 = vmatpush.bf16.msra.mxu0 0
      %613 = vmatpush.bf16.msra.mxu0 0
      %614 = vmatpush.bf16.msra.mxu0 0
      %615 = vmatpush.bf16.msra.mxu0 0
      %616 = vmatpush.bf16.msra.mxu0 0
      %617 = vmatpush.bf16.msra.mxu0 0
      %618 = vmatpush.bf16.msra.mxu0 %v563
      %619 = vmatmul.bf16.gmra.mxu0 %v596
      %v620 = vpop.f32.mrf.mxu0
      %v621 = vadd.f32 %v608, %v620
      %v622 = vpop.f32.mrf.mxu0
      %623 = vdwg.mxu0
      %624 = vmatpush.bf16.msra.mxu0 %v521
      %625 = vmatpush.bf16.msra.mxu0 %v478
      %626 = vmatpush.bf16.msra.mxu0 %v435
      %627 = vmatpush.bf16.msra.mxu0 %v392
      %628 = vmatpush.bf16.msra.mxu0 %v349
      %629 = vmatpush.bf16.msra.mxu0 %v306
      %630 = vmatpush.bf16.msra.mxu0 %v263
      %631 = vmatpush.bf16.msra.mxu0 %v215
      %632 = vmatmul.bf16.gmra.mxu0 %v592
      %v633 = vpop.f32.mrf.mxu0
      %v634 = vadd.f32 %v588, %v633
      %v635 = vpop.f32.mrf.mxu0
      %636 = vdwg.mxu0
      %637 = vmatpush.bf16.msra.mxu0 0
      %638 = vmatpush.bf16.msra.mxu0 0
      %639 = vmatpush.bf16.msra.mxu0 0
      %640 = vmatpush.bf16.msra.mxu0 0
      %641 = vmatpush.bf16.msra.mxu0 0
      %642 = vmatpush.bf16.msra.mxu0 0
      %643 = vmatpush.bf16.msra.mxu0 0
      %644 = vmatpush.bf16.msra.mxu0 %v564
      %645 = vmatmul.bf16.gmra.mxu0 %v596
      %v646 = vpop.f32.mrf.mxu0
      %v647 = vadd.f32 %v634, %v646
      %v648 = vpop.f32.mrf.mxu0
      %649 = vdwg.mxu0
      %650 = vmatpush.bf16.msra.mxu0 %v522
      %651 = vmatpush.bf16.msra.mxu0 %v479
      %652 = vmatpush.bf16.msra.mxu0 %v436
      %653 = vmatpush.bf16.msra.mxu0 %v393
      %654 = vmatpush.bf16.msra.mxu0 %v350
      %655 = vmatpush.bf16.msra.mxu0 %v307
      %656 = vmatpush.bf16.msra.mxu0 %v264
      %657 = vmatpush.bf16.msra.mxu0 %v216
      %658 = vmatmul.bf16.gmra.mxu0 %v592
      %v659 = vpop.f32.mrf.mxu0
      %v660 = vadd.f32 %v588, %v659
      %v661 = vpop.f32.mrf.mxu0
      %662 = vdwg.mxu0
      %663 = vmatpush.bf16.msra.mxu0 0
      %664 = vmatpush.bf16.msra.mxu0 0
      %665 = vmatpush.bf16.msra.mxu0 0
      %666 = vmatpush.bf16.msra.mxu0 0
      %667 = vmatpush.bf16.msra.mxu0 0
      %668 = vmatpush.bf16.msra.mxu0 0
      %669 = vmatpush.bf16.msra.mxu0 0
      %670 = vmatpush.bf16.msra.mxu0 %v565
      %671 = vmatmul.bf16.gmra.mxu0 %v596
      %v672 = vpop.f32.mrf.mxu0
      %v673 = vadd.f32 %v660, %v672
      %v674 = vpop.f32.mrf.mxu0
      %675 = vdwg.mxu0
      %676 = vmatpush.bf16.msra.mxu0 %v523
      %677 = vmatpush.bf16.msra.mxu0 %v480
      %678 = vmatpush.bf16.msra.mxu0 %v437
      %679 = vmatpush.bf16.msra.mxu0 %v394
      %680 = vmatpush.bf16.msra.mxu0 %v351
      %681 = vmatpush.bf16.msra.mxu0 %v308
      %682 = vmatpush.bf16.msra.mxu0 %v265
      %683 = vmatpush.bf16.msra.mxu0 %v217
      %684 = vmatmul.bf16.gmra.mxu0 %v592
      %v685 = vpop.f32.mrf.mxu0
      %v686 = vadd.f32 %v588, %v685
      %v687 = vpop.f32.mrf.mxu0
      %688 = vdwg.mxu0
      %689 = vmatpush.bf16.msra.mxu0 0
      %690 = vmatpush.bf16.msra.mxu0 0
      %691 = vmatpush.bf16.msra.mxu0 0
      %692 = vmatpush.bf16.msra.mxu0 0
      %693 = vmatpush.bf16.msra.mxu0 0
      %694 = vmatpush.bf16.msra.mxu0 0
      %695 = vmatpush.bf16.msra.mxu0 0
      %696 = vmatpush.bf16.msra.mxu0 %v566
      %697 = vmatmul.bf16.gmra.mxu0 %v596
      %v698 = vpop.f32.mrf.mxu0
      %v699 = vadd.f32 %v686, %v698
      %v700 = vpop.f32.mrf.mxu0
      %701 = vdwg.mxu0
      %702 = vmatpush.bf16.msra.mxu0 %v524
      %703 = vmatpush.bf16.msra.mxu0 %v481
      %704 = vmatpush.bf16.msra.mxu0 %v438
      %705 = vmatpush.bf16.msra.mxu0 %v395
      %706 = vmatpush.bf16.msra.mxu0 %v352
      %707 = vmatpush.bf16.msra.mxu0 %v309
      %708 = vmatpush.bf16.msra.mxu0 %v266
      %709 = vmatpush.bf16.msra.mxu0 %v218
      %710 = vmatmul.bf16.gmra.mxu0 %v592
      %v711 = vpop.f32.mrf.mxu0
      %v712 = vadd.f32 %v588, %v711
      %v713 = vpop.f32.mrf.mxu0
      %714 = vdwg.mxu0
      %715 = vmatpush.bf16.msra.mxu0 0
      %716 = vmatpush.bf16.msra.mxu0 0
      %717 = vmatpush.bf16.msra.mxu0 0
      %718 = vmatpush.bf16.msra.mxu0 0
      %719 = vmatpush.bf16.msra.mxu0 0
      %720 = vmatpush.bf16.msra.mxu0 0
      %721 = vmatpush.bf16.msra.mxu0 0
      %722 = vmatpush.bf16.msra.mxu0 %v567
      %723 = vmatmul.bf16.gmra.mxu0 %v596
      %v724 = vpop.f32.mrf.mxu0
      %v725 = vadd.f32 %v712, %v724
      %v726 = vpop.f32.mrf.mxu0
      %727 = vdwg.mxu0
      %728 = vmatpush.bf16.msra.mxu0 %v525
      %729 = vmatpush.bf16.msra.mxu0 %v482
      %730 = vmatpush.bf16.msra.mxu0 %v439
      %731 = vmatpush.bf16.msra.mxu0 %v396
      %732 = vmatpush.bf16.msra.mxu0 %v353
      %733 = vmatpush.bf16.msra.mxu0 %v310
      %734 = vmatpush.bf16.msra.mxu0 %v267
      %735 = vmatpush.bf16.msra.mxu0 %v219
      %736 = vmatmul.bf16.gmra.mxu0 %v592
      %v737 = vpop.f32.mrf.mxu0
      %v738 = vadd.f32 %v588, %v737
      %v739 = vpop.f32.mrf.mxu0
      %740 = vdwg.mxu0
      %741 = vmatpush.bf16.msra.mxu0 0
      %742 = vmatpush.bf16.msra.mxu0 0
      %743 = vmatpush.bf16.msra.mxu0 0
      %744 = vmatpush.bf16.msra.mxu0 0
      %745 = vmatpush.bf16.msra.mxu0 0
      %746 = vmatpush.bf16.msra.mxu0 0
      %747 = vmatpush.bf16.msra.mxu0 0
      %748 = vmatpush.bf16.msra.mxu0 %v568
      %749 = vmatmul.bf16.gmra.mxu0 %v596
      %v750 = vpop.f32.mrf.mxu0
      %v751 = vadd.f32 %v738, %v750
      %v752 = vpop.f32.mrf.mxu0
      %753 = vdwg.mxu0
      %754 = vmatpush.bf16.msra.mxu0 %v526
      %755 = vmatpush.bf16.msra.mxu0 %v483
      %756 = vmatpush.bf16.msra.mxu0 %v440
      %757 = vmatpush.bf16.msra.mxu0 %v397
      %758 = vmatpush.bf16.msra.mxu0 %v354
      %759 = vmatpush.bf16.msra.mxu0 %v311
      %760 = vmatpush.bf16.msra.mxu0 %v268
      %761 = vmatpush.bf16.msra.mxu0 %v220
      %762 = vmatmul.bf16.gmra.mxu0 %v592
      %v763 = vpop.f32.mrf.mxu0
      %v764 = vadd.f32 %v588, %v763
      %v765 = vpop.f32.mrf.mxu0
      %766 = vdwg.mxu0
      %767 = vmatpush.bf16.msra.mxu0 0
      %768 = vmatpush.bf16.msra.mxu0 0
      %769 = vmatpush.bf16.msra.mxu0 0
      %770 = vmatpush.bf16.msra.mxu0 0
      %771 = vmatpush.bf16.msra.mxu0 0
      %772 = vmatpush.bf16.msra.mxu0 0
      %773 = vmatpush.bf16.msra.mxu0 0
      %774 = vmatpush.bf16.msra.mxu0 %v569
      %775 = vmatmul.bf16.gmra.mxu0 %v596
      %v776 = vpop.f32.mrf.mxu0
      %v777 = vadd.f32 %v764, %v776
      %v778 = vpop.f32.mrf.mxu0
      %779 = vdwg.mxu0
      %780 = vmatpush.bf16.msra.mxu0 %v527
      %781 = vmatpush.bf16.msra.mxu0 %v484
      %782 = vmatpush.bf16.msra.mxu0 %v441
      %783 = vmatpush.bf16.msra.mxu0 %v398
      %784 = vmatpush.bf16.msra.mxu0 %v355
      %785 = vmatpush.bf16.msra.mxu0 %v312
      %786 = vmatpush.bf16.msra.mxu0 %v269
      %787 = vmatpush.bf16.msra.mxu0 %v221
      %788 = vmatmul.bf16.gmra.mxu0 %v592
      %v789 = vpop.f32.mrf.mxu0
      %v790 = vadd.f32 %v588, %v789
      %v791 = vpop.f32.mrf.mxu0
      %792 = vdwg.mxu0
      %793 = vmatpush.bf16.msra.mxu0 0
      %794 = vmatpush.bf16.msra.mxu0 0
      %795 = vmatpush.bf16.msra.mxu0 0
      %796 = vmatpush.bf16.msra.mxu0 0
      %797 = vmatpush.bf16.msra.mxu0 0
      %798 = vmatpush.bf16.msra.mxu0 0
      %799 = vmatpush.bf16.msra.mxu0 0
      %800 = vmatpush.bf16.msra.mxu0 %v570
      %801 = vmatmul.bf16.gmra.mxu0 %v596
      %v802 = vpop.f32.mrf.mxu0
      %v803 = vadd.f32 %v790, %v802
      %v804 = vpop.f32.mrf.mxu0
      %805 = vdwg.mxu0
      %806 = vmatpush.bf16.msra.mxu0 %v528
      %807 = vmatpush.bf16.msra.mxu0 %v485
      %808 = vmatpush.bf16.msra.mxu0 %v442
      %809 = vmatpush.bf16.msra.mxu0 %v399
      %810 = vmatpush.bf16.msra.mxu0 %v356
      %811 = vmatpush.bf16.msra.mxu0 %v313
      %812 = vmatpush.bf16.msra.mxu0 %v270
      %813 = vmatpush.bf16.msra.mxu0 %v222
      %814 = vmatmul.bf16.gmra.mxu0 %v592
      %v815 = vpop.f32.mrf.mxu0
      %v816 = vadd.f32 %v588, %v815
      %v817 = vpop.f32.mrf.mxu0
      %818 = vdwg.mxu0
      %819 = vmatpush.bf16.msra.mxu0 0
      %820 = vmatpush.bf16.msra.mxu0 0
      %821 = vmatpush.bf16.msra.mxu0 0
      %822 = vmatpush.bf16.msra.mxu0 0
      %823 = vmatpush.bf16.msra.mxu0 0
      %824 = vmatpush.bf16.msra.mxu0 0
      %825 = vmatpush.bf16.msra.mxu0 0
      %826 = vmatpush.bf16.msra.mxu0 %v571
      %827 = vmatmul.bf16.gmra.mxu0 %v596
      %v828 = vpop.f32.mrf.mxu0
      %v829 = vadd.f32 %v816, %v828
      %v830 = vpop.f32.mrf.mxu0
      %831 = vdwg.mxu0
      %832 = vmatpush.bf16.msra.mxu0 %v529
      %833 = vmatpush.bf16.msra.mxu0 %v486
      %834 = vmatpush.bf16.msra.mxu0 %v443
      %835 = vmatpush.bf16.msra.mxu0 %v400
      %836 = vmatpush.bf16.msra.mxu0 %v357
      %837 = vmatpush.bf16.msra.mxu0 %v314
      %838 = vmatpush.bf16.msra.mxu0 %v271
      %839 = vmatpush.bf16.msra.mxu0 %v223
      %840 = vmatmul.bf16.gmra.mxu0 %v592
      %v841 = vpop.f32.mrf.mxu0
      %v842 = vadd.f32 %v588, %v841
      %v843 = vpop.f32.mrf.mxu0
      %844 = vdwg.mxu0
      %845 = vmatpush.bf16.msra.mxu0 0
      %846 = vmatpush.bf16.msra.mxu0 0
      %847 = vmatpush.bf16.msra.mxu0 0
      %848 = vmatpush.bf16.msra.mxu0 0
      %849 = vmatpush.bf16.msra.mxu0 0
      %850 = vmatpush.bf16.msra.mxu0 0
      %851 = vmatpush.bf16.msra.mxu0 0
      %852 = vmatpush.bf16.msra.mxu0 %v572
      %853 = vmatmul.bf16.gmra.mxu0 %v596
      %v854 = vpop.f32.mrf.mxu0
      %v855 = vadd.f32 %v842, %v854
      %v856 = vpop.f32.mrf.mxu0
      %857 = vdwg.mxu0
      %v858 = vtanh.pop %v621
      %v859 = vtanh.pop %v647
      %v860 = vtanh.pop %v673
      %v861 = vtanh.pop %v699
      %v862 = vtanh.pop %v725
      %v863 = vtanh.pop %v751
      %v864 = vtanh.pop %v777
      %v865 = vtanh.pop %v803
      %v866 = vtanh.pop %v829
      %v867 = vtanh.pop %v855
      %v878 = vrot.slane %v859, 4
      %v879 = vrot.slane %v861, 4
      %v880 = vrot.slane %v863, 4
      %v881 = vrot.slane %v865, 4
      %v882 = vrot.slane %v867, 4
      %vm883 = vcmask 1043456
      %v884 = vsel %vm883, %v858, %v878
      %v885 = vsel %vm883, %v860, %v879
      %v886 = vsel %vm883, %v862, %v880
      %v887 = vsel %vm883, %v864, %v881
      %v888 = vsel %vm883, %v866, %v882
      %894 = vst [vmem:[%s170] sm:$0xff] %v884
      %895 = vst [vmem:[%s170 + $0x8] sm:$0xff] %v885
      %896 = vst [vmem:[%s170 + $0x10] sm:$0xff] %v886
      %897 = vst [vmem:[%s170 + $0x18] sm:$0xff] %v887
      %898 = vst [vmem:[%s170 + $0x20] sm:$0xff] %v888
      %p899 = scmp.lt.s32.totalorder %s14, 1
      %s900 = scalar_select %p899, %s14, 1
      %s901 = smul.addr %s900, 10
      %s902 = smul.addr %s901, 4
      %s903 = scalar_lea.vmem %s3, %s902
      // Predicated region
      $region33: #{generator_forward.9} parent=31 // pred_check
        %p904 = pneg %p100
      $region34: #{generator_forward.9} parent=31 // pred_check_branch
        %906 = sbr.rel (%p904) target = $region36
      $region35: #{generator_forward.9} parent=31 // pred_region
        _
      $region36: #{generator_forward.9} parent=31 // pred_fallthru
        _
    $region32: #{generator_forward.9} parent=5 // pred_fallthru
      _
    %p907 = scmp.le.s32.totalorder 2, %s9
    // Predicated region
    $region37: #{generator_forward.9} parent=5 // pred_check
      %p908 = pneg %p907
    $region38: #{generator_forward.9} parent=5 // pred_check_branch
      %910 = sbr.rel (%p908) target = $region40
    $region39: #{generator_forward.9} parent=5 // pred_region
      %s911 = ssub.s32 %s9, 2
      // Predicated region
      $region41: #{generator_forward.9} parent=39 // pred_check
        %p912 = pneg %p106
      $region42: #{generator_forward.9} parent=39 // pred_check_branch
        %914 = sbr.rel (%p912) target = $region44
      $region43: #{generator_forward.9} parent=39 // pred_region
        %p915 = scmp.lt.s32.totalorder %s15, 1
        %s916 = scalar_select %p915, %s15, 1
        %s917 = smul.addr %s916, 10
        %s918 = smul.addr %s917, 4
        %s919 = scalar_lea.vmem %s3, %s918
      $region44: #{generator_forward.9} parent=39 // pred_fallthru
        _
    $region40: #{generator_forward.9} parent=5 // pred_fallthru
      _
  $region6: #{generator_forward.9} parent=0 // loop_footer
    %s13 = sadd.s32 1, %s9
  $region7: #{generator_forward.9} parent=0 // loop_footer_branch
    %8 = sbr.rel target = $region3
  $region8: #{generator_forward.9} parent=0 // loop_exit
    _

</llo_original>
